<compile_context>
chip_gen: v5e
topology: v5e:2x2
jax: 0.10.0
libtpu: 0.0.40
codegen_flags: <defaults>
</compile_context>

<pallas_src>
import functools

import jax
import jax.numpy as jnp
from jax.experimental import pallas as pl
from jax.experimental.pallas import tpu as pltpu

# ------------------------- small, kernel-friendly config ---------------------
DATA_DIM = 64          # image is 8x8 (MNIST would be 28*28=784)
DIM = 128              # model width       (cfg.net.dim, 1024 in the original)
MLP_DIM = 256          # mlp hidden        (cfg.net.mlp_dim)
FREQ_DIM = 64          # fourier freq dim  (cfg.net.freq_dim) -> emb dim = 256
DEPTH = 2              # number of AdaLN MLP blocks (cfg.net.depth)
N_BATCH = 256          # batch; amortizes the fixed weight-DMA / launch cost

SAMPLING_STEPS = 32
LOGNORM_MU = 0.0
LOGNORM_STD = 1.0
LOSS_WT_POWER = 0.0
TIME_FOURIER_FREQS = (0.1, 100.0)
DIFF_FOURIER_FREQS = (0.1, 100.0)
RMS_EPS = 1e-6

TILE_N = 128           # rows per grid step (x2 effective after primal/tangent stack)


# ------------------------------ in-kernel helpers ----------------------------
def _rmsnorm_jvp(z, dz, g):
    """RMSNorm(z) and its JVP; g is the learned scale of shape (1, dim). f32."""
    m = jnp.mean(z * z, axis=-1, keepdims=True)
    s = jax.lax.rsqrt(m + RMS_EPS)                # EUP
    n = z * s * g
    mzdz = jnp.mean(z * dz, axis=-1, keepdims=True)
    dn = (dz * s - z * (s * s * s) * mzdz) * g
    return n, dn


def _silu_jvp(s, ds):
    sig = jax.nn.sigmoid(s)                       # EUP
    a = s * sig
    da = sig * (1.0 + s * (1.0 - sig)) * ds
    return a, da


# ------------------------------- the Pallas kernel ----------------------------
def net_jvp_kernel(pin_ref, tin_ref, cond_ref,
                   w_inemb_ref, g_ref, wm_ref, wk_ref, wv_ref, w_out_ref,
                   out_ref, *, depth, dim, tile_n):
    """SimpleMLPNet forward + JVP.

    pin = [xt | emb]  (primal, bf16), tin = [vt | demb]  (tangent, bf16),
    cond tangent is zero.  Output lanes: [u | du]  (f32, lane-dense 128).
    Primal rows 0:tn and tangent rows tn:2tn are stacked on the sublane axis
    so every shared weight is hit by exactly one matmul.
    """
    f32 = jnp.float32
    bf16 = jnp.bfloat16
    tn = tile_n

    # merged in_proj + emb_proj (block-diag weight) -> [x | c_emb] in one matmul
    inp = jnp.concatenate([pin_ref[...], tin_ref[...]], axis=0)       # (2tn, in_dim) bf16
    xc = jnp.dot(inp, w_inemb_ref[...], preferred_element_type=f32)   # (2tn, 2*dim)

    # keep primal / tangent halves as separate values between blocks (no
    # stack/unstack f32 round-trips); cond has zero tangent -> primal only.
    x_p = xc[:tn, :dim]
    x_t = xc[tn:, :dim]
    c_p = xc[:tn, dim:] + cond_ref[...]
    c_t = xc[tn:, dim:]

    # AdaLN MLP blocks (RMSNorm weight shared between x and c, as in the module).
    # Static unroll (depth=2) on purpose — LLO scheduler visibility.
    for l in range(depth):
        g = g_ref[l]        # (1, dim)      f32
        wm = wm_ref[l]      # (dim, 3*dim)  bf16
        wk = wk_ref[l]      # (dim, mlp)    bf16
        wv = wv_ref[l]      # (mlp, dim)    bf16

        # modulation branch
        nc, dnc = _rmsnorm_jvp(c_p, c_t, g)
        mod = jnp.dot(jnp.concatenate([nc.astype(bf16), dnc.astype(bf16)], axis=0),
                      wm, preferred_element_type=f32)                 # (2tn, 3*dim)
        # chunk order matches torch .chunk(3, dim=-1): gate, shift, scale
        gate, shift, scale = mod[:tn, :dim], mod[:tn, dim:2 * dim], mod[:tn, 2 * dim:]
        dgate, dshift, dscale = mod[tn:, :dim], mod[tn:, dim:2 * dim], mod[tn:, 2 * dim:]

        # x branch
        nx, dnx = _rmsnorm_jvp(x_p, x_t, g)
        h = nx * (1.0 + gate) + shift
        dh = dnx * (1.0 + gate) + nx * dgate + dshift

        s = jnp.dot(jnp.concatenate([h.astype(bf16), dh.astype(bf16)], axis=0),
                    wk, preferred_element_type=f32)                   # (2tn, mlp)
        a, da = _silu_jvp(s[:tn], s[tn:])

        v = jnp.dot(jnp.concatenate([a.astype(bf16), da.astype(bf16)], axis=0),
                    wv, preferred_element_type=f32)                   # (2tn, dim)
        x_p = x_p + v[:tn] * scale
        x_t = x_t + v[tn:] * scale + v[:tn] * dscale

    # out_head: lane-dense [u | du] via block-diag(w_out, w_out) -> full-width vst.
    # TODO(synk): `Output(dim, data_dim, pad_to=64)` internals unknown; modeled
    # as a bias-free linear (data_dim already a multiple of 64 here).
    xdx = jnp.concatenate([x_p.astype(bf16), x_t.astype(bf16)], axis=-1)  # (tn, 2*dim)
    out_ref[...] = jnp.dot(xdx, w_out_ref[...], preferred_element_type=f32)


def run_net_jvp(xt, vt, emb, demb, cond, net):
    N, data_dim = xt.shape
    emb_dim = emb.shape[1]
    in_dim = data_dim + emb_dim
    dim = net["g"].shape[-1]
    depth = net["wm"].shape[0]
    mlp_dim = net["wk"].shape[2]

    # Wrapper-side layout plumbing: lane-concat the primal / tangent inputs and
    # cast the matmul operands to bf16 (accumulation stays f32 in the kernel).
    pin = jnp.concatenate([xt, emb], axis=-1).astype(jnp.bfloat16)    # (N, in_dim)
    tin = jnp.concatenate([vt, demb], axis=-1).astype(jnp.bfloat16)   # (N, in_dim)

    def row_spec(d):
        return pl.BlockSpec((TILE_N, d), lambda i: (i, 0))

    def full_spec(shape):
        nz = len(shape)
        return pl.BlockSpec(shape, lambda i, _n=nz: (0,) * _n)

    kernel = functools.partial(net_jvp_kernel, depth=depth, dim=dim, tile_n=TILE_N)

    # Advisory cost hint so XLA overlaps the surrounding glue with the weight
    # DMA of this overhead-bound kernel.
    mults = (2 * in_dim * 2 * dim
             + 2 * depth * (dim * 3 * dim + dim * mlp_dim + mlp_dim * dim)
             + 2 * dim * 2 * data_dim)
    flops = int(2 * N * mults)
    bytes_w = int(2 * (in_dim * 2 * dim
                       + depth * (dim * 3 * dim + dim * mlp_dim + mlp_dim * dim)
                       + 2 * dim * 2 * data_dim) + 4 * depth * dim)
    bytes_io = int(2 * (2 * N * in_dim) + 4 * N * dim + 4 * N * 2 * data_dim)
    cost = pl.CostEstimate(flops=flops,
                           transcendentals=int(N * depth * (mlp_dim + 2)),
                           bytes_accessed=bytes_w + bytes_io)

    out = pl.pallas_call(
        kernel,
        out_shape=jax.ShapeDtypeStruct((N, 2 * data_dim), jnp.float32),
        grid=(N // TILE_N,),
        in_specs=[
            row_spec(in_dim),                     # [xt | emb]   (bf16)
            row_spec(in_dim),                     # [vt | demb]  (bf16)
            row_spec(dim),                        # cond         (f32)
            full_spec((in_dim, 2 * dim)),         # block-diag [w_in ; w_emb]   (bf16)
            full_spec((depth, 1, dim)),           # per-block RMSNorm scale     (f32)
            full_spec((depth, dim, 3 * dim)),     # modulation                  (bf16)
            full_spec((depth, dim, mlp_dim)),     # k                           (bf16)
            full_spec((depth, mlp_dim, dim)),     # v                           (bf16)
            full_spec((2 * dim, 2 * data_dim)),   # block-diag [w_out, w_out]   (bf16)
        ],
        out_specs=row_spec(2 * data_dim),         # lane-dense 128-wide output
        compiler_params=pltpu.CompilerParams(dimension_semantics=("parallel",)),
        cost_estimate=cost,
    )(pin, tin, cond,
      net["w_inemb"], net["g"], net["wm"], net["wk"], net["wv"], net["w_out_bd"])

    return out[:, :data_dim], out[:, data_dim:]   # u, du


# ------------------------------- parameter init -------------------------------
def make_frequencies(freq_range, dim):
    min_f, max_f = freq_range
    return min_f * (max_f / min_f) ** jnp.linspace(0.0, 1.0, dim)


def _block_diag(a, b):
    ka, na = a.shape
    kb, nb = b.shape
    top = jnp.concatenate([a, jnp.zeros((ka, nb), a.dtype)], axis=1)
    bot = jnp.concatenate([jnp.zeros((kb, na), b.dtype), b], axis=1)
    return jnp.concatenate([top, bot], axis=0)


def init_params(key):
    ks = jax.random.split(key, 8)
    # NOTE: modulation / out head are zero-init in the PyTorch module; we use
    # small deterministic random weights instead so the kernel exercises the
    # full compute path (synthetic init, not a checkpoint).
    params = {
        "class_embed": 0.5 * jax.random.normal(ks[0], (10, DIM), jnp.float32),
        "time_freqs": make_frequencies(TIME_FOURIER_FREQS, FREQ_DIM).astype(jnp.float32),
        "diff_freqs": make_frequencies(DIFF_FOURIER_FREQS, FREQ_DIM).astype(jnp.float32),
        "w_in": jax.random.normal(ks[1], (DATA_DIM, DIM), jnp.float32) / jnp.sqrt(DATA_DIM),
        "w_emb": jax.random.normal(ks[2], (4 * FREQ_DIM, DIM), jnp.float32) / jnp.sqrt(4 * FREQ_DIM),
        "g": jnp.ones((DEPTH, 1, DIM), jnp.float32),
        "wm": 0.02 * jax.random.normal(ks[3], (DEPTH, DIM, 3 * DIM), jnp.float32),
        "wk": jax.random.normal(ks[4], (DEPTH, DIM, MLP_DIM), jnp.float32) / jnp.sqrt(DIM),
        "wv": jax.random.normal(ks[5], (DEPTH, MLP_DIM, DIM), jnp.float32) / jnp.sqrt(MLP_DIM),
        "w_out": 0.02 * jax.random.normal(ks[6], (DIM, DATA_DIM), jnp.float32),
    }
    return params


def pack_net_params(params):
    """Pack kernel-ready weights: bf16 matmul operands, merged block-diag
    in/emb projection and doubled (lane-dense) output head."""
    bf16 = jnp.bfloat16
    return {
        "w_inemb": _block_diag(params["w_in"], params["w_emb"]).astype(bf16),   # (320, 256)
        "g": params["g"].astype(jnp.float32),                                   # f32 elementwise
        "wm": params["wm"].astype(bf16),
        "wk": params["wk"].astype(bf16),
        "wv": params["wv"].astype(bf16),
        "w_out_bd": _block_diag(params["w_out"], params["w_out"]).astype(bf16), # (256, 128)
    }


# ------------------------ pure-JAX f32 reference (checking) -------------------
def _rmsnorm_ref(z, g):
    return z * jax.lax.rsqrt(jnp.mean(z * z, axis=-1, keepdims=True) + RMS_EPS) * g


def net_forward_ref(x_in, emb, cond, params):
    x = x_in @ params["w_in"]
    c = emb @ params["w_emb"] + cond
    for l in range(params["wm"].shape[0]):
        g = params["g"][l]
        gate, shift, scale = jnp.split(_rmsnorm_ref(c, g) @ params["wm"][l], 3, axis=-1)
        h = _rmsnorm_ref(x, g) * (1.0 + gate) + shift
        a = jax.nn.silu(h @ params["wk"][l])
        x = x + (a @ params["wv"][l]) * scale
    return x @ params["w_out"]


def reference_net_jvp(xt, vt, emb, demb, cond, params):
    f = lambda xi, e: net_forward_ref(xi, e, cond, params)
    return jax.jvp(f, (xt, emb), (vt, demb))


# ----------------------------- MnistFlow.forward ------------------------------
def build_net_inputs(images_NHW, labels_N, params, key):
    N = images_NHW.shape[0]

    # image preprocessing (glue)
    imgs = images_NHW.astype(jnp.float32) / 255.0
    imgs_ND = imgs.reshape(N, -1) * 2.0 - 1.0                    # (N, DATA_DIM)
    cond_ND = params["class_embed"][labels_N]                    # (N, DIM)

    # Meanflow.loss sampling (torch.randn / torch.rand -> jax.random glue)
    k1, k2, k3 = jax.random.split(key, 3)
    mid = jax.nn.sigmoid(LOGNORM_MU + LOGNORM_STD * jax.random.normal(k1, (N, 1)))
    diff = jax.random.uniform(k2, (N, 1)) * 1.5 / SAMPLING_STEPS
    r = jnp.clip(mid - diff / 2.0, 0.0, None)
    t = jnp.clip(mid + diff / 2.0, None, 1.0)

    x = imgs_ND
    e = jax.random.normal(k3, x.shape)

    # trig schedule
    cos_t = jnp.cos(jnp.pi / 2.0 * t)
    sin_t = jnp.sin(jnp.pi / 2.0 * t)
    xt = cos_t * x + sin_t * e
    vt = (jnp.pi / 2.0) * (-sin_t * x + cos_t * e)

    # fourier embedding of (t, t-r) and its tangent for (dt, dr) = (1, 0)
    tf = params["time_freqs"][None, :]
    df = params["diff_freqs"][None, :]
    th_t = t * tf
    th_d = (t - r) * df
    emb = jnp.concatenate([jnp.sin(th_t), jnp.cos(th_t),
                           jnp.sin(th_d), jnp.cos(th_d)], axis=-1)
    demb = jnp.concatenate([jnp.cos(th_t) * tf, -jnp.sin(th_t) * tf,
                            jnp.cos(th_d) * df, -jnp.sin(th_d) * df], axis=-1)
    return xt, vt, emb, demb, cond_ND, t, r


def mnist_flow_loss(images_NHW, labels_N, params, key):
    net = pack_net_params(params)
    xt, vt, emb, demb, cond_ND, t, r = build_net_inputs(images_NHW, labels_N, params, key)

    # hot path: net forward + JVP in the Pallas kernel
    u, dudt = run_net_jvp(xt, vt, emb, demb, cond_ND, net)

    # mean-flow distillation loss
    u_tgt = vt - (t - r) * jax.lax.stop_gradient(dudt)
    loss_distill = (u - u_tgt) ** 2
    weights = (jax.lax.stop_gradient(loss_distill).mean(axis=-1) + 0.001) ** (-LOSS_WT_POWER)
    loss = loss_distill * weights[:, None]
    # consistency_steps = 0 in FlowConfig -> no consistency branch
    return loss.mean()


if __name__ == "__main__":
    key = jax.random.PRNGKey(0)
    k_img, k_lbl, k_par, k_flow = jax.random.split(key, 4)

    images = jax.random.randint(k_img, (N_BATCH, 8, 8), 0, 256, dtype=jnp.int32).astype(jnp.uint8)
    labels = jax.random.randint(k_lbl, (N_BATCH,), 0, 10, dtype=jnp.int32)
    params = init_params(k_par)

    # --- correctness: kernel (bf16 operands / f32 accum) vs f32 jax.jvp reference ---
    xt, vt, emb, demb, cond, t, r = build_net_inputs(images, labels, params, k_flow)
    net = pack_net_params(params)
    u_k, du_k = run_net_jvp(xt, vt, emb, demb, cond, net)
    u_r, du_r = reference_net_jvp(xt, vt, emb, demb, cond, params)
    jax.block_until_ready((u_k, du_k, u_r, du_r))
    err_u = float(jnp.max(jnp.abs(u_k - u_r)) / (jnp.max(jnp.abs(u_r)) + 1e-6))
    err_du = float(jnp.max(jnp.abs(du_k - du_r)) / (jnp.max(jnp.abs(du_r)) + 1e-6))
    # bf16 tangent inputs (demb carries the fourier frequencies, up to 100) set the floor
    assert err_u < 0.1 and err_du < 0.1, (err_u, err_du)

    # --- full mean-flow loss ---
    loss = jax.jit(mnist_flow_loss)(images, labels, params, k_flow)
    loss = jax.block_until_ready(loss)
    assert loss.shape == () and bool(jnp.isfinite(loss))
    print("KERNEL_OK")
</pallas_src>

<mosaic_0001>
module attributes {stable_mosaic.version = 11 : i64} {
  func.func @net_jvp_kernel(%arg0: i32, %arg1: memref<128x320xbf16, #tpu.memory_space<vmem>>, %arg2: memref<128x320xbf16, #tpu.memory_space<vmem>>, %arg3: memref<128x128xf32, #tpu.memory_space<vmem>>, %arg4: memref<320x256xbf16, #tpu.memory_space<vmem>>, %arg5: memref<2x1x128xf32, #tpu.memory_space<vmem>>, %arg6: memref<2x128x384xbf16, #tpu.memory_space<vmem>>, %arg7: memref<2x128x256xbf16, #tpu.memory_space<vmem>>, %arg8: memref<2x256x128xbf16, #tpu.memory_space<vmem>>, %arg9: memref<256x128xbf16, #tpu.memory_space<vmem>>, %arg10: memref<128x128xf32, #tpu.memory_space<vmem>>) attributes {dimension_semantics = [#tpu.dimension_semantics<parallel>], iteration_bounds = array<i64: 2>, scalar_prefetch = 0 : i64, scratch_operands = 0 : i64, tpu.core_type = #tpu.core_type<tc>, window_params = [{transform_indices = @transform_0, window_bounds = array<i64: 128, 320>}, {transform_indices = @transform_1, window_bounds = array<i64: 128, 320>}, {transform_indices = @transform_2, window_bounds = array<i64: 128, 128>}, {pipeline_mode = #tpu.pipeline_mode<synchronous>, transform_indices = @transform_3, window_bounds = array<i64: 320, 256>}, {pipeline_mode = #tpu.pipeline_mode<synchronous>, transform_indices = @transform_4, window_bounds = array<i64: 2, 1, 128>}, {pipeline_mode = #tpu.pipeline_mode<synchronous>, transform_indices = @transform_5, window_bounds = array<i64: 2, 128, 384>}, {pipeline_mode = #tpu.pipeline_mode<synchronous>, transform_indices = @transform_6, window_bounds = array<i64: 2, 128, 256>}, {pipeline_mode = #tpu.pipeline_mode<synchronous>, transform_indices = @transform_7, window_bounds = array<i64: 2, 256, 128>}, {pipeline_mode = #tpu.pipeline_mode<synchronous>, transform_indices = @transform_8, window_bounds = array<i64: 256, 128>}, {transform_indices = @transform_9, window_bounds = array<i64: 128, 128>}]} {
    %c0 = arith.constant 0 : index
    %c0_0 = arith.constant 0 : index
    %0 = vector.load %arg1[%c0, %c0_0] : memref<128x320xbf16, #tpu.memory_space<vmem>>, vector<128x320xbf16>
    %c0_1 = arith.constant 0 : index
    %c0_2 = arith.constant 0 : index
    %1 = vector.load %arg2[%c0_1, %c0_2] : memref<128x320xbf16, #tpu.memory_space<vmem>>, vector<128x320xbf16>
    %2 = tpu.concatenate %0, %1 in 0 : vector<128x320xbf16>, vector<128x320xbf16> -> vector<256x320xbf16>
    %c0_3 = arith.constant 0 : index
    %c0_4 = arith.constant 0 : index
    %3 = vector.load %arg4[%c0_3, %c0_4] : memref<320x256xbf16, #tpu.memory_space<vmem>>, vector<320x256xbf16>
    %cst = arith.constant dense<0.000000e+00> : vector<256x256xf32>
    %4 = tpu.matmul %2, %3, %cst {dimension_numbers = #tpu.dot_dimension_numbers<[1], [0], [0], [1], [0, 0, 1, 1], [], []>} : vector<256x320xbf16>, vector<320x256xbf16>, vector<256x256xf32> -> vector<256x256xf32>
    %5 = vector.extract_strided_slice %4 {offsets = [0, 0], sizes = [128, 128], strides = [1, 1]} : vector<256x256xf32> to vector<128x128xf32>
    %6 = vector.extract_strided_slice %4 {offsets = [128, 0], sizes = [128, 128], strides = [1, 1]} : vector<256x256xf32> to vector<128x128xf32>
    %7 = vector.extract_strided_slice %4 {offsets = [0, 128], sizes = [128, 128], strides = [1, 1]} : vector<256x256xf32> to vector<128x128xf32>
    %c0_5 = arith.constant 0 : index
    %c0_6 = arith.constant 0 : index
    %8 = vector.load %arg3[%c0_5, %c0_6] : memref<128x128xf32, #tpu.memory_space<vmem>>, vector<128x128xf32>
    %9 = arith.addf %7, %8 : vector<128x128xf32>
    %10 = vector.extract_strided_slice %4 {offsets = [128, 128], sizes = [128, 128], strides = [1, 1]} : vector<256x256xf32> to vector<128x128xf32>
    %c0_7 = arith.constant 0 : index
    %c0_8 = arith.constant 0 : index
    %c0_9 = arith.constant 0 : index
    %11 = vector.load %arg5[%c0_7, %c0_8, %c0_9] : memref<2x1x128xf32, #tpu.memory_space<vmem>>, vector<1x1x128xf32>
    %12 = vector.shape_cast %11 : vector<1x1x128xf32> to vector<1x128xf32>
    %c0_10 = arith.constant 0 : index
    %c0_11 = arith.constant 0 : index
    %c0_12 = arith.constant 0 : index
    %13 = vector.load %arg6[%c0_10, %c0_11, %c0_12] : memref<2x128x384xbf16, #tpu.memory_space<vmem>>, vector<1x128x384xbf16>
    %14 = vector.shape_cast %13 : vector<1x128x384xbf16> to vector<128x384xbf16>
    %c0_13 = arith.constant 0 : index
    %c0_14 = arith.constant 0 : index
    %c0_15 = arith.constant 0 : index
    %15 = vector.load %arg7[%c0_13, %c0_14, %c0_15] : memref<2x128x256xbf16, #tpu.memory_space<vmem>>, vector<1x128x256xbf16>
    %16 = vector.shape_cast %15 : vector<1x128x256xbf16> to vector<128x256xbf16>
    %c0_16 = arith.constant 0 : index
    %c0_17 = arith.constant 0 : index
    %c0_18 = arith.constant 0 : index
    %17 = vector.load %arg8[%c0_16, %c0_17, %c0_18] : memref<2x256x128xbf16, #tpu.memory_space<vmem>>, vector<1x256x128xbf16>
    %18 = vector.shape_cast %17 : vector<1x256x128xbf16> to vector<256x128xbf16>
    %19 = arith.mulf %9, %9 : vector<128x128xf32>
    %cst_19 = arith.constant dense<0.000000e+00> : vector<128xf32>
    %20 = vector.multi_reduction <add>, %19, %cst_19 [1] : vector<128x128xf32> to vector<128xf32>
    %21 = vector.shape_cast %20 : vector<128xf32> to vector<128x1xf32>
    %cst_20 = arith.constant 1.280000e+02 : f32
    %22 = vector.broadcast %cst_20 : f32 to vector<128x1xf32>
    %23 = arith.divf %21, %22 : vector<128x1xf32>
    %cst_21 = arith.constant 9.99999997E-7 : f32
    %24 = vector.broadcast %cst_21 : f32 to vector<128x1xf32>
    %25 = arith.addf %23, %24 : vector<128x1xf32>
    %26 = math.rsqrt %25 : vector<128x1xf32>
    %27 = vector.broadcast %26 : vector<128x1xf32> to vector<128x128xf32>
    %28 = arith.mulf %9, %27 : vector<128x128xf32>
    %29 = vector.broadcast %12 : vector<1x128xf32> to vector<128x128xf32>
    %30 = arith.mulf %28, %29 : vector<128x128xf32>
    %31 = arith.mulf %9, %10 : vector<128x128xf32>
    %cst_22 = arith.constant dense<0.000000e+00> : vector<128xf32>
    %32 = vector.multi_reduction <add>, %31, %cst_22 [1] : vector<128x128xf32> to vector<128xf32>
    %33 = vector.shape_cast %32 : vector<128xf32> to vector<128x1xf32>
    %cst_23 = arith.constant 1.280000e+02 : f32
    %34 = vector.broadcast %cst_23 : f32 to vector<128x1xf32>
    %35 = arith.divf %33, %34 : vector<128x1xf32>
    %36 = vector.broadcast %26 : vector<128x1xf32> to vector<128x128xf32>
    %37 = arith.mulf %10, %36 : vector<128x128xf32>
    %38 = arith.mulf %26, %26 : vector<128x1xf32>
    %39 = arith.mulf %38, %26 : vector<128x1xf32>
    %40 = vector.broadcast %39 : vector<128x1xf32> to vector<128x128xf32>
    %41 = arith.mulf %9, %40 : vector<128x128xf32>
    %42 = vector.broadcast %35 : vector<128x1xf32> to vector<128x128xf32>
    %43 = arith.mulf %41, %42 : vector<128x128xf32>
    %44 = arith.subf %37, %43 : vector<128x128xf32>
    %45 = vector.broadcast %12 : vector<1x128xf32> to vector<128x128xf32>
    %46 = arith.mulf %44, %45 : vector<128x128xf32>
    %47 = arith.truncf %30 : vector<128x128xf32> to vector<128x128xbf16>
    %48 = arith.truncf %46 : vector<128x128xf32> to vector<128x128xbf16>
    %49 = tpu.concatenate %47, %48 in 0 : vector<128x128xbf16>, vector<128x128xbf16> -> vector<256x128xbf16>
    %cst_24 = arith.constant dense<0.000000e+00> : vector<256x384xf32>
    %50 = tpu.matmul %49, %14, %cst_24 {dimension_numbers = #tpu.dot_dimension_numbers<[1], [0], [0], [1], [0, 0, 1, 1], [], []>} : vector<256x128xbf16>, vector<128x384xbf16>, vector<256x384xf32> -> vector<256x384xf32>
    %51 = vector.extract_strided_slice %50 {offsets = [0, 0], sizes = [128, 128], strides = [1, 1]} : vector<256x384xf32> to vector<128x128xf32>
    %52 = vector.extract_strided_slice %50 {offsets = [0, 128], sizes = [128, 128], strides = [1, 1]} : vector<256x384xf32> to vector<128x128xf32>
    %53 = vector.extract_strided_slice %50 {offsets = [0, 256], sizes = [128, 128], strides = [1, 1]} : vector<256x384xf32> to vector<128x128xf32>
    %54 = vector.extract_strided_slice %50 {offsets = [128, 0], sizes = [128, 128], strides = [1, 1]} : vector<256x384xf32> to vector<128x128xf32>
    %55 = vector.extract_strided_slice %50 {offsets = [128, 128], sizes = [128, 128], strides = [1, 1]} : vector<256x384xf32> to vector<128x128xf32>
    %56 = vector.extract_strided_slice %50 {offsets = [128, 256], sizes = [128, 128], strides = [1, 1]} : vector<256x384xf32> to vector<128x128xf32>
    %57 = arith.mulf %5, %5 : vector<128x128xf32>
    %cst_25 = arith.constant dense<0.000000e+00> : vector<128xf32>
    %58 = vector.multi_reduction <add>, %57, %cst_25 [1] : vector<128x128xf32> to vector<128xf32>
    %59 = vector.shape_cast %58 : vector<128xf32> to vector<128x1xf32>
    %cst_26 = arith.constant 1.280000e+02 : f32
    %60 = vector.broadcast %cst_26 : f32 to vector<128x1xf32>
    %61 = arith.divf %59, %60 : vector<128x1xf32>
    %cst_27 = arith.constant 9.99999997E-7 : f32
    %62 = vector.broadcast %cst_27 : f32 to vector<128x1xf32>
    %63 = arith.addf %61, %62 : vector<128x1xf32>
    %64 = math.rsqrt %63 : vector<128x1xf32>
    %65 = vector.broadcast %64 : vector<128x1xf32> to vector<128x128xf32>
    %66 = arith.mulf %5, %65 : vector<128x128xf32>
    %67 = vector.broadcast %12 : vector<1x128xf32> to vector<128x128xf32>
    %68 = arith.mulf %66, %67 : vector<128x128xf32>
    %69 = arith.mulf %5, %6 : vector<128x128xf32>
    %cst_28 = arith.constant dense<0.000000e+00> : vector<128xf32>
    %70 = vector.multi_reduction <add>, %69, %cst_28 [1] : vector<128x128xf32> to vector<128xf32>
    %71 = vector.shape_cast %70 : vector<128xf32> to vector<128x1xf32>
    %cst_29 = arith.constant 1.280000e+02 : f32
    %72 = vector.broadcast %cst_29 : f32 to vector<128x1xf32>
    %73 = arith.divf %71, %72 : vector<128x1xf32>
    %74 = vector.broadcast %64 : vector<128x1xf32> to vector<128x128xf32>
    %75 = arith.mulf %6, %74 : vector<128x128xf32>
    %76 = arith.mulf %64, %64 : vector<128x1xf32>
    %77 = arith.mulf %76, %64 : vector<128x1xf32>
    %78 = vector.broadcast %77 : vector<128x1xf32> to vector<128x128xf32>
    %79 = arith.mulf %5, %78 : vector<128x128xf32>
    %80 = vector.broadcast %73 : vector<128x1xf32> to vector<128x128xf32>
    %81 = arith.mulf %79, %80 : vector<128x128xf32>
    %82 = arith.subf %75, %81 : vector<128x128xf32>
    %83 = vector.broadcast %12 : vector<1x128xf32> to vector<128x128xf32>
    %84 = arith.mulf %82, %83 : vector<128x128xf32>
    %cst_30 = arith.constant 1.000000e+00 : f32
    %85 = vector.broadcast %cst_30 : f32 to vector<128x128xf32>
    %86 = arith.addf %85, %51 : vector<128x128xf32>
    %87 = arith.mulf %68, %86 : vector<128x128xf32>
    %88 = arith.addf %87, %52 : vector<128x128xf32>
    %cst_31 = arith.constant 1.000000e+00 : f32
    %89 = vector.broadcast %cst_31 : f32 to vector<128x128xf32>
    %90 = arith.addf %89, %51 : vector<128x128xf32>
    %91 = arith.mulf %84, %90 : vector<128x128xf32>
    %92 = arith.mulf %68, %54 : vector<128x128xf32>
    %93 = arith.addf %91, %92 : vector<128x128xf32>
    %94 = arith.addf %93, %55 : vector<128x128xf32>
    %95 = arith.truncf %88 : vector<128x128xf32> to vector<128x128xbf16>
    %96 = arith.truncf %94 : vector<128x128xf32> to vector<128x128xbf16>
    %97 = tpu.concatenate %95, %96 in 0 : vector<128x128xbf16>, vector<128x128xbf16> -> vector<256x128xbf16>
    %cst_32 = arith.constant dense<0.000000e+00> : vector<256x256xf32>
    %98 = tpu.matmul %97, %16, %cst_32 {dimension_numbers = #tpu.dot_dimension_numbers<[1], [0], [0], [1], [0, 0, 1, 1], [], []>} : vector<256x128xbf16>, vector<128x256xbf16>, vector<256x256xf32> -> vector<256x256xf32>
    %99 = vector.extract_strided_slice %98 {offsets = [0, 0], sizes = [128, 256], strides = [1, 1]} : vector<256x256xf32> to vector<128x256xf32>
    %100 = vector.extract_strided_slice %98 {offsets = [128, 0], sizes = [128, 256], strides = [1, 1]} : vector<256x256xf32> to vector<128x256xf32>
    %101 = arith.negf %99 : vector<128x256xf32>
    %102 = math.exp %101 : vector<128x256xf32>
    %cst_33 = arith.constant 1.000000e+00 : f32
    %103 = vector.broadcast %cst_33 : f32 to vector<128x256xf32>
    %104 = arith.addf %103, %102 : vector<128x256xf32>
    %105 = arith.divf %103, %104 : vector<128x256xf32>
    %106 = arith.mulf %99, %105 : vector<128x256xf32>
    %cst_34 = arith.constant 1.000000e+00 : f32
    %107 = vector.broadcast %cst_34 : f32 to vector<128x256xf32>
    %108 = arith.subf %107, %105 : vector<128x256xf32>
    %109 = arith.mulf %99, %108 : vector<128x256xf32>
    %cst_35 = arith.constant 1.000000e+00 : f32
    %110 = vector.broadcast %cst_35 : f32 to vector<128x256xf32>
    %111 = arith.addf %110, %109 : vector<128x256xf32>
    %112 = arith.mulf %105, %111 : vector<128x256xf32>
    %113 = arith.mulf %112, %100 : vector<128x256xf32>
    %114 = arith.truncf %106 : vector<128x256xf32> to vector<128x256xbf16>
    %115 = arith.truncf %113 : vector<128x256xf32> to vector<128x256xbf16>
    %116 = tpu.concatenate %114, %115 in 0 : vector<128x256xbf16>, vector<128x256xbf16> -> vector<256x256xbf16>
    %cst_36 = arith.constant dense<0.000000e+00> : vector<256x128xf32>
    %117 = tpu.matmul %116, %18, %cst_36 {dimension_numbers = #tpu.dot_dimension_numbers<[1], [0], [0], [1], [0, 0, 1, 1], [], []>} : vector<256x256xbf16>, vector<256x128xbf16>, vector<256x128xf32> -> vector<256x128xf32>
    %118 = vector.extract_strided_slice %117 {offsets = [0, 0], sizes = [128, 128], strides = [1, 1]} : vector<256x128xf32> to vector<128x128xf32>
    %119 = arith.mulf %118, %53 : vector<128x128xf32>
    %120 = arith.addf %5, %119 : vector<128x128xf32>
    %121 = vector.extract_strided_slice %117 {offsets = [128, 0], sizes = [128, 128], strides = [1, 1]} : vector<256x128xf32> to vector<128x128xf32>
    %122 = arith.mulf %121, %53 : vector<128x128xf32>
    %123 = arith.addf %6, %122 : vector<128x128xf32>
    %124 = vector.extract_strided_slice %117 {offsets = [0, 0], sizes = [128, 128], strides = [1, 1]} : vector<256x128xf32> to vector<128x128xf32>
    %125 = arith.mulf %124, %56 : vector<128x128xf32>
    %126 = arith.addf %123, %125 : vector<128x128xf32>
    %c1 = arith.constant 1 : index
    %c0_37 = arith.constant 0 : index
    %c0_38 = arith.constant 0 : index
    %127 = vector.load %arg5[%c1, %c0_37, %c0_38] : memref<2x1x128xf32, #tpu.memory_space<vmem>>, vector<1x1x128xf32>
    %128 = vector.shape_cast %127 : vector<1x1x128xf32> to vector<1x128xf32>
    %c1_39 = arith.constant 1 : index
    %c0_40 = arith.constant 0 : index
    %c0_41 = arith.constant 0 : index
    %129 = vector.load %arg6[%c1_39, %c0_40, %c0_41] : memref<2x128x384xbf16, #tpu.memory_space<vmem>>, vector<1x128x384xbf16>
    %130 = vector.shape_cast %129 : vector<1x128x384xbf16> to vector<128x384xbf16>
    %c1_42 = arith.constant 1 : index
    %c0_43 = arith.constant 0 : index
    %c0_44 = arith.constant 0 : index
    %131 = vector.load %arg7[%c1_42, %c0_43, %c0_44] : memref<2x128x256xbf16, #tpu.memory_space<vmem>>, vector<1x128x256xbf16>
    %132 = vector.shape_cast %131 : vector<1x128x256xbf16> to vector<128x256xbf16>
    %c1_45 = arith.constant 1 : index
    %c0_46 = arith.constant 0 : index
    %c0_47 = arith.constant 0 : index
    %133 = vector.load %arg8[%c1_45, %c0_46, %c0_47] : memref<2x256x128xbf16, #tpu.memory_space<vmem>>, vector<1x256x128xbf16>
    %134 = vector.shape_cast %133 : vector<1x256x128xbf16> to vector<256x128xbf16>
    %135 = arith.mulf %9, %9 : vector<128x128xf32>
    %cst_48 = arith.constant dense<0.000000e+00> : vector<128xf32>
    %136 = vector.multi_reduction <add>, %135, %cst_48 [1] : vector<128x128xf32> to vector<128xf32>
    %137 = vector.shape_cast %136 : vector<128xf32> to vector<128x1xf32>
    %cst_49 = arith.constant 1.280000e+02 : f32
    %138 = vector.broadcast %cst_49 : f32 to vector<128x1xf32>
    %139 = arith.divf %137, %138 : vector<128x1xf32>
    %cst_50 = arith.constant 9.99999997E-7 : f32
    %140 = vector.broadcast %cst_50 : f32 to vector<128x1xf32>
    %141 = arith.addf %139, %140 : vector<128x1xf32>
    %142 = math.rsqrt %141 : vector<128x1xf32>
    %143 = vector.broadcast %142 : vector<128x1xf32> to vector<128x128xf32>
    %144 = arith.mulf %9, %143 : vector<128x128xf32>
    %145 = vector.broadcast %128 : vector<1x128xf32> to vector<128x128xf32>
    %146 = arith.mulf %144, %145 : vector<128x128xf32>
    %147 = arith.mulf %9, %10 : vector<128x128xf32>
    %cst_51 = arith.constant dense<0.000000e+00> : vector<128xf32>
    %148 = vector.multi_reduction <add>, %147, %cst_51 [1] : vector<128x128xf32> to vector<128xf32>
    %149 = vector.shape_cast %148 : vector<128xf32> to vector<128x1xf32>
    %cst_52 = arith.constant 1.280000e+02 : f32
    %150 = vector.broadcast %cst_52 : f32 to vector<128x1xf32>
    %151 = arith.divf %149, %150 : vector<128x1xf32>
    %152 = vector.broadcast %142 : vector<128x1xf32> to vector<128x128xf32>
    %153 = arith.mulf %10, %152 : vector<128x128xf32>
    %154 = arith.mulf %142, %142 : vector<128x1xf32>
    %155 = arith.mulf %154, %142 : vector<128x1xf32>
    %156 = vector.broadcast %155 : vector<128x1xf32> to vector<128x128xf32>
    %157 = arith.mulf %9, %156 : vector<128x128xf32>
    %158 = vector.broadcast %151 : vector<128x1xf32> to vector<128x128xf32>
    %159 = arith.mulf %157, %158 : vector<128x128xf32>
    %160 = arith.subf %153, %159 : vector<128x128xf32>
    %161 = vector.broadcast %128 : vector<1x128xf32> to vector<128x128xf32>
    %162 = arith.mulf %160, %161 : vector<128x128xf32>
    %163 = arith.truncf %146 : vector<128x128xf32> to vector<128x128xbf16>
    %164 = arith.truncf %162 : vector<128x128xf32> to vector<128x128xbf16>
    %165 = tpu.concatenate %163, %164 in 0 : vector<128x128xbf16>, vector<128x128xbf16> -> vector<256x128xbf16>
    %cst_53 = arith.constant dense<0.000000e+00> : vector<256x384xf32>
    %166 = tpu.matmul %165, %130, %cst_53 {dimension_numbers = #tpu.dot_dimension_numbers<[1], [0], [0], [1], [0, 0, 1, 1], [], []>} : vector<256x128xbf16>, vector<128x384xbf16>, vector<256x384xf32> -> vector<256x384xf32>
    %167 = vector.extract_strided_slice %166 {offsets = [0, 0], sizes = [128, 128], strides = [1, 1]} : vector<256x384xf32> to vector<128x128xf32>
    %168 = vector.extract_strided_slice %166 {offsets = [0, 128], sizes = [128, 128], strides = [1, 1]} : vector<256x384xf32> to vector<128x128xf32>
    %169 = vector.extract_strided_slice %166 {offsets = [0, 256], sizes = [128, 128], strides = [1, 1]} : vector<256x384xf32> to vector<128x128xf32>
    %170 = vector.extract_strided_slice %166 {offsets = [128, 0], sizes = [128, 128], strides = [1, 1]} : vector<256x384xf32> to vector<128x128xf32>
    %171 = vector.extract_strided_slice %166 {offsets = [128, 128], sizes = [128, 128], strides = [1, 1]} : vector<256x384xf32> to vector<128x128xf32>
    %172 = vector.extract_strided_slice %166 {offsets = [128, 256], sizes = [128, 128], strides = [1, 1]} : vector<256x384xf32> to vector<128x128xf32>
    %173 = arith.mulf %120, %120 : vector<128x128xf32>
    %cst_54 = arith.constant dense<0.000000e+00> : vector<128xf32>
    %174 = vector.multi_reduction <add>, %173, %cst_54 [1] : vector<128x128xf32> to vector<128xf32>
    %175 = vector.shape_cast %174 : vector<128xf32> to vector<128x1xf32>
    %cst_55 = arith.constant 1.280000e+02 : f32
    %176 = vector.broadcast %cst_55 : f32 to vector<128x1xf32>
    %177 = arith.divf %175, %176 : vector<128x1xf32>
    %cst_56 = arith.constant 9.99999997E-7 : f32
    %178 = vector.broadcast %cst_56 : f32 to vector<128x1xf32>
    %179 = arith.addf %177, %178 : vector<128x1xf32>
    %180 = math.rsqrt %179 : vector<128x1xf32>
    %181 = vector.broadcast %180 : vector<128x1xf32> to vector<128x128xf32>
    %182 = arith.mulf %120, %181 : vector<128x128xf32>
    %183 = vector.broadcast %128 : vector<1x128xf32> to vector<128x128xf32>
    %184 = arith.mulf %182, %183 : vector<128x128xf32>
    %185 = arith.mulf %120, %126 : vector<128x128xf32>
    %cst_57 = arith.constant dense<0.000000e+00> : vector<128xf32>
    %186 = vector.multi_reduction <add>, %185, %cst_57 [1] : vector<128x128xf32> to vector<128xf32>
    %187 = vector.shape_cast %186 : vector<128xf32> to vector<128x1xf32>
    %cst_58 = arith.constant 1.280000e+02 : f32
    %188 = vector.broadcast %cst_58 : f32 to vector<128x1xf32>
    %189 = arith.divf %187, %188 : vector<128x1xf32>
    %190 = vector.broadcast %180 : vector<128x1xf32> to vector<128x128xf32>
    %191 = arith.mulf %126, %190 : vector<128x128xf32>
    %192 = arith.mulf %180, %180 : vector<128x1xf32>
    %193 = arith.mulf %192, %180 : vector<128x1xf32>
    %194 = vector.broadcast %193 : vector<128x1xf32> to vector<128x128xf32>
    %195 = arith.mulf %120, %194 : vector<128x128xf32>
    %196 = vector.broadcast %189 : vector<128x1xf32> to vector<128x128xf32>
    %197 = arith.mulf %195, %196 : vector<128x128xf32>
    %198 = arith.subf %191, %197 : vector<128x128xf32>
    %199 = vector.broadcast %128 : vector<1x128xf32> to vector<128x128xf32>
    %200 = arith.mulf %198, %199 : vector<128x128xf32>
    %cst_59 = arith.constant 1.000000e+00 : f32
    %201 = vector.broadcast %cst_59 : f32 to vector<128x128xf32>
    %202 = arith.addf %201, %167 : vector<128x128xf32>
    %203 = arith.mulf %184, %202 : vector<128x128xf32>
    %204 = arith.addf %203, %168 : vector<128x128xf32>
    %cst_60 = arith.constant 1.000000e+00 : f32
    %205 = vector.broadcast %cst_60 : f32 to vector<128x128xf32>
    %206 = arith.addf %205, %167 : vector<128x128xf32>
    %207 = arith.mulf %200, %206 : vector<128x128xf32>
    %208 = arith.mulf %184, %170 : vector<128x128xf32>
    %209 = arith.addf %207, %208 : vector<128x128xf32>
    %210 = arith.addf %209, %171 : vector<128x128xf32>
    %211 = arith.truncf %204 : vector<128x128xf32> to vector<128x128xbf16>
    %212 = arith.truncf %210 : vector<128x128xf32> to vector<128x128xbf16>
    %213 = tpu.concatenate %211, %212 in 0 : vector<128x128xbf16>, vector<128x128xbf16> -> vector<256x128xbf16>
    %cst_61 = arith.constant dense<0.000000e+00> : vector<256x256xf32>
    %214 = tpu.matmul %213, %132, %cst_61 {dimension_numbers = #tpu.dot_dimension_numbers<[1], [0], [0], [1], [0, 0, 1, 1], [], []>} : vector<256x128xbf16>, vector<128x256xbf16>, vector<256x256xf32> -> vector<256x256xf32>
    %215 = vector.extract_strided_slice %214 {offsets = [0, 0], sizes = [128, 256], strides = [1, 1]} : vector<256x256xf32> to vector<128x256xf32>
    %216 = vector.extract_strided_slice %214 {offsets = [128, 0], sizes = [128, 256], strides = [1, 1]} : vector<256x256xf32> to vector<128x256xf32>
    %217 = arith.negf %215 : vector<128x256xf32>
    %218 = math.exp %217 : vector<128x256xf32>
    %cst_62 = arith.constant 1.000000e+00 : f32
    %219 = vector.broadcast %cst_62 : f32 to vector<128x256xf32>
    %220 = arith.addf %219, %218 : vector<128x256xf32>
    %221 = arith.divf %219, %220 : vector<128x256xf32>
    %222 = arith.mulf %215, %221 : vector<128x256xf32>
    %cst_63 = arith.constant 1.000000e+00 : f32
    %223 = vector.broadcast %cst_63 : f32 to vector<128x256xf32>
    %224 = arith.subf %223, %221 : vector<128x256xf32>
    %225 = arith.mulf %215, %224 : vector<128x256xf32>
    %cst_64 = arith.constant 1.000000e+00 : f32
    %226 = vector.broadcast %cst_64 : f32 to vector<128x256xf32>
    %227 = arith.addf %226, %225 : vector<128x256xf32>
    %228 = arith.mulf %221, %227 : vector<128x256xf32>
    %229 = arith.mulf %228, %216 : vector<128x256xf32>
    %230 = arith.truncf %222 : vector<128x256xf32> to vector<128x256xbf16>
    %231 = arith.truncf %229 : vector<128x256xf32> to vector<128x256xbf16>
    %232 = tpu.concatenate %230, %231 in 0 : vector<128x256xbf16>, vector<128x256xbf16> -> vector<256x256xbf16>
    %cst_65 = arith.constant dense<0.000000e+00> : vector<256x128xf32>
    %233 = tpu.matmul %232, %134, %cst_65 {dimension_numbers = #tpu.dot_dimension_numbers<[1], [0], [0], [1], [0, 0, 1, 1], [], []>} : vector<256x256xbf16>, vector<256x128xbf16>, vector<256x128xf32> -> vector<256x128xf32>
    %234 = vector.extract_strided_slice %233 {offsets = [0, 0], sizes = [128, 128], strides = [1, 1]} : vector<256x128xf32> to vector<128x128xf32>
    %235 = arith.mulf %234, %169 : vector<128x128xf32>
    %236 = arith.addf %120, %235 : vector<128x128xf32>
    %237 = vector.extract_strided_slice %233 {offsets = [128, 0], sizes = [128, 128], strides = [1, 1]} : vector<256x128xf32> to vector<128x128xf32>
    %238 = arith.mulf %237, %169 : vector<128x128xf32>
    %239 = arith.addf %126, %238 : vector<128x128xf32>
    %240 = vector.extract_strided_slice %233 {offsets = [0, 0], sizes = [128, 128], strides = [1, 1]} : vector<256x128xf32> to vector<128x128xf32>
    %241 = arith.mulf %240, %172 : vector<128x128xf32>
    %242 = arith.addf %239, %241 : vector<128x128xf32>
    %243 = arith.truncf %236 : vector<128x128xf32> to vector<128x128xbf16>
    %244 = arith.truncf %242 : vector<128x128xf32> to vector<128x128xbf16>
    %245 = tpu.concatenate %243, %244 in 1 : vector<128x128xbf16>, vector<128x128xbf16> -> vector<128x256xbf16>
    %c0_66 = arith.constant 0 : index
    %c0_67 = arith.constant 0 : index
    %246 = vector.load %arg9[%c0_66, %c0_67] : memref<256x128xbf16, #tpu.memory_space<vmem>>, vector<256x128xbf16>
    %cst_68 = arith.constant dense<0.000000e+00> : vector<128x128xf32>
    %247 = tpu.matmul %245, %246, %cst_68 {dimension_numbers = #tpu.dot_dimension_numbers<[1], [0], [0], [1], [0, 0, 1, 1], [], []>} : vector<128x256xbf16>, vector<256x128xbf16>, vector<128x128xf32> -> vector<128x128xf32>
    %c0_69 = arith.constant 0 : index
    %c0_70 = arith.constant 0 : index
    %248 = vector.load %arg10[%c0_69, %c0_70] : memref<128x128xf32, #tpu.memory_space<vmem>>, vector<128x128xf32>
    tpu.vector_store %arg10[%c0_69, %c0_70], %247 {strides = array<i32>} : memref<128x128xf32, #tpu.memory_space<vmem>>, vector<128x128xf32>,
    return
  }
  func.func @transform_0(%arg0: i32) -> (i32, i32) {
    %c0_i32 = arith.constant 0 : i32
    %c0_i32_0 = arith.constant 0 : i32
    return %arg0, %c0_i32 : i32, i32
  }
  func.func @transform_1(%arg0: i32) -> (i32, i32) {
    %c0_i32 = arith.constant 0 : i32
    %c0_i32_0 = arith.constant 0 : i32
    return %arg0, %c0_i32 : i32, i32
  }
  func.func @transform_2(%arg0: i32) -> (i32, i32) {
    %c0_i32 = arith.constant 0 : i32
    %c0_i32_0 = arith.constant 0 : i32
    return %arg0, %c0_i32 : i32, i32
  }
  func.func @transform_3(%arg0: i32) -> (i32, i32) {
    %c0_i32 = arith.constant 0 : i32
    %c0_i32_0 = arith.constant 0 : i32
    %c0_i32_1 = arith.constant 0 : i32
    return %c0_i32, %c0_i32_0 : i32, i32
  }
  func.func @transform_4(%arg0: i32) -> (i32, i32, i32) {
    %c0_i32 = arith.constant 0 : i32
    %c0_i32_0 = arith.constant 0 : i32
    %c0_i32_1 = arith.constant 0 : i32
    %c0_i32_2 = arith.constant 0 : i32
    return %c0_i32, %c0_i32_0, %c0_i32_1 : i32, i32, i32
  }
  func.func @transform_5(%arg0: i32) -> (i32, i32, i32) {
    %c0_i32 = arith.constant 0 : i32
    %c0_i32_0 = arith.constant 0 : i32
    %c0_i32_1 = arith.constant 0 : i32
    %c0_i32_2 = arith.constant 0 : i32
    return %c0_i32, %c0_i32_0, %c0_i32_1 : i32, i32, i32
  }
  func.func @transform_6(%arg0: i32) -> (i32, i32, i32) {
    %c0_i32 = arith.constant 0 : i32
    %c0_i32_0 = arith.constant 0 : i32
    %c0_i32_1 = arith.constant 0 : i32
    %c0_i32_2 = arith.constant 0 : i32
    return %c0_i32, %c0_i32_0, %c0_i32_1 : i32, i32, i32
  }
  func.func @transform_7(%arg0: i32) -> (i32, i32, i32) {
    %c0_i32 = arith.constant 0 : i32
    %c0_i32_0 = arith.constant 0 : i32
    %c0_i32_1 = arith.constant 0 : i32
    %c0_i32_2 = arith.constant 0 : i32
    return %c0_i32, %c0_i32_0, %c0_i32_1 : i32, i32, i32
  }
  func.func @transform_8(%arg0: i32) -> (i32, i32) {
    %c0_i32 = arith.constant 0 : i32
    %c0_i32_0 = arith.constant 0 : i32
    %c0_i32_1 = arith.constant 0 : i32
    return %c0_i32, %c0_i32_0 : i32, i32
  }
  func.func @transform_9(%arg0: i32) -> (i32, i32) {
    %c0_i32 = arith.constant 0 : i32
    %c0_i32_0 = arith.constant 0 : i32
    return %arg0, %c0_i32 : i32, i32
  }
}

</mosaic_0001>

<llo_original>
// kernel: tpu_custom_call.1
$region0: #{tpu_custom_call.1}
  #allocation0 [shape = 'u32[]', space=smem, size = 0x4, offset = 0x4, fixed_abs, tag = 'smem constant byte address 0x4 - core index']
  #allocation1 [shape = 'u32[72,128]{1,0:T(1,128)}', space=vmem, size = 0x9000, scoped, tag = 'internal scratch']
  %s0 = inlined_call_operand.vmem [shape: bf16[256,320], index: 0, kind: input, shape index: {}]
  %s1 = inlined_call_operand.vmem [shape: bf16[256,320], index: 1, kind: input, shape index: {}]
  %s2 = inlined_call_operand.vmem [shape: f32[256,128], index: 2, kind: input, shape index: {}]
  %s3 = inlined_call_operand.vmem [shape: bf16[320,256], index: 3, kind: input, shape index: {}]
  %s4 = inlined_call_operand.hbm [shape: f32[2,1,128], index: 4, kind: input, shape index: {}]
  %s5 = inlined_call_operand.vmem [shape: bf16[2,128,384], index: 5, kind: input, shape index: {}]
  %s6 = inlined_call_operand.hbm [shape: bf16[2,128,256], index: 6, kind: input, shape index: {}]
  %s7 = inlined_call_operand.hbm [shape: bf16[2,256,128], index: 7, kind: input, shape index: {}]
  %s8 = inlined_call_operand.vmem [shape: bf16[256,128], index: 8, kind: input, shape index: {}]
  %s9 = inlined_call_operand.hbm [shape: f32[256,128], index: 9, kind: output, shape index: {}]
  %s10 = sld [smem:[#allocation0]]
  $region81: #{tpu_custom_call.1} parent=0
    _
  %s12 = ssub.s32 1, %s10
  %s13 = scalar_select 0, %s12, %s10
  $region1: #{tpu_custom_call.1} parent=0
    #allocation2 [shape = 'u8[1024]{0}', space=vmem, size = 0x400, scoped, tag = 'input window, operand 4, single buffered']
    #allocation3 [shape = 's32[2]{0}', space=sflag, size = 0x8, scoped, tag = 'scoped memory for tpu_custom_call.1']
    #allocation4 [shape = 's32[2]{0}', space=sflag, size = 0x8, scoped, tag = 'scoped memory for tpu_custom_call.1']
    #allocation5 [shape = 'u8[131072]{0}', space=vmem, size = 0x20000, scoped, tag = 'input window, operand 6, single buffered']
    #allocation6 [shape = 's32[1]{0}', space=sflag, size = 0x4, scoped, tag = 'scoped memory for tpu_custom_call.1']
    #allocation7 [shape = 'u8[131072]{0}', space=vmem, size = 0x20000, scoped, tag = 'input window, operand 7, single buffered']
    #allocation8 [shape = 'u8[131072]{0}', space=vmem, size = 0x20000, scoped, tag = 'output window, operand 0']
    %14 = vsyncpa [#allocation3], 0
    %15 = vsyncpa [#allocation6], 0
    %16 = vsyncpa [#allocation4], 0
    %s17 = scalar_lea.sflag [#allocation4], 1
    %18 = vsyncpa %s17, 0
    loop: start=0, step=1, limit=4
    $region2: #{tpu_custom_call.1} parent=1 // loop_pre_header
      _
    $region3: #{tpu_custom_call.1} parent=1 // loop_header
      %s20 = sphi 0, %s24
      %p21 = scmp.ge.s32.totalorder %s20, 4
      %s30 = sphi 0, %s32
      %s33 = sphi 0, %s30
      %s34 = sphi 0, %s33
      %s50 = sphi 0, %s34
      %s56 = sphi 0, %s58
      %s59 = sphi 0, %s56
      %s60 = sphi 0, %s59
      %s76 = sphi 0, %s60
      %s82 = sphi 0, %s84
      %s85 = sphi 0, %s82
      %s86 = sphi 0, %s85
      %s102 = sphi 0, %s86
      %s106 = sphi 0, %s106
      %s108 = sphi 0, %s106
      %s109 = sphi 0, %s108
      %s123 = sphi 0, %s109
      %s127 = sphi 0, %s127
      %s129 = sphi 0, %s127
      %s130 = sphi 0, %s129
      %s144 = sphi 0, %s130
      %s148 = sphi 0, %s148
      %s150 = sphi 0, %s148
      %s151 = sphi 0, %s150
      %s165 = sphi 0, %s151
      %s169 = sphi 0, %s169
      %s171 = sphi 0, %s169
      %s172 = sphi 0, %s171
      %s186 = sphi 0, %s172
      %s190 = sphi 0, %s190
      %s192 = sphi 0, %s190
      %s193 = sphi 0, %s192
      %s207 = sphi 0, %s193
      %s211 = sphi 0, %s211
      %s213 = sphi 0, %s211
      %s214 = sphi 0, %s213
      %s228 = sphi 0, %s214
      %s234 = sphi 0, %s236
      %s237 = sphi 0, %s234
      %s238 = sphi 0, %s237
      %s254 = sphi 0, %s238
    $region4: #{tpu_custom_call.1} parent=1 // loop_header_branch
      %23 = sbr.rel (%p21) target = $region8
    $region5: #{tpu_custom_call.1} parent=1 // loop_body
      %s25 = ssub.s32 %s20, 1
      %s26 = ssub.s32 %s20, 2
      %s27 = sadd.s32 %s20, 1
      %s28 = ssub.s32 %s20, %s27
      %p29 = scmp.eq.s32.totalorder %s28, 0
      %s31 = sadd.s32 %s30, 1
      %s32 = scalar_select %p29, %s30, %s31
      %p35 = pneg %p29
      %p36 = scmp.eq.s32.totalorder %s20, 1
      %p37 = por %p35, %p36
      %p38 = scmp.ne.s32.totalorder %s30, %s33
      %p39 = scmp.eq.s32.totalorder %s20, 0
      %p40 = por %p38, %p39
      %p41 = scmp.ne.s32.totalorder %s30, %s33
      %p42 = scmp.eq.s32.totalorder %s25, 1
      %p43 = por %p41, %p42
      %p44 = scmp.ne.s32.totalorder %s33, %s34
      %p45 = scmp.eq.s32.totalorder %s25, 0
      %p46 = por %p44, %p45
      %p47 = scmp.ne.s32.totalorder %s33, %s34
      %p48 = scmp.eq.s32.totalorder %s26, 1
      %p49 = por %p47, %p48
      %p51 = scmp.ne.s32.totalorder %s34, %s50
      %p52 = scmp.eq.s32.totalorder %s26, 0
      %p53 = por %p51, %p52
      %s54 = ssub.s32 %s20, %s27
      %p55 = scmp.eq.s32.totalorder %s54, 0
      %s57 = sadd.s32 %s56, 1
      %s58 = scalar_select %p55, %s56, %s57
      %p61 = pneg %p55
      %p62 = scmp.eq.s32.totalorder %s20, 1
      %p63 = por %p61, %p62
      %p64 = scmp.ne.s32.totalorder %s56, %s59
      %p65 = scmp.eq.s32.totalorder %s20, 0
      %p66 = por %p64, %p65
      %p67 = scmp.ne.s32.totalorder %s56, %s59
      %p68 = scmp.eq.s32.totalorder %s25, 1
      %p69 = por %p67, %p68
      %p70 = scmp.ne.s32.totalorder %s59, %s60
      %p71 = scmp.eq.s32.totalorder %s25, 0
      %p72 = por %p70, %p71
      %p73 = scmp.ne.s32.totalorder %s59, %s60
      %p74 = scmp.eq.s32.totalorder %s26, 1
      %p75 = por %p73, %p74
      %p77 = scmp.ne.s32.totalorder %s60, %s76
      %p78 = scmp.eq.s32.totalorder %s26, 0
      %p79 = por %p77, %p78
      %s80 = ssub.s32 %s20, %s27
      %p81 = scmp.eq.s32.totalorder %s80, 0
      %s83 = sadd.s32 %s82, 1
      %s84 = scalar_select %p81, %s82, %s83
      %p87 = pneg %p81
      %p88 = scmp.eq.s32.totalorder %s20, 1
      %p89 = por %p87, %p88
      %p90 = scmp.ne.s32.totalorder %s82, %s85
      %p91 = scmp.eq.s32.totalorder %s20, 0
      %p92 = por %p90, %p91
      %p93 = scmp.ne.s32.totalorder %s82, %s85
      %p94 = scmp.eq.s32.totalorder %s25, 1
      %p95 = por %p93, %p94
      %p96 = scmp.ne.s32.totalorder %s85, %s86
      %p97 = scmp.eq.s32.totalorder %s25, 0
      %p98 = por %p96, %p97
      %p99 = scmp.ne.s32.totalorder %s85, %s86
      %p100 = scmp.eq.s32.totalorder %s26, 1
      %p101 = por %p99, %p100
      %p103 = scmp.ne.s32.totalorder %s86, %s102
      %p104 = scmp.eq.s32.totalorder %s26, 0
      %p105 = por %p103, %p104
      %s107 = sadd.s32 %s106, 1
      %p110 = scmp.eq.s32.totalorder %s20, 1
      %p111 = scmp.ne.s32.totalorder %s106, %s108
      %p112 = scmp.eq.s32.totalorder %s20, 0
      %p113 = por %p111, %p112
      %p114 = scmp.ne.s32.totalorder %s106, %s108
      %p115 = scmp.eq.s32.totalorder %s25, 1
      %p116 = por %p114, %p115
      %p117 = scmp.ne.s32.totalorder %s108, %s109
      %p118 = scmp.eq.s32.totalorder %s25, 0
      %p119 = por %p117, %p118
      %p120 = scmp.ne.s32.totalorder %s108, %s109
      %p121 = scmp.eq.s32.totalorder %s26, 1
      %p122 = por %p120, %p121
      %p124 = scmp.ne.s32.totalorder %s109, %s123
      %p125 = scmp.eq.s32.totalorder %s26, 0
      %p126 = por %p124, %p125
      %s128 = sadd.s32 %s127, 1
      %p131 = scmp.eq.s32.totalorder %s20, 1
      %p132 = scmp.ne.s32.totalorder %s127, %s129
      %p133 = scmp.eq.s32.totalorder %s20, 0
      %p134 = por %p132, %p133
      %p135 = scmp.ne.s32.totalorder %s127, %s129
      %p136 = scmp.eq.s32.totalorder %s25, 1
      %p137 = por %p135, %p136
      %p138 = scmp.ne.s32.totalorder %s129, %s130
      %p139 = scmp.eq.s32.totalorder %s25, 0
      %p140 = por %p138, %p139
      %p141 = scmp.ne.s32.totalorder %s129, %s130
      %p142 = scmp.eq.s32.totalorder %s26, 1
      %p143 = por %p141, %p142
      %p145 = scmp.ne.s32.totalorder %s130, %s144
      %p146 = scmp.eq.s32.totalorder %s26, 0
      %p147 = por %p145, %p146
      %s149 = sadd.s32 %s148, 1
      %p152 = scmp.eq.s32.totalorder %s20, 1
      %p153 = scmp.ne.s32.totalorder %s148, %s150
      %p154 = scmp.eq.s32.totalorder %s20, 0
      %p155 = por %p153, %p154
      %p156 = scmp.ne.s32.totalorder %s148, %s150
      %p157 = scmp.eq.s32.totalorder %s25, 1
      %p158 = por %p156, %p157
      %p159 = scmp.ne.s32.totalorder %s150, %s151
      %p160 = scmp.eq.s32.totalorder %s25, 0
      %p161 = por %p159, %p160
      %p162 = scmp.ne.s32.totalorder %s150, %s151
      %p163 = scmp.eq.s32.totalorder %s26, 1
      %p164 = por %p162, %p163
      %p166 = scmp.ne.s32.totalorder %s151, %s165
      %p167 = scmp.eq.s32.totalorder %s26, 0
      %p168 = por %p166, %p167
      %s170 = sadd.s32 %s169, 1
      %p173 = scmp.eq.s32.totalorder %s20, 1
      %p174 = scmp.ne.s32.totalorder %s169, %s171
      %p175 = scmp.eq.s32.totalorder %s20, 0
      %p176 = por %p174, %p175
      %p177 = scmp.ne.s32.totalorder %s169, %s171
      %p178 = scmp.eq.s32.totalorder %s25, 1
      %p179 = por %p177, %p178
      %p180 = scmp.ne.s32.totalorder %s171, %s172
      %p181 = scmp.eq.s32.totalorder %s25, 0
      %p182 = por %p180, %p181
      %p183 = scmp.ne.s32.totalorder %s171, %s172
      %p184 = scmp.eq.s32.totalorder %s26, 1
      %p185 = por %p183, %p184
      %p187 = scmp.ne.s32.totalorder %s172, %s186
      %p188 = scmp.eq.s32.totalorder %s26, 0
      %p189 = por %p187, %p188
      %s191 = sadd.s32 %s190, 1
      %p194 = scmp.eq.s32.totalorder %s20, 1
      %p195 = scmp.ne.s32.totalorder %s190, %s192
      %p196 = scmp.eq.s32.totalorder %s20, 0
      %p197 = por %p195, %p196
      %p198 = scmp.ne.s32.totalorder %s190, %s192
      %p199 = scmp.eq.s32.totalorder %s25, 1
      %p200 = por %p198, %p199
      %p201 = scmp.ne.s32.totalorder %s192, %s193
      %p202 = scmp.eq.s32.totalorder %s25, 0
      %p203 = por %p201, %p202
      %p204 = scmp.ne.s32.totalorder %s192, %s193
      %p205 = scmp.eq.s32.totalorder %s26, 1
      %p206 = por %p204, %p205
      %p208 = scmp.ne.s32.totalorder %s193, %s207
      %p209 = scmp.eq.s32.totalorder %s26, 0
      %p210 = por %p208, %p209
      %s212 = sadd.s32 %s211, 1
      %p215 = scmp.eq.s32.totalorder %s20, 1
      %p216 = scmp.ne.s32.totalorder %s211, %s213
      %p217 = scmp.eq.s32.totalorder %s20, 0
      %p218 = por %p216, %p217
      %p219 = scmp.ne.s32.totalorder %s211, %s213
      %p220 = scmp.eq.s32.totalorder %s25, 1
      %p221 = por %p219, %p220
      %p222 = scmp.ne.s32.totalorder %s213, %s214
      %p223 = scmp.eq.s32.totalorder %s25, 0
      %p224 = por %p222, %p223
      %p225 = scmp.ne.s32.totalorder %s213, %s214
      %p226 = scmp.eq.s32.totalorder %s26, 1
      %p227 = por %p225, %p226
      %p229 = scmp.ne.s32.totalorder %s214, %s228
      %p230 = scmp.eq.s32.totalorder %s26, 0
      %p231 = por %p229, %p230
      %s232 = ssub.s32 %s20, %s27
      %p233 = scmp.eq.s32.totalorder %s232, 0
      %s235 = sadd.s32 %s234, 1
      %s236 = scalar_select %p233, %s234, %s235
      %p239 = pneg %p233
      %p240 = scmp.eq.s32.totalorder %s20, 1
      %p241 = por %p239, %p240
      %p242 = scmp.ne.s32.totalorder %s234, %s237
      %p243 = scmp.eq.s32.totalorder %s20, 0
      %p244 = por %p242, %p243
      %p245 = scmp.ne.s32.totalorder %s234, %s237
      %p246 = scmp.eq.s32.totalorder %s25, 1
      %p247 = por %p245, %p246
      %p248 = scmp.ne.s32.totalorder %s237, %s238
      %p249 = scmp.eq.s32.totalorder %s25, 0
      %p250 = por %p248, %p249
      %p251 = scmp.ne.s32.totalorder %s237, %s238
      %p252 = scmp.eq.s32.totalorder %s26, 1
      %p253 = por %p251, %p252
      %p255 = scmp.ne.s32.totalorder %s238, %s254
      %p256 = scmp.eq.s32.totalorder %s26, 0
      %p257 = por %p255, %p256
      %p258 = scmp.le.s32.totalorder 1, %s20
      %p259 = scmp.lt.s32.totalorder %s20, 3
      %p260 = pnand %p258, %p259
      %p261 = pneg %p260
      // Predicated region
      $region9: #{tpu_custom_call.1} parent=5 // pred_check
        _
      $region10: #{tpu_custom_call.1} parent=5 // pred_check_branch
        %263 = sbr.rel (%p260) target = $region12
      $region11: #{tpu_custom_call.1} parent=5 // pred_region
        %s264 = ssub.s32 %s20, 1
        // Predicated region
        $region13: #{tpu_custom_call.1} parent=11 // pred_check
          %p265 = pneg %p119
        $region14: #{tpu_custom_call.1} parent=11 // pred_check_branch
          %267 = sbr.rel (%p265) target = $region16
        $region15: #{tpu_custom_call.1} parent=11 // pred_region
          _
        $region16: #{tpu_custom_call.1} parent=11 // pred_fallthru
          _
        // Predicated region
        $region17: #{tpu_custom_call.1} parent=11 // pred_check
          %p268 = pneg %p140
        $region18: #{tpu_custom_call.1} parent=11 // pred_check_branch
          %270 = sbr.rel (%p268) target = $region20
        $region19: #{tpu_custom_call.1} parent=11 // pred_region
          %272 = vsyncadd [#allocation3], 0
          %s273 = sshll.u32 %s4, 4
          %s274 = int_to_ptr.hbm [resolvable:$true] %s273
          %s275 = sshll.u32 [#allocation2], 4
          %s276 = int_to_ptr.vmem [resolvable:$true] %s275
          %281 = dma.hbm_to_vmem [thread:$0]  %s274, 32, %s276, [#allocation3], 16, 16, 1
        $region20: #{tpu_custom_call.1} parent=11 // pred_fallthru
          _
        // Predicated region
        $region21: #{tpu_custom_call.1} parent=11 // pred_check
          %p282 = pneg %p161
        $region22: #{tpu_custom_call.1} parent=11 // pred_check_branch
          %284 = sbr.rel (%p282) target = $region24
        $region23: #{tpu_custom_call.1} parent=11 // pred_region
          _
        $region24: #{tpu_custom_call.1} parent=11 // pred_fallthru
          _
        // Predicated region
        $region25: #{tpu_custom_call.1} parent=11 // pred_check
          %p285 = pneg %p182
        $region26: #{tpu_custom_call.1} parent=11 // pred_check_branch
          %287 = sbr.rel (%p285) target = $region28
        $region27: #{tpu_custom_call.1} parent=11 // pred_region
          %289 = vsyncadd [#allocation6], 0
          %s290 = sshll.u32 %s6, 4
          %s291 = int_to_ptr.hbm [resolvable:$true] %s290
          %s292 = sshll.u32 [#allocation5], 4
          %s293 = int_to_ptr.vmem [resolvable:$true] %s292
          %298 = dma.hbm_to_vmem [thread:$0]  %s291, 4096, %s293, [#allocation6], 128, 128, 8
        $region28: #{tpu_custom_call.1} parent=11 // pred_fallthru
          _
        // Predicated region
        $region29: #{tpu_custom_call.1} parent=11 // pred_check
          %p299 = pneg %p203
        $region30: #{tpu_custom_call.1} parent=11 // pred_check_branch
          %301 = sbr.rel (%p299) target = $region32
        $region31: #{tpu_custom_call.1} parent=11 // pred_region
          %303 = vsyncadd [#allocation6], 0
          %s304 = sshll.u32 %s7, 4
          %s305 = int_to_ptr.hbm [resolvable:$true] %s304
          %s306 = sshll.u32 [#allocation7], 4
          %s307 = int_to_ptr.vmem [resolvable:$true] %s306
          %312 = dma.hbm_to_vmem [thread:$0]  %s305, 4096, %s307, [#allocation6], 64, 64, 4
        $region32: #{tpu_custom_call.1} parent=11 // pred_fallthru
          _
        // Predicated region
        $region33: #{tpu_custom_call.1} parent=11 // pred_check
          %p313 = pneg %p224
        $region34: #{tpu_custom_call.1} parent=11 // pred_check_branch
          %315 = sbr.rel (%p313) target = $region36
        $region35: #{tpu_custom_call.1} parent=11 // pred_region
          _
        $region36: #{tpu_custom_call.1} parent=11 // pred_fallthru
          _
      $region12: #{tpu_custom_call.1} parent=5 // pred_fallthru
        _
      %p316 = scmp.lt.s32.totalorder %s20, 2
      // Predicated region
      $region37: #{tpu_custom_call.1} parent=5 // pred_check
        %p317 = pneg %p316
      $region38: #{tpu_custom_call.1} parent=5 // pred_check_branch
        %319 = sbr.rel (%p317) target = $region40
      $region39: #{tpu_custom_call.1} parent=5 // pred_region
        // Predicated region
        $region41: #{tpu_custom_call.1} parent=39 // pred_check
          %p320 = pneg %p40
        $region42: #{tpu_custom_call.1} parent=39 // pred_check_branch
          %322 = sbr.rel (%p320) target = $region44
        $region43: #{tpu_custom_call.1} parent=39 // pred_region
          %s323 = smul.u32 16, %s20
          %p324 = scmp.lt.s32.totalorder %s323, 31
          %s325 = scalar_select %p324, %s323, 31
          %s326 = smul.addr %s325, 3
          %s327 = smul.addr %s326, 4
          %s328 = scalar_lea.vmem %s0, %s327
          %s329 = smul.u32 16, %s20
        $region44: #{tpu_custom_call.1} parent=39 // pred_fallthru
          _
        // Predicated region
        $region45: #{tpu_custom_call.1} parent=39 // pred_check
          %p330 = pneg %p66
        $region46: #{tpu_custom_call.1} parent=39 // pred_check_branch
          %332 = sbr.rel (%p330) target = $region48
        $region47: #{tpu_custom_call.1} parent=39 // pred_region
          %s333 = smul.u32 16, %s20
          %p334 = scmp.lt.s32.totalorder %s333, 31
          %s335 = scalar_select %p334, %s333, 31
          %s336 = smul.addr %s335, 3
          %s337 = smul.addr %s336, 4
          %s338 = scalar_lea.vmem %s1, %s337
          %s339 = smul.u32 16, %s20
        $region48: #{tpu_custom_call.1} parent=39 // pred_fallthru
          _
        // Predicated region
        $region49: #{tpu_custom_call.1} parent=39 // pred_check
          %p340 = pneg %p92
        $region50: #{tpu_custom_call.1} parent=39 // pred_check_branch
          %342 = sbr.rel (%p340) target = $region52
        $region51: #{tpu_custom_call.1} parent=39 // pred_region
          %s343 = smul.u32 16, %s20
          %p344 = scmp.lt.s32.totalorder %s343, 31
          %s345 = scalar_select %p344, %s343, 31
          %s346 = smul.addr %s345, 8
          %s347 = scalar_lea.vmem %s2, %s346
          %s348 = smul.u32 16, %s20
        $region52: #{tpu_custom_call.1} parent=39 // pred_fallthru
          _
      $region40: #{tpu_custom_call.1} parent=5 // pred_fallthru
        _
      %p349 = scmp.le.s32.totalorder 1, %s20
      %p350 = scmp.lt.s32.totalorder %s20, 3
      %p351 = pnand %p349, %p350
      %p352 = pneg %p351
      // Predicated region
      $region53: #{tpu_custom_call.1} parent=5 // pred_check
        _
      $region54: #{tpu_custom_call.1} parent=5 // pred_check_branch
        %354 = sbr.rel (%p351) target = $region56
      $region55: #{tpu_custom_call.1} parent=5 // pred_region
        %s355 = ssub.s32 %s20, 1
        // Predicated region
        $region57: #{tpu_custom_call.1} parent=55 // pred_check
          %p356 = pneg %p140
        $region58: #{tpu_custom_call.1} parent=55 // pred_check_branch
          %358 = sbr.rel (%p356) target = $region60
        $region59: #{tpu_custom_call.1} parent=55 // pred_region
          %360 = dma.done [#allocation3], 32
        $region60: #{tpu_custom_call.1} parent=55 // pred_fallthru
          _
        // Predicated region
        $region61: #{tpu_custom_call.1} parent=55 // pred_check
          %p361 = pneg %p182
        $region62: #{tpu_custom_call.1} parent=55 // pred_check_branch
          %363 = sbr.rel (%p361) target = $region64
        $region63: #{tpu_custom_call.1} parent=55 // pred_region
          %365 = dma.done [#allocation6], 4096
        $region64: #{tpu_custom_call.1} parent=55 // pred_fallthru
          _
        // Predicated region
        $region65: #{tpu_custom_call.1} parent=55 // pred_check
          %p366 = pneg %p203
        $region66: #{tpu_custom_call.1} parent=55 // pred_check_branch
          %368 = sbr.rel (%p366) target = $region68
        $region67: #{tpu_custom_call.1} parent=55 // pred_region
          %370 = dma.done [#allocation6], 4096
        $region68: #{tpu_custom_call.1} parent=55 // pred_fallthru
          _
        %s371 = smul.u32 16, %s25
        %p372 = scmp.lt.s32.totalorder %s371, 31
        %s373 = scalar_select %p372, %s371, 31
        %s374 = smul.addr %s373, 3
        %s375 = smul.addr %s374, 4
        %s376 = scalar_lea.vmem %s0, %s375
        %p377 = pneg %p46
        %p378 = pneg %p43
        %s379 = smul.u32 16, %s25
        %p380 = scmp.lt.s32.totalorder %s379, 31
        %s381 = scalar_select %p380, %s379, 31
        %s382 = smul.addr %s381, 3
        %s383 = smul.addr %s382, 4
        %s384 = scalar_lea.vmem %s1, %s383
        %p385 = pneg %p72
        %p386 = pneg %p69
        %s387 = smul.u32 16, %s25
        %p388 = scmp.lt.s32.totalorder %s387, 31
        %s389 = scalar_select %p388, %s387, 31
        %s390 = smul.addr %s389, 8
        %s391 = scalar_lea.vmem %s2, %s390
        %p392 = pneg %p98
        %p393 = pneg %p95
        %p394 = pneg %p119
        %p395 = pneg %p116
        %p396 = pneg %p140
        %p397 = pneg %p137
        %p398 = pneg %p161
        %p399 = pneg %p158
        %p400 = pneg %p182
        %p401 = pneg %p179
        %p402 = pneg %p203
        %p403 = pneg %p200
        %p404 = pneg %p224
        %p405 = pneg %p221
        %p406 = pneg %p250
        %p407 = pneg %p247
        %s408 = sand.u32 %s237, 1
        %s409 = scalar_lea.sflag [#allocation4], %s408
        %s410 = sand.u32 %s237, 1
        %s411 = smul.addr %s410, 128
        %s412 = scalar_lea.vmem [#allocation8], %s411
        %s413 = smul.u32 16, %s25
        %p414 = scmp.lt.s32.totalorder %s413, 31
        %s415 = scalar_select %p414, %s413, 31
        %s416 = smul.addr %s415, 3
        %s417 = smul.addr %s416, 4
        %s418 = scalar_lea.vmem %s0, %s417
        %s419 = smul.u32 16, %s25
        %s420 = smul.u32 16, %s25
        %p421 = scmp.lt.s32.totalorder %s420, 31
        %s422 = scalar_select %p421, %s420, 31
        %s423 = smul.addr %s422, 3
        %s424 = smul.addr %s423, 4
        %s425 = scalar_lea.vmem %s1, %s424
        %s426 = smul.u32 16, %s25
        %s427 = smul.u32 16, %s25
        %p428 = scmp.lt.s32.totalorder %s427, 31
        %s429 = scalar_select %p428, %s427, 31
        %s430 = smul.addr %s429, 8
        %s431 = scalar_lea.vmem %s2, %s430
        %s432 = smul.u32 16, %s25
        %s433 = smul.u32 16, %s25
        %v435 = vld [vmem:[%s418] sm:$0xff]
        %v436 = vld [vmem:[%s418 + $0x8] sm:$0xf]
        %v437 = vld [vmem:[%s418 + $0xc] sm:$0xff]
        %v438 = vld [vmem:[%s418 + $0x14] sm:$0xf]
        %v439 = vld [vmem:[%s418 + $0x18] sm:$0xff]
        %v440 = vld [vmem:[%s418 + $0x20] sm:$0xf]
        %v441 = vld [vmem:[%s418 + $0x24] sm:$0xff]
        %v442 = vld [vmem:[%s418 + $0x2c] sm:$0xf]
        %v443 = vld [vmem:[%s418 + $0x30] sm:$0xff]
        %v444 = vld [vmem:[%s418 + $0x38] sm:$0xf]
        %v445 = vld [vmem:[%s418 + $0x3c] sm:$0xff]
        %v446 = vld [vmem:[%s418 + $0x44] sm:$0xf]
        %v447 = vld [vmem:[%s418 + $0x48] sm:$0xff]
        %v448 = vld [vmem:[%s418 + $0x50] sm:$0xf]
        %v449 = vld [vmem:[%s418 + $0x54] sm:$0xff]
        %v450 = vld [vmem:[%s418 + $0x5c] sm:$0xf]
        %v451 = vld [vmem:[%s418 + $0x60] sm:$0xff]
        %v452 = vld [vmem:[%s418 + $0x68] sm:$0xf]
        %v453 = vld [vmem:[%s418 + $0x6c] sm:$0xff]
        %v454 = vld [vmem:[%s418 + $0x74] sm:$0xf]
        %v455 = vld [vmem:[%s418 + $0x78] sm:$0xff]
        %v456 = vld [vmem:[%s418 + $0x80] sm:$0xf]
        %v457 = vld [vmem:[%s418 + $0x84] sm:$0xff]
        %v458 = vld [vmem:[%s418 + $0x8c] sm:$0xf]
        %v459 = vld [vmem:[%s418 + $0x90] sm:$0xff]
        %v460 = vld [vmem:[%s418 + $0x98] sm:$0xf]
        %v461 = vld [vmem:[%s418 + $0x9c] sm:$0xff]
        %v462 = vld [vmem:[%s418 + $0xa4] sm:$0xf]
        %v463 = vld [vmem:[%s418 + $0xa8] sm:$0xff]
        %v464 = vld [vmem:[%s418 + $0xb0] sm:$0xf]
        %v465 = vld [vmem:[%s418 + $0xb4] sm:$0xff]
        %v466 = vld [vmem:[%s418 + $0xbc] sm:$0xf]
        %v467 = vld [vmem:[%s425] sm:$0xff]
        %v468 = vld [vmem:[%s425 + $0x8] sm:$0xf]
        %v469 = vld [vmem:[%s425 + $0xc] sm:$0xff]
        %v470 = vld [vmem:[%s425 + $0x14] sm:$0xf]
        %v471 = vld [vmem:[%s425 + $0x18] sm:$0xff]
        %v472 = vld [vmem:[%s425 + $0x20] sm:$0xf]
        %v473 = vld [vmem:[%s425 + $0x24] sm:$0xff]
        %v474 = vld [vmem:[%s425 + $0x2c] sm:$0xf]
        %v475 = vld [vmem:[%s425 + $0x30] sm:$0xff]
        %v476 = vld [vmem:[%s425 + $0x38] sm:$0xf]
        %v477 = vld [vmem:[%s425 + $0x3c] sm:$0xff]
        %v478 = vld [vmem:[%s425 + $0x44] sm:$0xf]
        %v479 = vld [vmem:[%s425 + $0x48] sm:$0xff]
        %v480 = vld [vmem:[%s425 + $0x50] sm:$0xf]
        %v481 = vld [vmem:[%s425 + $0x54] sm:$0xff]
        %v482 = vld [vmem:[%s425 + $0x5c] sm:$0xf]
        %v483 = vld [vmem:[%s425 + $0x60] sm:$0xff]
        %v484 = vld [vmem:[%s425 + $0x68] sm:$0xf]
        %v485 = vld [vmem:[%s425 + $0x6c] sm:$0xff]
        %v486 = vld [vmem:[%s425 + $0x74] sm:$0xf]
        %v487 = vld [vmem:[%s425 + $0x78] sm:$0xff]
        %v488 = vld [vmem:[%s425 + $0x80] sm:$0xf]
        %v489 = vld [vmem:[%s425 + $0x84] sm:$0xff]
        %v490 = vld [vmem:[%s425 + $0x8c] sm:$0xf]
        %v491 = vld [vmem:[%s425 + $0x90] sm:$0xff]
        %v492 = vld [vmem:[%s425 + $0x98] sm:$0xf]
        %v493 = vld [vmem:[%s425 + $0x9c] sm:$0xff]
        %v494 = vld [vmem:[%s425 + $0xa4] sm:$0xf]
        %v495 = vld [vmem:[%s425 + $0xa8] sm:$0xff]
        %v496 = vld [vmem:[%s425 + $0xb0] sm:$0xf]
        %v497 = vld [vmem:[%s425 + $0xb4] sm:$0xff]
        %v498 = vld [vmem:[%s425 + $0xbc] sm:$0xf]
        %v531 = vunpack.c.l.b16 %v435
        %v532 = vunpack.c.h.b16 %v435
        %v533 = vunpack.c.l.b16 %v436
        %v534 = vunpack.c.l.b16 %v437
        %v535 = vunpack.c.h.b16 %v437
        %v536 = vunpack.c.l.b16 %v438
        %v537 = vunpack.c.l.b16 %v439
        %v538 = vunpack.c.h.b16 %v439
        %v539 = vunpack.c.l.b16 %v440
        %v540 = vunpack.c.l.b16 %v441
        %v541 = vunpack.c.h.b16 %v441
        %v542 = vunpack.c.l.b16 %v442
        %v543 = vunpack.c.l.b16 %v443
        %v544 = vunpack.c.h.b16 %v443
        %v545 = vunpack.c.l.b16 %v444
        %v546 = vunpack.c.l.b16 %v445
        %v547 = vunpack.c.h.b16 %v445
        %v548 = vunpack.c.l.b16 %v446
        %v549 = vunpack.c.l.b16 %v447
        %v550 = vunpack.c.h.b16 %v447
        %v551 = vunpack.c.l.b16 %v448
        %v552 = vunpack.c.l.b16 %v449
        %v553 = vunpack.c.h.b16 %v449
        %v554 = vunpack.c.l.b16 %v450
        %v555 = vunpack.c.l.b16 %v451
        %v556 = vunpack.c.h.b16 %v451
        %v557 = vunpack.c.l.b16 %v452
        %v558 = vunpack.c.l.b16 %v453
        %v559 = vunpack.c.h.b16 %v453
        %v560 = vunpack.c.l.b16 %v454
        %v561 = vunpack.c.l.b16 %v455
        %v562 = vunpack.c.h.b16 %v455
        %v563 = vunpack.c.l.b16 %v456
        %v564 = vunpack.c.l.b16 %v457
        %v565 = vunpack.c.h.b16 %v457
        %v566 = vunpack.c.l.b16 %v458
        %v567 = vunpack.c.l.b16 %v459
        %v568 = vunpack.c.h.b16 %v459
        %v569 = vunpack.c.l.b16 %v460
        %v570 = vunpack.c.l.b16 %v461
        %v571 = vunpack.c.h.b16 %v461
        %v572 = vunpack.c.l.b16 %v462
        %v573 = vunpack.c.l.b16 %v463
        %v574 = vunpack.c.h.b16 %v463
        %v575 = vunpack.c.l.b16 %v464
        %v576 = vunpack.c.l.b16 %v465
        %v577 = vunpack.c.h.b16 %v465
        %v578 = vunpack.c.l.b16 %v466
        %v579 = vpack.c.b16 %v534, %v531
        %v580 = vpack.c.b16 %v535, %v532
        %v581 = vpack.c.b16 %v536, %v533
        %v582 = vpack.c.b16 %v540, %v537
        %v583 = vpack.c.b16 %v541, %v538
        %v584 = vpack.c.b16 %v542, %v539
        %v585 = vpack.c.b16 %v546, %v543
        %v586 = vpack.c.b16 %v547, %v544
        %v587 = vpack.c.b16 %v548, %v545
        %v588 = vpack.c.b16 %v552, %v549
        %v589 = vpack.c.b16 %v553, %v550
        %v590 = vpack.c.b16 %v554, %v551
        %v591 = vpack.c.b16 %v558, %v555
        %v592 = vpack.c.b16 %v559, %v556
        %v593 = vpack.c.b16 %v560, %v557
        %v594 = vpack.c.b16 %v564, %v561
        %v595 = vpack.c.b16 %v565, %v562
        %v596 = vpack.c.b16 %v566, %v563
        %v597 = vpack.c.b16 %v570, %v567
        %v598 = vpack.c.b16 %v571, %v568
        %v599 = vpack.c.b16 %v572, %v569
        %v600 = vpack.c.b16 %v576, %v573
        %v601 = vpack.c.b16 %v577, %v574
        %v602 = vpack.c.b16 %v578, %v575
        %v651 = vunpack.c.l.b16 %v467
        %v652 = vunpack.c.h.b16 %v467
        %v653 = vunpack.c.l.b16 %v468
        %v654 = vunpack.c.l.b16 %v469
        %v655 = vunpack.c.h.b16 %v469
        %v656 = vunpack.c.l.b16 %v470
        %v657 = vunpack.c.l.b16 %v471
        %v658 = vunpack.c.h.b16 %v471
        %v659 = vunpack.c.l.b16 %v472
        %v660 = vunpack.c.l.b16 %v473
        %v661 = vunpack.c.h.b16 %v473
        %v662 = vunpack.c.l.b16 %v474
        %v663 = vunpack.c.l.b16 %v475
        %v664 = vunpack.c.h.b16 %v475
        %v665 = vunpack.c.l.b16 %v476
        %v666 = vunpack.c.l.b16 %v477
        %v667 = vunpack.c.h.b16 %v477
        %v668 = vunpack.c.l.b16 %v478
        %v669 = vunpack.c.l.b16 %v479
        %v670 = vunpack.c.h.b16 %v479
        %v671 = vunpack.c.l.b16 %v480
        %v672 = vunpack.c.l.b16 %v481
        %v673 = vunpack.c.h.b16 %v481
        %v674 = vunpack.c.l.b16 %v482
        %v675 = vunpack.c.l.b16 %v483
        %v676 = vunpack.c.h.b16 %v483
        %v677 = vunpack.c.l.b16 %v484
        %v678 = vunpack.c.l.b16 %v485
        %v679 = vunpack.c.h.b16 %v485
        %v680 = vunpack.c.l.b16 %v486
        %v681 = vunpack.c.l.b16 %v487
        %v682 = vunpack.c.h.b16 %v487
        %v683 = vunpack.c.l.b16 %v488
        %v684 = vunpack.c.l.b16 %v489
        %v685 = vunpack.c.h.b16 %v489
        %v686 = vunpack.c.l.b16 %v490
        %v687 = vunpack.c.l.b16 %v491
        %v688 = vunpack.c.h.b16 %v491
        %v689 = vunpack.c.l.b16 %v492
        %v690 = vunpack.c.l.b16 %v493
        %v691 = vunpack.c.h.b16 %v493
        %v692 = vunpack.c.l.b16 %v494
        %v693 = vunpack.c.l.b16 %v495
        %v694 = vunpack.c.h.b16 %v495
        %v695 = vunpack.c.l.b16 %v496
        %v696 = vunpack.c.l.b16 %v497
        %v697 = vunpack.c.h.b16 %v497
        %v698 = vunpack.c.l.b16 %v498
        %v699 = vpack.c.b16 %v654, %v651
        %v700 = vpack.c.b16 %v655, %v652
        %v701 = vpack.c.b16 %v656, %v653
        %v702 = vpack.c.b16 %v660, %v657
        %v703 = vpack.c.b16 %v661, %v658
        %v704 = vpack.c.b16 %v662, %v659
        %v705 = vpack.c.b16 %v666, %v663
        %v706 = vpack.c.b16 %v667, %v664
        %v707 = vpack.c.b16 %v668, %v665
        %v708 = vpack.c.b16 %v672, %v669
        %v709 = vpack.c.b16 %v673, %v670
        %v710 = vpack.c.b16 %v674, %v671
        %v711 = vpack.c.b16 %v678, %v675
        %v712 = vpack.c.b16 %v679, %v676
        %v713 = vpack.c.b16 %v680, %v677
        %v714 = vpack.c.b16 %v684, %v681
        %v715 = vpack.c.b16 %v685, %v682
        %v716 = vpack.c.b16 %v686, %v683
        %v717 = vpack.c.b16 %v690, %v687
        %v718 = vpack.c.b16 %v691, %v688
        %v719 = vpack.c.b16 %v692, %v689
        %v720 = vpack.c.b16 %v696, %v693
        %v721 = vpack.c.b16 %v697, %v694
        %v722 = vpack.c.b16 %v698, %v695
        %v739 = vld [vmem:[%s3] sm:$0xff]
        %v740 = vld [vmem:[%s3 + $0x8] sm:$0xff]
        %v741 = vld [vmem:[%s3 + $0x10] sm:$0xff]
        %v742 = vld [vmem:[%s3 + $0x18] sm:$0xff]
        %v743 = vld [vmem:[%s3 + $0x20] sm:$0xff]
        %v744 = vld [vmem:[%s3 + $0x28] sm:$0xff]
        %v745 = vld [vmem:[%s3 + $0x30] sm:$0xff]
        %v746 = vld [vmem:[%s3 + $0x38] sm:$0xff]
        %v747 = vld [vmem:[%s3 + $0x40] sm:$0xff]
        %v748 = vld [vmem:[%s3 + $0x48] sm:$0xff]
        %v749 = vld [vmem:[%s3 + $0x50] sm:$0xff]
        %v750 = vld [vmem:[%s3 + $0x58] sm:$0xff]
        %v751 = vld [vmem:[%s3 + $0x60] sm:$0xff]
        %v752 = vld [vmem:[%s3 + $0x68] sm:$0xff]
        %v753 = vld [vmem:[%s3 + $0x70] sm:$0xff]
        %v754 = vld [vmem:[%s3 + $0x78] sm:$0xff]
        %v755 = vld [vmem:[%s3 + $0x80] sm:$0xff]
        %v756 = vld [vmem:[%s3 + $0x88] sm:$0xff]
        %v757 = vld [vmem:[%s3 + $0x90] sm:$0xff]
        %v758 = vld [vmem:[%s3 + $0x98] sm:$0xff]
        %v759 = vld [vmem:[%s3 + $0xa0] sm:$0xff]
        %v760 = vld [vmem:[%s3 + $0xa8] sm:$0xff]
        %v761 = vld [vmem:[%s3 + $0xb0] sm:$0xff]
        %v762 = vld [vmem:[%s3 + $0xb8] sm:$0xff]
        %v763 = vld [vmem:[%s3 + $0xc0] sm:$0xff]
        %v764 = vld [vmem:[%s3 + $0xc8] sm:$0xff]
        %v765 = vld [vmem:[%s3 + $0xd0] sm:$0xff]
        %v766 = vld [vmem:[%s3 + $0xd8] sm:$0xff]
        %v767 = vld [vmem:[%s3 + $0xe0] sm:$0xff]
        %v768 = vld [vmem:[%s3 + $0xe8] sm:$0xff]
        %v769 = vld [vmem:[%s3 + $0xf0] sm:$0xff]
        %v770 = vld [vmem:[%s3 + $0xf8] sm:$0xff]
        %v771 = vld [vmem:[%s3 + $0x100] sm:$0xff]
        %v772 = vld [vmem:[%s3 + $0x108] sm:$0xff]
        %v773 = vld [vmem:[%s3 + $0x110] sm:$0xff]
        %v774 = vld [vmem:[%s3 + $0x118] sm:$0xff]
        %v775 = vld [vmem:[%s3 + $0x120] sm:$0xff]
        %v776 = vld [vmem:[%s3 + $0x128] sm:$0xff]
        %v777 = vld [vmem:[%s3 + $0x130] sm:$0xff]
        %v778 = vld [vmem:[%s3 + $0x138] sm:$0xff]
        %v819 = vunpack.c.l.b16 %v739
        %v820 = vunpack.c.h.b16 %v739
        %v821 = vunpack.c.l.b16 %v740
        %v822 = vunpack.c.h.b16 %v740
        %v823 = vunpack.c.l.b16 %v741
        %v824 = vunpack.c.h.b16 %v741
        %v825 = vunpack.c.l.b16 %v742
        %v826 = vunpack.c.h.b16 %v742
        %v827 = vunpack.c.l.b16 %v743
        %v828 = vunpack.c.h.b16 %v743
        %v829 = vunpack.c.l.b16 %v744
        %v830 = vunpack.c.h.b16 %v744
        %v831 = vunpack.c.l.b16 %v745
        %v832 = vunpack.c.h.b16 %v745
        %v833 = vunpack.c.l.b16 %v746
        %v834 = vunpack.c.h.b16 %v746
        %v835 = vunpack.c.l.b16 %v747
        %v836 = vunpack.c.h.b16 %v747
        %v837 = vunpack.c.l.b16 %v748
        %v838 = vunpack.c.h.b16 %v748
        %v839 = vunpack.c.l.b16 %v749
        %v840 = vunpack.c.h.b16 %v749
        %v841 = vunpack.c.l.b16 %v750
        %v842 = vunpack.c.h.b16 %v750
        %v843 = vunpack.c.l.b16 %v751
        %v844 = vunpack.c.h.b16 %v751
        %v845 = vunpack.c.l.b16 %v752
        %v846 = vunpack.c.h.b16 %v752
        %v847 = vunpack.c.l.b16 %v753
        %v848 = vunpack.c.h.b16 %v753
        %v849 = vunpack.c.l.b16 %v754
        %v850 = vunpack.c.h.b16 %v754
        %v851 = vunpack.c.l.b16 %v755
        %v852 = vunpack.c.h.b16 %v755
        %v853 = vunpack.c.l.b16 %v756
        %v854 = vunpack.c.h.b16 %v756
        %v855 = vunpack.c.l.b16 %v757
        %v856 = vunpack.c.h.b16 %v757
        %v857 = vunpack.c.l.b16 %v758
        %v858 = vunpack.c.h.b16 %v758
        %v859 = vunpack.c.l.b16 %v759
        %v860 = vunpack.c.h.b16 %v759
        %v861 = vunpack.c.l.b16 %v760
        %v862 = vunpack.c.h.b16 %v760
        %v863 = vunpack.c.l.b16 %v761
        %v864 = vunpack.c.h.b16 %v761
        %v865 = vunpack.c.l.b16 %v762
        %v866 = vunpack.c.h.b16 %v762
        %v867 = vunpack.c.l.b16 %v763
        %v868 = vunpack.c.h.b16 %v763
        %v869 = vunpack.c.l.b16 %v764
        %v870 = vunpack.c.h.b16 %v764
        %v871 = vunpack.c.l.b16 %v765
        %v872 = vunpack.c.h.b16 %v765
        %v873 = vunpack.c.l.b16 %v766
        %v874 = vunpack.c.h.b16 %v766
        %v875 = vunpack.c.l.b16 %v767
        %v876 = vunpack.c.h.b16 %v767
        %v877 = vunpack.c.l.b16 %v768
        %v878 = vunpack.c.h.b16 %v768
        %v879 = vunpack.c.l.b16 %v769
        %v880 = vunpack.c.h.b16 %v769
        %v881 = vunpack.c.l.b16 %v770
        %v882 = vunpack.c.h.b16 %v770
        %v883 = vunpack.c.l.b16 %v771
        %v884 = vunpack.c.h.b16 %v771
        %v885 = vunpack.c.l.b16 %v772
        %v886 = vunpack.c.h.b16 %v772
        %v887 = vunpack.c.l.b16 %v773
        %v888 = vunpack.c.h.b16 %v773
        %v889 = vunpack.c.l.b16 %v774
        %v890 = vunpack.c.h.b16 %v774
        %v891 = vunpack.c.l.b16 %v775
        %v892 = vunpack.c.h.b16 %v775
        %v893 = vunpack.c.l.b16 %v776
        %v894 = vunpack.c.h.b16 %v776
        %v895 = vunpack.c.l.b16 %v777
        %v896 = vunpack.c.h.b16 %v777
        %v897 = vunpack.c.l.b16 %v778
        %v898 = vunpack.c.h.b16 %v778
        %v899 = vpack.c.b16 %v821, %v819
        %v900 = vpack.c.b16 %v822, %v820
        %v901 = vpack.c.b16 %v825, %v823
        %v902 = vpack.c.b16 %v826, %v824
        %v903 = vpack.c.b16 %v829, %v827
        %v904 = vpack.c.b16 %v830, %v828
        %v905 = vpack.c.b16 %v833, %v831
        %v906 = vpack.c.b16 %v834, %v832
        %v907 = vpack.c.b16 %v837, %v835
        %v908 = vpack.c.b16 %v838, %v836
        %v909 = vpack.c.b16 %v841, %v839
        %v910 = vpack.c.b16 %v842, %v840
        %v911 = vpack.c.b16 %v845, %v843
        %v912 = vpack.c.b16 %v846, %v844
        %v913 = vpack.c.b16 %v849, %v847
        %v914 = vpack.c.b16 %v850, %v848
        %v915 = vpack.c.b16 %v853, %v851
        %v916 = vpack.c.b16 %v854, %v852
        %v917 = vpack.c.b16 %v857, %v855
        %v918 = vpack.c.b16 %v858, %v856
        %v919 = vpack.c.b16 %v861, %v859
        %v920 = vpack.c.b16 %v862, %v860
        %v921 = vpack.c.b16 %v865, %v863
        %v922 = vpack.c.b16 %v866, %v864
        %v923 = vpack.c.b16 %v869, %v867
        %v924 = vpack.c.b16 %v870, %v868
        %v925 = vpack.c.b16 %v873, %v871
        %v926 = vpack.c.b16 %v874, %v872
        %v927 = vpack.c.b16 %v877, %v875
        %v928 = vpack.c.b16 %v878, %v876
        %v929 = vpack.c.b16 %v881, %v879
        %v930 = vpack.c.b16 %v882, %v880
        %v931 = vpack.c.b16 %v885, %v883
        %v932 = vpack.c.b16 %v886, %v884
        %v933 = vpack.c.b16 %v889, %v887
        %v934 = vpack.c.b16 %v890, %v888
        %v935 = vpack.c.b16 %v893, %v891
        %v936 = vpack.c.b16 %v894, %v892
        %v937 = vpack.c.b16 %v897, %v895
        %v938 = vpack.c.b16 %v898, %v896
        %vm979 = vcmask 523264
        %v981 = vsel %vm979, %v581, 0
        %v984 = vsel %vm979, %v584, 0
        %v987 = vsel %vm979, %v587, 0
        %v990 = vsel %vm979, %v590, 0
        %v993 = vsel %vm979, %v593, 0
        %v996 = vsel %vm979, %v596, 0
        %v999 = vsel %vm979, %v599, 0
        %v1002 = vsel %vm979, %v602, 0
        %v1005 = vsel %vm979, %v701, 0
        %v1008 = vsel %vm979, %v704, 0
        %v1011 = vsel %vm979, %v707, 0
        %v1014 = vsel %vm979, %v710, 0
        %v1017 = vsel %vm979, %v713, 0
        %v1020 = vsel %vm979, %v716, 0
        %v1023 = vsel %vm979, %v719, 0
        %v1026 = vsel %vm979, %v722, 0
        %1028 = vmatpush.bf16.msra.mxu0 %v913
        %1029 = vmatpush.bf16.msra.mxu0 %v911
        %1030 = vmatpush.bf16.msra.mxu0 %v909
        %1031 = vmatpush.bf16.msra.mxu0 %v907
        %1032 = vmatpush.bf16.msra.mxu0 %v905
        %1033 = vmatpush.bf16.msra.mxu0 %v903
        %1034 = vmatpush.bf16.msra.mxu0 %v901
        %1035 = vmatpush.bf16.msra.mxu0 %v899
        %1036 = vmatmul.bf16.gmra.mxu0 %v579
        %v1037 = vpop.f32.mrf.mxu0
        %v1038 = vadd.f32 0.0, %v1037
        %v1039 = vpop.f32.mrf.mxu0
        %v1040 = vadd.f32 0.0, %v1039
        %1041 = vmatmul.bf16.gmra.mxu0 %v582
        %v1042 = vpop.f32.mrf.mxu0
        %v1043 = vadd.f32 0.0, %v1042
        %v1044 = vpop.f32.mrf.mxu0
        %v1045 = vadd.f32 0.0, %v1044
        %1046 = vmatmul.bf16.gmra.mxu0 %v585
        %v1047 = vpop.f32.mrf.mxu0
        %v1048 = vadd.f32 0.0, %v1047
        %v1049 = vpop.f32.mrf.mxu0
        %v1050 = vadd.f32 0.0, %v1049
        %1051 = vmatmul.bf16.gmra.mxu0 %v588
        %v1052 = vpop.f32.mrf.mxu0
        %v1053 = vadd.f32 0.0, %v1052
        %v1054 = vpop.f32.mrf.mxu0
        %v1055 = vadd.f32 0.0, %v1054
        %1056 = vmatmul.bf16.gmra.mxu0 %v591
        %v1057 = vpop.f32.mrf.mxu0
        %v1058 = vadd.f32 0.0, %v1057
        %v1059 = vpop.f32.mrf.mxu0
        %v1060 = vadd.f32 0.0, %v1059
        %1061 = vmatmul.bf16.gmra.mxu0 %v594
        %v1062 = vpop.f32.mrf.mxu0
        %v1063 = vadd.f32 0.0, %v1062
        %v1064 = vpop.f32.mrf.mxu0
        %v1065 = vadd.f32 0.0, %v1064
        %1066 = vmatmul.bf16.gmra.mxu0 %v597
        %v1067 = vpop.f32.mrf.mxu0
        %v1068 = vadd.f32 0.0, %v1067
        %v1069 = vpop.f32.mrf.mxu0
        %v1070 = vadd.f32 0.0, %v1069
        %1071 = vmatmul.bf16.gmra.mxu0 %v600
        %v1072 = vpop.f32.mrf.mxu0
        %v1073 = vadd.f32 0.0, %v1072
        %v1074 = vpop.f32.mrf.mxu0
        %v1075 = vadd.f32 0.0, %v1074
        %1076 = vmatmul.bf16.gmra.mxu0 %v699
        %v1077 = vpop.f32.mrf.mxu0
        %v1078 = vadd.f32 0.0, %v1077
        %v1079 = vpop.f32.mrf.mxu0
        %v1080 = vadd.f32 0.0, %v1079
        %1081 = vmatmul.bf16.gmra.mxu0 %v702
        %v1082 = vpop.f32.mrf.mxu0
        %v1083 = vadd.f32 0.0, %v1082
        %v1084 = vpop.f32.mrf.mxu0
        %v1085 = vadd.f32 0.0, %v1084
        %1086 = vmatmul.bf16.gmra.mxu0 %v705
        %v1087 = vpop.f32.mrf.mxu0
        %v1088 = vadd.f32 0.0, %v1087
        %v1089 = vpop.f32.mrf.mxu0
        %v1090 = vadd.f32 0.0, %v1089
        %1091 = vmatmul.bf16.gmra.mxu0 %v708
        %v1092 = vpop.f32.mrf.mxu0
        %v1093 = vadd.f32 0.0, %v1092
        %v1094 = vpop.f32.mrf.mxu0
        %v1095 = vadd.f32 0.0, %v1094
        %1096 = vmatmul.bf16.gmra.mxu0 %v711
        %v1097 = vpop.f32.mrf.mxu0
        %v1098 = vadd.f32 0.0, %v1097
        %v1099 = vpop.f32.mrf.mxu0
        %v1100 = vadd.f32 0.0, %v1099
        %1101 = vmatmul.bf16.gmra.mxu0 %v714
        %v1102 = vpop.f32.mrf.mxu0
        %v1103 = vadd.f32 0.0, %v1102
        %v1104 = vpop.f32.mrf.mxu0
        %v1105 = vadd.f32 0.0, %v1104
        %1106 = vmatmul.bf16.gmra.mxu0 %v717
        %v1107 = vpop.f32.mrf.mxu0
        %v1108 = vadd.f32 0.0, %v1107
        %v1109 = vpop.f32.mrf.mxu0
        %v1110 = vadd.f32 0.0, %v1109
        %1111 = vmatmul.bf16.gmra.mxu0 %v720
        %v1112 = vpop.f32.mrf.mxu0
        %v1113 = vadd.f32 0.0, %v1112
        %v1114 = vpop.f32.mrf.mxu0
        %v1115 = vadd.f32 0.0, %v1114
        %1116 = vdwg.mxu0
        %1117 = vmatpush.bf16.msra.mxu0 %v929
        %1118 = vmatpush.bf16.msra.mxu0 %v927
        %1119 = vmatpush.bf16.msra.mxu0 %v925
        %1120 = vmatpush.bf16.msra.mxu0 %v923
        %1121 = vmatpush.bf16.msra.mxu0 %v921
        %1122 = vmatpush.bf16.msra.mxu0 %v919
        %1123 = vmatpush.bf16.msra.mxu0 %v917
        %1124 = vmatpush.bf16.msra.mxu0 %v915
        %1125 = vmatmul.bf16.gmra.mxu0 %v580
        %v1126 = vpop.f32.mrf.mxu0
        %v1127 = vadd.f32 %v1038, %v1126
        %v1128 = vpop.f32.mrf.mxu0
        %v1129 = vadd.f32 %v1040, %v1128
        %1130 = vmatmul.bf16.gmra.mxu0 %v583
        %v1131 = vpop.f32.mrf.mxu0
        %v1132 = vadd.f32 %v1043, %v1131
        %v1133 = vpop.f32.mrf.mxu0
        %v1134 = vadd.f32 %v1045, %v1133
        %1135 = vmatmul.bf16.gmra.mxu0 %v586
        %v1136 = vpop.f32.mrf.mxu0
        %v1137 = vadd.f32 %v1048, %v1136
        %v1138 = vpop.f32.mrf.mxu0
        %v1139 = vadd.f32 %v1050, %v1138
        %1140 = vmatmul.bf16.gmra.mxu0 %v589
        %v1141 = vpop.f32.mrf.mxu0
        %v1142 = vadd.f32 %v1053, %v1141
        %v1143 = vpop.f32.mrf.mxu0
        %v1144 = vadd.f32 %v1055, %v1143
        %1145 = vmatmul.bf16.gmra.mxu0 %v592
        %v1146 = vpop.f32.mrf.mxu0
        %v1147 = vadd.f32 %v1058, %v1146
        %v1148 = vpop.f32.mrf.mxu0
        %v1149 = vadd.f32 %v1060, %v1148
        %1150 = vmatmul.bf16.gmra.mxu0 %v595
        %v1151 = vpop.f32.mrf.mxu0
        %v1152 = vadd.f32 %v1063, %v1151
        %v1153 = vpop.f32.mrf.mxu0
        %v1154 = vadd.f32 %v1065, %v1153
        %1155 = vmatmul.bf16.gmra.mxu0 %v598
        %v1156 = vpop.f32.mrf.mxu0
        %v1157 = vadd.f32 %v1068, %v1156
        %v1158 = vpop.f32.mrf.mxu0
        %v1159 = vadd.f32 %v1070, %v1158
        %1160 = vmatmul.bf16.gmra.mxu0 %v601
        %v1161 = vpop.f32.mrf.mxu0
        %v1162 = vadd.f32 %v1073, %v1161
        %v1163 = vpop.f32.mrf.mxu0
        %v1164 = vadd.f32 %v1075, %v1163
        %1165 = vmatmul.bf16.gmra.mxu0 %v700
        %v1166 = vpop.f32.mrf.mxu0
        %v1167 = vadd.f32 %v1078, %v1166
        %v1168 = vpop.f32.mrf.mxu0
        %v1169 = vadd.f32 %v1080, %v1168
        %1170 = vmatmul.bf16.gmra.mxu0 %v703
        %v1171 = vpop.f32.mrf.mxu0
        %v1172 = vadd.f32 %v1083, %v1171
        %v1173 = vpop.f32.mrf.mxu0
        %v1174 = vadd.f32 %v1085, %v1173
        %1175 = vmatmul.bf16.gmra.mxu0 %v706
        %v1176 = vpop.f32.mrf.mxu0
        %v1177 = vadd.f32 %v1088, %v1176
        %v1178 = vpop.f32.mrf.mxu0
        %v1179 = vadd.f32 %v1090, %v1178
        %1180 = vmatmul.bf16.gmra.mxu0 %v709
        %v1181 = vpop.f32.mrf.mxu0
        %v1182 = vadd.f32 %v1093, %v1181
        %v1183 = vpop.f32.mrf.mxu0
        %v1184 = vadd.f32 %v1095, %v1183
        %1185 = vmatmul.bf16.gmra.mxu0 %v712
        %v1186 = vpop.f32.mrf.mxu0
        %v1187 = vadd.f32 %v1098, %v1186
        %v1188 = vpop.f32.mrf.mxu0
        %v1189 = vadd.f32 %v1100, %v1188
        %1190 = vmatmul.bf16.gmra.mxu0 %v715
        %v1191 = vpop.f32.mrf.mxu0
        %v1192 = vadd.f32 %v1103, %v1191
        %v1193 = vpop.f32.mrf.mxu0
        %v1194 = vadd.f32 %v1105, %v1193
        %1195 = vmatmul.bf16.gmra.mxu0 %v718
        %v1196 = vpop.f32.mrf.mxu0
        %v1197 = vadd.f32 %v1108, %v1196
        %v1198 = vpop.f32.mrf.mxu0
        %v1199 = vadd.f32 %v1110, %v1198
        %1200 = vmatmul.bf16.gmra.mxu0 %v721
        %v1201 = vpop.f32.mrf.mxu0
        %v1202 = vadd.f32 %v1113, %v1201
        %v1203 = vpop.f32.mrf.mxu0
        %v1204 = vadd.f32 %v1115, %v1203
        %1205 = vdwg.mxu0
        %1206 = vmatpush.bf16.msra.mxu0 0
        %1207 = vmatpush.bf16.msra.mxu0 0
        %1208 = vmatpush.bf16.msra.mxu0 0
        %1209 = vmatpush.bf16.msra.mxu0 0
        %1210 = vmatpush.bf16.msra.mxu0 %v937
        %1211 = vmatpush.bf16.msra.mxu0 %v935
        %1212 = vmatpush.bf16.msra.mxu0 %v933
        %1213 = vmatpush.bf16.msra.mxu0 %v931
        %1214 = vmatmul.bf16.gmra.mxu0 %v981
        %v1215 = vpop.f32.mrf.mxu0
        %v1216 = vadd.f32 %v1127, %v1215
        %v1217 = vpop.f32.mrf.mxu0
        %v1218 = vadd.f32 %v1129, %v1217
        %1219 = vmatmul.bf16.gmra.mxu0 %v984
        %v1220 = vpop.f32.mrf.mxu0
        %v1221 = vadd.f32 %v1132, %v1220
        %v1222 = vpop.f32.mrf.mxu0
        %v1223 = vadd.f32 %v1134, %v1222
        %1224 = vmatmul.bf16.gmra.mxu0 %v987
        %v1225 = vpop.f32.mrf.mxu0
        %v1226 = vadd.f32 %v1137, %v1225
        %v1227 = vpop.f32.mrf.mxu0
        %v1228 = vadd.f32 %v1139, %v1227
        %1229 = vmatmul.bf16.gmra.mxu0 %v990
        %v1230 = vpop.f32.mrf.mxu0
        %v1231 = vadd.f32 %v1142, %v1230
        %v1232 = vpop.f32.mrf.mxu0
        %v1233 = vadd.f32 %v1144, %v1232
        %1234 = vmatmul.bf16.gmra.mxu0 %v993
        %v1235 = vpop.f32.mrf.mxu0
        %v1236 = vadd.f32 %v1147, %v1235
        %v1237 = vpop.f32.mrf.mxu0
        %v1238 = vadd.f32 %v1149, %v1237
        %1239 = vmatmul.bf16.gmra.mxu0 %v996
        %v1240 = vpop.f32.mrf.mxu0
        %v1241 = vadd.f32 %v1152, %v1240
        %v1242 = vpop.f32.mrf.mxu0
        %v1243 = vadd.f32 %v1154, %v1242
        %1244 = vmatmul.bf16.gmra.mxu0 %v999
        %v1245 = vpop.f32.mrf.mxu0
        %v1246 = vadd.f32 %v1157, %v1245
        %v1247 = vpop.f32.mrf.mxu0
        %v1248 = vadd.f32 %v1159, %v1247
        %1249 = vmatmul.bf16.gmra.mxu0 %v1002
        %v1250 = vpop.f32.mrf.mxu0
        %v1251 = vadd.f32 %v1162, %v1250
        %v1252 = vpop.f32.mrf.mxu0
        %v1253 = vadd.f32 %v1164, %v1252
        %1254 = vmatmul.bf16.gmra.mxu0 %v1005
        %v1255 = vpop.f32.mrf.mxu0
        %v1256 = vadd.f32 %v1167, %v1255
        %v1257 = vpop.f32.mrf.mxu0
        %v1258 = vadd.f32 %v1169, %v1257
        %1259 = vmatmul.bf16.gmra.mxu0 %v1008
        %v1260 = vpop.f32.mrf.mxu0
        %v1261 = vadd.f32 %v1172, %v1260
        %v1262 = vpop.f32.mrf.mxu0
        %v1263 = vadd.f32 %v1174, %v1262
        %1264 = vmatmul.bf16.gmra.mxu0 %v1011
        %v1265 = vpop.f32.mrf.mxu0
        %v1266 = vadd.f32 %v1177, %v1265
        %v1267 = vpop.f32.mrf.mxu0
        %v1268 = vadd.f32 %v1179, %v1267
        %1269 = vmatmul.bf16.gmra.mxu0 %v1014
        %v1270 = vpop.f32.mrf.mxu0
        %v1271 = vadd.f32 %v1182, %v1270
        %v1272 = vpop.f32.mrf.mxu0
        %v1273 = vadd.f32 %v1184, %v1272
        %1274 = vmatmul.bf16.gmra.mxu0 %v1017
        %v1275 = vpop.f32.mrf.mxu0
        %v1276 = vadd.f32 %v1187, %v1275
        %v1277 = vpop.f32.mrf.mxu0
        %v1278 = vadd.f32 %v1189, %v1277
        %1279 = vmatmul.bf16.gmra.mxu0 %v1020
        %v1280 = vpop.f32.mrf.mxu0
        %v1281 = vadd.f32 %v1192, %v1280
        %v1282 = vpop.f32.mrf.mxu0
        %v1283 = vadd.f32 %v1194, %v1282
        %1284 = vmatmul.bf16.gmra.mxu0 %v1023
        %v1285 = vpop.f32.mrf.mxu0
        %v1286 = vadd.f32 %v1197, %v1285
        %v1287 = vpop.f32.mrf.mxu0
        %v1288 = vadd.f32 %v1199, %v1287
        %1289 = vmatmul.bf16.gmra.mxu0 %v1026
        %v1290 = vpop.f32.mrf.mxu0
        %v1291 = vadd.f32 %v1202, %v1290
        %v1292 = vpop.f32.mrf.mxu0
        %v1293 = vadd.f32 %v1204, %v1292
        %1294 = vdwg.mxu0
        %1295 = vmatpush.bf16.msra.mxu0 %v914
        %1296 = vmatpush.bf16.msra.mxu0 %v912
        %1297 = vmatpush.bf16.msra.mxu0 %v910
        %1298 = vmatpush.bf16.msra.mxu0 %v908
        %1299 = vmatpush.bf16.msra.mxu0 %v906
        %1300 = vmatpush.bf16.msra.mxu0 %v904
        %1301 = vmatpush.bf16.msra.mxu0 %v902
        %1302 = vmatpush.bf16.msra.mxu0 %v900
        %1303 = vmatmul.bf16.gmra.mxu0 %v579
        %v1304 = vpop.f32.mrf.mxu0
        %v1305 = vadd.f32 0.0, %v1304
        %v1306 = vpop.f32.mrf.mxu0
        %v1307 = vadd.f32 0.0, %v1306
        %1308 = vmatmul.bf16.gmra.mxu0 %v582
        %v1309 = vpop.f32.mrf.mxu0
        %v1310 = vadd.f32 0.0, %v1309
        %v1311 = vpop.f32.mrf.mxu0
        %v1312 = vadd.f32 0.0, %v1311
        %1313 = vmatmul.bf16.gmra.mxu0 %v585
        %v1314 = vpop.f32.mrf.mxu0
        %v1315 = vadd.f32 0.0, %v1314
        %v1316 = vpop.f32.mrf.mxu0
        %v1317 = vadd.f32 0.0, %v1316
        %1318 = vmatmul.bf16.gmra.mxu0 %v588
        %v1319 = vpop.f32.mrf.mxu0
        %v1320 = vadd.f32 0.0, %v1319
        %v1321 = vpop.f32.mrf.mxu0
        %v1322 = vadd.f32 0.0, %v1321
        %1323 = vmatmul.bf16.gmra.mxu0 %v591
        %v1324 = vpop.f32.mrf.mxu0
        %v1325 = vadd.f32 0.0, %v1324
        %v1326 = vpop.f32.mrf.mxu0
        %v1327 = vadd.f32 0.0, %v1326
        %1328 = vmatmul.bf16.gmra.mxu0 %v594
        %v1329 = vpop.f32.mrf.mxu0
        %v1330 = vadd.f32 0.0, %v1329
        %v1331 = vpop.f32.mrf.mxu0
        %v1332 = vadd.f32 0.0, %v1331
        %1333 = vmatmul.bf16.gmra.mxu0 %v597
        %v1334 = vpop.f32.mrf.mxu0
        %v1335 = vadd.f32 0.0, %v1334
        %v1336 = vpop.f32.mrf.mxu0
        %v1337 = vadd.f32 0.0, %v1336
        %1338 = vmatmul.bf16.gmra.mxu0 %v600
        %v1339 = vpop.f32.mrf.mxu0
        %v1340 = vadd.f32 0.0, %v1339
        %v1341 = vpop.f32.mrf.mxu0
        %v1342 = vadd.f32 0.0, %v1341
        %1343 = vmatmul.bf16.gmra.mxu0 %v699
        %v1344 = vpop.f32.mrf.mxu0
        %v1345 = vadd.f32 0.0, %v1344
        %v1346 = vpop.f32.mrf.mxu0
        %v1347 = vadd.f32 0.0, %v1346
        %1348 = vmatmul.bf16.gmra.mxu0 %v702
        %v1349 = vpop.f32.mrf.mxu0
        %v1350 = vadd.f32 0.0, %v1349
        %v1351 = vpop.f32.mrf.mxu0
        %v1352 = vadd.f32 0.0, %v1351
        %1353 = vmatmul.bf16.gmra.mxu0 %v705
        %v1354 = vpop.f32.mrf.mxu0
        %v1355 = vadd.f32 0.0, %v1354
        %v1356 = vpop.f32.mrf.mxu0
        %v1357 = vadd.f32 0.0, %v1356
        %1358 = vmatmul.bf16.gmra.mxu0 %v708
        %v1359 = vpop.f32.mrf.mxu0
        %v1360 = vadd.f32 0.0, %v1359
        %v1361 = vpop.f32.mrf.mxu0
        %v1362 = vadd.f32 0.0, %v1361
        %1363 = vmatmul.bf16.gmra.mxu0 %v711
        %v1364 = vpop.f32.mrf.mxu0
        %v1365 = vadd.f32 0.0, %v1364
        %v1366 = vpop.f32.mrf.mxu0
        %v1367 = vadd.f32 0.0, %v1366
        %1368 = vmatmul.bf16.gmra.mxu0 %v714
        %v1369 = vpop.f32.mrf.mxu0
        %v1370 = vadd.f32 0.0, %v1369
        %v1371 = vpop.f32.mrf.mxu0
        %v1372 = vadd.f32 0.0, %v1371
        %1373 = vmatmul.bf16.gmra.mxu0 %v717
        %v1374 = vpop.f32.mrf.mxu0
        %v1375 = vadd.f32 0.0, %v1374
        %v1376 = vpop.f32.mrf.mxu0
        %v1377 = vadd.f32 0.0, %v1376
        %1378 = vmatmul.bf16.gmra.mxu0 %v720
        %v1379 = vpop.f32.mrf.mxu0
        %v1380 = vadd.f32 0.0, %v1379
        %v1381 = vpop.f32.mrf.mxu0
        %v1382 = vadd.f32 0.0, %v1381
        %1383 = vdwg.mxu0
        %1384 = vmatpush.bf16.msra.mxu0 %v930
        %1385 = vmatpush.bf16.msra.mxu0 %v928
        %1386 = vmatpush.bf16.msra.mxu0 %v926
        %1387 = vmatpush.bf16.msra.mxu0 %v924
        %1388 = vmatpush.bf16.msra.mxu0 %v922
        %1389 = vmatpush.bf16.msra.mxu0 %v920
        %1390 = vmatpush.bf16.msra.mxu0 %v918
        %1391 = vmatpush.bf16.msra.mxu0 %v916
        %1392 = vmatmul.bf16.gmra.mxu0 %v580
        %v1393 = vpop.f32.mrf.mxu0
        %v1394 = vadd.f32 %v1305, %v1393
        %v1395 = vpop.f32.mrf.mxu0
        %v1396 = vadd.f32 %v1307, %v1395
        %1397 = vmatmul.bf16.gmra.mxu0 %v583
        %v1398 = vpop.f32.mrf.mxu0
        %v1399 = vadd.f32 %v1310, %v1398
        %v1400 = vpop.f32.mrf.mxu0
        %v1401 = vadd.f32 %v1312, %v1400
        %1402 = vmatmul.bf16.gmra.mxu0 %v586
        %v1403 = vpop.f32.mrf.mxu0
        %v1404 = vadd.f32 %v1315, %v1403
        %v1405 = vpop.f32.mrf.mxu0
        %v1406 = vadd.f32 %v1317, %v1405
        %1407 = vmatmul.bf16.gmra.mxu0 %v589
        %v1408 = vpop.f32.mrf.mxu0
        %v1409 = vadd.f32 %v1320, %v1408
        %v1410 = vpop.f32.mrf.mxu0
        %v1411 = vadd.f32 %v1322, %v1410
        %1412 = vmatmul.bf16.gmra.mxu0 %v592
        %v1413 = vpop.f32.mrf.mxu0
        %v1414 = vadd.f32 %v1325, %v1413
        %v1415 = vpop.f32.mrf.mxu0
        %v1416 = vadd.f32 %v1327, %v1415
        %1417 = vmatmul.bf16.gmra.mxu0 %v595
        %v1418 = vpop.f32.mrf.mxu0
        %v1419 = vadd.f32 %v1330, %v1418
        %v1420 = vpop.f32.mrf.mxu0
        %v1421 = vadd.f32 %v1332, %v1420
        %1422 = vmatmul.bf16.gmra.mxu0 %v598
        %v1423 = vpop.f32.mrf.mxu0
        %v1424 = vadd.f32 %v1335, %v1423
        %v1425 = vpop.f32.mrf.mxu0
        %v1426 = vadd.f32 %v1337, %v1425
        %1427 = vmatmul.bf16.gmra.mxu0 %v601
        %v1428 = vpop.f32.mrf.mxu0
        %v1429 = vadd.f32 %v1340, %v1428
        %v1430 = vpop.f32.mrf.mxu0
        %v1431 = vadd.f32 %v1342, %v1430
        %1432 = vmatmul.bf16.gmra.mxu0 %v700
        %v1433 = vpop.f32.mrf.mxu0
        %v1434 = vadd.f32 %v1345, %v1433
        %v1435 = vpop.f32.mrf.mxu0
        %v1436 = vadd.f32 %v1347, %v1435
        %1437 = vmatmul.bf16.gmra.mxu0 %v703
        %v1438 = vpop.f32.mrf.mxu0
        %v1439 = vadd.f32 %v1350, %v1438
        %v1440 = vpop.f32.mrf.mxu0
        %v1441 = vadd.f32 %v1352, %v1440
        %1442 = vmatmul.bf16.gmra.mxu0 %v706
        %v1443 = vpop.f32.mrf.mxu0
        %v1444 = vadd.f32 %v1355, %v1443
        %v1445 = vpop.f32.mrf.mxu0
        %v1446 = vadd.f32 %v1357, %v1445
        %1447 = vmatmul.bf16.gmra.mxu0 %v709
        %v1448 = vpop.f32.mrf.mxu0
        %v1449 = vadd.f32 %v1360, %v1448
        %v1450 = vpop.f32.mrf.mxu0
        %v1451 = vadd.f32 %v1362, %v1450
        %1452 = vmatmul.bf16.gmra.mxu0 %v712
        %v1453 = vpop.f32.mrf.mxu0
        %v1454 = vadd.f32 %v1365, %v1453
        %v1455 = vpop.f32.mrf.mxu0
        %v1456 = vadd.f32 %v1367, %v1455
        %1457 = vmatmul.bf16.gmra.mxu0 %v715
        %v1458 = vpop.f32.mrf.mxu0
        %v1459 = vadd.f32 %v1370, %v1458
        %v1460 = vpop.f32.mrf.mxu0
        %v1461 = vadd.f32 %v1372, %v1460
        %1462 = vmatmul.bf16.gmra.mxu0 %v718
        %v1463 = vpop.f32.mrf.mxu0
        %v1464 = vadd.f32 %v1375, %v1463
        %v1465 = vpop.f32.mrf.mxu0
        %v1466 = vadd.f32 %v1377, %v1465
        %1467 = vmatmul.bf16.gmra.mxu0 %v721
        %v1468 = vpop.f32.mrf.mxu0
        %v1469 = vadd.f32 %v1380, %v1468
        %v1470 = vpop.f32.mrf.mxu0
        %v1471 = vadd.f32 %v1382, %v1470
        %1472 = vdwg.mxu0
        %1473 = vmatpush.bf16.msra.mxu0 0
        %1474 = vmatpush.bf16.msra.mxu0 0
        %1475 = vmatpush.bf16.msra.mxu0 0
        %1476 = vmatpush.bf16.msra.mxu0 0
        %1477 = vmatpush.bf16.msra.mxu0 %v938
        %1478 = vmatpush.bf16.msra.mxu0 %v936
        %1479 = vmatpush.bf16.msra.mxu0 %v934
        %1480 = vmatpush.bf16.msra.mxu0 %v932
        %1481 = vmatmul.bf16.gmra.mxu0 %v981
        %v1482 = vpop.f32.mrf.mxu0
        %v1483 = vadd.f32 %v1394, %v1482
        %v1484 = vpop.f32.mrf.mxu0
        %v1485 = vadd.f32 %v1396, %v1484
        %1486 = vmatmul.bf16.gmra.mxu0 %v984
        %v1487 = vpop.f32.mrf.mxu0
        %v1488 = vadd.f32 %v1399, %v1487
        %v1489 = vpop.f32.mrf.mxu0
        %v1490 = vadd.f32 %v1401, %v1489
        %1491 = vmatmul.bf16.gmra.mxu0 %v987
        %v1492 = vpop.f32.mrf.mxu0
        %v1493 = vadd.f32 %v1404, %v1492
        %v1494 = vpop.f32.mrf.mxu0
        %v1495 = vadd.f32 %v1406, %v1494
        %1496 = vmatmul.bf16.gmra.mxu0 %v990
        %v1497 = vpop.f32.mrf.mxu0
        %v1498 = vadd.f32 %v1409, %v1497
        %v1499 = vpop.f32.mrf.mxu0
        %v1500 = vadd.f32 %v1411, %v1499
        %1501 = vmatmul.bf16.gmra.mxu0 %v993
        %v1502 = vpop.f32.mrf.mxu0
        %v1503 = vadd.f32 %v1414, %v1502
        %v1504 = vpop.f32.mrf.mxu0
        %v1505 = vadd.f32 %v1416, %v1504
        %1506 = vmatmul.bf16.gmra.mxu0 %v996
        %v1507 = vpop.f32.mrf.mxu0
        %v1508 = vadd.f32 %v1419, %v1507
        %v1509 = vpop.f32.mrf.mxu0
        %v1510 = vadd.f32 %v1421, %v1509
        %1511 = vmatmul.bf16.gmra.mxu0 %v999
        %v1512 = vpop.f32.mrf.mxu0
        %v1513 = vadd.f32 %v1424, %v1512
        %v1514 = vpop.f32.mrf.mxu0
        %v1515 = vadd.f32 %v1426, %v1514
        %1516 = vmatmul.bf16.gmra.mxu0 %v1002
        %v1517 = vpop.f32.mrf.mxu0
        %v1518 = vadd.f32 %v1429, %v1517
        %v1519 = vpop.f32.mrf.mxu0
        %v1520 = vadd.f32 %v1431, %v1519
        %1521 = vmatmul.bf16.gmra.mxu0 %v1005
        %v1522 = vpop.f32.mrf.mxu0
        %v1523 = vadd.f32 %v1434, %v1522
        %v1524 = vpop.f32.mrf.mxu0
        %v1525 = vadd.f32 %v1436, %v1524
        %1526 = vmatmul.bf16.gmra.mxu0 %v1008
        %v1527 = vpop.f32.mrf.mxu0
        %v1528 = vadd.f32 %v1439, %v1527
        %v1529 = vpop.f32.mrf.mxu0
        %v1530 = vadd.f32 %v1441, %v1529
        %1531 = vmatmul.bf16.gmra.mxu0 %v1011
        %v1532 = vpop.f32.mrf.mxu0
        %v1533 = vadd.f32 %v1444, %v1532
        %v1534 = vpop.f32.mrf.mxu0
        %v1535 = vadd.f32 %v1446, %v1534
        %1536 = vmatmul.bf16.gmra.mxu0 %v1014
        %v1537 = vpop.f32.mrf.mxu0
        %v1538 = vadd.f32 %v1449, %v1537
        %v1539 = vpop.f32.mrf.mxu0
        %v1540 = vadd.f32 %v1451, %v1539
        %1541 = vmatmul.bf16.gmra.mxu0 %v1017
        %v1542 = vpop.f32.mrf.mxu0
        %v1543 = vadd.f32 %v1454, %v1542
        %v1544 = vpop.f32.mrf.mxu0
        %v1545 = vadd.f32 %v1456, %v1544
        %1546 = vmatmul.bf16.gmra.mxu0 %v1020
        %v1547 = vpop.f32.mrf.mxu0
        %v1548 = vadd.f32 %v1459, %v1547
        %v1549 = vpop.f32.mrf.mxu0
        %v1550 = vadd.f32 %v1461, %v1549
        %1551 = vmatmul.bf16.gmra.mxu0 %v1023
        %v1552 = vpop.f32.mrf.mxu0
        %v1553 = vadd.f32 %v1464, %v1552
        %v1554 = vpop.f32.mrf.mxu0
        %v1555 = vadd.f32 %v1466, %v1554
        %1556 = vmatmul.bf16.gmra.mxu0 %v1026
        %v1557 = vpop.f32.mrf.mxu0
        %v1558 = vadd.f32 %v1469, %v1557
        %v1559 = vpop.f32.mrf.mxu0
        %v1560 = vadd.f32 %v1471, %v1559
        %1561 = vdwg.mxu0
        %v1562 = vld [vmem:[%s431] sm:$0xff]
        %v1563 = vld [vmem:[%s431 + $0x8] sm:$0xff]
        %v1564 = vld [vmem:[%s431 + $0x10] sm:$0xff]
        %v1565 = vld [vmem:[%s431 + $0x18] sm:$0xff]
        %v1566 = vld [vmem:[%s431 + $0x20] sm:$0xff]
        %v1567 = vld [vmem:[%s431 + $0x28] sm:$0xff]
        %v1568 = vld [vmem:[%s431 + $0x30] sm:$0xff]
        %v1569 = vld [vmem:[%s431 + $0x38] sm:$0xff]
        %v1570 = vld [vmem:[%s431 + $0x40] sm:$0xff]
        %v1571 = vld [vmem:[%s431 + $0x48] sm:$0xff]
        %v1572 = vld [vmem:[%s431 + $0x50] sm:$0xff]
        %v1573 = vld [vmem:[%s431 + $0x58] sm:$0xff]
        %v1574 = vld [vmem:[%s431 + $0x60] sm:$0xff]
        %v1575 = vld [vmem:[%s431 + $0x68] sm:$0xff]
        %v1576 = vld [vmem:[%s431 + $0x70] sm:$0xff]
        %v1577 = vld [vmem:[%s431 + $0x78] sm:$0xff]
        %v1578 = vadd.f32 %v1483, %v1562
        %v1579 = vadd.f32 %v1485, %v1563
        %v1580 = vadd.f32 %v1488, %v1564
        %v1581 = vadd.f32 %v1490, %v1565
        %v1582 = vadd.f32 %v1493, %v1566
        %v1583 = vadd.f32 %v1495, %v1567
        %v1584 = vadd.f32 %v1498, %v1568
        %v1585 = vadd.f32 %v1500, %v1569
        %v1586 = vadd.f32 %v1503, %v1570
        %v1587 = vadd.f32 %v1505, %v1571
        %v1588 = vadd.f32 %v1508, %v1572
        %v1589 = vadd.f32 %v1510, %v1573
        %v1590 = vadd.f32 %v1513, %v1574
        %v1591 = vadd.f32 %v1515, %v1575
        %v1592 = vadd.f32 %v1518, %v1576
        %v1593 = vadd.f32 %v1520, %v1577
        %v1594 = vld [vmem:[#allocation2] sm:$0x1]
        %v1595 = vld [vmem:[%s5] sm:$0xff]
        %v1596 = vld [vmem:[%s5 + $0x8] sm:$0xf]
        %v1597 = vld [vmem:[%s5 + $0xc] sm:$0xff]
        %v1598 = vld [vmem:[%s5 + $0x14] sm:$0xf]
        %v1599 = vld [vmem:[%s5 + $0x18] sm:$0xff]
        %v1600 = vld [vmem:[%s5 + $0x20] sm:$0xf]
        %v1601 = vld [vmem:[%s5 + $0x24] sm:$0xff]
        %v1602 = vld [vmem:[%s5 + $0x2c] sm:$0xf]
        %v1603 = vld [vmem:[%s5 + $0x30] sm:$0xff]
        %v1604 = vld [vmem:[%s5 + $0x38] sm:$0xf]
        %v1605 = vld [vmem:[%s5 + $0x3c] sm:$0xff]
        %v1606 = vld [vmem:[%s5 + $0x44] sm:$0xf]
        %v1607 = vld [vmem:[%s5 + $0x48] sm:$0xff]
        %v1608 = vld [vmem:[%s5 + $0x50] sm:$0xf]
        %v1609 = vld [vmem:[%s5 + $0x54] sm:$0xff]
        %v1610 = vld [vmem:[%s5 + $0x5c] sm:$0xf]
        %v1611 = vld [vmem:[%s5 + $0x60] sm:$0xff]
        %v1612 = vld [vmem:[%s5 + $0x68] sm:$0xf]
        %v1613 = vld [vmem:[%s5 + $0x6c] sm:$0xff]
        %v1614 = vld [vmem:[%s5 + $0x74] sm:$0xf]
        %v1615 = vld [vmem:[%s5 + $0x78] sm:$0xff]
        %v1616 = vld [vmem:[%s5 + $0x80] sm:$0xf]
        %v1617 = vld [vmem:[%s5 + $0x84] sm:$0xff]
        %v1618 = vld [vmem:[%s5 + $0x8c] sm:$0xf]
        %v1619 = vld [vmem:[%s5 + $0x90] sm:$0xff]
        %v1620 = vld [vmem:[%s5 + $0x98] sm:$0xf]
        %v1621 = vld [vmem:[%s5 + $0x9c] sm:$0xff]
        %v1622 = vld [vmem:[%s5 + $0xa4] sm:$0xf]
        %v1623 = vld [vmem:[%s5 + $0xa8] sm:$0xff]
        %v1624 = vld [vmem:[%s5 + $0xb0] sm:$0xf]
        %v1625 = vld [vmem:[%s5 + $0xb4] sm:$0xff]
        %v1626 = vld [vmem:[%s5 + $0xbc] sm:$0xf]
        %v1627 = vld [vmem:[#allocation5] sm:$0xff]
        %v1628 = vld [vmem:[#allocation5 + $0x8] sm:$0xff]
        %v1629 = vld [vmem:[#allocation5 + $0x10] sm:$0xff]
        %v1630 = vld [vmem:[#allocation5 + $0x18] sm:$0xff]
        %v1631 = vld [vmem:[#allocation5 + $0x20] sm:$0xff]
        %v1632 = vld [vmem:[#allocation5 + $0x28] sm:$0xff]
        %v1633 = vld [vmem:[#allocation5 + $0x30] sm:$0xff]
        %v1634 = vld [vmem:[#allocation5 + $0x38] sm:$0xff]
        %v1635 = vld [vmem:[#allocation5 + $0x40] sm:$0xff]
        %v1636 = vld [vmem:[#allocation5 + $0x48] sm:$0xff]
        %v1637 = vld [vmem:[#allocation5 + $0x50] sm:$0xff]
        %v1638 = vld [vmem:[#allocation5 + $0x58] sm:$0xff]
        %v1639 = vld [vmem:[#allocation5 + $0x60] sm:$0xff]
        %v1640 = vld [vmem:[#allocation5 + $0x68] sm:$0xff]
        %v1641 = vld [vmem:[#allocation5 + $0x70] sm:$0xff]
        %v1642 = vld [vmem:[#allocation5 + $0x78] sm:$0xff]
        %v1643 = vld [vmem:[#allocation7] sm:$0xf]
        %v1644 = vld [vmem:[#allocation7 + $0x4] sm:$0xf]
        %v1645 = vld [vmem:[#allocation7 + $0x8] sm:$0xf]
        %v1646 = vld [vmem:[#allocation7 + $0xc] sm:$0xf]
        %v1647 = vld [vmem:[#allocation7 + $0x10] sm:$0xf]
        %v1648 = vld [vmem:[#allocation7 + $0x14] sm:$0xf]
        %v1649 = vld [vmem:[#allocation7 + $0x18] sm:$0xf]
        %v1650 = vld [vmem:[#allocation7 + $0x1c] sm:$0xf]
        %v1651 = vld [vmem:[#allocation7 + $0x20] sm:$0xf]
        %v1652 = vld [vmem:[#allocation7 + $0x24] sm:$0xf]
        %v1653 = vld [vmem:[#allocation7 + $0x28] sm:$0xf]
        %v1654 = vld [vmem:[#allocation7 + $0x2c] sm:$0xf]
        %v1655 = vld [vmem:[#allocation7 + $0x30] sm:$0xf]
        %v1656 = vld [vmem:[#allocation7 + $0x34] sm:$0xf]
        %v1657 = vld [vmem:[#allocation7 + $0x38] sm:$0xf]
        %v1658 = vld [vmem:[#allocation7 + $0x3c] sm:$0xf]
        %v1659 = vld [vmem:[#allocation7 + $0x40] sm:$0xf]
        %v1660 = vld [vmem:[#allocation7 + $0x44] sm:$0xf]
        %v1661 = vld [vmem:[#allocation7 + $0x48] sm:$0xf]
        %v1662 = vld [vmem:[#allocation7 + $0x4c] sm:$0xf]
        %v1663 = vld [vmem:[#allocation7 + $0x50] sm:$0xf]
        %v1664 = vld [vmem:[#allocation7 + $0x54] sm:$0xf]
        %v1665 = vld [vmem:[#allocation7 + $0x58] sm:$0xf]
        %v1666 = vld [vmem:[#allocation7 + $0x5c] sm:$0xf]
        %v1667 = vld [vmem:[#allocation7 + $0x60] sm:$0xf]
        %v1668 = vld [vmem:[#allocation7 + $0x64] sm:$0xf]
        %v1669 = vld [vmem:[#allocation7 + $0x68] sm:$0xf]
        %v1670 = vld [vmem:[#allocation7 + $0x6c] sm:$0xf]
        %v1671 = vld [vmem:[#allocation7 + $0x70] sm:$0xf]
        %v1672 = vld [vmem:[#allocation7 + $0x74] sm:$0xf]
        %v1673 = vld [vmem:[#allocation7 + $0x78] sm:$0xf]
        %v1674 = vld [vmem:[#allocation7 + $0x7c] sm:$0xf]
        %v1675 = vmul.f32 %v1578, %v1578
        %v1676 = vmul.f32 %v1579, %v1579
        %v1677 = vmul.f32 %v1580, %v1580
        %v1678 = vmul.f32 %v1581, %v1581
        %v1679 = vmul.f32 %v1582, %v1582
        %v1680 = vmul.f32 %v1583, %v1583
        %v1681 = vmul.f32 %v1584, %v1584
        %v1682 = vmul.f32 %v1585, %v1585
        %v1683 = vmul.f32 %v1586, %v1586
        %v1684 = vmul.f32 %v1587, %v1587
        %v1685 = vmul.f32 %v1588, %v1588
        %v1686 = vmul.f32 %v1589, %v1589
        %v1687 = vmul.f32 %v1590, %v1590
        %v1688 = vmul.f32 %v1591, %v1591
        %v1689 = vmul.f32 %v1592, %v1592
        %v1690 = vmul.f32 %v1593, %v1593
        %1691 = vadd.xlane.f32.xlu0 %v1675
        %v1692 = vpop.xlane.xlu0 %1691
        %1693 = vadd.xlane.f32.xlu0 %v1676
        %v1694 = vpop.xlane.xlu0 %1693
        %1695 = vadd.xlane.f32.xlu0 %v1677
        %v1696 = vpop.xlane.xlu0 %1695
        %1697 = vadd.xlane.f32.xlu0 %v1678
        %v1698 = vpop.xlane.xlu0 %1697
        %1699 = vadd.xlane.f32.xlu0 %v1679
        %v1700 = vpop.xlane.xlu0 %1699
        %1701 = vadd.xlane.f32.xlu0 %v1680
        %v1702 = vpop.xlane.xlu0 %1701
        %1703 = vadd.xlane.f32.xlu0 %v1681
        %v1704 = vpop.xlane.xlu0 %1703
        %1705 = vadd.xlane.f32.xlu0 %v1682
        %v1706 = vpop.xlane.xlu0 %1705
        %1707 = vadd.xlane.f32.xlu0 %v1683
        %v1708 = vpop.xlane.xlu0 %1707
        %1709 = vadd.xlane.f32.xlu0 %v1684
        %v1710 = vpop.xlane.xlu0 %1709
        %1711 = vadd.xlane.f32.xlu0 %v1685
        %v1712 = vpop.xlane.xlu0 %1711
        %1713 = vadd.xlane.f32.xlu0 %v1686
        %v1714 = vpop.xlane.xlu0 %1713
        %1715 = vadd.xlane.f32.xlu0 %v1687
        %v1716 = vpop.xlane.xlu0 %1715
        %1717 = vadd.xlane.f32.xlu0 %v1688
        %v1718 = vpop.xlane.xlu0 %1717
        %1719 = vadd.xlane.f32.xlu0 %v1689
        %v1720 = vpop.xlane.xlu0 %1719
        %1721 = vadd.xlane.f32.xlu0 %v1690
        %v1722 = vpop.xlane.xlu0 %1721
        %v1723 = vrcp.pop 128.0
        %v1724 = vmul.f32 128.0, %v1723
        %v1725 = vsub.f32 1.0, %v1724
        %v1726 = vmul.f32 %v1723, %v1725
        %v1727 = vadd.f32 %v1723, %v1726
        %vm1728 = vweird.f32 %v1723
        %v1729 = vsel %vm1728, %v1723, %v1727
        %v1730 = vmul.f32 %v1692, %v1729
        %v1731 = vmul.f32 %v1694, %v1729
        %v1732 = vmul.f32 %v1696, %v1729
        %v1733 = vmul.f32 %v1698, %v1729
        %v1734 = vmul.f32 %v1700, %v1729
        %v1735 = vmul.f32 %v1702, %v1729
        %v1736 = vmul.f32 %v1704, %v1729
        %v1737 = vmul.f32 %v1706, %v1729
        %v1738 = vmul.f32 %v1708, %v1729
        %v1739 = vmul.f32 %v1710, %v1729
        %v1740 = vmul.f32 %v1712, %v1729
        %v1741 = vmul.f32 %v1714, %v1729
        %v1742 = vmul.f32 %v1716, %v1729
        %v1743 = vmul.f32 %v1718, %v1729
        %v1744 = vmul.f32 %v1720, %v1729
        %v1745 = vmul.f32 %v1722, %v1729
        %v1746 = vadd.f32 %v1730, 1e-06
        %v1747 = vadd.f32 %v1731, 1e-06
        %v1748 = vadd.f32 %v1732, 1e-06
        %v1749 = vadd.f32 %v1733, 1e-06
        %v1750 = vadd.f32 %v1734, 1e-06
        %v1751 = vadd.f32 %v1735, 1e-06
        %v1752 = vadd.f32 %v1736, 1e-06
        %v1753 = vadd.f32 %v1737, 1e-06
        %v1754 = vadd.f32 %v1738, 1e-06
        %v1755 = vadd.f32 %v1739, 1e-06
        %v1756 = vadd.f32 %v1740, 1e-06
        %v1757 = vadd.f32 %v1741, 1e-06
        %v1758 = vadd.f32 %v1742, 1e-06
        %v1759 = vadd.f32 %v1743, 1e-06
        %v1760 = vadd.f32 %v1744, 1e-06
        %v1761 = vadd.f32 %v1745, 1e-06
        %v1762 = vrsqrt.pop %v1746
        %v1763 = vmul.f32 %v1762, %v1746
        %v1764 = vmul.f32 %v1763, %v1762
        %v1765 = vmul.f32 0.5, %v1764
        %v1766 = vsub.f32 1.5, %v1765
        %v1767 = vmul.f32 %v1762, %v1766
        %vm1768 = vweird.f32 %v1746
        %vm1769 = vweird.f32 %v1762
        %vm1770 = vmor %vm1768, %vm1769
        %v1771 = vsel %vm1770, %v1762, %v1767
        %v1772 = vrsqrt.pop %v1747
        %v1773 = vmul.f32 %v1772, %v1747
        %v1774 = vmul.f32 %v1773, %v1772
        %v1775 = vmul.f32 0.5, %v1774
        %v1776 = vsub.f32 1.5, %v1775
        %v1777 = vmul.f32 %v1772, %v1776
        %vm1778 = vweird.f32 %v1747
        %vm1779 = vweird.f32 %v1772
        %vm1780 = vmor %vm1778, %vm1779
        %v1781 = vsel %vm1780, %v1772, %v1777
        %v1782 = vrsqrt.pop %v1748
        %v1783 = vmul.f32 %v1782, %v1748
        %v1784 = vmul.f32 %v1783, %v1782
        %v1785 = vmul.f32 0.5, %v1784
        %v1786 = vsub.f32 1.5, %v1785
        %v1787 = vmul.f32 %v1782, %v1786
        %vm1788 = vweird.f32 %v1748
        %vm1789 = vweird.f32 %v1782
        %vm1790 = vmor %vm1788, %vm1789
        %v1791 = vsel %vm1790, %v1782, %v1787
        %v1792 = vrsqrt.pop %v1749
        %v1793 = vmul.f32 %v1792, %v1749
        %v1794 = vmul.f32 %v1793, %v1792
        %v1795 = vmul.f32 0.5, %v1794
        %v1796 = vsub.f32 1.5, %v1795
        %v1797 = vmul.f32 %v1792, %v1796
        %vm1798 = vweird.f32 %v1749
        %vm1799 = vweird.f32 %v1792
        %vm1800 = vmor %vm1798, %vm1799
        %v1801 = vsel %vm1800, %v1792, %v1797
        %v1802 = vrsqrt.pop %v1750
        %v1803 = vmul.f32 %v1802, %v1750
        %v1804 = vmul.f32 %v1803, %v1802
        %v1805 = vmul.f32 0.5, %v1804
        %v1806 = vsub.f32 1.5, %v1805
        %v1807 = vmul.f32 %v1802, %v1806
        %vm1808 = vweird.f32 %v1750
        %vm1809 = vweird.f32 %v1802
        %vm1810 = vmor %vm1808, %vm1809
        %v1811 = vsel %vm1810, %v1802, %v1807
        %v1812 = vrsqrt.pop %v1751
        %v1813 = vmul.f32 %v1812, %v1751
        %v1814 = vmul.f32 %v1813, %v1812
        %v1815 = vmul.f32 0.5, %v1814
        %v1816 = vsub.f32 1.5, %v1815
        %v1817 = vmul.f32 %v1812, %v1816
        %vm1818 = vweird.f32 %v1751
        %vm1819 = vweird.f32 %v1812
        %vm1820 = vmor %vm1818, %vm1819
        %v1821 = vsel %vm1820, %v1812, %v1817
        %v1822 = vrsqrt.pop %v1752
        %v1823 = vmul.f32 %v1822, %v1752
        %v1824 = vmul.f32 %v1823, %v1822
        %v1825 = vmul.f32 0.5, %v1824
        %v1826 = vsub.f32 1.5, %v1825
        %v1827 = vmul.f32 %v1822, %v1826
        %vm1828 = vweird.f32 %v1752
        %vm1829 = vweird.f32 %v1822
        %vm1830 = vmor %vm1828, %vm1829
        %v1831 = vsel %vm1830, %v1822, %v1827
        %v1832 = vrsqrt.pop %v1753
        %v1833 = vmul.f32 %v1832, %v1753
        %v1834 = vmul.f32 %v1833, %v1832
        %v1835 = vmul.f32 0.5, %v1834
        %v1836 = vsub.f32 1.5, %v1835
        %v1837 = vmul.f32 %v1832, %v1836
        %vm1838 = vweird.f32 %v1753
        %vm1839 = vweird.f32 %v1832
        %vm1840 = vmor %vm1838, %vm1839
        %v1841 = vsel %vm1840, %v1832, %v1837
        %v1842 = vrsqrt.pop %v1754
        %v1843 = vmul.f32 %v1842, %v1754
        %v1844 = vmul.f32 %v1843, %v1842
        %v1845 = vmul.f32 0.5, %v1844
        %v1846 = vsub.f32 1.5, %v1845
        %v1847 = vmul.f32 %v1842, %v1846
        %vm1848 = vweird.f32 %v1754
        %vm1849 = vweird.f32 %v1842
        %vm1850 = vmor %vm1848, %vm1849
        %v1851 = vsel %vm1850, %v1842, %v1847
        %v1852 = vrsqrt.pop %v1755
        %v1853 = vmul.f32 %v1852, %v1755
        %v1854 = vmul.f32 %v1853, %v1852
        %v1855 = vmul.f32 0.5, %v1854
        %v1856 = vsub.f32 1.5, %v1855
        %v1857 = vmul.f32 %v1852, %v1856
        %vm1858 = vweird.f32 %v1755
        %vm1859 = vweird.f32 %v1852
        %vm1860 = vmor %vm1858, %vm1859
        %v1861 = vsel %vm1860, %v1852, %v1857
        %v1862 = vrsqrt.pop %v1756
        %v1863 = vmul.f32 %v1862, %v1756
        %v1864 = vmul.f32 %v1863, %v1862
        %v1865 = vmul.f32 0.5, %v1864
        %v1866 = vsub.f32 1.5, %v1865
        %v1867 = vmul.f32 %v1862, %v1866
        %vm1868 = vweird.f32 %v1756
        %vm1869 = vweird.f32 %v1862
        %vm1870 = vmor %vm1868, %vm1869
        %v1871 = vsel %vm1870, %v1862, %v1867
        %v1872 = vrsqrt.pop %v1757
        %v1873 = vmul.f32 %v1872, %v1757
        %v1874 = vmul.f32 %v1873, %v1872
        %v1875 = vmul.f32 0.5, %v1874
        %v1876 = vsub.f32 1.5, %v1875
        %v1877 = vmul.f32 %v1872, %v1876
        %vm1878 = vweird.f32 %v1757
        %vm1879 = vweird.f32 %v1872
        %vm1880 = vmor %vm1878, %vm1879
        %v1881 = vsel %vm1880, %v1872, %v1877
        %v1882 = vrsqrt.pop %v1758
        %v1883 = vmul.f32 %v1882, %v1758
        %v1884 = vmul.f32 %v1883, %v1882
        %v1885 = vmul.f32 0.5, %v1884
        %v1886 = vsub.f32 1.5, %v1885
        %v1887 = vmul.f32 %v1882, %v1886
        %vm1888 = vweird.f32 %v1758
        %vm1889 = vweird.f32 %v1882
        %vm1890 = vmor %vm1888, %vm1889
        %v1891 = vsel %vm1890, %v1882, %v1887
        %v1892 = vrsqrt.pop %v1759
        %v1893 = vmul.f32 %v1892, %v1759
        %v1894 = vmul.f32 %v1893, %v1892
        %v1895 = vmul.f32 0.5, %v1894
        %v1896 = vsub.f32 1.5, %v1895
        %v1897 = vmul.f32 %v1892, %v1896
        %vm1898 = vweird.f32 %v1759
        %vm1899 = vweird.f32 %v1892
        %vm1900 = vmor %vm1898, %vm1899
        %v1901 = vsel %vm1900, %v1892, %v1897
        %v1902 = vrsqrt.pop %v1760
        %v1903 = vmul.f32 %v1902, %v1760
        %v1904 = vmul.f32 %v1903, %v1902
        %v1905 = vmul.f32 0.5, %v1904
        %v1906 = vsub.f32 1.5, %v1905
        %v1907 = vmul.f32 %v1902, %v1906
        %vm1908 = vweird.f32 %v1760
        %vm1909 = vweird.f32 %v1902
        %vm1910 = vmor %vm1908, %vm1909
        %v1911 = vsel %vm1910, %v1902, %v1907
        %v1912 = vrsqrt.pop %v1761
        %v1913 = vmul.f32 %v1912, %v1761
        %v1914 = vmul.f32 %v1913, %v1912
        %v1915 = vmul.f32 0.5, %v1914
        %v1916 = vsub.f32 1.5, %v1915
        %v1917 = vmul.f32 %v1912, %v1916
        %vm1918 = vweird.f32 %v1761
        %vm1919 = vweird.f32 %v1912
        %vm1920 = vmor %vm1918, %vm1919
        %v1921 = vsel %vm1920, %v1912, %v1917
        %v1922 = vmul.f32 %v1578, %v1771
        %v1923 = vmul.f32 %v1579, %v1781
        %v1924 = vmul.f32 %v1580, %v1791
        %v1925 = vmul.f32 %v1581, %v1801
        %v1926 = vmul.f32 %v1582, %v1811
        %v1927 = vmul.f32 %v1583, %v1821
        %v1928 = vmul.f32 %v1584, %v1831
        %v1929 = vmul.f32 %v1585, %v1841
        %v1930 = vmul.f32 %v1586, %v1851
        %v1931 = vmul.f32 %v1587, %v1861
        %v1932 = vmul.f32 %v1588, %v1871
        %v1933 = vmul.f32 %v1589, %v1881
        %v1934 = vmul.f32 %v1590, %v1891
        %v1935 = vmul.f32 %v1591, %v1901
        %v1936 = vmul.f32 %v1592, %v1911
        %v1937 = vmul.f32 %v1593, %v1921
        %v1939 = vperm.slane %v1594, 0
        %v1941 = vmul.f32 %v1922, %v1939
        %v1942 = vmul.f32 %v1923, %v1939
        %v1943 = vmul.f32 %v1924, %v1939
        %v1944 = vmul.f32 %v1925, %v1939
        %v1945 = vmul.f32 %v1926, %v1939
        %v1946 = vmul.f32 %v1927, %v1939
        %v1947 = vmul.f32 %v1928, %v1939
        %v1948 = vmul.f32 %v1929, %v1939
        %v1949 = vmul.f32 %v1930, %v1939
        %v1950 = vmul.f32 %v1931, %v1939
        %v1951 = vmul.f32 %v1932, %v1939
        %v1952 = vmul.f32 %v1933, %v1939
        %v1953 = vmul.f32 %v1934, %v1939
        %v1954 = vmul.f32 %v1935, %v1939
        %v1955 = vmul.f32 %v1936, %v1939
        %v1956 = vmul.f32 %v1937, %v1939
        %v1957 = vmul.f32 %v1578, %v1523
        %v1958 = vmul.f32 %v1579, %v1525
        %v1959 = vmul.f32 %v1580, %v1528
        %v1960 = vmul.f32 %v1581, %v1530
        %v1961 = vmul.f32 %v1582, %v1533
        %v1962 = vmul.f32 %v1583, %v1535
        %v1963 = vmul.f32 %v1584, %v1538
        %v1964 = vmul.f32 %v1585, %v1540
        %v1965 = vmul.f32 %v1586, %v1543
        %v1966 = vmul.f32 %v1587, %v1545
        %v1967 = vmul.f32 %v1588, %v1548
        %v1968 = vmul.f32 %v1589, %v1550
        %v1969 = vmul.f32 %v1590, %v1553
        %v1970 = vmul.f32 %v1591, %v1555
        %v1971 = vmul.f32 %v1592, %v1558
        %v1972 = vmul.f32 %v1593, %v1560
        %1973 = vadd.xlane.f32.xlu0 %v1957
        %v1974 = vpop.xlane.xlu0 %1973
        %1975 = vadd.xlane.f32.xlu0 %v1958
        %v1976 = vpop.xlane.xlu0 %1975
        %1977 = vadd.xlane.f32.xlu0 %v1959
        %v1978 = vpop.xlane.xlu0 %1977
        %1979 = vadd.xlane.f32.xlu0 %v1960
        %v1980 = vpop.xlane.xlu0 %1979
        %1981 = vadd.xlane.f32.xlu0 %v1961
        %v1982 = vpop.xlane.xlu0 %1981
        %1983 = vadd.xlane.f32.xlu0 %v1962
        %v1984 = vpop.xlane.xlu0 %1983
        %1985 = vadd.xlane.f32.xlu0 %v1963
        %v1986 = vpop.xlane.xlu0 %1985
        %1987 = vadd.xlane.f32.xlu0 %v1964
        %v1988 = vpop.xlane.xlu0 %1987
        %1989 = vadd.xlane.f32.xlu0 %v1965
        %v1990 = vpop.xlane.xlu0 %1989
        %1991 = vadd.xlane.f32.xlu0 %v1966
        %v1992 = vpop.xlane.xlu0 %1991
        %1993 = vadd.xlane.f32.xlu0 %v1967
        %v1994 = vpop.xlane.xlu0 %1993
        %1995 = vadd.xlane.f32.xlu0 %v1968
        %v1996 = vpop.xlane.xlu0 %1995
        %1997 = vadd.xlane.f32.xlu0 %v1969
        %v1998 = vpop.xlane.xlu0 %1997
        %1999 = vadd.xlane.f32.xlu0 %v1970
        %v2000 = vpop.xlane.xlu0 %1999
        %2001 = vadd.xlane.f32.xlu0 %v1971
        %v2002 = vpop.xlane.xlu0 %2001
        %2003 = vadd.xlane.f32.xlu0 %v1972
        %v2004 = vpop.xlane.xlu0 %2003
        %v2005 = vmul.f32 %v1974, %v1729
        %v2006 = vmul.f32 %v1976, %v1729
        %v2007 = vmul.f32 %v1978, %v1729
        %v2008 = vmul.f32 %v1980, %v1729
        %v2009 = vmul.f32 %v1982, %v1729
        %v2010 = vmul.f32 %v1984, %v1729
        %v2011 = vmul.f32 %v1986, %v1729
        %v2012 = vmul.f32 %v1988, %v1729
        %v2013 = vmul.f32 %v1990, %v1729
        %v2014 = vmul.f32 %v1992, %v1729
        %v2015 = vmul.f32 %v1994, %v1729
        %v2016 = vmul.f32 %v1996, %v1729
        %v2017 = vmul.f32 %v1998, %v1729
        %v2018 = vmul.f32 %v2000, %v1729
        %v2019 = vmul.f32 %v2002, %v1729
        %v2020 = vmul.f32 %v2004, %v1729
        %v2021 = vmul.f32 %v1523, %v1771
        %v2022 = vmul.f32 %v1525, %v1781
        %v2023 = vmul.f32 %v1528, %v1791
        %v2024 = vmul.f32 %v1530, %v1801
        %v2025 = vmul.f32 %v1533, %v1811
        %v2026 = vmul.f32 %v1535, %v1821
        %v2027 = vmul.f32 %v1538, %v1831
        %v2028 = vmul.f32 %v1540, %v1841
        %v2029 = vmul.f32 %v1543, %v1851
        %v2030 = vmul.f32 %v1545, %v1861
        %v2031 = vmul.f32 %v1548, %v1871
        %v2032 = vmul.f32 %v1550, %v1881
        %v2033 = vmul.f32 %v1553, %v1891
        %v2034 = vmul.f32 %v1555, %v1901
        %v2035 = vmul.f32 %v1558, %v1911
        %v2036 = vmul.f32 %v1560, %v1921
        %v2037 = vmul.f32 %v1771, %v1771
        %v2038 = vmul.f32 %v1781, %v1781
        %v2039 = vmul.f32 %v1791, %v1791
        %v2040 = vmul.f32 %v1801, %v1801
        %v2041 = vmul.f32 %v1811, %v1811
        %v2042 = vmul.f32 %v1821, %v1821
        %v2043 = vmul.f32 %v1831, %v1831
        %v2044 = vmul.f32 %v1841, %v1841
        %v2045 = vmul.f32 %v1851, %v1851
        %v2046 = vmul.f32 %v1861, %v1861
        %v2047 = vmul.f32 %v1871, %v1871
        %v2048 = vmul.f32 %v1881, %v1881
        %v2049 = vmul.f32 %v1891, %v1891
        %v2050 = vmul.f32 %v1901, %v1901
        %v2051 = vmul.f32 %v1911, %v1911
        %v2052 = vmul.f32 %v1921, %v1921
        %v2053 = vmul.f32 %v2037, %v1771
        %v2054 = vmul.f32 %v2038, %v1781
        %v2055 = vmul.f32 %v2039, %v1791
        %v2056 = vmul.f32 %v2040, %v1801
        %v2057 = vmul.f32 %v2041, %v1811
        %v2058 = vmul.f32 %v2042, %v1821
        %v2059 = vmul.f32 %v2043, %v1831
        %v2060 = vmul.f32 %v2044, %v1841
        %v2061 = vmul.f32 %v2045, %v1851
        %v2062 = vmul.f32 %v2046, %v1861
        %v2063 = vmul.f32 %v2047, %v1871
        %v2064 = vmul.f32 %v2048, %v1881
        %v2065 = vmul.f32 %v2049, %v1891
        %v2066 = vmul.f32 %v2050, %v1901
        %v2067 = vmul.f32 %v2051, %v1911
        %v2068 = vmul.f32 %v2052, %v1921
        %v2069 = vmul.f32 %v1578, %v2053
        %v2070 = vmul.f32 %v1579, %v2054
        %v2071 = vmul.f32 %v1580, %v2055
        %v2072 = vmul.f32 %v1581, %v2056
        %v2073 = vmul.f32 %v1582, %v2057
        %v2074 = vmul.f32 %v1583, %v2058
        %v2075 = vmul.f32 %v1584, %v2059
        %v2076 = vmul.f32 %v1585, %v2060
        %v2077 = vmul.f32 %v1586, %v2061
        %v2078 = vmul.f32 %v1587, %v2062
        %v2079 = vmul.f32 %v1588, %v2063
        %v2080 = vmul.f32 %v1589, %v2064
        %v2081 = vmul.f32 %v1590, %v2065
        %v2082 = vmul.f32 %v1591, %v2066
        %v2083 = vmul.f32 %v1592, %v2067
        %v2084 = vmul.f32 %v1593, %v2068
        %v2085 = vmul.f32 %v2069, %v2005
        %v2086 = vmul.f32 %v2070, %v2006
        %v2087 = vmul.f32 %v2071, %v2007
        %v2088 = vmul.f32 %v2072, %v2008
        %v2089 = vmul.f32 %v2073, %v2009
        %v2090 = vmul.f32 %v2074, %v2010
        %v2091 = vmul.f32 %v2075, %v2011
        %v2092 = vmul.f32 %v2076, %v2012
        %v2093 = vmul.f32 %v2077, %v2013
        %v2094 = vmul.f32 %v2078, %v2014
        %v2095 = vmul.f32 %v2079, %v2015
        %v2096 = vmul.f32 %v2080, %v2016
        %v2097 = vmul.f32 %v2081, %v2017
        %v2098 = vmul.f32 %v2082, %v2018
        %v2099 = vmul.f32 %v2083, %v2019
        %v2100 = vmul.f32 %v2084, %v2020
        %v2101 = vsub.f32 %v2021, %v2085
        %v2102 = vsub.f32 %v2022, %v2086
        %v2103 = vsub.f32 %v2023, %v2087
        %v2104 = vsub.f32 %v2024, %v2088
        %v2105 = vsub.f32 %v2025, %v2089
        %v2106 = vsub.f32 %v2026, %v2090
        %v2107 = vsub.f32 %v2027, %v2091
        %v2108 = vsub.f32 %v2028, %v2092
        %v2109 = vsub.f32 %v2029, %v2093
        %v2110 = vsub.f32 %v2030, %v2094
        %v2111 = vsub.f32 %v2031, %v2095
        %v2112 = vsub.f32 %v2032, %v2096
        %v2113 = vsub.f32 %v2033, %v2097
        %v2114 = vsub.f32 %v2034, %v2098
        %v2115 = vsub.f32 %v2035, %v2099
        %v2116 = vsub.f32 %v2036, %v2100
        %v2117 = vmul.f32 %v2101, %v1939
        %v2118 = vmul.f32 %v2102, %v1939
        %v2119 = vmul.f32 %v2103, %v1939
        %v2120 = vmul.f32 %v2104, %v1939
        %v2121 = vmul.f32 %v2105, %v1939
        %v2122 = vmul.f32 %v2106, %v1939
        %v2123 = vmul.f32 %v2107, %v1939
        %v2124 = vmul.f32 %v2108, %v1939
        %v2125 = vmul.f32 %v2109, %v1939
        %v2126 = vmul.f32 %v2110, %v1939
        %v2127 = vmul.f32 %v2111, %v1939
        %v2128 = vmul.f32 %v2112, %v1939
        %v2129 = vmul.f32 %v2113, %v1939
        %v2130 = vmul.f32 %v2114, %v1939
        %v2131 = vmul.f32 %v2115, %v1939
        %v2132 = vmul.f32 %v2116, %v1939
        %v2133 = vpack.c.bf16 %v1941, %v1941
        %v2134 = vpack.c.bf16 %v1942, %v1942
        %v2135 = vpack.c.bf16 %v1943, %v1943
        %v2136 = vpack.c.bf16 %v1944, %v1944
        %v2137 = vpack.c.bf16 %v1945, %v1945
        %v2138 = vpack.c.bf16 %v1946, %v1946
        %v2139 = vpack.c.bf16 %v1947, %v1947
        %v2140 = vpack.c.bf16 %v1948, %v1948
        %v2141 = vpack.c.bf16 %v1949, %v1949
        %v2142 = vpack.c.bf16 %v1950, %v1950
        %v2143 = vpack.c.bf16 %v1951, %v1951
        %v2144 = vpack.c.bf16 %v1952, %v1952
        %v2145 = vpack.c.bf16 %v1953, %v1953
        %v2146 = vpack.c.bf16 %v1954, %v1954
        %v2147 = vpack.c.bf16 %v1955, %v1955
        %v2148 = vpack.c.bf16 %v1956, %v1956
        %v2149 = vpack.c.bf16 %v2117, %v2117
        %v2150 = vpack.c.bf16 %v2118, %v2118
        %v2151 = vpack.c.bf16 %v2119, %v2119
        %v2152 = vpack.c.bf16 %v2120, %v2120
        %v2153 = vpack.c.bf16 %v2121, %v2121
        %v2154 = vpack.c.bf16 %v2122, %v2122
        %v2155 = vpack.c.bf16 %v2123, %v2123
        %v2156 = vpack.c.bf16 %v2124, %v2124
        %v2157 = vpack.c.bf16 %v2125, %v2125
        %v2158 = vpack.c.bf16 %v2126, %v2126
        %v2159 = vpack.c.bf16 %v2127, %v2127
        %v2160 = vpack.c.bf16 %v2128, %v2128
        %v2161 = vpack.c.bf16 %v2129, %v2129
        %v2162 = vpack.c.bf16 %v2130, %v2130
        %v2163 = vpack.c.bf16 %v2131, %v2131
        %v2164 = vpack.c.bf16 %v2132, %v2132
        %v2181 = vunpack.c.l.b16 %v2133
        %v2182 = vunpack.c.l.b16 %v2134
        %v2183 = vunpack.c.l.b16 %v2135
        %v2184 = vunpack.c.l.b16 %v2136
        %v2185 = vunpack.c.l.b16 %v2137
        %v2186 = vunpack.c.l.b16 %v2138
        %v2187 = vunpack.c.l.b16 %v2139
        %v2188 = vunpack.c.l.b16 %v2140
        %v2189 = vunpack.c.l.b16 %v2141
        %v2190 = vunpack.c.l.b16 %v2142
        %v2191 = vunpack.c.l.b16 %v2143
        %v2192 = vunpack.c.l.b16 %v2144
        %v2193 = vunpack.c.l.b16 %v2145
        %v2194 = vunpack.c.l.b16 %v2146
        %v2195 = vunpack.c.l.b16 %v2147
        %v2196 = vunpack.c.l.b16 %v2148
        %v2197 = vpack.c.b16 %v2182, %v2181
        %v2198 = vpack.c.b16 %v2184, %v2183
        %v2199 = vpack.c.b16 %v2186, %v2185
        %v2200 = vpack.c.b16 %v2188, %v2187
        %v2201 = vpack.c.b16 %v2190, %v2189
        %v2202 = vpack.c.b16 %v2192, %v2191
        %v2203 = vpack.c.b16 %v2194, %v2193
        %v2204 = vpack.c.b16 %v2196, %v2195
        %v2229 = vunpack.c.l.b16 %v2149
        %v2230 = vunpack.c.l.b16 %v2150
        %v2231 = vunpack.c.l.b16 %v2151
        %v2232 = vunpack.c.l.b16 %v2152
        %v2233 = vunpack.c.l.b16 %v2153
        %v2234 = vunpack.c.l.b16 %v2154
        %v2235 = vunpack.c.l.b16 %v2155
        %v2236 = vunpack.c.l.b16 %v2156
        %v2237 = vunpack.c.l.b16 %v2157
        %v2238 = vunpack.c.l.b16 %v2158
        %v2239 = vunpack.c.l.b16 %v2159
        %v2240 = vunpack.c.l.b16 %v2160
        %v2241 = vunpack.c.l.b16 %v2161
        %v2242 = vunpack.c.l.b16 %v2162
        %v2243 = vunpack.c.l.b16 %v2163
        %v2244 = vunpack.c.l.b16 %v2164
        %v2245 = vpack.c.b16 %v2230, %v2229
        %v2246 = vpack.c.b16 %v2232, %v2231
        %v2247 = vpack.c.b16 %v2234, %v2233
        %v2248 = vpack.c.b16 %v2236, %v2235
        %v2249 = vpack.c.b16 %v2238, %v2237
        %v2250 = vpack.c.b16 %v2240, %v2239
        %v2251 = vpack.c.b16 %v2242, %v2241
        %v2252 = vpack.c.b16 %v2244, %v2243
        %v2293 = vunpack.c.l.b16 %v1595
        %v2294 = vunpack.c.h.b16 %v1595
        %v2295 = vunpack.c.l.b16 %v1596
        %v2296 = vunpack.c.l.b16 %v1597
        %v2297 = vunpack.c.h.b16 %v1597
        %v2298 = vunpack.c.l.b16 %v1598
        %v2299 = vunpack.c.l.b16 %v1599
        %v2300 = vunpack.c.h.b16 %v1599
        %v2301 = vunpack.c.l.b16 %v1600
        %v2302 = vunpack.c.l.b16 %v1601
        %v2303 = vunpack.c.h.b16 %v1601
        %v2304 = vunpack.c.l.b16 %v1602
        %v2305 = vunpack.c.l.b16 %v1603
        %v2306 = vunpack.c.h.b16 %v1603
        %v2307 = vunpack.c.l.b16 %v1604
        %v2308 = vunpack.c.l.b16 %v1605
        %v2309 = vunpack.c.h.b16 %v1605
        %v2310 = vunpack.c.l.b16 %v1606
        %v2311 = vunpack.c.l.b16 %v1607
        %v2312 = vunpack.c.h.b16 %v1607
        %v2313 = vunpack.c.l.b16 %v1608
        %v2314 = vunpack.c.l.b16 %v1609
        %v2315 = vunpack.c.h.b16 %v1609
        %v2316 = vunpack.c.l.b16 %v1610
        %v2317 = vunpack.c.l.b16 %v1611
        %v2318 = vunpack.c.h.b16 %v1611
        %v2319 = vunpack.c.l.b16 %v1612
        %v2320 = vunpack.c.l.b16 %v1613
        %v2321 = vunpack.c.h.b16 %v1613
        %v2322 = vunpack.c.l.b16 %v1614
        %v2323 = vunpack.c.l.b16 %v1615
        %v2324 = vunpack.c.h.b16 %v1615
        %v2325 = vunpack.c.l.b16 %v1616
        %v2326 = vunpack.c.l.b16 %v1617
        %v2327 = vunpack.c.h.b16 %v1617
        %v2328 = vunpack.c.l.b16 %v1618
        %v2329 = vunpack.c.l.b16 %v1619
        %v2330 = vunpack.c.h.b16 %v1619
        %v2331 = vunpack.c.l.b16 %v1620
        %v2332 = vunpack.c.l.b16 %v1621
        %v2333 = vunpack.c.h.b16 %v1621
        %v2334 = vunpack.c.l.b16 %v1622
        %v2335 = vunpack.c.l.b16 %v1623
        %v2336 = vunpack.c.h.b16 %v1623
        %v2337 = vunpack.c.l.b16 %v1624
        %v2338 = vunpack.c.l.b16 %v1625
        %v2339 = vunpack.c.h.b16 %v1625
        %v2340 = vunpack.c.l.b16 %v1626
        %v2341 = vpack.c.b16 %v2296, %v2293
        %v2342 = vpack.c.b16 %v2297, %v2294
        %v2343 = vpack.c.b16 %v2298, %v2295
        %v2344 = vpack.c.b16 %v2302, %v2299
        %v2345 = vpack.c.b16 %v2303, %v2300
        %v2346 = vpack.c.b16 %v2304, %v2301
        %v2347 = vpack.c.b16 %v2308, %v2305
        %v2348 = vpack.c.b16 %v2309, %v2306
        %v2349 = vpack.c.b16 %v2310, %v2307
        %v2350 = vpack.c.b16 %v2314, %v2311
        %v2351 = vpack.c.b16 %v2315, %v2312
        %v2352 = vpack.c.b16 %v2316, %v2313
        %v2353 = vpack.c.b16 %v2320, %v2317
        %v2354 = vpack.c.b16 %v2321, %v2318
        %v2355 = vpack.c.b16 %v2322, %v2319
        %v2356 = vpack.c.b16 %v2326, %v2323
        %v2357 = vpack.c.b16 %v2327, %v2324
        %v2358 = vpack.c.b16 %v2328, %v2325
        %v2359 = vpack.c.b16 %v2332, %v2329
        %v2360 = vpack.c.b16 %v2333, %v2330
        %v2361 = vpack.c.b16 %v2334, %v2331
        %v2362 = vpack.c.b16 %v2338, %v2335
        %v2363 = vpack.c.b16 %v2339, %v2336
        %v2364 = vpack.c.b16 %v2340, %v2337
        %2389 = vmatpush.bf16.msra.mxu0 %v2362
        %2390 = vmatpush.bf16.msra.mxu0 %v2359
        %2391 = vmatpush.bf16.msra.mxu0 %v2356
        %2392 = vmatpush.bf16.msra.mxu0 %v2353
        %2393 = vmatpush.bf16.msra.mxu0 %v2350
        %2394 = vmatpush.bf16.msra.mxu0 %v2347
        %2395 = vmatpush.bf16.msra.mxu0 %v2344
        %2396 = vmatpush.bf16.msra.mxu0 %v2341
        %2397 = vmatmul.bf16.gmra.mxu0 %v2197
        %v2398 = vpop.f32.mrf.mxu0
        %v2399 = vadd.f32 0.0, %v2398
        %v2400 = vpop.f32.mrf.mxu0
        %v2401 = vadd.f32 0.0, %v2400
        %2402 = vmatmul.bf16.gmra.mxu0 %v2198
        %v2403 = vpop.f32.mrf.mxu0
        %v2404 = vadd.f32 0.0, %v2403
        %v2405 = vpop.f32.mrf.mxu0
        %v2406 = vadd.f32 0.0, %v2405
        %2407 = vmatmul.bf16.gmra.mxu0 %v2199
        %v2408 = vpop.f32.mrf.mxu0
        %v2409 = vadd.f32 0.0, %v2408
        %v2410 = vpop.f32.mrf.mxu0
        %v2411 = vadd.f32 0.0, %v2410
        %2412 = vmatmul.bf16.gmra.mxu0 %v2200
        %v2413 = vpop.f32.mrf.mxu0
        %v2414 = vadd.f32 0.0, %v2413
        %v2415 = vpop.f32.mrf.mxu0
        %v2416 = vadd.f32 0.0, %v2415
        %2417 = vmatmul.bf16.gmra.mxu0 %v2201
        %v2418 = vpop.f32.mrf.mxu0
        %v2419 = vadd.f32 0.0, %v2418
        %v2420 = vpop.f32.mrf.mxu0
        %v2421 = vadd.f32 0.0, %v2420
        %2422 = vmatmul.bf16.gmra.mxu0 %v2202
        %v2423 = vpop.f32.mrf.mxu0
        %v2424 = vadd.f32 0.0, %v2423
        %v2425 = vpop.f32.mrf.mxu0
        %v2426 = vadd.f32 0.0, %v2425
        %2427 = vmatmul.bf16.gmra.mxu0 %v2203
        %v2428 = vpop.f32.mrf.mxu0
        %v2429 = vadd.f32 0.0, %v2428
        %v2430 = vpop.f32.mrf.mxu0
        %v2431 = vadd.f32 0.0, %v2430
        %2432 = vmatmul.bf16.gmra.mxu0 %v2204
        %v2433 = vpop.f32.mrf.mxu0
        %v2434 = vadd.f32 0.0, %v2433
        %v2435 = vpop.f32.mrf.mxu0
        %v2436 = vadd.f32 0.0, %v2435
        %2437 = vmatmul.bf16.gmra.mxu0 %v2245
        %v2438 = vpop.f32.mrf.mxu0
        %v2439 = vadd.f32 0.0, %v2438
        %v2440 = vpop.f32.mrf.mxu0
        %v2441 = vadd.f32 0.0, %v2440
        %2442 = vmatmul.bf16.gmra.mxu0 %v2246
        %v2443 = vpop.f32.mrf.mxu0
        %v2444 = vadd.f32 0.0, %v2443
        %v2445 = vpop.f32.mrf.mxu0
        %v2446 = vadd.f32 0.0, %v2445
        %2447 = vmatmul.bf16.gmra.mxu0 %v2247
        %v2448 = vpop.f32.mrf.mxu0
        %v2449 = vadd.f32 0.0, %v2448
        %v2450 = vpop.f32.mrf.mxu0
        %v2451 = vadd.f32 0.0, %v2450
        %2452 = vmatmul.bf16.gmra.mxu0 %v2248
        %v2453 = vpop.f32.mrf.mxu0
        %v2454 = vadd.f32 0.0, %v2453
        %v2455 = vpop.f32.mrf.mxu0
        %v2456 = vadd.f32 0.0, %v2455
        %2457 = vmatmul.bf16.gmra.mxu0 %v2249
        %v2458 = vpop.f32.mrf.mxu0
        %v2459 = vadd.f32 0.0, %v2458
        %v2460 = vpop.f32.mrf.mxu0
        %v2461 = vadd.f32 0.0, %v2460
        %2462 = vmatmul.bf16.gmra.mxu0 %v2250
        %v2463 = vpop.f32.mrf.mxu0
        %v2464 = vadd.f32 0.0, %v2463
        %v2465 = vpop.f32.mrf.mxu0
        %v2466 = vadd.f32 0.0, %v2465
        %2467 = vmatmul.bf16.gmra.mxu0 %v2251
        %v2468 = vpop.f32.mrf.mxu0
        %v2469 = vadd.f32 0.0, %v2468
        %v2470 = vpop.f32.mrf.mxu0
        %v2471 = vadd.f32 0.0, %v2470
        %2472 = vmatmul.bf16.gmra.mxu0 %v2252
        %v2473 = vpop.f32.mrf.mxu0
        %v2474 = vadd.f32 0.0, %v2473
        %v2475 = vpop.f32.mrf.mxu0
        %v2476 = vadd.f32 0.0, %v2475
        %2477 = vdwg.mxu0
        %2478 = vmatpush.bf16.msra.mxu0 %v2363
        %2479 = vmatpush.bf16.msra.mxu0 %v2360
        %2480 = vmatpush.bf16.msra.mxu0 %v2357
        %2481 = vmatpush.bf16.msra.mxu0 %v2354
        %2482 = vmatpush.bf16.msra.mxu0 %v2351
        %2483 = vmatpush.bf16.msra.mxu0 %v2348
        %2484 = vmatpush.bf16.msra.mxu0 %v2345
        %2485 = vmatpush.bf16.msra.mxu0 %v2342
        %2486 = vmatmul.bf16.gmra.mxu0 %v2197
        %v2487 = vpop.f32.mrf.mxu0
        %v2488 = vadd.f32 0.0, %v2487
        %v2489 = vpop.f32.mrf.mxu0
        %v2490 = vadd.f32 0.0, %v2489
        %2491 = vmatmul.bf16.gmra.mxu0 %v2198
        %v2492 = vpop.f32.mrf.mxu0
        %v2493 = vadd.f32 0.0, %v2492
        %v2494 = vpop.f32.mrf.mxu0
        %v2495 = vadd.f32 0.0, %v2494
        %2496 = vmatmul.bf16.gmra.mxu0 %v2199
        %v2497 = vpop.f32.mrf.mxu0
        %v2498 = vadd.f32 0.0, %v2497
        %v2499 = vpop.f32.mrf.mxu0
        %v2500 = vadd.f32 0.0, %v2499
        %2501 = vmatmul.bf16.gmra.mxu0 %v2200
        %v2502 = vpop.f32.mrf.mxu0
        %v2503 = vadd.f32 0.0, %v2502
        %v2504 = vpop.f32.mrf.mxu0
        %v2505 = vadd.f32 0.0, %v2504
        %2506 = vmatmul.bf16.gmra.mxu0 %v2201
        %v2507 = vpop.f32.mrf.mxu0
        %v2508 = vadd.f32 0.0, %v2507
        %v2509 = vpop.f32.mrf.mxu0
        %v2510 = vadd.f32 0.0, %v2509
        %2511 = vmatmul.bf16.gmra.mxu0 %v2202
        %v2512 = vpop.f32.mrf.mxu0
        %v2513 = vadd.f32 0.0, %v2512
        %v2514 = vpop.f32.mrf.mxu0
        %v2515 = vadd.f32 0.0, %v2514
        %2516 = vmatmul.bf16.gmra.mxu0 %v2203
        %v2517 = vpop.f32.mrf.mxu0
        %v2518 = vadd.f32 0.0, %v2517
        %v2519 = vpop.f32.mrf.mxu0
        %v2520 = vadd.f32 0.0, %v2519
        %2521 = vmatmul.bf16.gmra.mxu0 %v2204
        %v2522 = vpop.f32.mrf.mxu0
        %v2523 = vadd.f32 0.0, %v2522
        %v2524 = vpop.f32.mrf.mxu0
        %v2525 = vadd.f32 0.0, %v2524
        %2526 = vmatmul.bf16.gmra.mxu0 %v2245
        %v2527 = vpop.f32.mrf.mxu0
        %v2528 = vadd.f32 0.0, %v2527
        %v2529 = vpop.f32.mrf.mxu0
        %v2530 = vadd.f32 0.0, %v2529
        %2531 = vmatmul.bf16.gmra.mxu0 %v2246
        %v2532 = vpop.f32.mrf.mxu0
        %v2533 = vadd.f32 0.0, %v2532
        %v2534 = vpop.f32.mrf.mxu0
        %v2535 = vadd.f32 0.0, %v2534
        %2536 = vmatmul.bf16.gmra.mxu0 %v2247
        %v2537 = vpop.f32.mrf.mxu0
        %v2538 = vadd.f32 0.0, %v2537
        %v2539 = vpop.f32.mrf.mxu0
        %v2540 = vadd.f32 0.0, %v2539
        %2541 = vmatmul.bf16.gmra.mxu0 %v2248
        %v2542 = vpop.f32.mrf.mxu0
        %v2543 = vadd.f32 0.0, %v2542
        %v2544 = vpop.f32.mrf.mxu0
        %v2545 = vadd.f32 0.0, %v2544
        %2546 = vmatmul.bf16.gmra.mxu0 %v2249
        %v2547 = vpop.f32.mrf.mxu0
        %v2548 = vadd.f32 0.0, %v2547
        %v2549 = vpop.f32.mrf.mxu0
        %v2550 = vadd.f32 0.0, %v2549
        %2551 = vmatmul.bf16.gmra.mxu0 %v2250
        %v2552 = vpop.f32.mrf.mxu0
        %v2553 = vadd.f32 0.0, %v2552
        %v2554 = vpop.f32.mrf.mxu0
        %v2555 = vadd.f32 0.0, %v2554
        %2556 = vmatmul.bf16.gmra.mxu0 %v2251
        %v2557 = vpop.f32.mrf.mxu0
        %v2558 = vadd.f32 0.0, %v2557
        %v2559 = vpop.f32.mrf.mxu0
        %v2560 = vadd.f32 0.0, %v2559
        %2561 = vmatmul.bf16.gmra.mxu0 %v2252
        %v2562 = vpop.f32.mrf.mxu0
        %v2563 = vadd.f32 0.0, %v2562
        %v2564 = vpop.f32.mrf.mxu0
        %v2565 = vadd.f32 0.0, %v2564
        %2566 = vdwg.mxu0
        %2567 = vmatpush.bf16.msra.mxu0 %v2364
        %2568 = vmatpush.bf16.msra.mxu0 %v2361
        %2569 = vmatpush.bf16.msra.mxu0 %v2358
        %2570 = vmatpush.bf16.msra.mxu0 %v2355
        %2571 = vmatpush.bf16.msra.mxu0 %v2352
        %2572 = vmatpush.bf16.msra.mxu0 %v2349
        %2573 = vmatpush.bf16.msra.mxu0 %v2346
        %2574 = vmatpush.bf16.msra.mxu0 %v2343
        %2575 = vmatmul.bf16.gmra.mxu0 %v2197
        %v2576 = vpop.f32.mrf.mxu0
        %v2577 = vadd.f32 0.0, %v2576
        %v2578 = vpop.f32.mrf.mxu0
        %v2579 = vadd.f32 0.0, %v2578
        %2580 = vmatmul.bf16.gmra.mxu0 %v2198
        %v2581 = vpop.f32.mrf.mxu0
        %v2582 = vadd.f32 0.0, %v2581
        %v2583 = vpop.f32.mrf.mxu0
        %v2584 = vadd.f32 0.0, %v2583
        %2585 = vmatmul.bf16.gmra.mxu0 %v2199
        %v2586 = vpop.f32.mrf.mxu0
        %v2587 = vadd.f32 0.0, %v2586
        %v2588 = vpop.f32.mrf.mxu0
        %v2589 = vadd.f32 0.0, %v2588
        %2590 = vmatmul.bf16.gmra.mxu0 %v2200
        %v2591 = vpop.f32.mrf.mxu0
        %v2592 = vadd.f32 0.0, %v2591
        %v2593 = vpop.f32.mrf.mxu0
        %v2594 = vadd.f32 0.0, %v2593
        %2595 = vmatmul.bf16.gmra.mxu0 %v2201
        %v2596 = vpop.f32.mrf.mxu0
        %v2597 = vadd.f32 0.0, %v2596
        %v2598 = vpop.f32.mrf.mxu0
        %v2599 = vadd.f32 0.0, %v2598
        %2600 = vmatmul.bf16.gmra.mxu0 %v2202
        %v2601 = vpop.f32.mrf.mxu0
        %v2602 = vadd.f32 0.0, %v2601
        %v2603 = vpop.f32.mrf.mxu0
        %v2604 = vadd.f32 0.0, %v2603
        %2605 = vmatmul.bf16.gmra.mxu0 %v2203
        %v2606 = vpop.f32.mrf.mxu0
        %v2607 = vadd.f32 0.0, %v2606
        %v2608 = vpop.f32.mrf.mxu0
        %v2609 = vadd.f32 0.0, %v2608
        %2610 = vmatmul.bf16.gmra.mxu0 %v2204
        %v2611 = vpop.f32.mrf.mxu0
        %v2612 = vadd.f32 0.0, %v2611
        %v2613 = vpop.f32.mrf.mxu0
        %v2614 = vadd.f32 0.0, %v2613
        %2615 = vmatmul.bf16.gmra.mxu0 %v2245
        %v2616 = vpop.f32.mrf.mxu0
        %v2617 = vadd.f32 0.0, %v2616
        %v2618 = vpop.f32.mrf.mxu0
        %v2619 = vadd.f32 0.0, %v2618
        %2620 = vmatmul.bf16.gmra.mxu0 %v2246
        %v2621 = vpop.f32.mrf.mxu0
        %v2622 = vadd.f32 0.0, %v2621
        %v2623 = vpop.f32.mrf.mxu0
        %v2624 = vadd.f32 0.0, %v2623
        %2625 = vmatmul.bf16.gmra.mxu0 %v2247
        %v2626 = vpop.f32.mrf.mxu0
        %v2627 = vadd.f32 0.0, %v2626
        %v2628 = vpop.f32.mrf.mxu0
        %v2629 = vadd.f32 0.0, %v2628
        %2630 = vmatmul.bf16.gmra.mxu0 %v2248
        %v2631 = vpop.f32.mrf.mxu0
        %v2632 = vadd.f32 0.0, %v2631
        %v2633 = vpop.f32.mrf.mxu0
        %v2634 = vadd.f32 0.0, %v2633
        %2635 = vmatmul.bf16.gmra.mxu0 %v2249
        %v2636 = vpop.f32.mrf.mxu0
        %v2637 = vadd.f32 0.0, %v2636
        %v2638 = vpop.f32.mrf.mxu0
        %v2639 = vadd.f32 0.0, %v2638
        %2640 = vmatmul.bf16.gmra.mxu0 %v2250
        %v2641 = vpop.f32.mrf.mxu0
        %v2642 = vadd.f32 0.0, %v2641
        %v2643 = vpop.f32.mrf.mxu0
        %v2644 = vadd.f32 0.0, %v2643
        %2645 = vmatmul.bf16.gmra.mxu0 %v2251
        %v2646 = vpop.f32.mrf.mxu0
        %v2647 = vadd.f32 0.0, %v2646
        %v2648 = vpop.f32.mrf.mxu0
        %v2649 = vadd.f32 0.0, %v2648
        %2650 = vmatmul.bf16.gmra.mxu0 %v2252
        %v2651 = vpop.f32.mrf.mxu0
        %v2652 = vadd.f32 0.0, %v2651
        %v2653 = vpop.f32.mrf.mxu0
        %v2654 = vadd.f32 0.0, %v2653
        %2655 = vdwg.mxu0
        %v2656 = vmul.f32 %v1216, %v1216
        %v2657 = vmul.f32 %v1218, %v1218
        %v2658 = vmul.f32 %v1221, %v1221
        %v2659 = vmul.f32 %v1223, %v1223
        %v2660 = vmul.f32 %v1226, %v1226
        %v2661 = vmul.f32 %v1228, %v1228
        %v2662 = vmul.f32 %v1231, %v1231
        %v2663 = vmul.f32 %v1233, %v1233
        %v2664 = vmul.f32 %v1236, %v1236
        %v2665 = vmul.f32 %v1238, %v1238
        %v2666 = vmul.f32 %v1241, %v1241
        %v2667 = vmul.f32 %v1243, %v1243
        %v2668 = vmul.f32 %v1246, %v1246
        %v2669 = vmul.f32 %v1248, %v1248
        %v2670 = vmul.f32 %v1251, %v1251
        %v2671 = vmul.f32 %v1253, %v1253
        %2672 = vadd.xlane.f32.xlu0 %v2656
        %v2673 = vpop.xlane.xlu0 %2672
        %2674 = vadd.xlane.f32.xlu0 %v2657
        %v2675 = vpop.xlane.xlu0 %2674
        %2676 = vadd.xlane.f32.xlu0 %v2658
        %v2677 = vpop.xlane.xlu0 %2676
        %2678 = vadd.xlane.f32.xlu0 %v2659
        %v2679 = vpop.xlane.xlu0 %2678
        %2680 = vadd.xlane.f32.xlu0 %v2660
        %v2681 = vpop.xlane.xlu0 %2680
        %2682 = vadd.xlane.f32.xlu0 %v2661
        %v2683 = vpop.xlane.xlu0 %2682
        %2684 = vadd.xlane.f32.xlu0 %v2662
        %v2685 = vpop.xlane.xlu0 %2684
        %2686 = vadd.xlane.f32.xlu0 %v2663
        %v2687 = vpop.xlane.xlu0 %2686
        %2688 = vadd.xlane.f32.xlu0 %v2664
        %v2689 = vpop.xlane.xlu0 %2688
        %2690 = vadd.xlane.f32.xlu0 %v2665
        %v2691 = vpop.xlane.xlu0 %2690
        %2692 = vadd.xlane.f32.xlu0 %v2666
        %v2693 = vpop.xlane.xlu0 %2692
        %2694 = vadd.xlane.f32.xlu0 %v2667
        %v2695 = vpop.xlane.xlu0 %2694
        %2696 = vadd.xlane.f32.xlu0 %v2668
        %v2697 = vpop.xlane.xlu0 %2696
        %2698 = vadd.xlane.f32.xlu0 %v2669
        %v2699 = vpop.xlane.xlu0 %2698
        %2700 = vadd.xlane.f32.xlu0 %v2670
        %v2701 = vpop.xlane.xlu0 %2700
        %2702 = vadd.xlane.f32.xlu0 %v2671
        %v2703 = vpop.xlane.xlu0 %2702
        %v2704 = vmul.f32 %v2673, %v1729
        %v2705 = vmul.f32 %v2675, %v1729
        %v2706 = vmul.f32 %v2677, %v1729
        %v2707 = vmul.f32 %v2679, %v1729
        %v2708 = vmul.f32 %v2681, %v1729
        %v2709 = vmul.f32 %v2683, %v1729
        %v2710 = vmul.f32 %v2685, %v1729
        %v2711 = vmul.f32 %v2687, %v1729
        %v2712 = vmul.f32 %v2689, %v1729
        %v2713 = vmul.f32 %v2691, %v1729
        %v2714 = vmul.f32 %v2693, %v1729
        %v2715 = vmul.f32 %v2695, %v1729
        %v2716 = vmul.f32 %v2697, %v1729
        %v2717 = vmul.f32 %v2699, %v1729
        %v2718 = vmul.f32 %v2701, %v1729
        %v2719 = vmul.f32 %v2703, %v1729
        %v2720 = vadd.f32 %v2704, 1e-06
        %v2721 = vadd.f32 %v2705, 1e-06
        %v2722 = vadd.f32 %v2706, 1e-06
        %v2723 = vadd.f32 %v2707, 1e-06
        %v2724 = vadd.f32 %v2708, 1e-06
        %v2725 = vadd.f32 %v2709, 1e-06
        %v2726 = vadd.f32 %v2710, 1e-06
        %v2727 = vadd.f32 %v2711, 1e-06
        %v2728 = vadd.f32 %v2712, 1e-06
        %v2729 = vadd.f32 %v2713, 1e-06
        %v2730 = vadd.f32 %v2714, 1e-06
        %v2731 = vadd.f32 %v2715, 1e-06
        %v2732 = vadd.f32 %v2716, 1e-06
        %v2733 = vadd.f32 %v2717, 1e-06
        %v2734 = vadd.f32 %v2718, 1e-06
        %v2735 = vadd.f32 %v2719, 1e-06
        %v2736 = vrsqrt.pop %v2720
        %v2737 = vmul.f32 %v2736, %v2720
        %v2738 = vmul.f32 %v2737, %v2736
        %v2739 = vmul.f32 0.5, %v2738
        %v2740 = vsub.f32 1.5, %v2739
        %v2741 = vmul.f32 %v2736, %v2740
        %vm2742 = vweird.f32 %v2720
        %vm2743 = vweird.f32 %v2736
        %vm2744 = vmor %vm2742, %vm2743
        %v2745 = vsel %vm2744, %v2736, %v2741
        %v2746 = vrsqrt.pop %v2721
        %v2747 = vmul.f32 %v2746, %v2721
        %v2748 = vmul.f32 %v2747, %v2746
        %v2749 = vmul.f32 0.5, %v2748
        %v2750 = vsub.f32 1.5, %v2749
        %v2751 = vmul.f32 %v2746, %v2750
        %vm2752 = vweird.f32 %v2721
        %vm2753 = vweird.f32 %v2746
        %vm2754 = vmor %vm2752, %vm2753
        %v2755 = vsel %vm2754, %v2746, %v2751
        %v2756 = vrsqrt.pop %v2722
        %v2757 = vmul.f32 %v2756, %v2722
        %v2758 = vmul.f32 %v2757, %v2756
        %v2759 = vmul.f32 0.5, %v2758
        %v2760 = vsub.f32 1.5, %v2759
        %v2761 = vmul.f32 %v2756, %v2760
        %vm2762 = vweird.f32 %v2722
        %vm2763 = vweird.f32 %v2756
        %vm2764 = vmor %vm2762, %vm2763
        %v2765 = vsel %vm2764, %v2756, %v2761
        %v2766 = vrsqrt.pop %v2723
        %v2767 = vmul.f32 %v2766, %v2723
        %v2768 = vmul.f32 %v2767, %v2766
        %v2769 = vmul.f32 0.5, %v2768
        %v2770 = vsub.f32 1.5, %v2769
        %v2771 = vmul.f32 %v2766, %v2770
        %vm2772 = vweird.f32 %v2723
        %vm2773 = vweird.f32 %v2766
        %vm2774 = vmor %vm2772, %vm2773
        %v2775 = vsel %vm2774, %v2766, %v2771
        %v2776 = vrsqrt.pop %v2724
        %v2777 = vmul.f32 %v2776, %v2724
        %v2778 = vmul.f32 %v2777, %v2776
        %v2779 = vmul.f32 0.5, %v2778
        %v2780 = vsub.f32 1.5, %v2779
        %v2781 = vmul.f32 %v2776, %v2780
        %vm2782 = vweird.f32 %v2724
        %vm2783 = vweird.f32 %v2776
        %vm2784 = vmor %vm2782, %vm2783
        %v2785 = vsel %vm2784, %v2776, %v2781
        %v2786 = vrsqrt.pop %v2725
        %v2787 = vmul.f32 %v2786, %v2725
        %v2788 = vmul.f32 %v2787, %v2786
        %v2789 = vmul.f32 0.5, %v2788
        %v2790 = vsub.f32 1.5, %v2789
        %v2791 = vmul.f32 %v2786, %v2790
        %vm2792 = vweird.f32 %v2725
        %vm2793 = vweird.f32 %v2786
        %vm2794 = vmor %vm2792, %vm2793
        %v2795 = vsel %vm2794, %v2786, %v2791
        %v2796 = vrsqrt.pop %v2726
        %v2797 = vmul.f32 %v2796, %v2726
        %v2798 = vmul.f32 %v2797, %v2796
        %v2799 = vmul.f32 0.5, %v2798
        %v2800 = vsub.f32 1.5, %v2799
        %v2801 = vmul.f32 %v2796, %v2800
        %vm2802 = vweird.f32 %v2726
        %vm2803 = vweird.f32 %v2796
        %vm2804 = vmor %vm2802, %vm2803
        %v2805 = vsel %vm2804, %v2796, %v2801
        %v2806 = vrsqrt.pop %v2727
        %v2807 = vmul.f32 %v2806, %v2727
        %v2808 = vmul.f32 %v2807, %v2806
        %v2809 = vmul.f32 0.5, %v2808
        %v2810 = vsub.f32 1.5, %v2809
        %v2811 = vmul.f32 %v2806, %v2810
        %vm2812 = vweird.f32 %v2727
        %vm2813 = vweird.f32 %v2806
        %vm2814 = vmor %vm2812, %vm2813
        %v2815 = vsel %vm2814, %v2806, %v2811
        %v2816 = vrsqrt.pop %v2728
        %v2817 = vmul.f32 %v2816, %v2728
        %v2818 = vmul.f32 %v2817, %v2816
        %v2819 = vmul.f32 0.5, %v2818
        %v2820 = vsub.f32 1.5, %v2819
        %v2821 = vmul.f32 %v2816, %v2820
        %vm2822 = vweird.f32 %v2728
        %vm2823 = vweird.f32 %v2816
        %vm2824 = vmor %vm2822, %vm2823
        %v2825 = vsel %vm2824, %v2816, %v2821
        %v2826 = vrsqrt.pop %v2729
        %v2827 = vmul.f32 %v2826, %v2729
        %v2828 = vmul.f32 %v2827, %v2826
        %v2829 = vmul.f32 0.5, %v2828
        %v2830 = vsub.f32 1.5, %v2829
        %v2831 = vmul.f32 %v2826, %v2830
        %vm2832 = vweird.f32 %v2729
        %vm2833 = vweird.f32 %v2826
        %vm2834 = vmor %vm2832, %vm2833
        %v2835 = vsel %vm2834, %v2826, %v2831
        %v2836 = vrsqrt.pop %v2730
        %v2837 = vmul.f32 %v2836, %v2730
        %v2838 = vmul.f32 %v2837, %v2836
        %v2839 = vmul.f32 0.5, %v2838
        %v2840 = vsub.f32 1.5, %v2839
        %v2841 = vmul.f32 %v2836, %v2840
        %vm2842 = vweird.f32 %v2730
        %vm2843 = vweird.f32 %v2836
        %vm2844 = vmor %vm2842, %vm2843
        %v2845 = vsel %vm2844, %v2836, %v2841
        %v2846 = vrsqrt.pop %v2731
        %v2847 = vmul.f32 %v2846, %v2731
        %v2848 = vmul.f32 %v2847, %v2846
        %v2849 = vmul.f32 0.5, %v2848
        %v2850 = vsub.f32 1.5, %v2849
        %v2851 = vmul.f32 %v2846, %v2850
        %vm2852 = vweird.f32 %v2731
        %vm2853 = vweird.f32 %v2846
        %vm2854 = vmor %vm2852, %vm2853
        %v2855 = vsel %vm2854, %v2846, %v2851
        %v2856 = vrsqrt.pop %v2732
        %v2857 = vmul.f32 %v2856, %v2732
        %v2858 = vmul.f32 %v2857, %v2856
        %v2859 = vmul.f32 0.5, %v2858
        %v2860 = vsub.f32 1.5, %v2859
        %v2861 = vmul.f32 %v2856, %v2860
        %vm2862 = vweird.f32 %v2732
        %vm2863 = vweird.f32 %v2856
        %vm2864 = vmor %vm2862, %vm2863
        %v2865 = vsel %vm2864, %v2856, %v2861
        %v2866 = vrsqrt.pop %v2733
        %v2867 = vmul.f32 %v2866, %v2733
        %v2868 = vmul.f32 %v2867, %v2866
        %v2869 = vmul.f32 0.5, %v2868
        %v2870 = vsub.f32 1.5, %v2869
        %v2871 = vmul.f32 %v2866, %v2870
        %vm2872 = vweird.f32 %v2733
        %vm2873 = vweird.f32 %v2866
        %vm2874 = vmor %vm2872, %vm2873
        %v2875 = vsel %vm2874, %v2866, %v2871
        %v2876 = vrsqrt.pop %v2734
        %v2877 = vmul.f32 %v2876, %v2734
        %v2878 = vmul.f32 %v2877, %v2876
        %v2879 = vmul.f32 0.5, %v2878
        %v2880 = vsub.f32 1.5, %v2879
        %v2881 = vmul.f32 %v2876, %v2880
        %vm2882 = vweird.f32 %v2734
        %vm2883 = vweird.f32 %v2876
        %vm2884 = vmor %vm2882, %vm2883
        %v2885 = vsel %vm2884, %v2876, %v2881
        %v2886 = vrsqrt.pop %v2735
        %v2887 = vmul.f32 %v2886, %v2735
        %v2888 = vmul.f32 %v2887, %v2886
        %v2889 = vmul.f32 0.5, %v2888
        %v2890 = vsub.f32 1.5, %v2889
        %v2891 = vmul.f32 %v2886, %v2890
        %vm2892 = vweird.f32 %v2735
        %vm2893 = vweird.f32 %v2886
        %vm2894 = vmor %vm2892, %vm2893
        %v2895 = vsel %vm2894, %v2886, %v2891
        %v2896 = vmul.f32 %v1216, %v2745
        %v2897 = vmul.f32 %v1218, %v2755
        %v2898 = vmul.f32 %v1221, %v2765
        %v2899 = vmul.f32 %v1223, %v2775
        %v2900 = vmul.f32 %v1226, %v2785
        %v2901 = vmul.f32 %v1228, %v2795
        %v2902 = vmul.f32 %v1231, %v2805
        %v2903 = vmul.f32 %v1233, %v2815
        %v2904 = vmul.f32 %v1236, %v2825
        %v2905 = vmul.f32 %v1238, %v2835
        %v2906 = vmul.f32 %v1241, %v2845
        %v2907 = vmul.f32 %v1243, %v2855
        %v2908 = vmul.f32 %v1246, %v2865
        %v2909 = vmul.f32 %v1248, %v2875
        %v2910 = vmul.f32 %v1251, %v2885
        %v2911 = vmul.f32 %v1253, %v2895
        %v2912 = vmul.f32 %v2896, %v1939
        %v2913 = vmul.f32 %v2897, %v1939
        %v2914 = vmul.f32 %v2898, %v1939
        %v2915 = vmul.f32 %v2899, %v1939
        %v2916 = vmul.f32 %v2900, %v1939
        %v2917 = vmul.f32 %v2901, %v1939
        %v2918 = vmul.f32 %v2902, %v1939
        %v2919 = vmul.f32 %v2903, %v1939
        %v2920 = vmul.f32 %v2904, %v1939
        %v2921 = vmul.f32 %v2905, %v1939
        %v2922 = vmul.f32 %v2906, %v1939
        %v2923 = vmul.f32 %v2907, %v1939
        %v2924 = vmul.f32 %v2908, %v1939
        %v2925 = vmul.f32 %v2909, %v1939
        %v2926 = vmul.f32 %v2910, %v1939
        %v2927 = vmul.f32 %v2911, %v1939
        %v2928 = vmul.f32 %v1216, %v1256
        %v2929 = vmul.f32 %v1218, %v1258
        %v2930 = vmul.f32 %v1221, %v1261
        %v2931 = vmul.f32 %v1223, %v1263
        %v2932 = vmul.f32 %v1226, %v1266
        %v2933 = vmul.f32 %v1228, %v1268
        %v2934 = vmul.f32 %v1231, %v1271
        %v2935 = vmul.f32 %v1233, %v1273
        %v2936 = vmul.f32 %v1236, %v1276
        %v2937 = vmul.f32 %v1238, %v1278
        %v2938 = vmul.f32 %v1241, %v1281
        %v2939 = vmul.f32 %v1243, %v1283
        %v2940 = vmul.f32 %v1246, %v1286
        %v2941 = vmul.f32 %v1248, %v1288
        %v2942 = vmul.f32 %v1251, %v1291
        %v2943 = vmul.f32 %v1253, %v1293
        %2944 = vadd.xlane.f32.xlu0 %v2928
        %v2945 = vpop.xlane.xlu0 %2944
        %2946 = vadd.xlane.f32.xlu0 %v2929
        %v2947 = vpop.xlane.xlu0 %2946
        %2948 = vadd.xlane.f32.xlu0 %v2930
        %v2949 = vpop.xlane.xlu0 %2948
        %2950 = vadd.xlane.f32.xlu0 %v2931
        %v2951 = vpop.xlane.xlu0 %2950
        %2952 = vadd.xlane.f32.xlu0 %v2932
        %v2953 = vpop.xlane.xlu0 %2952
        %2954 = vadd.xlane.f32.xlu0 %v2933
        %v2955 = vpop.xlane.xlu0 %2954
        %2956 = vadd.xlane.f32.xlu0 %v2934
        %v2957 = vpop.xlane.xlu0 %2956
        %2958 = vadd.xlane.f32.xlu0 %v2935
        %v2959 = vpop.xlane.xlu0 %2958
        %2960 = vadd.xlane.f32.xlu0 %v2936
        %v2961 = vpop.xlane.xlu0 %2960
        %2962 = vadd.xlane.f32.xlu0 %v2937
        %v2963 = vpop.xlane.xlu0 %2962
        %2964 = vadd.xlane.f32.xlu0 %v2938
        %v2965 = vpop.xlane.xlu0 %2964
        %2966 = vadd.xlane.f32.xlu0 %v2939
        %v2967 = vpop.xlane.xlu0 %2966
        %2968 = vadd.xlane.f32.xlu0 %v2940
        %v2969 = vpop.xlane.xlu0 %2968
        %2970 = vadd.xlane.f32.xlu0 %v2941
        %v2971 = vpop.xlane.xlu0 %2970
        %2972 = vadd.xlane.f32.xlu0 %v2942
        %v2973 = vpop.xlane.xlu0 %2972
        %2974 = vadd.xlane.f32.xlu0 %v2943
        %v2975 = vpop.xlane.xlu0 %2974
        %v2976 = vmul.f32 %v2945, %v1729
        %v2977 = vmul.f32 %v2947, %v1729
        %v2978 = vmul.f32 %v2949, %v1729
        %v2979 = vmul.f32 %v2951, %v1729
        %v2980 = vmul.f32 %v2953, %v1729
        %v2981 = vmul.f32 %v2955, %v1729
        %v2982 = vmul.f32 %v2957, %v1729
        %v2983 = vmul.f32 %v2959, %v1729
        %v2984 = vmul.f32 %v2961, %v1729
        %v2985 = vmul.f32 %v2963, %v1729
        %v2986 = vmul.f32 %v2965, %v1729
        %v2987 = vmul.f32 %v2967, %v1729
        %v2988 = vmul.f32 %v2969, %v1729
        %v2989 = vmul.f32 %v2971, %v1729
        %v2990 = vmul.f32 %v2973, %v1729
        %v2991 = vmul.f32 %v2975, %v1729
        %v2992 = vmul.f32 %v1256, %v2745
        %v2993 = vmul.f32 %v1258, %v2755
        %v2994 = vmul.f32 %v1261, %v2765
        %v2995 = vmul.f32 %v1263, %v2775
        %v2996 = vmul.f32 %v1266, %v2785
        %v2997 = vmul.f32 %v1268, %v2795
        %v2998 = vmul.f32 %v1271, %v2805
        %v2999 = vmul.f32 %v1273, %v2815
        %v3000 = vmul.f32 %v1276, %v2825
        %v3001 = vmul.f32 %v1278, %v2835
        %v3002 = vmul.f32 %v1281, %v2845
        %v3003 = vmul.f32 %v1283, %v2855
        %v3004 = vmul.f32 %v1286, %v2865
        %v3005 = vmul.f32 %v1288, %v2875
        %v3006 = vmul.f32 %v1291, %v2885
        %v3007 = vmul.f32 %v1293, %v2895
        %v3008 = vmul.f32 %v2745, %v2745
        %v3009 = vmul.f32 %v2755, %v2755
        %v3010 = vmul.f32 %v2765, %v2765
        %v3011 = vmul.f32 %v2775, %v2775
        %v3012 = vmul.f32 %v2785, %v2785
        %v3013 = vmul.f32 %v2795, %v2795
        %v3014 = vmul.f32 %v2805, %v2805
        %v3015 = vmul.f32 %v2815, %v2815
        %v3016 = vmul.f32 %v2825, %v2825
        %v3017 = vmul.f32 %v2835, %v2835
        %v3018 = vmul.f32 %v2845, %v2845
        %v3019 = vmul.f32 %v2855, %v2855
        %v3020 = vmul.f32 %v2865, %v2865
        %v3021 = vmul.f32 %v2875, %v2875
        %v3022 = vmul.f32 %v2885, %v2885
        %v3023 = vmul.f32 %v2895, %v2895
        %v3024 = vmul.f32 %v3008, %v2745
        %v3025 = vmul.f32 %v3009, %v2755
        %v3026 = vmul.f32 %v3010, %v2765
        %v3027 = vmul.f32 %v3011, %v2775
        %v3028 = vmul.f32 %v3012, %v2785
        %v3029 = vmul.f32 %v3013, %v2795
        %v3030 = vmul.f32 %v3014, %v2805
        %v3031 = vmul.f32 %v3015, %v2815
        %v3032 = vmul.f32 %v3016, %v2825
        %v3033 = vmul.f32 %v3017, %v2835
        %v3034 = vmul.f32 %v3018, %v2845
        %v3035 = vmul.f32 %v3019, %v2855
        %v3036 = vmul.f32 %v3020, %v2865
        %v3037 = vmul.f32 %v3021, %v2875
        %v3038 = vmul.f32 %v3022, %v2885
        %v3039 = vmul.f32 %v3023, %v2895
        %v3040 = vmul.f32 %v1216, %v3024
        %v3041 = vmul.f32 %v1218, %v3025
        %v3042 = vmul.f32 %v1221, %v3026
        %v3043 = vmul.f32 %v1223, %v3027
        %v3044 = vmul.f32 %v1226, %v3028
        %v3045 = vmul.f32 %v1228, %v3029
        %v3046 = vmul.f32 %v1231, %v3030
        %v3047 = vmul.f32 %v1233, %v3031
        %v3048 = vmul.f32 %v1236, %v3032
        %v3049 = vmul.f32 %v1238, %v3033
        %v3050 = vmul.f32 %v1241, %v3034
        %v3051 = vmul.f32 %v1243, %v3035
        %v3052 = vmul.f32 %v1246, %v3036
        %v3053 = vmul.f32 %v1248, %v3037
        %v3054 = vmul.f32 %v1251, %v3038
        %v3055 = vmul.f32 %v1253, %v3039
        %v3056 = vmul.f32 %v3040, %v2976
        %v3057 = vmul.f32 %v3041, %v2977
        %v3058 = vmul.f32 %v3042, %v2978
        %v3059 = vmul.f32 %v3043, %v2979
        %v3060 = vmul.f32 %v3044, %v2980
        %v3061 = vmul.f32 %v3045, %v2981
        %v3062 = vmul.f32 %v3046, %v2982
        %v3063 = vmul.f32 %v3047, %v2983
        %v3064 = vmul.f32 %v3048, %v2984
        %v3065 = vmul.f32 %v3049, %v2985
        %v3066 = vmul.f32 %v3050, %v2986
        %v3067 = vmul.f32 %v3051, %v2987
        %v3068 = vmul.f32 %v3052, %v2988
        %v3069 = vmul.f32 %v3053, %v2989
        %v3070 = vmul.f32 %v3054, %v2990
        %v3071 = vmul.f32 %v3055, %v2991
        %v3072 = vsub.f32 %v2992, %v3056
        %v3073 = vsub.f32 %v2993, %v3057
        %v3074 = vsub.f32 %v2994, %v3058
        %v3075 = vsub.f32 %v2995, %v3059
        %v3076 = vsub.f32 %v2996, %v3060
        %v3077 = vsub.f32 %v2997, %v3061
        %v3078 = vsub.f32 %v2998, %v3062
        %v3079 = vsub.f32 %v2999, %v3063
        %v3080 = vsub.f32 %v3000, %v3064
        %v3081 = vsub.f32 %v3001, %v3065
        %v3082 = vsub.f32 %v3002, %v3066
        %v3083 = vsub.f32 %v3003, %v3067
        %v3084 = vsub.f32 %v3004, %v3068
        %v3085 = vsub.f32 %v3005, %v3069
        %v3086 = vsub.f32 %v3006, %v3070
        %v3087 = vsub.f32 %v3007, %v3071
        %v3088 = vmul.f32 %v3072, %v1939
        %v3089 = vmul.f32 %v3073, %v1939
        %v3090 = vmul.f32 %v3074, %v1939
        %v3091 = vmul.f32 %v3075, %v1939
        %v3092 = vmul.f32 %v3076, %v1939
        %v3093 = vmul.f32 %v3077, %v1939
        %v3094 = vmul.f32 %v3078, %v1939
        %v3095 = vmul.f32 %v3079, %v1939
        %v3096 = vmul.f32 %v3080, %v1939
        %v3097 = vmul.f32 %v3081, %v1939
        %v3098 = vmul.f32 %v3082, %v1939
        %v3099 = vmul.f32 %v3083, %v1939
        %v3100 = vmul.f32 %v3084, %v1939
        %v3101 = vmul.f32 %v3085, %v1939
        %v3102 = vmul.f32 %v3086, %v1939
        %v3103 = vmul.f32 %v3087, %v1939
        %v3104 = vadd.f32 %v2399, 1.0
        %v3105 = vadd.f32 %v2401, 1.0
        %v3106 = vadd.f32 %v2404, 1.0
        %v3107 = vadd.f32 %v2406, 1.0
        %v3108 = vadd.f32 %v2409, 1.0
        %v3109 = vadd.f32 %v2411, 1.0
        %v3110 = vadd.f32 %v2414, 1.0
        %v3111 = vadd.f32 %v2416, 1.0
        %v3112 = vadd.f32 %v2419, 1.0
        %v3113 = vadd.f32 %v2421, 1.0
        %v3114 = vadd.f32 %v2424, 1.0
        %v3115 = vadd.f32 %v2426, 1.0
        %v3116 = vadd.f32 %v2429, 1.0
        %v3117 = vadd.f32 %v2431, 1.0
        %v3118 = vadd.f32 %v2434, 1.0
        %v3119 = vadd.f32 %v2436, 1.0
        %v3120 = vmul.f32 %v2912, %v3104
        %v3121 = vmul.f32 %v2913, %v3105
        %v3122 = vmul.f32 %v2914, %v3106
        %v3123 = vmul.f32 %v2915, %v3107
        %v3124 = vmul.f32 %v2916, %v3108
        %v3125 = vmul.f32 %v2917, %v3109
        %v3126 = vmul.f32 %v2918, %v3110
        %v3127 = vmul.f32 %v2919, %v3111
        %v3128 = vmul.f32 %v2920, %v3112
        %v3129 = vmul.f32 %v2921, %v3113
        %v3130 = vmul.f32 %v2922, %v3114
        %v3131 = vmul.f32 %v2923, %v3115
        %v3132 = vmul.f32 %v2924, %v3116
        %v3133 = vmul.f32 %v2925, %v3117
        %v3134 = vmul.f32 %v2926, %v3118
        %v3135 = vmul.f32 %v2927, %v3119
        %v3136 = vadd.f32 %v3120, %v2488
        %v3137 = vadd.f32 %v3121, %v2490
        %v3138 = vadd.f32 %v3122, %v2493
        %v3139 = vadd.f32 %v3123, %v2495
        %v3140 = vadd.f32 %v3124, %v2498
        %v3141 = vadd.f32 %v3125, %v2500
        %v3142 = vadd.f32 %v3126, %v2503
        %v3143 = vadd.f32 %v3127, %v2505
        %v3144 = vadd.f32 %v3128, %v2508
        %v3145 = vadd.f32 %v3129, %v2510
        %v3146 = vadd.f32 %v3130, %v2513
        %v3147 = vadd.f32 %v3131, %v2515
        %v3148 = vadd.f32 %v3132, %v2518
        %v3149 = vadd.f32 %v3133, %v2520
        %v3150 = vadd.f32 %v3134, %v2523
        %v3151 = vadd.f32 %v3135, %v2525
        %v3152 = vmul.f32 %v3088, %v3104
        %v3153 = vmul.f32 %v3089, %v3105
        %v3154 = vmul.f32 %v3090, %v3106
        %v3155 = vmul.f32 %v3091, %v3107
        %v3156 = vmul.f32 %v3092, %v3108
        %v3157 = vmul.f32 %v3093, %v3109
        %v3158 = vmul.f32 %v3094, %v3110
        %v3159 = vmul.f32 %v3095, %v3111
        %v3160 = vmul.f32 %v3096, %v3112
        %v3161 = vmul.f32 %v3097, %v3113
        %v3162 = vmul.f32 %v3098, %v3114
        %v3163 = vmul.f32 %v3099, %v3115
        %v3164 = vmul.f32 %v3100, %v3116
        %v3165 = vmul.f32 %v3101, %v3117
        %v3166 = vmul.f32 %v3102, %v3118
        %v3167 = vmul.f32 %v3103, %v3119
        %v3168 = vmul.f32 %v2912, %v2439
        %v3169 = vmul.f32 %v2913, %v2441
        %v3170 = vmul.f32 %v2914, %v2444
        %v3171 = vmul.f32 %v2915, %v2446
        %v3172 = vmul.f32 %v2916, %v2449
        %v3173 = vmul.f32 %v2917, %v2451
        %v3174 = vmul.f32 %v2918, %v2454
        %v3175 = vmul.f32 %v2919, %v2456
        %v3176 = vmul.f32 %v2920, %v2459
        %v3177 = vmul.f32 %v2921, %v2461
        %v3178 = vmul.f32 %v2922, %v2464
        %v3179 = vmul.f32 %v2923, %v2466
        %v3180 = vmul.f32 %v2924, %v2469
        %v3181 = vmul.f32 %v2925, %v2471
        %v3182 = vmul.f32 %v2926, %v2474
        %v3183 = vmul.f32 %v2927, %v2476
        %v3184 = vadd.f32 %v3152, %v3168
        %v3185 = vadd.f32 %v3153, %v3169
        %v3186 = vadd.f32 %v3154, %v3170
        %v3187 = vadd.f32 %v3155, %v3171
        %v3188 = vadd.f32 %v3156, %v3172
        %v3189 = vadd.f32 %v3157, %v3173
        %v3190 = vadd.f32 %v3158, %v3174
        %v3191 = vadd.f32 %v3159, %v3175
        %v3192 = vadd.f32 %v3160, %v3176
        %v3193 = vadd.f32 %v3161, %v3177
        %v3194 = vadd.f32 %v3162, %v3178
        %v3195 = vadd.f32 %v3163, %v3179
        %v3196 = vadd.f32 %v3164, %v3180
        %v3197 = vadd.f32 %v3165, %v3181
        %v3198 = vadd.f32 %v3166, %v3182
        %v3199 = vadd.f32 %v3167, %v3183
        %v3200 = vadd.f32 %v3184, %v2528
        %v3201 = vadd.f32 %v3185, %v2530
        %v3202 = vadd.f32 %v3186, %v2533
        %v3203 = vadd.f32 %v3187, %v2535
        %v3204 = vadd.f32 %v3188, %v2538
        %v3205 = vadd.f32 %v3189, %v2540
        %v3206 = vadd.f32 %v3190, %v2543
        %v3207 = vadd.f32 %v3191, %v2545
        %v3208 = vadd.f32 %v3192, %v2548
        %v3209 = vadd.f32 %v3193, %v2550
        %v3210 = vadd.f32 %v3194, %v2553
        %v3211 = vadd.f32 %v3195, %v2555
        %v3212 = vadd.f32 %v3196, %v2558
        %v3213 = vadd.f32 %v3197, %v2560
        %v3214 = vadd.f32 %v3198, %v2563
        %v3215 = vadd.f32 %v3199, %v2565
        %v3216 = vpack.c.bf16 %v3136, %v3136
        %v3217 = vpack.c.bf16 %v3137, %v3137
        %v3218 = vpack.c.bf16 %v3138, %v3138
        %v3219 = vpack.c.bf16 %v3139, %v3139
        %v3220 = vpack.c.bf16 %v3140, %v3140
        %v3221 = vpack.c.bf16 %v3141, %v3141
        %v3222 = vpack.c.bf16 %v3142, %v3142
        %v3223 = vpack.c.bf16 %v3143, %v3143
        %v3224 = vpack.c.bf16 %v3144, %v3144
        %v3225 = vpack.c.bf16 %v3145, %v3145
        %v3226 = vpack.c.bf16 %v3146, %v3146
        %v3227 = vpack.c.bf16 %v3147, %v3147
        %v3228 = vpack.c.bf16 %v3148, %v3148
        %v3229 = vpack.c.bf16 %v3149, %v3149
        %v3230 = vpack.c.bf16 %v3150, %v3150
        %v3231 = vpack.c.bf16 %v3151, %v3151
        %v3232 = vpack.c.bf16 %v3200, %v3200
        %v3233 = vpack.c.bf16 %v3201, %v3201
        %v3234 = vpack.c.bf16 %v3202, %v3202
        %v3235 = vpack.c.bf16 %v3203, %v3203
        %v3236 = vpack.c.bf16 %v3204, %v3204
        %v3237 = vpack.c.bf16 %v3205, %v3205
        %v3238 = vpack.c.bf16 %v3206, %v3206
        %v3239 = vpack.c.bf16 %v3207, %v3207
        %v3240 = vpack.c.bf16 %v3208, %v3208
        %v3241 = vpack.c.bf16 %v3209, %v3209
        %v3242 = vpack.c.bf16 %v3210, %v3210
        %v3243 = vpack.c.bf16 %v3211, %v3211
        %v3244 = vpack.c.bf16 %v3212, %v3212
        %v3245 = vpack.c.bf16 %v3213, %v3213
        %v3246 = vpack.c.bf16 %v3214, %v3214
        %v3247 = vpack.c.bf16 %v3215, %v3215
        %v3264 = vunpack.c.l.b16 %v3216
        %v3265 = vunpack.c.l.b16 %v3217
        %v3266 = vunpack.c.l.b16 %v3218
        %v3267 = vunpack.c.l.b16 %v3219
        %v3268 = vunpack.c.l.b16 %v3220
        %v3269 = vunpack.c.l.b16 %v3221
        %v3270 = vunpack.c.l.b16 %v3222
        %v3271 = vunpack.c.l.b16 %v3223
        %v3272 = vunpack.c.l.b16 %v3224
        %v3273 = vunpack.c.l.b16 %v3225
        %v3274 = vunpack.c.l.b16 %v3226
        %v3275 = vunpack.c.l.b16 %v3227
        %v3276 = vunpack.c.l.b16 %v3228
        %v3277 = vunpack.c.l.b16 %v3229
        %v3278 = vunpack.c.l.b16 %v3230
        %v3279 = vunpack.c.l.b16 %v3231
        %v3280 = vpack.c.b16 %v3265, %v3264
        %v3281 = vpack.c.b16 %v3267, %v3266
        %v3282 = vpack.c.b16 %v3269, %v3268
        %v3283 = vpack.c.b16 %v3271, %v3270
        %v3284 = vpack.c.b16 %v3273, %v3272
        %v3285 = vpack.c.b16 %v3275, %v3274
        %v3286 = vpack.c.b16 %v3277, %v3276
        %v3287 = vpack.c.b16 %v3279, %v3278
        %v3312 = vunpack.c.l.b16 %v3232
        %v3313 = vunpack.c.l.b16 %v3233
        %v3314 = vunpack.c.l.b16 %v3234
        %v3315 = vunpack.c.l.b16 %v3235
        %v3316 = vunpack.c.l.b16 %v3236
        %v3317 = vunpack.c.l.b16 %v3237
        %v3318 = vunpack.c.l.b16 %v3238
        %v3319 = vunpack.c.l.b16 %v3239
        %v3320 = vunpack.c.l.b16 %v3240
        %v3321 = vunpack.c.l.b16 %v3241
        %v3322 = vunpack.c.l.b16 %v3242
        %v3323 = vunpack.c.l.b16 %v3243
        %v3324 = vunpack.c.l.b16 %v3244
        %v3325 = vunpack.c.l.b16 %v3245
        %v3326 = vunpack.c.l.b16 %v3246
        %v3327 = vunpack.c.l.b16 %v3247
        %v3328 = vpack.c.b16 %v3313, %v3312
        %v3329 = vpack.c.b16 %v3315, %v3314
        %v3330 = vpack.c.b16 %v3317, %v3316
        %v3331 = vpack.c.b16 %v3319, %v3318
        %v3332 = vpack.c.b16 %v3321, %v3320
        %v3333 = vpack.c.b16 %v3323, %v3322
        %v3334 = vpack.c.b16 %v3325, %v3324
        %v3335 = vpack.c.b16 %v3327, %v3326
        %v3360 = vunpack.c.l.b16 %v1627
        %v3361 = vunpack.c.h.b16 %v1627
        %v3362 = vunpack.c.l.b16 %v1628
        %v3363 = vunpack.c.h.b16 %v1628
        %v3364 = vunpack.c.l.b16 %v1629
        %v3365 = vunpack.c.h.b16 %v1629
        %v3366 = vunpack.c.l.b16 %v1630
        %v3367 = vunpack.c.h.b16 %v1630
        %v3368 = vunpack.c.l.b16 %v1631
        %v3369 = vunpack.c.h.b16 %v1631
        %v3370 = vunpack.c.l.b16 %v1632
        %v3371 = vunpack.c.h.b16 %v1632
        %v3372 = vunpack.c.l.b16 %v1633
        %v3373 = vunpack.c.h.b16 %v1633
        %v3374 = vunpack.c.l.b16 %v1634
        %v3375 = vunpack.c.h.b16 %v1634
        %v3376 = vunpack.c.l.b16 %v1635
        %v3377 = vunpack.c.h.b16 %v1635
        %v3378 = vunpack.c.l.b16 %v1636
        %v3379 = vunpack.c.h.b16 %v1636
        %v3380 = vunpack.c.l.b16 %v1637
        %v3381 = vunpack.c.h.b16 %v1637
        %v3382 = vunpack.c.l.b16 %v1638
        %v3383 = vunpack.c.h.b16 %v1638
        %v3384 = vunpack.c.l.b16 %v1639
        %v3385 = vunpack.c.h.b16 %v1639
        %v3386 = vunpack.c.l.b16 %v1640
        %v3387 = vunpack.c.h.b16 %v1640
        %v3388 = vunpack.c.l.b16 %v1641
        %v3389 = vunpack.c.h.b16 %v1641
        %v3390 = vunpack.c.l.b16 %v1642
        %v3391 = vunpack.c.h.b16 %v1642
        %v3392 = vpack.c.b16 %v3362, %v3360
        %v3393 = vpack.c.b16 %v3363, %v3361
        %v3394 = vpack.c.b16 %v3366, %v3364
        %v3395 = vpack.c.b16 %v3367, %v3365
        %v3396 = vpack.c.b16 %v3370, %v3368
        %v3397 = vpack.c.b16 %v3371, %v3369
        %v3398 = vpack.c.b16 %v3374, %v3372
        %v3399 = vpack.c.b16 %v3375, %v3373
        %v3400 = vpack.c.b16 %v3378, %v3376
        %v3401 = vpack.c.b16 %v3379, %v3377
        %v3402 = vpack.c.b16 %v3382, %v3380
        %v3403 = vpack.c.b16 %v3383, %v3381
        %v3404 = vpack.c.b16 %v3386, %v3384
        %v3405 = vpack.c.b16 %v3387, %v3385
        %v3406 = vpack.c.b16 %v3390, %v3388
        %v3407 = vpack.c.b16 %v3391, %v3389
        %3424 = vmatpush.bf16.msra.mxu0 %v3406
        %3425 = vmatpush.bf16.msra.mxu0 %v3404
        %3426 = vmatpush.bf16.msra.mxu0 %v3402
        %3427 = vmatpush.bf16.msra.mxu0 %v3400
        %3428 = vmatpush.bf16.msra.mxu0 %v3398
        %3429 = vmatpush.bf16.msra.mxu0 %v3396
        %3430 = vmatpush.bf16.msra.mxu0 %v3394
        %3431 = vmatpush.bf16.msra.mxu0 %v3392
        %3432 = vmatmul.bf16.gmra.mxu0 %v3280
        %v3433 = vpop.f32.mrf.mxu0
        %v3434 = vadd.f32 0.0, %v3433
        %v3435 = vpop.f32.mrf.mxu0
        %v3436 = vadd.f32 0.0, %v3435
        %3437 = vmatmul.bf16.gmra.mxu0 %v3281
        %v3438 = vpop.f32.mrf.mxu0
        %v3439 = vadd.f32 0.0, %v3438
        %v3440 = vpop.f32.mrf.mxu0
        %v3441 = vadd.f32 0.0, %v3440
        %3442 = vmatmul.bf16.gmra.mxu0 %v3282
        %v3443 = vpop.f32.mrf.mxu0
        %v3444 = vadd.f32 0.0, %v3443
        %v3445 = vpop.f32.mrf.mxu0
        %v3446 = vadd.f32 0.0, %v3445
        %3447 = vmatmul.bf16.gmra.mxu0 %v3283
        %v3448 = vpop.f32.mrf.mxu0
        %v3449 = vadd.f32 0.0, %v3448
        %v3450 = vpop.f32.mrf.mxu0
        %v3451 = vadd.f32 0.0, %v3450
        %3452 = vmatmul.bf16.gmra.mxu0 %v3284
        %v3453 = vpop.f32.mrf.mxu0
        %v3454 = vadd.f32 0.0, %v3453
        %v3455 = vpop.f32.mrf.mxu0
        %v3456 = vadd.f32 0.0, %v3455
        %3457 = vmatmul.bf16.gmra.mxu0 %v3285
        %v3458 = vpop.f32.mrf.mxu0
        %v3459 = vadd.f32 0.0, %v3458
        %v3460 = vpop.f32.mrf.mxu0
        %v3461 = vadd.f32 0.0, %v3460
        %3462 = vmatmul.bf16.gmra.mxu0 %v3286
        %v3463 = vpop.f32.mrf.mxu0
        %v3464 = vadd.f32 0.0, %v3463
        %v3465 = vpop.f32.mrf.mxu0
        %v3466 = vadd.f32 0.0, %v3465
        %3467 = vmatmul.bf16.gmra.mxu0 %v3287
        %v3468 = vpop.f32.mrf.mxu0
        %v3469 = vadd.f32 0.0, %v3468
        %v3470 = vpop.f32.mrf.mxu0
        %v3471 = vadd.f32 0.0, %v3470
        %3472 = vmatmul.bf16.gmra.mxu0 %v3328
        %v3473 = vpop.f32.mrf.mxu0
        %v3474 = vadd.f32 0.0, %v3473
        %v3475 = vpop.f32.mrf.mxu0
        %v3476 = vadd.f32 0.0, %v3475
        %3477 = vmatmul.bf16.gmra.mxu0 %v3329
        %v3478 = vpop.f32.mrf.mxu0
        %v3479 = vadd.f32 0.0, %v3478
        %v3480 = vpop.f32.mrf.mxu0
        %v3481 = vadd.f32 0.0, %v3480
        %3482 = vmatmul.bf16.gmra.mxu0 %v3330
        %v3483 = vpop.f32.mrf.mxu0
        %v3484 = vadd.f32 0.0, %v3483
        %v3485 = vpop.f32.mrf.mxu0
        %v3486 = vadd.f32 0.0, %v3485
        %3487 = vmatmul.bf16.gmra.mxu0 %v3331
        %v3488 = vpop.f32.mrf.mxu0
        %v3489 = vadd.f32 0.0, %v3488
        %v3490 = vpop.f32.mrf.mxu0
        %v3491 = vadd.f32 0.0, %v3490
        %3492 = vmatmul.bf16.gmra.mxu0 %v3332
        %v3493 = vpop.f32.mrf.mxu0
        %v3494 = vadd.f32 0.0, %v3493
        %v3495 = vpop.f32.mrf.mxu0
        %v3496 = vadd.f32 0.0, %v3495
        %3497 = vmatmul.bf16.gmra.mxu0 %v3333
        %v3498 = vpop.f32.mrf.mxu0
        %v3499 = vadd.f32 0.0, %v3498
        %v3500 = vpop.f32.mrf.mxu0
        %v3501 = vadd.f32 0.0, %v3500
        %3502 = vmatmul.bf16.gmra.mxu0 %v3334
        %v3503 = vpop.f32.mrf.mxu0
        %v3504 = vadd.f32 0.0, %v3503
        %v3505 = vpop.f32.mrf.mxu0
        %v3506 = vadd.f32 0.0, %v3505
        %3507 = vmatmul.bf16.gmra.mxu0 %v3335
        %v3508 = vpop.f32.mrf.mxu0
        %v3509 = vadd.f32 0.0, %v3508
        %v3510 = vpop.f32.mrf.mxu0
        %v3511 = vadd.f32 0.0, %v3510
        %3512 = vdwg.mxu0
        %3513 = vmatpush.bf16.msra.mxu0 %v3407
        %3514 = vmatpush.bf16.msra.mxu0 %v3405
        %3515 = vmatpush.bf16.msra.mxu0 %v3403
        %3516 = vmatpush.bf16.msra.mxu0 %v3401
        %3517 = vmatpush.bf16.msra.mxu0 %v3399
        %3518 = vmatpush.bf16.msra.mxu0 %v3397
        %3519 = vmatpush.bf16.msra.mxu0 %v3395
        %3520 = vmatpush.bf16.msra.mxu0 %v3393
        %3521 = vmatmul.bf16.gmra.mxu0 %v3280
        %v3522 = vpop.f32.mrf.mxu0
        %v3523 = vadd.f32 0.0, %v3522
        %v3524 = vpop.f32.mrf.mxu0
        %v3525 = vadd.f32 0.0, %v3524
        %3526 = vmatmul.bf16.gmra.mxu0 %v3281
        %v3527 = vpop.f32.mrf.mxu0
        %v3528 = vadd.f32 0.0, %v3527
        %v3529 = vpop.f32.mrf.mxu0
        %v3530 = vadd.f32 0.0, %v3529
        %3531 = vmatmul.bf16.gmra.mxu0 %v3282
        %v3532 = vpop.f32.mrf.mxu0
        %v3533 = vadd.f32 0.0, %v3532
        %v3534 = vpop.f32.mrf.mxu0
        %v3535 = vadd.f32 0.0, %v3534
        %3536 = vmatmul.bf16.gmra.mxu0 %v3283
        %v3537 = vpop.f32.mrf.mxu0
        %v3538 = vadd.f32 0.0, %v3537
        %v3539 = vpop.f32.mrf.mxu0
        %v3540 = vadd.f32 0.0, %v3539
        %3541 = vmatmul.bf16.gmra.mxu0 %v3284
        %v3542 = vpop.f32.mrf.mxu0
        %v3543 = vadd.f32 0.0, %v3542
        %v3544 = vpop.f32.mrf.mxu0
        %v3545 = vadd.f32 0.0, %v3544
        %3546 = vmatmul.bf16.gmra.mxu0 %v3285
        %v3547 = vpop.f32.mrf.mxu0
        %v3548 = vadd.f32 0.0, %v3547
        %v3549 = vpop.f32.mrf.mxu0
        %v3550 = vadd.f32 0.0, %v3549
        %3551 = vmatmul.bf16.gmra.mxu0 %v3286
        %v3552 = vpop.f32.mrf.mxu0
        %v3553 = vadd.f32 0.0, %v3552
        %v3554 = vpop.f32.mrf.mxu0
        %v3555 = vadd.f32 0.0, %v3554
        %3556 = vmatmul.bf16.gmra.mxu0 %v3287
        %v3557 = vpop.f32.mrf.mxu0
        %v3558 = vadd.f32 0.0, %v3557
        %v3559 = vpop.f32.mrf.mxu0
        %v3560 = vadd.f32 0.0, %v3559
        %3561 = vmatmul.bf16.gmra.mxu0 %v3328
        %v3562 = vpop.f32.mrf.mxu0
        %v3563 = vadd.f32 0.0, %v3562
        %v3564 = vpop.f32.mrf.mxu0
        %v3565 = vadd.f32 0.0, %v3564
        %3566 = vmatmul.bf16.gmra.mxu0 %v3329
        %v3567 = vpop.f32.mrf.mxu0
        %v3568 = vadd.f32 0.0, %v3567
        %v3569 = vpop.f32.mrf.mxu0
        %v3570 = vadd.f32 0.0, %v3569
        %3571 = vmatmul.bf16.gmra.mxu0 %v3330
        %v3572 = vpop.f32.mrf.mxu0
        %v3573 = vadd.f32 0.0, %v3572
        %v3574 = vpop.f32.mrf.mxu0
        %v3575 = vadd.f32 0.0, %v3574
        %3576 = vmatmul.bf16.gmra.mxu0 %v3331
        %v3577 = vpop.f32.mrf.mxu0
        %v3578 = vadd.f32 0.0, %v3577
        %v3579 = vpop.f32.mrf.mxu0
        %v3580 = vadd.f32 0.0, %v3579
        %3581 = vmatmul.bf16.gmra.mxu0 %v3332
        %v3582 = vpop.f32.mrf.mxu0
        %v3583 = vadd.f32 0.0, %v3582
        %v3584 = vpop.f32.mrf.mxu0
        %v3585 = vadd.f32 0.0, %v3584
        %3586 = vmatmul.bf16.gmra.mxu0 %v3333
        %v3587 = vpop.f32.mrf.mxu0
        %v3588 = vadd.f32 0.0, %v3587
        %v3589 = vpop.f32.mrf.mxu0
        %v3590 = vadd.f32 0.0, %v3589
        %3591 = vmatmul.bf16.gmra.mxu0 %v3334
        %v3592 = vpop.f32.mrf.mxu0
        %v3593 = vadd.f32 0.0, %v3592
        %v3594 = vpop.f32.mrf.mxu0
        %v3595 = vadd.f32 0.0, %v3594
        %3596 = vmatmul.bf16.gmra.mxu0 %v3335
        %v3597 = vpop.f32.mrf.mxu0
        %v3598 = vadd.f32 0.0, %v3597
        %v3599 = vpop.f32.mrf.mxu0
        %v3600 = vadd.f32 0.0, %v3599
        %3601 = vdwg.mxu0
        %v3602 = vxor.u32 %v3434, 2147483648
        %v3603 = vxor.u32 %v3523, 2147483648
        %v3604 = vxor.u32 %v3436, 2147483648
        %v3605 = vxor.u32 %v3525, 2147483648
        %v3606 = vxor.u32 %v3439, 2147483648
        %v3607 = vxor.u32 %v3528, 2147483648
        %v3608 = vxor.u32 %v3441, 2147483648
        %v3609 = vxor.u32 %v3530, 2147483648
        %v3610 = vxor.u32 %v3444, 2147483648
        %v3611 = vxor.u32 %v3533, 2147483648
        %v3612 = vxor.u32 %v3446, 2147483648
        %v3613 = vxor.u32 %v3535, 2147483648
        %v3614 = vxor.u32 %v3449, 2147483648
        %v3615 = vxor.u32 %v3538, 2147483648
        %v3616 = vxor.u32 %v3451, 2147483648
        %v3617 = vxor.u32 %v3540, 2147483648
        %v3618 = vxor.u32 %v3454, 2147483648
        %v3619 = vxor.u32 %v3543, 2147483648
        %v3620 = vxor.u32 %v3456, 2147483648
        %v3621 = vxor.u32 %v3545, 2147483648
        %v3622 = vxor.u32 %v3459, 2147483648
        %v3623 = vxor.u32 %v3548, 2147483648
        %v3624 = vxor.u32 %v3461, 2147483648
        %v3625 = vxor.u32 %v3550, 2147483648
        %v3626 = vxor.u32 %v3464, 2147483648
        %v3627 = vxor.u32 %v3553, 2147483648
        %v3628 = vxor.u32 %v3466, 2147483648
        %v3629 = vxor.u32 %v3555, 2147483648
        %v3630 = vxor.u32 %v3469, 2147483648
        %v3631 = vxor.u32 %v3558, 2147483648
        %v3632 = vxor.u32 %v3471, 2147483648
        %v3633 = vxor.u32 %v3560, 2147483648
        %v3634 = vmul.f32 %v3602, 1.442695
        %v3635 = vpow.pop %v3634
        %v3636 = vmul.f32 %v3603, 1.442695
        %v3637 = vpow.pop %v3636
        %v3638 = vmul.f32 %v3604, 1.442695
        %v3639 = vpow.pop %v3638
        %v3640 = vmul.f32 %v3605, 1.442695
        %v3641 = vpow.pop %v3640
        %v3642 = vmul.f32 %v3606, 1.442695
        %v3643 = vpow.pop %v3642
        %v3644 = vmul.f32 %v3607, 1.442695
        %v3645 = vpow.pop %v3644
        %v3646 = vmul.f32 %v3608, 1.442695
        %v3647 = vpow.pop %v3646
        %v3648 = vmul.f32 %v3609, 1.442695
        %v3649 = vpow.pop %v3648
        %v3650 = vmul.f32 %v3610, 1.442695
        %v3651 = vpow.pop %v3650
        %v3652 = vmul.f32 %v3611, 1.442695
        %v3653 = vpow.pop %v3652
        %v3654 = vmul.f32 %v3612, 1.442695
        %v3655 = vpow.pop %v3654
        %v3656 = vmul.f32 %v3613, 1.442695
        %v3657 = vpow.pop %v3656
        %v3658 = vmul.f32 %v3614, 1.442695
        %v3659 = vpow.pop %v3658
        %v3660 = vmul.f32 %v3615, 1.442695
        %v3661 = vpow.pop %v3660
        %v3662 = vmul.f32 %v3616, 1.442695
        %v3663 = vpow.pop %v3662
        %v3664 = vmul.f32 %v3617, 1.442695
        %v3665 = vpow.pop %v3664
        %v3666 = vmul.f32 %v3618, 1.442695
        %v3667 = vpow.pop %v3666
        %v3668 = vmul.f32 %v3619, 1.442695
        %v3669 = vpow.pop %v3668
        %v3670 = vmul.f32 %v3620, 1.442695
        %v3671 = vpow.pop %v3670
        %v3672 = vmul.f32 %v3621, 1.442695
        %v3673 = vpow.pop %v3672
        %v3674 = vmul.f32 %v3622, 1.442695
        %v3675 = vpow.pop %v3674
        %v3676 = vmul.f32 %v3623, 1.442695
        %v3677 = vpow.pop %v3676
        %v3678 = vmul.f32 %v3624, 1.442695
        %v3679 = vpow.pop %v3678
        %v3680 = vmul.f32 %v3625, 1.442695
        %v3681 = vpow.pop %v3680
        %v3682 = vmul.f32 %v3626, 1.442695
        %v3683 = vpow.pop %v3682
        %v3684 = vmul.f32 %v3627, 1.442695
        %v3685 = vpow.pop %v3684
        %v3686 = vmul.f32 %v3628, 1.442695
        %v3687 = vpow.pop %v3686
        %v3688 = vmul.f32 %v3629, 1.442695
        %v3689 = vpow.pop %v3688
        %v3690 = vmul.f32 %v3630, 1.442695
        %v3691 = vpow.pop %v3690
        %v3692 = vmul.f32 %v3631, 1.442695
        %v3693 = vpow.pop %v3692
        %v3694 = vmul.f32 %v3632, 1.442695
        %v3695 = vpow.pop %v3694
        %v3696 = vmul.f32 %v3633, 1.442695
        %v3697 = vpow.pop %v3696
        %v3698 = vadd.f32 %v3635, 1.0
        %v3699 = vadd.f32 %v3637, 1.0
        %v3700 = vadd.f32 %v3639, 1.0
        %v3701 = vadd.f32 %v3641, 1.0
        %v3702 = vadd.f32 %v3643, 1.0
        %v3703 = vadd.f32 %v3645, 1.0
        %v3704 = vadd.f32 %v3647, 1.0
        %v3705 = vadd.f32 %v3649, 1.0
        %v3706 = vadd.f32 %v3651, 1.0
        %v3707 = vadd.f32 %v3653, 1.0
        %v3708 = vadd.f32 %v3655, 1.0
        %v3709 = vadd.f32 %v3657, 1.0
        %v3710 = vadd.f32 %v3659, 1.0
        %v3711 = vadd.f32 %v3661, 1.0
        %v3712 = vadd.f32 %v3663, 1.0
        %v3713 = vadd.f32 %v3665, 1.0
        %v3714 = vadd.f32 %v3667, 1.0
        %v3715 = vadd.f32 %v3669, 1.0
        %v3716 = vadd.f32 %v3671, 1.0
        %v3717 = vadd.f32 %v3673, 1.0
        %v3718 = vadd.f32 %v3675, 1.0
        %v3719 = vadd.f32 %v3677, 1.0
        %v3720 = vadd.f32 %v3679, 1.0
        %v3721 = vadd.f32 %v3681, 1.0
        %v3722 = vadd.f32 %v3683, 1.0
        %v3723 = vadd.f32 %v3685, 1.0
        %v3724 = vadd.f32 %v3687, 1.0
        %v3725 = vadd.f32 %v3689, 1.0
        %v3726 = vadd.f32 %v3691, 1.0
        %v3727 = vadd.f32 %v3693, 1.0
        %v3728 = vadd.f32 %v3695, 1.0
        %v3729 = vadd.f32 %v3697, 1.0
        %v3730 = vrcp.pop %v3698
        %v3731 = vmul.f32 %v3698, %v3730
        %v3732 = vsub.f32 1.0, %v3731
        %v3733 = vmul.f32 %v3730, %v3732
        %v3734 = vadd.f32 %v3730, %v3733
        %vm3735 = vweird.f32 %v3698
        %vm3736 = vweird.f32 %v3730
        %vm3737 = vmor %vm3735, %vm3736
        %v3738 = vsel %vm3737, %v3730, %v3734
        %v3739 = vand.u32 2147483647, %v3698
        %vm3740 = vcmp.eq.f32.partialorder %v3739, 8.507059e+37
        %v3741 = vand.u32 %v3698, 2147483648
        %v3742 = vor.u32 1.1754944e-38, %v3741
        %v3743 = vsel %vm3740, %v3742, %v3738
        %v3744 = vmul.f32 1.0, %v3743
        %v3745 = vrcp.pop %v3699
        %v3746 = vmul.f32 %v3699, %v3745
        %v3747 = vsub.f32 1.0, %v3746
        %v3748 = vmul.f32 %v3745, %v3747
        %v3749 = vadd.f32 %v3745, %v3748
        %vm3750 = vweird.f32 %v3699
        %vm3751 = vweird.f32 %v3745
        %vm3752 = vmor %vm3750, %vm3751
        %v3753 = vsel %vm3752, %v3745, %v3749
        %v3754 = vand.u32 2147483647, %v3699
        %vm3755 = vcmp.eq.f32.partialorder %v3754, 8.507059e+37
        %v3756 = vand.u32 %v3699, 2147483648
        %v3757 = vor.u32 1.1754944e-38, %v3756
        %v3758 = vsel %vm3755, %v3757, %v3753
        %v3759 = vmul.f32 1.0, %v3758
        %v3760 = vrcp.pop %v3700
        %v3761 = vmul.f32 %v3700, %v3760
        %v3762 = vsub.f32 1.0, %v3761
        %v3763 = vmul.f32 %v3760, %v3762
        %v3764 = vadd.f32 %v3760, %v3763
        %vm3765 = vweird.f32 %v3700
        %vm3766 = vweird.f32 %v3760
        %vm3767 = vmor %vm3765, %vm3766
        %v3768 = vsel %vm3767, %v3760, %v3764
        %v3769 = vand.u32 2147483647, %v3700
        %vm3770 = vcmp.eq.f32.partialorder %v3769, 8.507059e+37
        %v3771 = vand.u32 %v3700, 2147483648
        %v3772 = vor.u32 1.1754944e-38, %v3771
        %v3773 = vsel %vm3770, %v3772, %v3768
        %v3774 = vmul.f32 1.0, %v3773
        %v3775 = vrcp.pop %v3701
        %v3776 = vmul.f32 %v3701, %v3775
        %v3777 = vsub.f32 1.0, %v3776
        %v3778 = vmul.f32 %v3775, %v3777
        %v3779 = vadd.f32 %v3775, %v3778
        %vm3780 = vweird.f32 %v3701
        %vm3781 = vweird.f32 %v3775
        %vm3782 = vmor %vm3780, %vm3781
        %v3783 = vsel %vm3782, %v3775, %v3779
        %v3784 = vand.u32 2147483647, %v3701
        %vm3785 = vcmp.eq.f32.partialorder %v3784, 8.507059e+37
        %v3786 = vand.u32 %v3701, 2147483648
        %v3787 = vor.u32 1.1754944e-38, %v3786
        %v3788 = vsel %vm3785, %v3787, %v3783
        %v3789 = vmul.f32 1.0, %v3788
        %v3790 = vrcp.pop %v3702
        %v3791 = vmul.f32 %v3702, %v3790
        %v3792 = vsub.f32 1.0, %v3791
        %v3793 = vmul.f32 %v3790, %v3792
        %v3794 = vadd.f32 %v3790, %v3793
        %vm3795 = vweird.f32 %v3702
        %vm3796 = vweird.f32 %v3790
        %vm3797 = vmor %vm3795, %vm3796
        %v3798 = vsel %vm3797, %v3790, %v3794
        %v3799 = vand.u32 2147483647, %v3702
        %vm3800 = vcmp.eq.f32.partialorder %v3799, 8.507059e+37
        %v3801 = vand.u32 %v3702, 2147483648
        %v3802 = vor.u32 1.1754944e-38, %v3801
        %v3803 = vsel %vm3800, %v3802, %v3798
        %v3804 = vmul.f32 1.0, %v3803
        %v3805 = vrcp.pop %v3703
        %v3806 = vmul.f32 %v3703, %v3805
        %v3807 = vsub.f32 1.0, %v3806
        %v3808 = vmul.f32 %v3805, %v3807
        %v3809 = vadd.f32 %v3805, %v3808
        %vm3810 = vweird.f32 %v3703
        %vm3811 = vweird.f32 %v3805
        %vm3812 = vmor %vm3810, %vm3811
        %v3813 = vsel %vm3812, %v3805, %v3809
        %v3814 = vand.u32 2147483647, %v3703
        %vm3815 = vcmp.eq.f32.partialorder %v3814, 8.507059e+37
        %v3816 = vand.u32 %v3703, 2147483648
        %v3817 = vor.u32 1.1754944e-38, %v3816
        %v3818 = vsel %vm3815, %v3817, %v3813
        %v3819 = vmul.f32 1.0, %v3818
        %v3820 = vrcp.pop %v3704
        %v3821 = vmul.f32 %v3704, %v3820
        %v3822 = vsub.f32 1.0, %v3821
        %v3823 = vmul.f32 %v3820, %v3822
        %v3824 = vadd.f32 %v3820, %v3823
        %vm3825 = vweird.f32 %v3704
        %vm3826 = vweird.f32 %v3820
        %vm3827 = vmor %vm3825, %vm3826
        %v3828 = vsel %vm3827, %v3820, %v3824
        %v3829 = vand.u32 2147483647, %v3704
        %vm3830 = vcmp.eq.f32.partialorder %v3829, 8.507059e+37
        %v3831 = vand.u32 %v3704, 2147483648
        %v3832 = vor.u32 1.1754944e-38, %v3831
        %v3833 = vsel %vm3830, %v3832, %v3828
        %v3834 = vmul.f32 1.0, %v3833
        %v3835 = vrcp.pop %v3705
        %v3836 = vmul.f32 %v3705, %v3835
        %v3837 = vsub.f32 1.0, %v3836
        %v3838 = vmul.f32 %v3835, %v3837
        %v3839 = vadd.f32 %v3835, %v3838
        %vm3840 = vweird.f32 %v3705
        %vm3841 = vweird.f32 %v3835
        %vm3842 = vmor %vm3840, %vm3841
        %v3843 = vsel %vm3842, %v3835, %v3839
        %v3844 = vand.u32 2147483647, %v3705
        %vm3845 = vcmp.eq.f32.partialorder %v3844, 8.507059e+37
        %v3846 = vand.u32 %v3705, 2147483648
        %v3847 = vor.u32 1.1754944e-38, %v3846
        %v3848 = vsel %vm3845, %v3847, %v3843
        %v3849 = vmul.f32 1.0, %v3848
        %v3850 = vrcp.pop %v3706
        %v3851 = vmul.f32 %v3706, %v3850
        %v3852 = vsub.f32 1.0, %v3851
        %v3853 = vmul.f32 %v3850, %v3852
        %v3854 = vadd.f32 %v3850, %v3853
        %vm3855 = vweird.f32 %v3706
        %vm3856 = vweird.f32 %v3850
        %vm3857 = vmor %vm3855, %vm3856
        %v3858 = vsel %vm3857, %v3850, %v3854
        %v3859 = vand.u32 2147483647, %v3706
        %vm3860 = vcmp.eq.f32.partialorder %v3859, 8.507059e+37
        %v3861 = vand.u32 %v3706, 2147483648
        %v3862 = vor.u32 1.1754944e-38, %v3861
        %v3863 = vsel %vm3860, %v3862, %v3858
        %v3864 = vmul.f32 1.0, %v3863
        %v3865 = vrcp.pop %v3707
        %v3866 = vmul.f32 %v3707, %v3865
        %v3867 = vsub.f32 1.0, %v3866
        %v3868 = vmul.f32 %v3865, %v3867
        %v3869 = vadd.f32 %v3865, %v3868
        %vm3870 = vweird.f32 %v3707
        %vm3871 = vweird.f32 %v3865
        %vm3872 = vmor %vm3870, %vm3871
        %v3873 = vsel %vm3872, %v3865, %v3869
        %v3874 = vand.u32 2147483647, %v3707
        %vm3875 = vcmp.eq.f32.partialorder %v3874, 8.507059e+37
        %v3876 = vand.u32 %v3707, 2147483648
        %v3877 = vor.u32 1.1754944e-38, %v3876
        %v3878 = vsel %vm3875, %v3877, %v3873
        %v3879 = vmul.f32 1.0, %v3878
        %v3880 = vrcp.pop %v3708
        %v3881 = vmul.f32 %v3708, %v3880
        %v3882 = vsub.f32 1.0, %v3881
        %v3883 = vmul.f32 %v3880, %v3882
        %v3884 = vadd.f32 %v3880, %v3883
        %vm3885 = vweird.f32 %v3708
        %vm3886 = vweird.f32 %v3880
        %vm3887 = vmor %vm3885, %vm3886
        %v3888 = vsel %vm3887, %v3880, %v3884
        %v3889 = vand.u32 2147483647, %v3708
        %vm3890 = vcmp.eq.f32.partialorder %v3889, 8.507059e+37
        %v3891 = vand.u32 %v3708, 2147483648
        %v3892 = vor.u32 1.1754944e-38, %v3891
        %v3893 = vsel %vm3890, %v3892, %v3888
        %v3894 = vmul.f32 1.0, %v3893
        %v3895 = vrcp.pop %v3709
        %v3896 = vmul.f32 %v3709, %v3895
        %v3897 = vsub.f32 1.0, %v3896
        %v3898 = vmul.f32 %v3895, %v3897
        %v3899 = vadd.f32 %v3895, %v3898
        %vm3900 = vweird.f32 %v3709
        %vm3901 = vweird.f32 %v3895
        %vm3902 = vmor %vm3900, %vm3901
        %v3903 = vsel %vm3902, %v3895, %v3899
        %v3904 = vand.u32 2147483647, %v3709
        %vm3905 = vcmp.eq.f32.partialorder %v3904, 8.507059e+37
        %v3906 = vand.u32 %v3709, 2147483648
        %v3907 = vor.u32 1.1754944e-38, %v3906
        %v3908 = vsel %vm3905, %v3907, %v3903
        %v3909 = vmul.f32 1.0, %v3908
        %v3910 = vrcp.pop %v3710
        %v3911 = vmul.f32 %v3710, %v3910
        %v3912 = vsub.f32 1.0, %v3911
        %v3913 = vmul.f32 %v3910, %v3912
        %v3914 = vadd.f32 %v3910, %v3913
        %vm3915 = vweird.f32 %v3710
        %vm3916 = vweird.f32 %v3910
        %vm3917 = vmor %vm3915, %vm3916
        %v3918 = vsel %vm3917, %v3910, %v3914
        %v3919 = vand.u32 2147483647, %v3710
        %vm3920 = vcmp.eq.f32.partialorder %v3919, 8.507059e+37
        %v3921 = vand.u32 %v3710, 2147483648
        %v3922 = vor.u32 1.1754944e-38, %v3921
        %v3923 = vsel %vm3920, %v3922, %v3918
        %v3924 = vmul.f32 1.0, %v3923
        %v3925 = vrcp.pop %v3711
        %v3926 = vmul.f32 %v3711, %v3925
        %v3927 = vsub.f32 1.0, %v3926
        %v3928 = vmul.f32 %v3925, %v3927
        %v3929 = vadd.f32 %v3925, %v3928
        %vm3930 = vweird.f32 %v3711
        %vm3931 = vweird.f32 %v3925
        %vm3932 = vmor %vm3930, %vm3931
        %v3933 = vsel %vm3932, %v3925, %v3929
        %v3934 = vand.u32 2147483647, %v3711
        %vm3935 = vcmp.eq.f32.partialorder %v3934, 8.507059e+37
        %v3936 = vand.u32 %v3711, 2147483648
        %v3937 = vor.u32 1.1754944e-38, %v3936
        %v3938 = vsel %vm3935, %v3937, %v3933
        %v3939 = vmul.f32 1.0, %v3938
        %v3940 = vrcp.pop %v3712
        %v3941 = vmul.f32 %v3712, %v3940
        %v3942 = vsub.f32 1.0, %v3941
        %v3943 = vmul.f32 %v3940, %v3942
        %v3944 = vadd.f32 %v3940, %v3943
        %vm3945 = vweird.f32 %v3712
        %vm3946 = vweird.f32 %v3940
        %vm3947 = vmor %vm3945, %vm3946
        %v3948 = vsel %vm3947, %v3940, %v3944
        %v3949 = vand.u32 2147483647, %v3712
        %vm3950 = vcmp.eq.f32.partialorder %v3949, 8.507059e+37
        %v3951 = vand.u32 %v3712, 2147483648
        %v3952 = vor.u32 1.1754944e-38, %v3951
        %v3953 = vsel %vm3950, %v3952, %v3948
        %v3954 = vmul.f32 1.0, %v3953
        %v3955 = vrcp.pop %v3713
        %v3956 = vmul.f32 %v3713, %v3955
        %v3957 = vsub.f32 1.0, %v3956
        %v3958 = vmul.f32 %v3955, %v3957
        %v3959 = vadd.f32 %v3955, %v3958
        %vm3960 = vweird.f32 %v3713
        %vm3961 = vweird.f32 %v3955
        %vm3962 = vmor %vm3960, %vm3961
        %v3963 = vsel %vm3962, %v3955, %v3959
        %v3964 = vand.u32 2147483647, %v3713
        %vm3965 = vcmp.eq.f32.partialorder %v3964, 8.507059e+37
        %v3966 = vand.u32 %v3713, 2147483648
        %v3967 = vor.u32 1.1754944e-38, %v3966
        %v3968 = vsel %vm3965, %v3967, %v3963
        %v3969 = vmul.f32 1.0, %v3968
        %v3970 = vrcp.pop %v3714
        %v3971 = vmul.f32 %v3714, %v3970
        %v3972 = vsub.f32 1.0, %v3971
        %v3973 = vmul.f32 %v3970, %v3972
        %v3974 = vadd.f32 %v3970, %v3973
        %vm3975 = vweird.f32 %v3714
        %vm3976 = vweird.f32 %v3970
        %vm3977 = vmor %vm3975, %vm3976
        %v3978 = vsel %vm3977, %v3970, %v3974
        %v3979 = vand.u32 2147483647, %v3714
        %vm3980 = vcmp.eq.f32.partialorder %v3979, 8.507059e+37
        %v3981 = vand.u32 %v3714, 2147483648
        %v3982 = vor.u32 1.1754944e-38, %v3981
        %v3983 = vsel %vm3980, %v3982, %v3978
        %v3984 = vmul.f32 1.0, %v3983
        %v3985 = vrcp.pop %v3715
        %v3986 = vmul.f32 %v3715, %v3985
        %v3987 = vsub.f32 1.0, %v3986
        %v3988 = vmul.f32 %v3985, %v3987
        %v3989 = vadd.f32 %v3985, %v3988
        %vm3990 = vweird.f32 %v3715
        %vm3991 = vweird.f32 %v3985
        %vm3992 = vmor %vm3990, %vm3991
        %v3993 = vsel %vm3992, %v3985, %v3989
        %v3994 = vand.u32 2147483647, %v3715
        %vm3995 = vcmp.eq.f32.partialorder %v3994, 8.507059e+37
        %v3996 = vand.u32 %v3715, 2147483648
        %v3997 = vor.u32 1.1754944e-38, %v3996
        %v3998 = vsel %vm3995, %v3997, %v3993
        %v3999 = vmul.f32 1.0, %v3998
        %v4000 = vrcp.pop %v3716
        %v4001 = vmul.f32 %v3716, %v4000
        %v4002 = vsub.f32 1.0, %v4001
        %v4003 = vmul.f32 %v4000, %v4002
        %v4004 = vadd.f32 %v4000, %v4003
        %vm4005 = vweird.f32 %v3716
        %vm4006 = vweird.f32 %v4000
        %vm4007 = vmor %vm4005, %vm4006
        %v4008 = vsel %vm4007, %v4000, %v4004
        %v4009 = vand.u32 2147483647, %v3716
        %vm4010 = vcmp.eq.f32.partialorder %v4009, 8.507059e+37
        %v4011 = vand.u32 %v3716, 2147483648
        %v4012 = vor.u32 1.1754944e-38, %v4011
        %v4013 = vsel %vm4010, %v4012, %v4008
        %v4014 = vmul.f32 1.0, %v4013
        %v4015 = vrcp.pop %v3717
        %v4016 = vmul.f32 %v3717, %v4015
        %v4017 = vsub.f32 1.0, %v4016
        %v4018 = vmul.f32 %v4015, %v4017
        %v4019 = vadd.f32 %v4015, %v4018
        %vm4020 = vweird.f32 %v3717
        %vm4021 = vweird.f32 %v4015
        %vm4022 = vmor %vm4020, %vm4021
        %v4023 = vsel %vm4022, %v4015, %v4019
        %v4024 = vand.u32 2147483647, %v3717
        %vm4025 = vcmp.eq.f32.partialorder %v4024, 8.507059e+37
        %v4026 = vand.u32 %v3717, 2147483648
        %v4027 = vor.u32 1.1754944e-38, %v4026
        %v4028 = vsel %vm4025, %v4027, %v4023
        %v4029 = vmul.f32 1.0, %v4028
        %v4030 = vrcp.pop %v3718
        %v4031 = vmul.f32 %v3718, %v4030
        %v4032 = vsub.f32 1.0, %v4031
        %v4033 = vmul.f32 %v4030, %v4032
        %v4034 = vadd.f32 %v4030, %v4033
        %vm4035 = vweird.f32 %v3718
        %vm4036 = vweird.f32 %v4030
        %vm4037 = vmor %vm4035, %vm4036
        %v4038 = vsel %vm4037, %v4030, %v4034
        %v4039 = vand.u32 2147483647, %v3718
        %vm4040 = vcmp.eq.f32.partialorder %v4039, 8.507059e+37
        %v4041 = vand.u32 %v3718, 2147483648
        %v4042 = vor.u32 1.1754944e-38, %v4041
        %v4043 = vsel %vm4040, %v4042, %v4038
        %v4044 = vmul.f32 1.0, %v4043
        %v4045 = vrcp.pop %v3719
        %v4046 = vmul.f32 %v3719, %v4045
        %v4047 = vsub.f32 1.0, %v4046
        %v4048 = vmul.f32 %v4045, %v4047
        %v4049 = vadd.f32 %v4045, %v4048
        %vm4050 = vweird.f32 %v3719
        %vm4051 = vweird.f32 %v4045
        %vm4052 = vmor %vm4050, %vm4051
        %v4053 = vsel %vm4052, %v4045, %v4049
        %v4054 = vand.u32 2147483647, %v3719
        %vm4055 = vcmp.eq.f32.partialorder %v4054, 8.507059e+37
        %v4056 = vand.u32 %v3719, 2147483648
        %v4057 = vor.u32 1.1754944e-38, %v4056
        %v4058 = vsel %vm4055, %v4057, %v4053
        %v4059 = vmul.f32 1.0, %v4058
        %v4060 = vrcp.pop %v3720
        %v4061 = vmul.f32 %v3720, %v4060
        %v4062 = vsub.f32 1.0, %v4061
        %v4063 = vmul.f32 %v4060, %v4062
        %v4064 = vadd.f32 %v4060, %v4063
        %vm4065 = vweird.f32 %v3720
        %vm4066 = vweird.f32 %v4060
        %vm4067 = vmor %vm4065, %vm4066
        %v4068 = vsel %vm4067, %v4060, %v4064
        %v4069 = vand.u32 2147483647, %v3720
        %vm4070 = vcmp.eq.f32.partialorder %v4069, 8.507059e+37
        %v4071 = vand.u32 %v3720, 2147483648
        %v4072 = vor.u32 1.1754944e-38, %v4071
        %v4073 = vsel %vm4070, %v4072, %v4068
        %v4074 = vmul.f32 1.0, %v4073
        %v4075 = vrcp.pop %v3721
        %v4076 = vmul.f32 %v3721, %v4075
        %v4077 = vsub.f32 1.0, %v4076
        %v4078 = vmul.f32 %v4075, %v4077
        %v4079 = vadd.f32 %v4075, %v4078
        %vm4080 = vweird.f32 %v3721
        %vm4081 = vweird.f32 %v4075
        %vm4082 = vmor %vm4080, %vm4081
        %v4083 = vsel %vm4082, %v4075, %v4079
        %v4084 = vand.u32 2147483647, %v3721
        %vm4085 = vcmp.eq.f32.partialorder %v4084, 8.507059e+37
        %v4086 = vand.u32 %v3721, 2147483648
        %v4087 = vor.u32 1.1754944e-38, %v4086
        %v4088 = vsel %vm4085, %v4087, %v4083
        %v4089 = vmul.f32 1.0, %v4088
        %v4090 = vrcp.pop %v3722
        %v4091 = vmul.f32 %v3722, %v4090
        %v4092 = vsub.f32 1.0, %v4091
        %v4093 = vmul.f32 %v4090, %v4092
        %v4094 = vadd.f32 %v4090, %v4093
        %vm4095 = vweird.f32 %v3722
        %vm4096 = vweird.f32 %v4090
        %vm4097 = vmor %vm4095, %vm4096
        %v4098 = vsel %vm4097, %v4090, %v4094
        %v4099 = vand.u32 2147483647, %v3722
        %vm4100 = vcmp.eq.f32.partialorder %v4099, 8.507059e+37
        %v4101 = vand.u32 %v3722, 2147483648
        %v4102 = vor.u32 1.1754944e-38, %v4101
        %v4103 = vsel %vm4100, %v4102, %v4098
        %v4104 = vmul.f32 1.0, %v4103
        %v4105 = vrcp.pop %v3723
        %v4106 = vmul.f32 %v3723, %v4105
        %v4107 = vsub.f32 1.0, %v4106
        %v4108 = vmul.f32 %v4105, %v4107
        %v4109 = vadd.f32 %v4105, %v4108
        %vm4110 = vweird.f32 %v3723
        %vm4111 = vweird.f32 %v4105
        %vm4112 = vmor %vm4110, %vm4111
        %v4113 = vsel %vm4112, %v4105, %v4109
        %v4114 = vand.u32 2147483647, %v3723
        %vm4115 = vcmp.eq.f32.partialorder %v4114, 8.507059e+37
        %v4116 = vand.u32 %v3723, 2147483648
        %v4117 = vor.u32 1.1754944e-38, %v4116
        %v4118 = vsel %vm4115, %v4117, %v4113
        %v4119 = vmul.f32 1.0, %v4118
        %v4120 = vrcp.pop %v3724
        %v4121 = vmul.f32 %v3724, %v4120
        %v4122 = vsub.f32 1.0, %v4121
        %v4123 = vmul.f32 %v4120, %v4122
        %v4124 = vadd.f32 %v4120, %v4123
        %vm4125 = vweird.f32 %v3724
        %vm4126 = vweird.f32 %v4120
        %vm4127 = vmor %vm4125, %vm4126
        %v4128 = vsel %vm4127, %v4120, %v4124
        %v4129 = vand.u32 2147483647, %v3724
        %vm4130 = vcmp.eq.f32.partialorder %v4129, 8.507059e+37
        %v4131 = vand.u32 %v3724, 2147483648
        %v4132 = vor.u32 1.1754944e-38, %v4131
        %v4133 = vsel %vm4130, %v4132, %v4128
        %v4134 = vmul.f32 1.0, %v4133
        %v4135 = vrcp.pop %v3725
        %v4136 = vmul.f32 %v3725, %v4135
        %v4137 = vsub.f32 1.0, %v4136
        %v4138 = vmul.f32 %v4135, %v4137
        %v4139 = vadd.f32 %v4135, %v4138
        %vm4140 = vweird.f32 %v3725
        %vm4141 = vweird.f32 %v4135
        %vm4142 = vmor %vm4140, %vm4141
        %v4143 = vsel %vm4142, %v4135, %v4139
        %v4144 = vand.u32 2147483647, %v3725
        %vm4145 = vcmp.eq.f32.partialorder %v4144, 8.507059e+37
        %v4146 = vand.u32 %v3725, 2147483648
        %v4147 = vor.u32 1.1754944e-38, %v4146
        %v4148 = vsel %vm4145, %v4147, %v4143
        %v4149 = vmul.f32 1.0, %v4148
        %v4150 = vrcp.pop %v3726
        %v4151 = vmul.f32 %v3726, %v4150
        %v4152 = vsub.f32 1.0, %v4151
        %v4153 = vmul.f32 %v4150, %v4152
        %v4154 = vadd.f32 %v4150, %v4153
        %vm4155 = vweird.f32 %v3726
        %vm4156 = vweird.f32 %v4150
        %vm4157 = vmor %vm4155, %vm4156
        %v4158 = vsel %vm4157, %v4150, %v4154
        %v4159 = vand.u32 2147483647, %v3726
        %vm4160 = vcmp.eq.f32.partialorder %v4159, 8.507059e+37
        %v4161 = vand.u32 %v3726, 2147483648
        %v4162 = vor.u32 1.1754944e-38, %v4161
        %v4163 = vsel %vm4160, %v4162, %v4158
        %v4164 = vmul.f32 1.0, %v4163
        %v4165 = vrcp.pop %v3727
        %v4166 = vmul.f32 %v3727, %v4165
        %v4167 = vsub.f32 1.0, %v4166
        %v4168 = vmul.f32 %v4165, %v4167
        %v4169 = vadd.f32 %v4165, %v4168
        %vm4170 = vweird.f32 %v3727
        %vm4171 = vweird.f32 %v4165
        %vm4172 = vmor %vm4170, %vm4171
        %v4173 = vsel %vm4172, %v4165, %v4169
        %v4174 = vand.u32 2147483647, %v3727
        %vm4175 = vcmp.eq.f32.partialorder %v4174, 8.507059e+37
        %v4176 = vand.u32 %v3727, 2147483648
        %v4177 = vor.u32 1.1754944e-38, %v4176
        %v4178 = vsel %vm4175, %v4177, %v4173
        %v4179 = vmul.f32 1.0, %v4178
        %v4180 = vrcp.pop %v3728
        %v4181 = vmul.f32 %v3728, %v4180
        %v4182 = vsub.f32 1.0, %v4181
        %v4183 = vmul.f32 %v4180, %v4182
        %v4184 = vadd.f32 %v4180, %v4183
        %vm4185 = vweird.f32 %v3728
        %vm4186 = vweird.f32 %v4180
        %vm4187 = vmor %vm4185, %vm4186
        %v4188 = vsel %vm4187, %v4180, %v4184
        %v4189 = vand.u32 2147483647, %v3728
        %vm4190 = vcmp.eq.f32.partialorder %v4189, 8.507059e+37
        %v4191 = vand.u32 %v3728, 2147483648
        %v4192 = vor.u32 1.1754944e-38, %v4191
        %v4193 = vsel %vm4190, %v4192, %v4188
        %v4194 = vmul.f32 1.0, %v4193
        %v4195 = vrcp.pop %v3729
        %v4196 = vmul.f32 %v3729, %v4195
        %v4197 = vsub.f32 1.0, %v4196
        %v4198 = vmul.f32 %v4195, %v4197
        %v4199 = vadd.f32 %v4195, %v4198
        %vm4200 = vweird.f32 %v3729
        %vm4201 = vweird.f32 %v4195
        %vm4202 = vmor %vm4200, %vm4201
        %v4203 = vsel %vm4202, %v4195, %v4199
        %v4204 = vand.u32 2147483647, %v3729
        %vm4205 = vcmp.eq.f32.partialorder %v4204, 8.507059e+37
        %v4206 = vand.u32 %v3729, 2147483648
        %v4207 = vor.u32 1.1754944e-38, %v4206
        %v4208 = vsel %vm4205, %v4207, %v4203
        %v4209 = vmul.f32 1.0, %v4208
        %v4210 = vmul.f32 %v3434, %v3744
        %v4211 = vmul.f32 %v3523, %v3759
        %v4212 = vmul.f32 %v3436, %v3774
        %v4213 = vmul.f32 %v3525, %v3789
        %v4214 = vmul.f32 %v3439, %v3804
        %v4215 = vmul.f32 %v3528, %v3819
        %v4216 = vmul.f32 %v3441, %v3834
        %v4217 = vmul.f32 %v3530, %v3849
        %v4218 = vmul.f32 %v3444, %v3864
        %v4219 = vmul.f32 %v3533, %v3879
        %v4220 = vmul.f32 %v3446, %v3894
        %v4221 = vmul.f32 %v3535, %v3909
        %v4222 = vmul.f32 %v3449, %v3924
        %v4223 = vmul.f32 %v3538, %v3939
        %v4224 = vmul.f32 %v3451, %v3954
        %v4225 = vmul.f32 %v3540, %v3969
        %v4226 = vmul.f32 %v3454, %v3984
        %v4227 = vmul.f32 %v3543, %v3999
        %v4228 = vmul.f32 %v3456, %v4014
        %v4229 = vmul.f32 %v3545, %v4029
        %v4230 = vmul.f32 %v3459, %v4044
        %v4231 = vmul.f32 %v3548, %v4059
        %v4232 = vmul.f32 %v3461, %v4074
        %v4233 = vmul.f32 %v3550, %v4089
        %v4234 = vmul.f32 %v3464, %v4104
        %v4235 = vmul.f32 %v3553, %v4119
        %v4236 = vmul.f32 %v3466, %v4134
        %v4237 = vmul.f32 %v3555, %v4149
        %v4238 = vmul.f32 %v3469, %v4164
        %v4239 = vmul.f32 %v3558, %v4179
        %v4240 = vmul.f32 %v3471, %v4194
        %v4241 = vmul.f32 %v3560, %v4209
        %v4242 = vsub.f32 1.0, %v3744
        %v4243 = vsub.f32 1.0, %v3759
        %v4244 = vsub.f32 1.0, %v3774
        %v4245 = vsub.f32 1.0, %v3789
        %v4246 = vsub.f32 1.0, %v3804
        %v4247 = vsub.f32 1.0, %v3819
        %v4248 = vsub.f32 1.0, %v3834
        %v4249 = vsub.f32 1.0, %v3849
        %v4250 = vsub.f32 1.0, %v3864
        %v4251 = vsub.f32 1.0, %v3879
        %v4252 = vsub.f32 1.0, %v3894
        %v4253 = vsub.f32 1.0, %v3909
        %v4254 = vsub.f32 1.0, %v3924
        %v4255 = vsub.f32 1.0, %v3939
        %v4256 = vsub.f32 1.0, %v3954
        %v4257 = vsub.f32 1.0, %v3969
        %v4258 = vsub.f32 1.0, %v3984
        %v4259 = vsub.f32 1.0, %v3999
        %v4260 = vsub.f32 1.0, %v4014
        %v4261 = vsub.f32 1.0, %v4029
        %v4262 = vsub.f32 1.0, %v4044
        %v4263 = vsub.f32 1.0, %v4059
        %v4264 = vsub.f32 1.0, %v4074
        %v4265 = vsub.f32 1.0, %v4089
        %v4266 = vsub.f32 1.0, %v4104
        %v4267 = vsub.f32 1.0, %v4119
        %v4268 = vsub.f32 1.0, %v4134
        %v4269 = vsub.f32 1.0, %v4149
        %v4270 = vsub.f32 1.0, %v4164
        %v4271 = vsub.f32 1.0, %v4179
        %v4272 = vsub.f32 1.0, %v4194
        %v4273 = vsub.f32 1.0, %v4209
        %v4274 = vmul.f32 %v3434, %v4242
        %v4275 = vmul.f32 %v3523, %v4243
        %v4276 = vmul.f32 %v3436, %v4244
        %v4277 = vmul.f32 %v3525, %v4245
        %v4278 = vmul.f32 %v3439, %v4246
        %v4279 = vmul.f32 %v3528, %v4247
        %v4280 = vmul.f32 %v3441, %v4248
        %v4281 = vmul.f32 %v3530, %v4249
        %v4282 = vmul.f32 %v3444, %v4250
        %v4283 = vmul.f32 %v3533, %v4251
        %v4284 = vmul.f32 %v3446, %v4252
        %v4285 = vmul.f32 %v3535, %v4253
        %v4286 = vmul.f32 %v3449, %v4254
        %v4287 = vmul.f32 %v3538, %v4255
        %v4288 = vmul.f32 %v3451, %v4256
        %v4289 = vmul.f32 %v3540, %v4257
        %v4290 = vmul.f32 %v3454, %v4258
        %v4291 = vmul.f32 %v3543, %v4259
        %v4292 = vmul.f32 %v3456, %v4260
        %v4293 = vmul.f32 %v3545, %v4261
        %v4294 = vmul.f32 %v3459, %v4262
        %v4295 = vmul.f32 %v3548, %v4263
        %v4296 = vmul.f32 %v3461, %v4264
        %v4297 = vmul.f32 %v3550, %v4265
        %v4298 = vmul.f32 %v3464, %v4266
        %v4299 = vmul.f32 %v3553, %v4267
        %v4300 = vmul.f32 %v3466, %v4268
        %v4301 = vmul.f32 %v3555, %v4269
        %v4302 = vmul.f32 %v3469, %v4270
        %v4303 = vmul.f32 %v3558, %v4271
        %v4304 = vmul.f32 %v3471, %v4272
        %v4305 = vmul.f32 %v3560, %v4273
        %v4306 = vadd.f32 %v4274, 1.0
        %v4307 = vadd.f32 %v4275, 1.0
        %v4308 = vadd.f32 %v4276, 1.0
        %v4309 = vadd.f32 %v4277, 1.0
        %v4310 = vadd.f32 %v4278, 1.0
        %v4311 = vadd.f32 %v4279, 1.0
        %v4312 = vadd.f32 %v4280, 1.0
        %v4313 = vadd.f32 %v4281, 1.0
        %v4314 = vadd.f32 %v4282, 1.0
        %v4315 = vadd.f32 %v4283, 1.0
        %v4316 = vadd.f32 %v4284, 1.0
        %v4317 = vadd.f32 %v4285, 1.0
        %v4318 = vadd.f32 %v4286, 1.0
        %v4319 = vadd.f32 %v4287, 1.0
        %v4320 = vadd.f32 %v4288, 1.0
        %v4321 = vadd.f32 %v4289, 1.0
        %v4322 = vadd.f32 %v4290, 1.0
        %v4323 = vadd.f32 %v4291, 1.0
        %v4324 = vadd.f32 %v4292, 1.0
        %v4325 = vadd.f32 %v4293, 1.0
        %v4326 = vadd.f32 %v4294, 1.0
        %v4327 = vadd.f32 %v4295, 1.0
        %v4328 = vadd.f32 %v4296, 1.0
        %v4329 = vadd.f32 %v4297, 1.0
        %v4330 = vadd.f32 %v4298, 1.0
        %v4331 = vadd.f32 %v4299, 1.0
        %v4332 = vadd.f32 %v4300, 1.0
        %v4333 = vadd.f32 %v4301, 1.0
        %v4334 = vadd.f32 %v4302, 1.0
        %v4335 = vadd.f32 %v4303, 1.0
        %v4336 = vadd.f32 %v4304, 1.0
        %v4337 = vadd.f32 %v4305, 1.0
        %v4338 = vmul.f32 %v3744, %v4306
        %v4339 = vmul.f32 %v3759, %v4307
        %v4340 = vmul.f32 %v3774, %v4308
        %v4341 = vmul.f32 %v3789, %v4309
        %v4342 = vmul.f32 %v3804, %v4310
        %v4343 = vmul.f32 %v3819, %v4311
        %v4344 = vmul.f32 %v3834, %v4312
        %v4345 = vmul.f32 %v3849, %v4313
        %v4346 = vmul.f32 %v3864, %v4314
        %v4347 = vmul.f32 %v3879, %v4315
        %v4348 = vmul.f32 %v3894, %v4316
        %v4349 = vmul.f32 %v3909, %v4317
        %v4350 = vmul.f32 %v3924, %v4318
        %v4351 = vmul.f32 %v3939, %v4319
        %v4352 = vmul.f32 %v3954, %v4320
        %v4353 = vmul.f32 %v3969, %v4321
        %v4354 = vmul.f32 %v3984, %v4322
        %v4355 = vmul.f32 %v3999, %v4323
        %v4356 = vmul.f32 %v4014, %v4324
        %v4357 = vmul.f32 %v4029, %v4325
        %v4358 = vmul.f32 %v4044, %v4326
        %v4359 = vmul.f32 %v4059, %v4327
        %v4360 = vmul.f32 %v4074, %v4328
        %v4361 = vmul.f32 %v4089, %v4329
        %v4362 = vmul.f32 %v4104, %v4330
        %v4363 = vmul.f32 %v4119, %v4331
        %v4364 = vmul.f32 %v4134, %v4332
        %v4365 = vmul.f32 %v4149, %v4333
        %v4366 = vmul.f32 %v4164, %v4334
        %v4367 = vmul.f32 %v4179, %v4335
        %v4368 = vmul.f32 %v4194, %v4336
        %v4369 = vmul.f32 %v4209, %v4337
        %v4370 = vmul.f32 %v4338, %v3474
        %v4371 = vmul.f32 %v4339, %v3563
        %v4372 = vmul.f32 %v4340, %v3476
        %v4373 = vmul.f32 %v4341, %v3565
        %v4374 = vmul.f32 %v4342, %v3479
        %v4375 = vmul.f32 %v4343, %v3568
        %v4376 = vmul.f32 %v4344, %v3481
        %v4377 = vmul.f32 %v4345, %v3570
        %v4378 = vmul.f32 %v4346, %v3484
        %v4379 = vmul.f32 %v4347, %v3573
        %v4380 = vmul.f32 %v4348, %v3486
        %v4381 = vmul.f32 %v4349, %v3575
        %v4382 = vmul.f32 %v4350, %v3489
        %v4383 = vmul.f32 %v4351, %v3578
        %v4384 = vmul.f32 %v4352, %v3491
        %v4385 = vmul.f32 %v4353, %v3580
        %v4386 = vmul.f32 %v4354, %v3494
        %v4387 = vmul.f32 %v4355, %v3583
        %v4388 = vmul.f32 %v4356, %v3496
        %v4389 = vmul.f32 %v4357, %v3585
        %v4390 = vmul.f32 %v4358, %v3499
        %v4391 = vmul.f32 %v4359, %v3588
        %v4392 = vmul.f32 %v4360, %v3501
        %v4393 = vmul.f32 %v4361, %v3590
        %v4394 = vmul.f32 %v4362, %v3504
        %v4395 = vmul.f32 %v4363, %v3593
        %v4396 = vmul.f32 %v4364, %v3506
        %v4397 = vmul.f32 %v4365, %v3595
        %v4398 = vmul.f32 %v4366, %v3509
        %v4399 = vmul.f32 %v4367, %v3598
        %v4400 = vmul.f32 %v4368, %v3511
        %v4401 = vmul.f32 %v4369, %v3600
        %v4402 = vpack.c.bf16 %v4211, %v4210
        %v4403 = vpack.c.bf16 %v4213, %v4212
        %v4404 = vpack.c.bf16 %v4215, %v4214
        %v4405 = vpack.c.bf16 %v4217, %v4216
        %v4406 = vpack.c.bf16 %v4219, %v4218
        %v4407 = vpack.c.bf16 %v4221, %v4220
        %v4408 = vpack.c.bf16 %v4223, %v4222
        %v4409 = vpack.c.bf16 %v4225, %v4224
        %v4410 = vpack.c.bf16 %v4227, %v4226
        %v4411 = vpack.c.bf16 %v4229, %v4228
        %v4412 = vpack.c.bf16 %v4231, %v4230
        %v4413 = vpack.c.bf16 %v4233, %v4232
        %v4414 = vpack.c.bf16 %v4235, %v4234
        %v4415 = vpack.c.bf16 %v4237, %v4236
        %v4416 = vpack.c.bf16 %v4239, %v4238
        %v4417 = vpack.c.bf16 %v4241, %v4240
        %v4418 = vpack.c.bf16 %v4371, %v4370
        %v4419 = vpack.c.bf16 %v4373, %v4372
        %v4420 = vpack.c.bf16 %v4375, %v4374
        %v4421 = vpack.c.bf16 %v4377, %v4376
        %v4422 = vpack.c.bf16 %v4379, %v4378
        %v4423 = vpack.c.bf16 %v4381, %v4380
        %v4424 = vpack.c.bf16 %v4383, %v4382
        %v4425 = vpack.c.bf16 %v4385, %v4384
        %v4426 = vpack.c.bf16 %v4387, %v4386
        %v4427 = vpack.c.bf16 %v4389, %v4388
        %v4428 = vpack.c.bf16 %v4391, %v4390
        %v4429 = vpack.c.bf16 %v4393, %v4392
        %v4430 = vpack.c.bf16 %v4395, %v4394
        %v4431 = vpack.c.bf16 %v4397, %v4396
        %v4432 = vpack.c.bf16 %v4399, %v4398
        %v4433 = vpack.c.bf16 %v4401, %v4400
        %v4450 = vunpack.c.l.b16 %v4402
        %v4451 = vunpack.c.h.b16 %v4402
        %v4452 = vunpack.c.l.b16 %v4403
        %v4453 = vunpack.c.h.b16 %v4403
        %v4454 = vunpack.c.l.b16 %v4404
        %v4455 = vunpack.c.h.b16 %v4404
        %v4456 = vunpack.c.l.b16 %v4405
        %v4457 = vunpack.c.h.b16 %v4405
        %v4458 = vunpack.c.l.b16 %v4406
        %v4459 = vunpack.c.h.b16 %v4406
        %v4460 = vunpack.c.l.b16 %v4407
        %v4461 = vunpack.c.h.b16 %v4407
        %v4462 = vunpack.c.l.b16 %v4408
        %v4463 = vunpack.c.h.b16 %v4408
        %v4464 = vunpack.c.l.b16 %v4409
        %v4465 = vunpack.c.h.b16 %v4409
        %v4466 = vunpack.c.l.b16 %v4410
        %v4467 = vunpack.c.h.b16 %v4410
        %v4468 = vunpack.c.l.b16 %v4411
        %v4469 = vunpack.c.h.b16 %v4411
        %v4470 = vunpack.c.l.b16 %v4412
        %v4471 = vunpack.c.h.b16 %v4412
        %v4472 = vunpack.c.l.b16 %v4413
        %v4473 = vunpack.c.h.b16 %v4413
        %v4474 = vunpack.c.l.b16 %v4414
        %v4475 = vunpack.c.h.b16 %v4414
        %v4476 = vunpack.c.l.b16 %v4415
        %v4477 = vunpack.c.h.b16 %v4415
        %v4478 = vunpack.c.l.b16 %v4416
        %v4479 = vunpack.c.h.b16 %v4416
        %v4480 = vunpack.c.l.b16 %v4417
        %v4481 = vunpack.c.h.b16 %v4417
        %v4482 = vpack.c.b16 %v4452, %v4450
        %v4483 = vpack.c.b16 %v4453, %v4451
        %v4484 = vpack.c.b16 %v4456, %v4454
        %v4485 = vpack.c.b16 %v4457, %v4455
        %v4486 = vpack.c.b16 %v4460, %v4458
        %v4487 = vpack.c.b16 %v4461, %v4459
        %v4488 = vpack.c.b16 %v4464, %v4462
        %v4489 = vpack.c.b16 %v4465, %v4463
        %v4490 = vpack.c.b16 %v4468, %v4466
        %v4491 = vpack.c.b16 %v4469, %v4467
        %v4492 = vpack.c.b16 %v4472, %v4470
        %v4493 = vpack.c.b16 %v4473, %v4471
        %v4494 = vpack.c.b16 %v4476, %v4474
        %v4495 = vpack.c.b16 %v4477, %v4475
        %v4496 = vpack.c.b16 %v4480, %v4478
        %v4497 = vpack.c.b16 %v4481, %v4479
        %v4530 = vunpack.c.l.b16 %v4418
        %v4531 = vunpack.c.h.b16 %v4418
        %v4532 = vunpack.c.l.b16 %v4419
        %v4533 = vunpack.c.h.b16 %v4419
        %v4534 = vunpack.c.l.b16 %v4420
        %v4535 = vunpack.c.h.b16 %v4420
        %v4536 = vunpack.c.l.b16 %v4421
        %v4537 = vunpack.c.h.b16 %v4421
        %v4538 = vunpack.c.l.b16 %v4422
        %v4539 = vunpack.c.h.b16 %v4422
        %v4540 = vunpack.c.l.b16 %v4423
        %v4541 = vunpack.c.h.b16 %v4423
        %v4542 = vunpack.c.l.b16 %v4424
        %v4543 = vunpack.c.h.b16 %v4424
        %v4544 = vunpack.c.l.b16 %v4425
        %v4545 = vunpack.c.h.b16 %v4425
        %v4546 = vunpack.c.l.b16 %v4426
        %v4547 = vunpack.c.h.b16 %v4426
        %v4548 = vunpack.c.l.b16 %v4427
        %v4549 = vunpack.c.h.b16 %v4427
        %v4550 = vunpack.c.l.b16 %v4428
        %v4551 = vunpack.c.h.b16 %v4428
        %v4552 = vunpack.c.l.b16 %v4429
        %v4553 = vunpack.c.h.b16 %v4429
        %v4554 = vunpack.c.l.b16 %v4430
        %v4555 = vunpack.c.h.b16 %v4430
        %v4556 = vunpack.c.l.b16 %v4431
        %v4557 = vunpack.c.h.b16 %v4431
        %v4558 = vunpack.c.l.b16 %v4432
        %v4559 = vunpack.c.h.b16 %v4432
        %v4560 = vunpack.c.l.b16 %v4433
        %v4561 = vunpack.c.h.b16 %v4433
        %v4562 = vpack.c.b16 %v4532, %v4530
        %v4563 = vpack.c.b16 %v4533, %v4531
        %v4564 = vpack.c.b16 %v4536, %v4534
        %v4565 = vpack.c.b16 %v4537, %v4535
        %v4566 = vpack.c.b16 %v4540, %v4538
        %v4567 = vpack.c.b16 %v4541, %v4539
        %v4568 = vpack.c.b16 %v4544, %v4542
        %v4569 = vpack.c.b16 %v4545, %v4543
        %v4570 = vpack.c.b16 %v4548, %v4546
        %v4571 = vpack.c.b16 %v4549, %v4547
        %v4572 = vpack.c.b16 %v4552, %v4550
        %v4573 = vpack.c.b16 %v4553, %v4551
        %v4574 = vpack.c.b16 %v4556, %v4554
        %v4575 = vpack.c.b16 %v4557, %v4555
        %v4576 = vpack.c.b16 %v4560, %v4558
        %v4577 = vpack.c.b16 %v4561, %v4559
        %v4626 = vunpack.c.l.b16 %v1643
        %v4627 = vunpack.c.l.b16 %v1644
        %v4628 = vunpack.c.l.b16 %v1645
        %v4629 = vunpack.c.l.b16 %v1646
        %v4630 = vunpack.c.l.b16 %v1647
        %v4631 = vunpack.c.l.b16 %v1648
        %v4632 = vunpack.c.l.b16 %v1649
        %v4633 = vunpack.c.l.b16 %v1650
        %v4634 = vunpack.c.l.b16 %v1651
        %v4635 = vunpack.c.l.b16 %v1652
        %v4636 = vunpack.c.l.b16 %v1653
        %v4637 = vunpack.c.l.b16 %v1654
        %v4638 = vunpack.c.l.b16 %v1655
        %v4639 = vunpack.c.l.b16 %v1656
        %v4640 = vunpack.c.l.b16 %v1657
        %v4641 = vunpack.c.l.b16 %v1658
        %v4642 = vunpack.c.l.b16 %v1659
        %v4643 = vunpack.c.l.b16 %v1660
        %v4644 = vunpack.c.l.b16 %v1661
        %v4645 = vunpack.c.l.b16 %v1662
        %v4646 = vunpack.c.l.b16 %v1663
        %v4647 = vunpack.c.l.b16 %v1664
        %v4648 = vunpack.c.l.b16 %v1665
        %v4649 = vunpack.c.l.b16 %v1666
        %v4650 = vunpack.c.l.b16 %v1667
        %v4651 = vunpack.c.l.b16 %v1668
        %v4652 = vunpack.c.l.b16 %v1669
        %v4653 = vunpack.c.l.b16 %v1670
        %v4654 = vunpack.c.l.b16 %v1671
        %v4655 = vunpack.c.l.b16 %v1672
        %v4656 = vunpack.c.l.b16 %v1673
        %v4657 = vunpack.c.l.b16 %v1674
        %v4658 = vpack.c.b16 %v4627, %v4626
        %v4659 = vpack.c.b16 %v4629, %v4628
        %v4660 = vpack.c.b16 %v4631, %v4630
        %v4661 = vpack.c.b16 %v4633, %v4632
        %v4662 = vpack.c.b16 %v4635, %v4634
        %v4663 = vpack.c.b16 %v4637, %v4636
        %v4664 = vpack.c.b16 %v4639, %v4638
        %v4665 = vpack.c.b16 %v4641, %v4640
        %v4666 = vpack.c.b16 %v4643, %v4642
        %v4667 = vpack.c.b16 %v4645, %v4644
        %v4668 = vpack.c.b16 %v4647, %v4646
        %v4669 = vpack.c.b16 %v4649, %v4648
        %v4670 = vpack.c.b16 %v4651, %v4650
        %v4671 = vpack.c.b16 %v4653, %v4652
        %v4672 = vpack.c.b16 %v4655, %v4654
        %v4673 = vpack.c.b16 %v4657, %v4656
        %4690 = vmatpush.bf16.msra.mxu0 %v4665
        %4691 = vmatpush.bf16.msra.mxu0 %v4664
        %4692 = vmatpush.bf16.msra.mxu0 %v4663
        %4693 = vmatpush.bf16.msra.mxu0 %v4662
        %4694 = vmatpush.bf16.msra.mxu0 %v4661
        %4695 = vmatpush.bf16.msra.mxu0 %v4660
        %4696 = vmatpush.bf16.msra.mxu0 %v4659
        %4697 = vmatpush.bf16.msra.mxu0 %v4658
        %4698 = vmatmul.bf16.gmra.mxu0 %v4482
        %v4699 = vpop.f32.mrf.mxu0
        %v4700 = vadd.f32 0.0, %v4699
        %v4701 = vpop.f32.mrf.mxu0
        %v4702 = vadd.f32 0.0, %v4701
        %4703 = vmatmul.bf16.gmra.mxu0 %v4484
        %v4704 = vpop.f32.mrf.mxu0
        %v4705 = vadd.f32 0.0, %v4704
        %v4706 = vpop.f32.mrf.mxu0
        %v4707 = vadd.f32 0.0, %v4706
        %4708 = vmatmul.bf16.gmra.mxu0 %v4486
        %v4709 = vpop.f32.mrf.mxu0
        %v4710 = vadd.f32 0.0, %v4709
        %v4711 = vpop.f32.mrf.mxu0
        %v4712 = vadd.f32 0.0, %v4711
        %4713 = vmatmul.bf16.gmra.mxu0 %v4488
        %v4714 = vpop.f32.mrf.mxu0
        %v4715 = vadd.f32 0.0, %v4714
        %v4716 = vpop.f32.mrf.mxu0
        %v4717 = vadd.f32 0.0, %v4716
        %4718 = vmatmul.bf16.gmra.mxu0 %v4490
        %v4719 = vpop.f32.mrf.mxu0
        %v4720 = vadd.f32 0.0, %v4719
        %v4721 = vpop.f32.mrf.mxu0
        %v4722 = vadd.f32 0.0, %v4721
        %4723 = vmatmul.bf16.gmra.mxu0 %v4492
        %v4724 = vpop.f32.mrf.mxu0
        %v4725 = vadd.f32 0.0, %v4724
        %v4726 = vpop.f32.mrf.mxu0
        %v4727 = vadd.f32 0.0, %v4726
        %4728 = vmatmul.bf16.gmra.mxu0 %v4494
        %v4729 = vpop.f32.mrf.mxu0
        %v4730 = vadd.f32 0.0, %v4729
        %v4731 = vpop.f32.mrf.mxu0
        %v4732 = vadd.f32 0.0, %v4731
        %4733 = vmatmul.bf16.gmra.mxu0 %v4496
        %v4734 = vpop.f32.mrf.mxu0
        %v4735 = vadd.f32 0.0, %v4734
        %v4736 = vpop.f32.mrf.mxu0
        %v4737 = vadd.f32 0.0, %v4736
        %4738 = vmatmul.bf16.gmra.mxu0 %v4562
        %v4739 = vpop.f32.mrf.mxu0
        %v4740 = vadd.f32 0.0, %v4739
        %v4741 = vpop.f32.mrf.mxu0
        %v4742 = vadd.f32 0.0, %v4741
        %4743 = vmatmul.bf16.gmra.mxu0 %v4564
        %v4744 = vpop.f32.mrf.mxu0
        %v4745 = vadd.f32 0.0, %v4744
        %v4746 = vpop.f32.mrf.mxu0
        %v4747 = vadd.f32 0.0, %v4746
        %4748 = vmatmul.bf16.gmra.mxu0 %v4566
        %v4749 = vpop.f32.mrf.mxu0
        %v4750 = vadd.f32 0.0, %v4749
        %v4751 = vpop.f32.mrf.mxu0
        %v4752 = vadd.f32 0.0, %v4751
        %4753 = vmatmul.bf16.gmra.mxu0 %v4568
        %v4754 = vpop.f32.mrf.mxu0
        %v4755 = vadd.f32 0.0, %v4754
        %v4756 = vpop.f32.mrf.mxu0
        %v4757 = vadd.f32 0.0, %v4756
        %4758 = vmatmul.bf16.gmra.mxu0 %v4570
        %v4759 = vpop.f32.mrf.mxu0
        %v4760 = vadd.f32 0.0, %v4759
        %v4761 = vpop.f32.mrf.mxu0
        %v4762 = vadd.f32 0.0, %v4761
        %4763 = vmatmul.bf16.gmra.mxu0 %v4572
        %v4764 = vpop.f32.mrf.mxu0
        %v4765 = vadd.f32 0.0, %v4764
        %v4766 = vpop.f32.mrf.mxu0
        %v4767 = vadd.f32 0.0, %v4766
        %4768 = vmatmul.bf16.gmra.mxu0 %v4574
        %v4769 = vpop.f32.mrf.mxu0
        %v4770 = vadd.f32 0.0, %v4769
        %v4771 = vpop.f32.mrf.mxu0
        %v4772 = vadd.f32 0.0, %v4771
        %4773 = vmatmul.bf16.gmra.mxu0 %v4576
        %v4774 = vpop.f32.mrf.mxu0
        %v4775 = vadd.f32 0.0, %v4774
        %v4776 = vpop.f32.mrf.mxu0
        %v4777 = vadd.f32 0.0, %v4776
        %4778 = vdwg.mxu0
        %4779 = vmatpush.bf16.msra.mxu0 %v4673
        %4780 = vmatpush.bf16.msra.mxu0 %v4672
        %4781 = vmatpush.bf16.msra.mxu0 %v4671
        %4782 = vmatpush.bf16.msra.mxu0 %v4670
        %4783 = vmatpush.bf16.msra.mxu0 %v4669
        %4784 = vmatpush.bf16.msra.mxu0 %v4668
        %4785 = vmatpush.bf16.msra.mxu0 %v4667
        %4786 = vmatpush.bf16.msra.mxu0 %v4666
        %4787 = vmatmul.bf16.gmra.mxu0 %v4483
        %v4788 = vpop.f32.mrf.mxu0
        %v4789 = vadd.f32 %v4700, %v4788
        %v4790 = vpop.f32.mrf.mxu0
        %v4791 = vadd.f32 %v4702, %v4790
        %4792 = vmatmul.bf16.gmra.mxu0 %v4485
        %v4793 = vpop.f32.mrf.mxu0
        %v4794 = vadd.f32 %v4705, %v4793
        %v4795 = vpop.f32.mrf.mxu0
        %v4796 = vadd.f32 %v4707, %v4795
        %4797 = vmatmul.bf16.gmra.mxu0 %v4487
        %v4798 = vpop.f32.mrf.mxu0
        %v4799 = vadd.f32 %v4710, %v4798
        %v4800 = vpop.f32.mrf.mxu0
        %v4801 = vadd.f32 %v4712, %v4800
        %4802 = vmatmul.bf16.gmra.mxu0 %v4489
        %v4803 = vpop.f32.mrf.mxu0
        %v4804 = vadd.f32 %v4715, %v4803
        %v4805 = vpop.f32.mrf.mxu0
        %v4806 = vadd.f32 %v4717, %v4805
        %4807 = vmatmul.bf16.gmra.mxu0 %v4491
        %v4808 = vpop.f32.mrf.mxu0
        %v4809 = vadd.f32 %v4720, %v4808
        %v4810 = vpop.f32.mrf.mxu0
        %v4811 = vadd.f32 %v4722, %v4810
        %4812 = vmatmul.bf16.gmra.mxu0 %v4493
        %v4813 = vpop.f32.mrf.mxu0
        %v4814 = vadd.f32 %v4725, %v4813
        %v4815 = vpop.f32.mrf.mxu0
        %v4816 = vadd.f32 %v4727, %v4815
        %4817 = vmatmul.bf16.gmra.mxu0 %v4495
        %v4818 = vpop.f32.mrf.mxu0
        %v4819 = vadd.f32 %v4730, %v4818
        %v4820 = vpop.f32.mrf.mxu0
        %v4821 = vadd.f32 %v4732, %v4820
        %4822 = vmatmul.bf16.gmra.mxu0 %v4497
        %v4823 = vpop.f32.mrf.mxu0
        %v4824 = vadd.f32 %v4735, %v4823
        %v4825 = vpop.f32.mrf.mxu0
        %v4826 = vadd.f32 %v4737, %v4825
        %4827 = vmatmul.bf16.gmra.mxu0 %v4563
        %v4828 = vpop.f32.mrf.mxu0
        %v4829 = vadd.f32 %v4740, %v4828
        %v4830 = vpop.f32.mrf.mxu0
        %v4831 = vadd.f32 %v4742, %v4830
        %4832 = vmatmul.bf16.gmra.mxu0 %v4565
        %v4833 = vpop.f32.mrf.mxu0
        %v4834 = vadd.f32 %v4745, %v4833
        %v4835 = vpop.f32.mrf.mxu0
        %v4836 = vadd.f32 %v4747, %v4835
        %4837 = vmatmul.bf16.gmra.mxu0 %v4567
        %v4838 = vpop.f32.mrf.mxu0
        %v4839 = vadd.f32 %v4750, %v4838
        %v4840 = vpop.f32.mrf.mxu0
        %v4841 = vadd.f32 %v4752, %v4840
        %4842 = vmatmul.bf16.gmra.mxu0 %v4569
        %v4843 = vpop.f32.mrf.mxu0
        %v4844 = vadd.f32 %v4755, %v4843
        %v4845 = vpop.f32.mrf.mxu0
        %v4846 = vadd.f32 %v4757, %v4845
        %4847 = vmatmul.bf16.gmra.mxu0 %v4571
        %v4848 = vpop.f32.mrf.mxu0
        %v4849 = vadd.f32 %v4760, %v4848
        %v4850 = vpop.f32.mrf.mxu0
        %v4851 = vadd.f32 %v4762, %v4850
        %4852 = vmatmul.bf16.gmra.mxu0 %v4573
        %v4853 = vpop.f32.mrf.mxu0
        %v4854 = vadd.f32 %v4765, %v4853
        %v4855 = vpop.f32.mrf.mxu0
        %v4856 = vadd.f32 %v4767, %v4855
        %4857 = vmatmul.bf16.gmra.mxu0 %v4575
        %v4858 = vpop.f32.mrf.mxu0
        %v4859 = vadd.f32 %v4770, %v4858
        %v4860 = vpop.f32.mrf.mxu0
        %v4861 = vadd.f32 %v4772, %v4860
        %4862 = vmatmul.bf16.gmra.mxu0 %v4577
        %v4863 = vpop.f32.mrf.mxu0
        %v4864 = vadd.f32 %v4775, %v4863
        %v4865 = vpop.f32.mrf.mxu0
        %v4866 = vadd.f32 %v4777, %v4865
        %4867 = vdwg.mxu0
        %v4868 = vmul.f32 %v4789, %v2577
        %v4869 = vmul.f32 %v4791, %v2579
        %v4870 = vmul.f32 %v4794, %v2582
        %v4871 = vmul.f32 %v4796, %v2584
        %v4872 = vmul.f32 %v4799, %v2587
        %v4873 = vmul.f32 %v4801, %v2589
        %v4874 = vmul.f32 %v4804, %v2592
        %v4875 = vmul.f32 %v4806, %v2594
        %v4876 = vmul.f32 %v4809, %v2597
        %v4877 = vmul.f32 %v4811, %v2599
        %v4878 = vmul.f32 %v4814, %v2602
        %v4879 = vmul.f32 %v4816, %v2604
        %v4880 = vmul.f32 %v4819, %v2607
        %v4881 = vmul.f32 %v4821, %v2609
        %v4882 = vmul.f32 %v4824, %v2612
        %v4883 = vmul.f32 %v4826, %v2614
        %v4884 = vadd.f32 %v1216, %v4868
        %v4885 = vadd.f32 %v1218, %v4869
        %v4886 = vadd.f32 %v1221, %v4870
        %v4887 = vadd.f32 %v1223, %v4871
        %v4888 = vadd.f32 %v1226, %v4872
        %v4889 = vadd.f32 %v1228, %v4873
        %v4890 = vadd.f32 %v1231, %v4874
        %v4891 = vadd.f32 %v1233, %v4875
        %v4892 = vadd.f32 %v1236, %v4876
        %v4893 = vadd.f32 %v1238, %v4877
        %v4894 = vadd.f32 %v1241, %v4878
        %v4895 = vadd.f32 %v1243, %v4879
        %v4896 = vadd.f32 %v1246, %v4880
        %v4897 = vadd.f32 %v1248, %v4881
        %v4898 = vadd.f32 %v1251, %v4882
        %v4899 = vadd.f32 %v1253, %v4883
        %v4900 = vmul.f32 %v4829, %v2577
        %v4901 = vmul.f32 %v4831, %v2579
        %v4902 = vmul.f32 %v4834, %v2582
        %v4903 = vmul.f32 %v4836, %v2584
        %v4904 = vmul.f32 %v4839, %v2587
        %v4905 = vmul.f32 %v4841, %v2589
        %v4906 = vmul.f32 %v4844, %v2592
        %v4907 = vmul.f32 %v4846, %v2594
        %v4908 = vmul.f32 %v4849, %v2597
        %v4909 = vmul.f32 %v4851, %v2599
        %v4910 = vmul.f32 %v4854, %v2602
        %v4911 = vmul.f32 %v4856, %v2604
        %v4912 = vmul.f32 %v4859, %v2607
        %v4913 = vmul.f32 %v4861, %v2609
        %v4914 = vmul.f32 %v4864, %v2612
        %v4915 = vmul.f32 %v4866, %v2614
        %v4916 = vadd.f32 %v1256, %v4900
        %v4917 = vadd.f32 %v1258, %v4901
        %v4918 = vadd.f32 %v1261, %v4902
        %v4919 = vadd.f32 %v1263, %v4903
        %v4920 = vadd.f32 %v1266, %v4904
        %v4921 = vadd.f32 %v1268, %v4905
        %v4922 = vadd.f32 %v1271, %v4906
        %v4923 = vadd.f32 %v1273, %v4907
        %v4924 = vadd.f32 %v1276, %v4908
        %v4925 = vadd.f32 %v1278, %v4909
        %v4926 = vadd.f32 %v1281, %v4910
        %v4927 = vadd.f32 %v1283, %v4911
        %v4928 = vadd.f32 %v1286, %v4912
        %v4929 = vadd.f32 %v1288, %v4913
        %v4930 = vadd.f32 %v1291, %v4914
        %v4931 = vadd.f32 %v1293, %v4915
        %v4932 = vmul.f32 %v4789, %v2617
        %v4933 = vmul.f32 %v4791, %v2619
        %v4934 = vmul.f32 %v4794, %v2622
        %v4935 = vmul.f32 %v4796, %v2624
        %v4936 = vmul.f32 %v4799, %v2627
        %v4937 = vmul.f32 %v4801, %v2629
        %v4938 = vmul.f32 %v4804, %v2632
        %v4939 = vmul.f32 %v4806, %v2634
        %v4940 = vmul.f32 %v4809, %v2637
        %v4941 = vmul.f32 %v4811, %v2639
        %v4942 = vmul.f32 %v4814, %v2642
        %v4943 = vmul.f32 %v4816, %v2644
        %v4944 = vmul.f32 %v4819, %v2647
        %v4945 = vmul.f32 %v4821, %v2649
        %v4946 = vmul.f32 %v4824, %v2652
        %v4947 = vmul.f32 %v4826, %v2654
        %v4948 = vadd.f32 %v4916, %v4932
        %v4949 = vadd.f32 %v4917, %v4933
        %v4950 = vadd.f32 %v4918, %v4934
        %v4951 = vadd.f32 %v4919, %v4935
        %v4952 = vadd.f32 %v4920, %v4936
        %v4953 = vadd.f32 %v4921, %v4937
        %v4954 = vadd.f32 %v4922, %v4938
        %v4955 = vadd.f32 %v4923, %v4939
        %v4956 = vadd.f32 %v4924, %v4940
        %v4957 = vadd.f32 %v4925, %v4941
        %v4958 = vadd.f32 %v4926, %v4942
        %v4959 = vadd.f32 %v4927, %v4943
        %v4960 = vadd.f32 %v4928, %v4944
        %v4961 = vadd.f32 %v4929, %v4945
        %v4962 = vadd.f32 %v4930, %v4946
        %v4963 = vadd.f32 %v4931, %v4947
        %s4964 = scalar_lea.vmem [#allocation2], 1
        %v4965 = vld [vmem:[%s4964] sm:$0x1]
        %s4966 = scalar_lea.vmem %s5, 192
        %v4967 = vld [vmem:[%s4966] sm:$0xff]
        %v4968 = vld [vmem:[%s4966 + $0x8] sm:$0xf]
        %v4969 = vld [vmem:[%s4966 + $0xc] sm:$0xff]
        %v4970 = vld [vmem:[%s4966 + $0x14] sm:$0xf]
        %v4971 = vld [vmem:[%s4966 + $0x18] sm:$0xff]
        %v4972 = vld [vmem:[%s4966 + $0x20] sm:$0xf]
        %v4973 = vld [vmem:[%s4966 + $0x24] sm:$0xff]
        %v4974 = vld [vmem:[%s4966 + $0x2c] sm:$0xf]
        %v4975 = vld [vmem:[%s4966 + $0x30] sm:$0xff]
        %v4976 = vld [vmem:[%s4966 + $0x38] sm:$0xf]
        %v4977 = vld [vmem:[%s4966 + $0x3c] sm:$0xff]
        %v4978 = vld [vmem:[%s4966 + $0x44] sm:$0xf]
        %v4979 = vld [vmem:[%s4966 + $0x48] sm:$0xff]
        %v4980 = vld [vmem:[%s4966 + $0x50] sm:$0xf]
        %v4981 = vld [vmem:[%s4966 + $0x54] sm:$0xff]
        %v4982 = vld [vmem:[%s4966 + $0x5c] sm:$0xf]
        %v4983 = vld [vmem:[%s4966 + $0x60] sm:$0xff]
        %v4984 = vld [vmem:[%s4966 + $0x68] sm:$0xf]
        %v4985 = vld [vmem:[%s4966 + $0x6c] sm:$0xff]
        %v4986 = vld [vmem:[%s4966 + $0x74] sm:$0xf]
        %v4987 = vld [vmem:[%s4966 + $0x78] sm:$0xff]
        %v4988 = vld [vmem:[%s4966 + $0x80] sm:$0xf]
        %v4989 = vld [vmem:[%s4966 + $0x84] sm:$0xff]
        %v4990 = vld [vmem:[%s4966 + $0x8c] sm:$0xf]
        %v4991 = vld [vmem:[%s4966 + $0x90] sm:$0xff]
        %v4992 = vld [vmem:[%s4966 + $0x98] sm:$0xf]
        %v4993 = vld [vmem:[%s4966 + $0x9c] sm:$0xff]
        %v4994 = vld [vmem:[%s4966 + $0xa4] sm:$0xf]
        %v4995 = vld [vmem:[%s4966 + $0xa8] sm:$0xff]
        %v4996 = vld [vmem:[%s4966 + $0xb0] sm:$0xf]
        %v4997 = vld [vmem:[%s4966 + $0xb4] sm:$0xff]
        %v4998 = vld [vmem:[%s4966 + $0xbc] sm:$0xf]
        %s4999 = scalar_lea.vmem [#allocation5], 128
        %v5000 = vld [vmem:[%s4999] sm:$0xff]
        %v5001 = vld [vmem:[%s4999 + $0x8] sm:$0xff]
        %v5002 = vld [vmem:[%s4999 + $0x10] sm:$0xff]
        %v5003 = vld [vmem:[%s4999 + $0x18] sm:$0xff]
        %v5004 = vld [vmem:[%s4999 + $0x20] sm:$0xff]
        %v5005 = vld [vmem:[%s4999 + $0x28] sm:$0xff]
        %v5006 = vld [vmem:[%s4999 + $0x30] sm:$0xff]
        %v5007 = vld [vmem:[%s4999 + $0x38] sm:$0xff]
        %v5008 = vld [vmem:[%s4999 + $0x40] sm:$0xff]
        %v5009 = vld [vmem:[%s4999 + $0x48] sm:$0xff]
        %v5010 = vld [vmem:[%s4999 + $0x50] sm:$0xff]
        %v5011 = vld [vmem:[%s4999 + $0x58] sm:$0xff]
        %v5012 = vld [vmem:[%s4999 + $0x60] sm:$0xff]
        %v5013 = vld [vmem:[%s4999 + $0x68] sm:$0xff]
        %v5014 = vld [vmem:[%s4999 + $0x70] sm:$0xff]
        %v5015 = vld [vmem:[%s4999 + $0x78] sm:$0xff]
        %s5016 = scalar_lea.vmem [#allocation7], 128
        %v5017 = vld [vmem:[%s5016] sm:$0xf]
        %v5018 = vld [vmem:[%s5016 + $0x4] sm:$0xf]
        %v5019 = vld [vmem:[%s5016 + $0x8] sm:$0xf]
        %v5020 = vld [vmem:[%s5016 + $0xc] sm:$0xf]
        %v5021 = vld [vmem:[%s5016 + $0x10] sm:$0xf]
        %v5022 = vld [vmem:[%s5016 + $0x14] sm:$0xf]
        %v5023 = vld [vmem:[%s5016 + $0x18] sm:$0xf]
        %v5024 = vld [vmem:[%s5016 + $0x1c] sm:$0xf]
        %v5025 = vld [vmem:[%s5016 + $0x20] sm:$0xf]
        %v5026 = vld [vmem:[%s5016 + $0x24] sm:$0xf]
        %v5027 = vld [vmem:[%s5016 + $0x28] sm:$0xf]
        %v5028 = vld [vmem:[%s5016 + $0x2c] sm:$0xf]
        %v5029 = vld [vmem:[%s5016 + $0x30] sm:$0xf]
        %v5030 = vld [vmem:[%s5016 + $0x34] sm:$0xf]
        %v5031 = vld [vmem:[%s5016 + $0x38] sm:$0xf]
        %v5032 = vld [vmem:[%s5016 + $0x3c] sm:$0xf]
        %v5033 = vld [vmem:[%s5016 + $0x40] sm:$0xf]
        %v5034 = vld [vmem:[%s5016 + $0x44] sm:$0xf]
        %v5035 = vld [vmem:[%s5016 + $0x48] sm:$0xf]
        %v5036 = vld [vmem:[%s5016 + $0x4c] sm:$0xf]
        %v5037 = vld [vmem:[%s5016 + $0x50] sm:$0xf]
        %v5038 = vld [vmem:[%s5016 + $0x54] sm:$0xf]
        %v5039 = vld [vmem:[%s5016 + $0x58] sm:$0xf]
        %v5040 = vld [vmem:[%s5016 + $0x5c] sm:$0xf]
        %v5041 = vld [vmem:[%s5016 + $0x60] sm:$0xf]
        %v5042 = vld [vmem:[%s5016 + $0x64] sm:$0xf]
        %v5043 = vld [vmem:[%s5016 + $0x68] sm:$0xf]
        %v5044 = vld [vmem:[%s5016 + $0x6c] sm:$0xf]
        %v5045 = vld [vmem:[%s5016 + $0x70] sm:$0xf]
        %v5046 = vld [vmem:[%s5016 + $0x74] sm:$0xf]
        %v5047 = vld [vmem:[%s5016 + $0x78] sm:$0xf]
        %v5048 = vld [vmem:[%s5016 + $0x7c] sm:$0xf]
        %v5050 = vperm.slane %v4965, 0
        %v5052 = vmul.f32 %v1922, %v5050
        %v5053 = vmul.f32 %v1923, %v5050
        %v5054 = vmul.f32 %v1924, %v5050
        %v5055 = vmul.f32 %v1925, %v5050
        %v5056 = vmul.f32 %v1926, %v5050
        %v5057 = vmul.f32 %v1927, %v5050
        %v5058 = vmul.f32 %v1928, %v5050
        %v5059 = vmul.f32 %v1929, %v5050
        %v5060 = vmul.f32 %v1930, %v5050
        %v5061 = vmul.f32 %v1931, %v5050
        %v5062 = vmul.f32 %v1932, %v5050
        %v5063 = vmul.f32 %v1933, %v5050
        %v5064 = vmul.f32 %v1934, %v5050
        %v5065 = vmul.f32 %v1935, %v5050
        %v5066 = vmul.f32 %v1936, %v5050
        %v5067 = vmul.f32 %v1937, %v5050
        %v5068 = vmul.f32 %v2101, %v5050
        %v5069 = vmul.f32 %v2102, %v5050
        %v5070 = vmul.f32 %v2103, %v5050
        %v5071 = vmul.f32 %v2104, %v5050
        %v5072 = vmul.f32 %v2105, %v5050
        %v5073 = vmul.f32 %v2106, %v5050
        %v5074 = vmul.f32 %v2107, %v5050
        %v5075 = vmul.f32 %v2108, %v5050
        %v5076 = vmul.f32 %v2109, %v5050
        %v5077 = vmul.f32 %v2110, %v5050
        %v5078 = vmul.f32 %v2111, %v5050
        %v5079 = vmul.f32 %v2112, %v5050
        %v5080 = vmul.f32 %v2113, %v5050
        %v5081 = vmul.f32 %v2114, %v5050
        %v5082 = vmul.f32 %v2115, %v5050
        %v5083 = vmul.f32 %v2116, %v5050
        %v5084 = vpack.c.bf16 %v5052, %v5052
        %v5085 = vpack.c.bf16 %v5053, %v5053
        %v5086 = vpack.c.bf16 %v5054, %v5054
        %v5087 = vpack.c.bf16 %v5055, %v5055
        %v5088 = vpack.c.bf16 %v5056, %v5056
        %v5089 = vpack.c.bf16 %v5057, %v5057
        %v5090 = vpack.c.bf16 %v5058, %v5058
        %v5091 = vpack.c.bf16 %v5059, %v5059
        %v5092 = vpack.c.bf16 %v5060, %v5060
        %v5093 = vpack.c.bf16 %v5061, %v5061
        %v5094 = vpack.c.bf16 %v5062, %v5062
        %v5095 = vpack.c.bf16 %v5063, %v5063
        %v5096 = vpack.c.bf16 %v5064, %v5064
        %v5097 = vpack.c.bf16 %v5065, %v5065
        %v5098 = vpack.c.bf16 %v5066, %v5066
        %v5099 = vpack.c.bf16 %v5067, %v5067
        %v5100 = vpack.c.bf16 %v5068, %v5068
        %v5101 = vpack.c.bf16 %v5069, %v5069
        %v5102 = vpack.c.bf16 %v5070, %v5070
        %v5103 = vpack.c.bf16 %v5071, %v5071
        %v5104 = vpack.c.bf16 %v5072, %v5072
        %v5105 = vpack.c.bf16 %v5073, %v5073
        %v5106 = vpack.c.bf16 %v5074, %v5074
        %v5107 = vpack.c.bf16 %v5075, %v5075
        %v5108 = vpack.c.bf16 %v5076, %v5076
        %v5109 = vpack.c.bf16 %v5077, %v5077
        %v5110 = vpack.c.bf16 %v5078, %v5078
        %v5111 = vpack.c.bf16 %v5079, %v5079
        %v5112 = vpack.c.bf16 %v5080, %v5080
        %v5113 = vpack.c.bf16 %v5081, %v5081
        %v5114 = vpack.c.bf16 %v5082, %v5082
        %v5115 = vpack.c.bf16 %v5083, %v5083
        %v5132 = vunpack.c.l.b16 %v5084
        %v5133 = vunpack.c.l.b16 %v5085
        %v5134 = vunpack.c.l.b16 %v5086
        %v5135 = vunpack.c.l.b16 %v5087
        %v5136 = vunpack.c.l.b16 %v5088
        %v5137 = vunpack.c.l.b16 %v5089
        %v5138 = vunpack.c.l.b16 %v5090
        %v5139 = vunpack.c.l.b16 %v5091
        %v5140 = vunpack.c.l.b16 %v5092
        %v5141 = vunpack.c.l.b16 %v5093
        %v5142 = vunpack.c.l.b16 %v5094
        %v5143 = vunpack.c.l.b16 %v5095
        %v5144 = vunpack.c.l.b16 %v5096
        %v5145 = vunpack.c.l.b16 %v5097
        %v5146 = vunpack.c.l.b16 %v5098
        %v5147 = vunpack.c.l.b16 %v5099
        %v5148 = vpack.c.b16 %v5133, %v5132
        %v5149 = vpack.c.b16 %v5135, %v5134
        %v5150 = vpack.c.b16 %v5137, %v5136
        %v5151 = vpack.c.b16 %v5139, %v5138
        %v5152 = vpack.c.b16 %v5141, %v5140
        %v5153 = vpack.c.b16 %v5143, %v5142
        %v5154 = vpack.c.b16 %v5145, %v5144
        %v5155 = vpack.c.b16 %v5147, %v5146
        %v5180 = vunpack.c.l.b16 %v5100
        %v5181 = vunpack.c.l.b16 %v5101
        %v5182 = vunpack.c.l.b16 %v5102
        %v5183 = vunpack.c.l.b16 %v5103
        %v5184 = vunpack.c.l.b16 %v5104
        %v5185 = vunpack.c.l.b16 %v5105
        %v5186 = vunpack.c.l.b16 %v5106
        %v5187 = vunpack.c.l.b16 %v5107
        %v5188 = vunpack.c.l.b16 %v5108
        %v5189 = vunpack.c.l.b16 %v5109
        %v5190 = vunpack.c.l.b16 %v5110
        %v5191 = vunpack.c.l.b16 %v5111
        %v5192 = vunpack.c.l.b16 %v5112
        %v5193 = vunpack.c.l.b16 %v5113
        %v5194 = vunpack.c.l.b16 %v5114
        %v5195 = vunpack.c.l.b16 %v5115
        %v5196 = vpack.c.b16 %v5181, %v5180
        %v5197 = vpack.c.b16 %v5183, %v5182
        %v5198 = vpack.c.b16 %v5185, %v5184
        %v5199 = vpack.c.b16 %v5187, %v5186
        %v5200 = vpack.c.b16 %v5189, %v5188
        %v5201 = vpack.c.b16 %v5191, %v5190
        %v5202 = vpack.c.b16 %v5193, %v5192
        %v5203 = vpack.c.b16 %v5195, %v5194
        %v5244 = vunpack.c.l.b16 %v4967
        %v5245 = vunpack.c.h.b16 %v4967
        %v5246 = vunpack.c.l.b16 %v4968
        %v5247 = vunpack.c.l.b16 %v4969
        %v5248 = vunpack.c.h.b16 %v4969
        %v5249 = vunpack.c.l.b16 %v4970
        %v5250 = vunpack.c.l.b16 %v4971
        %v5251 = vunpack.c.h.b16 %v4971
        %v5252 = vunpack.c.l.b16 %v4972
        %v5253 = vunpack.c.l.b16 %v4973
        %v5254 = vunpack.c.h.b16 %v4973
        %v5255 = vunpack.c.l.b16 %v4974
        %v5256 = vunpack.c.l.b16 %v4975
        %v5257 = vunpack.c.h.b16 %v4975
        %v5258 = vunpack.c.l.b16 %v4976
        %v5259 = vunpack.c.l.b16 %v4977
        %v5260 = vunpack.c.h.b16 %v4977
        %v5261 = vunpack.c.l.b16 %v4978
        %v5262 = vunpack.c.l.b16 %v4979
        %v5263 = vunpack.c.h.b16 %v4979
        %v5264 = vunpack.c.l.b16 %v4980
        %v5265 = vunpack.c.l.b16 %v4981
        %v5266 = vunpack.c.h.b16 %v4981
        %v5267 = vunpack.c.l.b16 %v4982
        %v5268 = vunpack.c.l.b16 %v4983
        %v5269 = vunpack.c.h.b16 %v4983
        %v5270 = vunpack.c.l.b16 %v4984
        %v5271 = vunpack.c.l.b16 %v4985
        %v5272 = vunpack.c.h.b16 %v4985
        %v5273 = vunpack.c.l.b16 %v4986
        %v5274 = vunpack.c.l.b16 %v4987
        %v5275 = vunpack.c.h.b16 %v4987
        %v5276 = vunpack.c.l.b16 %v4988
        %v5277 = vunpack.c.l.b16 %v4989
        %v5278 = vunpack.c.h.b16 %v4989
        %v5279 = vunpack.c.l.b16 %v4990
        %v5280 = vunpack.c.l.b16 %v4991
        %v5281 = vunpack.c.h.b16 %v4991
        %v5282 = vunpack.c.l.b16 %v4992
        %v5283 = vunpack.c.l.b16 %v4993
        %v5284 = vunpack.c.h.b16 %v4993
        %v5285 = vunpack.c.l.b16 %v4994
        %v5286 = vunpack.c.l.b16 %v4995
        %v5287 = vunpack.c.h.b16 %v4995
        %v5288 = vunpack.c.l.b16 %v4996
        %v5289 = vunpack.c.l.b16 %v4997
        %v5290 = vunpack.c.h.b16 %v4997
        %v5291 = vunpack.c.l.b16 %v4998
        %v5292 = vpack.c.b16 %v5247, %v5244
        %v5293 = vpack.c.b16 %v5248, %v5245
        %v5294 = vpack.c.b16 %v5249, %v5246
        %v5295 = vpack.c.b16 %v5253, %v5250
        %v5296 = vpack.c.b16 %v5254, %v5251
        %v5297 = vpack.c.b16 %v5255, %v5252
        %v5298 = vpack.c.b16 %v5259, %v5256
        %v5299 = vpack.c.b16 %v5260, %v5257
        %v5300 = vpack.c.b16 %v5261, %v5258
        %v5301 = vpack.c.b16 %v5265, %v5262
        %v5302 = vpack.c.b16 %v5266, %v5263
        %v5303 = vpack.c.b16 %v5267, %v5264
        %v5304 = vpack.c.b16 %v5271, %v5268
        %v5305 = vpack.c.b16 %v5272, %v5269
        %v5306 = vpack.c.b16 %v5273, %v5270
        %v5307 = vpack.c.b16 %v5277, %v5274
        %v5308 = vpack.c.b16 %v5278, %v5275
        %v5309 = vpack.c.b16 %v5279, %v5276
        %v5310 = vpack.c.b16 %v5283, %v5280
        %v5311 = vpack.c.b16 %v5284, %v5281
        %v5312 = vpack.c.b16 %v5285, %v5282
        %v5313 = vpack.c.b16 %v5289, %v5286
        %v5314 = vpack.c.b16 %v5290, %v5287
        %v5315 = vpack.c.b16 %v5291, %v5288
        %5340 = vmatpush.bf16.msra.mxu0 %v5313
        %5341 = vmatpush.bf16.msra.mxu0 %v5310
        %5342 = vmatpush.bf16.msra.mxu0 %v5307
        %5343 = vmatpush.bf16.msra.mxu0 %v5304
        %5344 = vmatpush.bf16.msra.mxu0 %v5301
        %5345 = vmatpush.bf16.msra.mxu0 %v5298
        %5346 = vmatpush.bf16.msra.mxu0 %v5295
        %5347 = vmatpush.bf16.msra.mxu0 %v5292
        %5348 = vmatmul.bf16.gmra.mxu0 %v5148
        %v5349 = vpop.f32.mrf.mxu0
        %v5350 = vadd.f32 0.0, %v5349
        %v5351 = vpop.f32.mrf.mxu0
        %v5352 = vadd.f32 0.0, %v5351
        %5353 = vmatmul.bf16.gmra.mxu0 %v5149
        %v5354 = vpop.f32.mrf.mxu0
        %v5355 = vadd.f32 0.0, %v5354
        %v5356 = vpop.f32.mrf.mxu0
        %v5357 = vadd.f32 0.0, %v5356
        %5358 = vmatmul.bf16.gmra.mxu0 %v5150
        %v5359 = vpop.f32.mrf.mxu0
        %v5360 = vadd.f32 0.0, %v5359
        %v5361 = vpop.f32.mrf.mxu0
        %v5362 = vadd.f32 0.0, %v5361
        %5363 = vmatmul.bf16.gmra.mxu0 %v5151
        %v5364 = vpop.f32.mrf.mxu0
        %v5365 = vadd.f32 0.0, %v5364
        %v5366 = vpop.f32.mrf.mxu0
        %v5367 = vadd.f32 0.0, %v5366
        %5368 = vmatmul.bf16.gmra.mxu0 %v5152
        %v5369 = vpop.f32.mrf.mxu0
        %v5370 = vadd.f32 0.0, %v5369
        %v5371 = vpop.f32.mrf.mxu0
        %v5372 = vadd.f32 0.0, %v5371
        %5373 = vmatmul.bf16.gmra.mxu0 %v5153
        %v5374 = vpop.f32.mrf.mxu0
        %v5375 = vadd.f32 0.0, %v5374
        %v5376 = vpop.f32.mrf.mxu0
        %v5377 = vadd.f32 0.0, %v5376
        %5378 = vmatmul.bf16.gmra.mxu0 %v5154
        %v5379 = vpop.f32.mrf.mxu0
        %v5380 = vadd.f32 0.0, %v5379
        %v5381 = vpop.f32.mrf.mxu0
        %v5382 = vadd.f32 0.0, %v5381
        %5383 = vmatmul.bf16.gmra.mxu0 %v5155
        %v5384 = vpop.f32.mrf.mxu0
        %v5385 = vadd.f32 0.0, %v5384
        %v5386 = vpop.f32.mrf.mxu0
        %v5387 = vadd.f32 0.0, %v5386
        %5388 = vmatmul.bf16.gmra.mxu0 %v5196
        %v5389 = vpop.f32.mrf.mxu0
        %v5390 = vadd.f32 0.0, %v5389
        %v5391 = vpop.f32.mrf.mxu0
        %v5392 = vadd.f32 0.0, %v5391
        %5393 = vmatmul.bf16.gmra.mxu0 %v5197
        %v5394 = vpop.f32.mrf.mxu0
        %v5395 = vadd.f32 0.0, %v5394
        %v5396 = vpop.f32.mrf.mxu0
        %v5397 = vadd.f32 0.0, %v5396
        %5398 = vmatmul.bf16.gmra.mxu0 %v5198
        %v5399 = vpop.f32.mrf.mxu0
        %v5400 = vadd.f32 0.0, %v5399
        %v5401 = vpop.f32.mrf.mxu0
        %v5402 = vadd.f32 0.0, %v5401
        %5403 = vmatmul.bf16.gmra.mxu0 %v5199
        %v5404 = vpop.f32.mrf.mxu0
        %v5405 = vadd.f32 0.0, %v5404
        %v5406 = vpop.f32.mrf.mxu0
        %v5407 = vadd.f32 0.0, %v5406
        %5408 = vmatmul.bf16.gmra.mxu0 %v5200
        %v5409 = vpop.f32.mrf.mxu0
        %v5410 = vadd.f32 0.0, %v5409
        %v5411 = vpop.f32.mrf.mxu0
        %v5412 = vadd.f32 0.0, %v5411
        %5413 = vmatmul.bf16.gmra.mxu0 %v5201
        %v5414 = vpop.f32.mrf.mxu0
        %v5415 = vadd.f32 0.0, %v5414
        %v5416 = vpop.f32.mrf.mxu0
        %v5417 = vadd.f32 0.0, %v5416
        %5418 = vmatmul.bf16.gmra.mxu0 %v5202
        %v5419 = vpop.f32.mrf.mxu0
        %v5420 = vadd.f32 0.0, %v5419
        %v5421 = vpop.f32.mrf.mxu0
        %v5422 = vadd.f32 0.0, %v5421
        %5423 = vmatmul.bf16.gmra.mxu0 %v5203
        %v5424 = vpop.f32.mrf.mxu0
        %v5425 = vadd.f32 0.0, %v5424
        %v5426 = vpop.f32.mrf.mxu0
        %v5427 = vadd.f32 0.0, %v5426
        %5428 = vdwg.mxu0
        %5429 = vmatpush.bf16.msra.mxu0 %v5314
        %5430 = vmatpush.bf16.msra.mxu0 %v5311
        %5431 = vmatpush.bf16.msra.mxu0 %v5308
        %5432 = vmatpush.bf16.msra.mxu0 %v5305
        %5433 = vmatpush.bf16.msra.mxu0 %v5302
        %5434 = vmatpush.bf16.msra.mxu0 %v5299
        %5435 = vmatpush.bf16.msra.mxu0 %v5296
        %5436 = vmatpush.bf16.msra.mxu0 %v5293
        %5437 = vmatmul.bf16.gmra.mxu0 %v5148
        %v5438 = vpop.f32.mrf.mxu0
        %v5439 = vadd.f32 0.0, %v5438
        %v5440 = vpop.f32.mrf.mxu0
        %v5441 = vadd.f32 0.0, %v5440
        %5442 = vmatmul.bf16.gmra.mxu0 %v5149
        %v5443 = vpop.f32.mrf.mxu0
        %v5444 = vadd.f32 0.0, %v5443
        %v5445 = vpop.f32.mrf.mxu0
        %v5446 = vadd.f32 0.0, %v5445
        %5447 = vmatmul.bf16.gmra.mxu0 %v5150
        %v5448 = vpop.f32.mrf.mxu0
        %v5449 = vadd.f32 0.0, %v5448
        %v5450 = vpop.f32.mrf.mxu0
        %v5451 = vadd.f32 0.0, %v5450
        %5452 = vmatmul.bf16.gmra.mxu0 %v5151
        %v5453 = vpop.f32.mrf.mxu0
        %v5454 = vadd.f32 0.0, %v5453
        %v5455 = vpop.f32.mrf.mxu0
        %v5456 = vadd.f32 0.0, %v5455
        %5457 = vmatmul.bf16.gmra.mxu0 %v5152
        %v5458 = vpop.f32.mrf.mxu0
        %v5459 = vadd.f32 0.0, %v5458
        %v5460 = vpop.f32.mrf.mxu0
        %v5461 = vadd.f32 0.0, %v5460
        %5462 = vmatmul.bf16.gmra.mxu0 %v5153
        %v5463 = vpop.f32.mrf.mxu0
        %v5464 = vadd.f32 0.0, %v5463
        %v5465 = vpop.f32.mrf.mxu0
        %v5466 = vadd.f32 0.0, %v5465
        %5467 = vmatmul.bf16.gmra.mxu0 %v5154
        %v5468 = vpop.f32.mrf.mxu0
        %v5469 = vadd.f32 0.0, %v5468
        %v5470 = vpop.f32.mrf.mxu0
        %v5471 = vadd.f32 0.0, %v5470
        %5472 = vmatmul.bf16.gmra.mxu0 %v5155
        %v5473 = vpop.f32.mrf.mxu0
        %v5474 = vadd.f32 0.0, %v5473
        %v5475 = vpop.f32.mrf.mxu0
        %v5476 = vadd.f32 0.0, %v5475
        %5477 = vmatmul.bf16.gmra.mxu0 %v5196
        %v5478 = vpop.f32.mrf.mxu0
        %v5479 = vadd.f32 0.0, %v5478
        %v5480 = vpop.f32.mrf.mxu0
        %v5481 = vadd.f32 0.0, %v5480
        %5482 = vmatmul.bf16.gmra.mxu0 %v5197
        %v5483 = vpop.f32.mrf.mxu0
        %v5484 = vadd.f32 0.0, %v5483
        %v5485 = vpop.f32.mrf.mxu0
        %v5486 = vadd.f32 0.0, %v5485
        %5487 = vmatmul.bf16.gmra.mxu0 %v5198
        %v5488 = vpop.f32.mrf.mxu0
        %v5489 = vadd.f32 0.0, %v5488
        %v5490 = vpop.f32.mrf.mxu0
        %v5491 = vadd.f32 0.0, %v5490
        %5492 = vmatmul.bf16.gmra.mxu0 %v5199
        %v5493 = vpop.f32.mrf.mxu0
        %v5494 = vadd.f32 0.0, %v5493
        %v5495 = vpop.f32.mrf.mxu0
        %v5496 = vadd.f32 0.0, %v5495
        %5497 = vmatmul.bf16.gmra.mxu0 %v5200
        %v5498 = vpop.f32.mrf.mxu0
        %v5499 = vadd.f32 0.0, %v5498
        %v5500 = vpop.f32.mrf.mxu0
        %v5501 = vadd.f32 0.0, %v5500
        %5502 = vmatmul.bf16.gmra.mxu0 %v5201
        %v5503 = vpop.f32.mrf.mxu0
        %v5504 = vadd.f32 0.0, %v5503
        %v5505 = vpop.f32.mrf.mxu0
        %v5506 = vadd.f32 0.0, %v5505
        %5507 = vmatmul.bf16.gmra.mxu0 %v5202
        %v5508 = vpop.f32.mrf.mxu0
        %v5509 = vadd.f32 0.0, %v5508
        %v5510 = vpop.f32.mrf.mxu0
        %v5511 = vadd.f32 0.0, %v5510
        %5512 = vmatmul.bf16.gmra.mxu0 %v5203
        %v5513 = vpop.f32.mrf.mxu0
        %v5514 = vadd.f32 0.0, %v5513
        %v5515 = vpop.f32.mrf.mxu0
        %v5516 = vadd.f32 0.0, %v5515
        %5517 = vdwg.mxu0
        %5518 = vmatpush.bf16.msra.mxu0 %v5315
        %5519 = vmatpush.bf16.msra.mxu0 %v5312
        %5520 = vmatpush.bf16.msra.mxu0 %v5309
        %5521 = vmatpush.bf16.msra.mxu0 %v5306
        %5522 = vmatpush.bf16.msra.mxu0 %v5303
        %5523 = vmatpush.bf16.msra.mxu0 %v5300
        %5524 = vmatpush.bf16.msra.mxu0 %v5297
        %5525 = vmatpush.bf16.msra.mxu0 %v5294
        %5526 = vmatmul.bf16.gmra.mxu0 %v5148
        %v5527 = vpop.f32.mrf.mxu0
        %v5528 = vadd.f32 0.0, %v5527
        %v5529 = vpop.f32.mrf.mxu0
        %v5530 = vadd.f32 0.0, %v5529
        %5531 = vmatmul.bf16.gmra.mxu0 %v5149
        %v5532 = vpop.f32.mrf.mxu0
        %v5533 = vadd.f32 0.0, %v5532
        %v5534 = vpop.f32.mrf.mxu0
        %v5535 = vadd.f32 0.0, %v5534
        %5536 = vmatmul.bf16.gmra.mxu0 %v5150
        %v5537 = vpop.f32.mrf.mxu0
        %v5538 = vadd.f32 0.0, %v5537
        %v5539 = vpop.f32.mrf.mxu0
        %v5540 = vadd.f32 0.0, %v5539
        %5541 = vmatmul.bf16.gmra.mxu0 %v5151
        %v5542 = vpop.f32.mrf.mxu0
        %v5543 = vadd.f32 0.0, %v5542
        %v5544 = vpop.f32.mrf.mxu0
        %v5545 = vadd.f32 0.0, %v5544
        %5546 = vmatmul.bf16.gmra.mxu0 %v5152
        %v5547 = vpop.f32.mrf.mxu0
        %v5548 = vadd.f32 0.0, %v5547
        %v5549 = vpop.f32.mrf.mxu0
        %v5550 = vadd.f32 0.0, %v5549
        %5551 = vmatmul.bf16.gmra.mxu0 %v5153
        %v5552 = vpop.f32.mrf.mxu0
        %v5553 = vadd.f32 0.0, %v5552
        %v5554 = vpop.f32.mrf.mxu0
        %v5555 = vadd.f32 0.0, %v5554
        %5556 = vmatmul.bf16.gmra.mxu0 %v5154
        %v5557 = vpop.f32.mrf.mxu0
        %v5558 = vadd.f32 0.0, %v5557
        %v5559 = vpop.f32.mrf.mxu0
        %v5560 = vadd.f32 0.0, %v5559
        %5561 = vmatmul.bf16.gmra.mxu0 %v5155
        %v5562 = vpop.f32.mrf.mxu0
        %v5563 = vadd.f32 0.0, %v5562
        %v5564 = vpop.f32.mrf.mxu0
        %v5565 = vadd.f32 0.0, %v5564
        %5566 = vmatmul.bf16.gmra.mxu0 %v5196
        %v5567 = vpop.f32.mrf.mxu0
        %v5568 = vadd.f32 0.0, %v5567
        %v5569 = vpop.f32.mrf.mxu0
        %v5570 = vadd.f32 0.0, %v5569
        %5571 = vmatmul.bf16.gmra.mxu0 %v5197
        %v5572 = vpop.f32.mrf.mxu0
        %v5573 = vadd.f32 0.0, %v5572
        %v5574 = vpop.f32.mrf.mxu0
        %v5575 = vadd.f32 0.0, %v5574
        %5576 = vmatmul.bf16.gmra.mxu0 %v5198
        %v5577 = vpop.f32.mrf.mxu0
        %v5578 = vadd.f32 0.0, %v5577
        %v5579 = vpop.f32.mrf.mxu0
        %v5580 = vadd.f32 0.0, %v5579
        %5581 = vmatmul.bf16.gmra.mxu0 %v5199
        %v5582 = vpop.f32.mrf.mxu0
        %v5583 = vadd.f32 0.0, %v5582
        %v5584 = vpop.f32.mrf.mxu0
        %v5585 = vadd.f32 0.0, %v5584
        %5586 = vmatmul.bf16.gmra.mxu0 %v5200
        %v5587 = vpop.f32.mrf.mxu0
        %v5588 = vadd.f32 0.0, %v5587
        %v5589 = vpop.f32.mrf.mxu0
        %v5590 = vadd.f32 0.0, %v5589
        %5591 = vmatmul.bf16.gmra.mxu0 %v5201
        %v5592 = vpop.f32.mrf.mxu0
        %v5593 = vadd.f32 0.0, %v5592
        %v5594 = vpop.f32.mrf.mxu0
        %v5595 = vadd.f32 0.0, %v5594
        %5596 = vmatmul.bf16.gmra.mxu0 %v5202
        %v5597 = vpop.f32.mrf.mxu0
        %v5598 = vadd.f32 0.0, %v5597
        %v5599 = vpop.f32.mrf.mxu0
        %v5600 = vadd.f32 0.0, %v5599
        %5601 = vmatmul.bf16.gmra.mxu0 %v5203
        %v5602 = vpop.f32.mrf.mxu0
        %v5603 = vadd.f32 0.0, %v5602
        %v5604 = vpop.f32.mrf.mxu0
        %v5605 = vadd.f32 0.0, %v5604
        %5606 = vdwg.mxu0
        %v5607 = vmul.f32 %v4884, %v4884
        %v5608 = vmul.f32 %v4885, %v4885
        %v5609 = vmul.f32 %v4886, %v4886
        %v5610 = vmul.f32 %v4887, %v4887
        %v5611 = vmul.f32 %v4888, %v4888
        %v5612 = vmul.f32 %v4889, %v4889
        %v5613 = vmul.f32 %v4890, %v4890
        %v5614 = vmul.f32 %v4891, %v4891
        %v5615 = vmul.f32 %v4892, %v4892
        %v5616 = vmul.f32 %v4893, %v4893
        %v5617 = vmul.f32 %v4894, %v4894
        %v5618 = vmul.f32 %v4895, %v4895
        %v5619 = vmul.f32 %v4896, %v4896
        %v5620 = vmul.f32 %v4897, %v4897
        %v5621 = vmul.f32 %v4898, %v4898
        %v5622 = vmul.f32 %v4899, %v4899
        %5623 = vadd.xlane.f32.xlu0 %v5607
        %v5624 = vpop.xlane.xlu0 %5623
        %5625 = vadd.xlane.f32.xlu0 %v5608
        %v5626 = vpop.xlane.xlu0 %5625
        %5627 = vadd.xlane.f32.xlu0 %v5609
        %v5628 = vpop.xlane.xlu0 %5627
        %5629 = vadd.xlane.f32.xlu0 %v5610
        %v5630 = vpop.xlane.xlu0 %5629
        %5631 = vadd.xlane.f32.xlu0 %v5611
        %v5632 = vpop.xlane.xlu0 %5631
        %5633 = vadd.xlane.f32.xlu0 %v5612
        %v5634 = vpop.xlane.xlu0 %5633
        %5635 = vadd.xlane.f32.xlu0 %v5613
        %v5636 = vpop.xlane.xlu0 %5635
        %5637 = vadd.xlane.f32.xlu0 %v5614
        %v5638 = vpop.xlane.xlu0 %5637
        %5639 = vadd.xlane.f32.xlu0 %v5615
        %v5640 = vpop.xlane.xlu0 %5639
        %5641 = vadd.xlane.f32.xlu0 %v5616
        %v5642 = vpop.xlane.xlu0 %5641
        %5643 = vadd.xlane.f32.xlu0 %v5617
        %v5644 = vpop.xlane.xlu0 %5643
        %5645 = vadd.xlane.f32.xlu0 %v5618
        %v5646 = vpop.xlane.xlu0 %5645
        %5647 = vadd.xlane.f32.xlu0 %v5619
        %v5648 = vpop.xlane.xlu0 %5647
        %5649 = vadd.xlane.f32.xlu0 %v5620
        %v5650 = vpop.xlane.xlu0 %5649
        %5651 = vadd.xlane.f32.xlu0 %v5621
        %v5652 = vpop.xlane.xlu0 %5651
        %5653 = vadd.xlane.f32.xlu0 %v5622
        %v5654 = vpop.xlane.xlu0 %5653
        %v5655 = vmul.f32 %v5624, %v1729
        %v5656 = vmul.f32 %v5626, %v1729
        %v5657 = vmul.f32 %v5628, %v1729
        %v5658 = vmul.f32 %v5630, %v1729
        %v5659 = vmul.f32 %v5632, %v1729
        %v5660 = vmul.f32 %v5634, %v1729
        %v5661 = vmul.f32 %v5636, %v1729
        %v5662 = vmul.f32 %v5638, %v1729
        %v5663 = vmul.f32 %v5640, %v1729
        %v5664 = vmul.f32 %v5642, %v1729
        %v5665 = vmul.f32 %v5644, %v1729
        %v5666 = vmul.f32 %v5646, %v1729
        %v5667 = vmul.f32 %v5648, %v1729
        %v5668 = vmul.f32 %v5650, %v1729
        %v5669 = vmul.f32 %v5652, %v1729
        %v5670 = vmul.f32 %v5654, %v1729
        %v5671 = vadd.f32 %v5655, 1e-06
        %v5672 = vadd.f32 %v5656, 1e-06
        %v5673 = vadd.f32 %v5657, 1e-06
        %v5674 = vadd.f32 %v5658, 1e-06
        %v5675 = vadd.f32 %v5659, 1e-06
        %v5676 = vadd.f32 %v5660, 1e-06
        %v5677 = vadd.f32 %v5661, 1e-06
        %v5678 = vadd.f32 %v5662, 1e-06
        %v5679 = vadd.f32 %v5663, 1e-06
        %v5680 = vadd.f32 %v5664, 1e-06
        %v5681 = vadd.f32 %v5665, 1e-06
        %v5682 = vadd.f32 %v5666, 1e-06
        %v5683 = vadd.f32 %v5667, 1e-06
        %v5684 = vadd.f32 %v5668, 1e-06
        %v5685 = vadd.f32 %v5669, 1e-06
        %v5686 = vadd.f32 %v5670, 1e-06
        %v5687 = vrsqrt.pop %v5671
        %v5688 = vmul.f32 %v5687, %v5671
        %v5689 = vmul.f32 %v5688, %v5687
        %v5690 = vmul.f32 0.5, %v5689
        %v5691 = vsub.f32 1.5, %v5690
        %v5692 = vmul.f32 %v5687, %v5691
        %vm5693 = vweird.f32 %v5671
        %vm5694 = vweird.f32 %v5687
        %vm5695 = vmor %vm5693, %vm5694
        %v5696 = vsel %vm5695, %v5687, %v5692
        %v5697 = vrsqrt.pop %v5672
        %v5698 = vmul.f32 %v5697, %v5672
        %v5699 = vmul.f32 %v5698, %v5697
        %v5700 = vmul.f32 0.5, %v5699
        %v5701 = vsub.f32 1.5, %v5700
        %v5702 = vmul.f32 %v5697, %v5701
        %vm5703 = vweird.f32 %v5672
        %vm5704 = vweird.f32 %v5697
        %vm5705 = vmor %vm5703, %vm5704
        %v5706 = vsel %vm5705, %v5697, %v5702
        %v5707 = vrsqrt.pop %v5673
        %v5708 = vmul.f32 %v5707, %v5673
        %v5709 = vmul.f32 %v5708, %v5707
        %v5710 = vmul.f32 0.5, %v5709
        %v5711 = vsub.f32 1.5, %v5710
        %v5712 = vmul.f32 %v5707, %v5711
        %vm5713 = vweird.f32 %v5673
        %vm5714 = vweird.f32 %v5707
        %vm5715 = vmor %vm5713, %vm5714
        %v5716 = vsel %vm5715, %v5707, %v5712
        %v5717 = vrsqrt.pop %v5674
        %v5718 = vmul.f32 %v5717, %v5674
        %v5719 = vmul.f32 %v5718, %v5717
        %v5720 = vmul.f32 0.5, %v5719
        %v5721 = vsub.f32 1.5, %v5720
        %v5722 = vmul.f32 %v5717, %v5721
        %vm5723 = vweird.f32 %v5674
        %vm5724 = vweird.f32 %v5717
        %vm5725 = vmor %vm5723, %vm5724
        %v5726 = vsel %vm5725, %v5717, %v5722
        %v5727 = vrsqrt.pop %v5675
        %v5728 = vmul.f32 %v5727, %v5675
        %v5729 = vmul.f32 %v5728, %v5727
        %v5730 = vmul.f32 0.5, %v5729
        %v5731 = vsub.f32 1.5, %v5730
        %v5732 = vmul.f32 %v5727, %v5731
        %vm5733 = vweird.f32 %v5675
        %vm5734 = vweird.f32 %v5727
        %vm5735 = vmor %vm5733, %vm5734
        %v5736 = vsel %vm5735, %v5727, %v5732
        %v5737 = vrsqrt.pop %v5676
        %v5738 = vmul.f32 %v5737, %v5676
        %v5739 = vmul.f32 %v5738, %v5737
        %v5740 = vmul.f32 0.5, %v5739
        %v5741 = vsub.f32 1.5, %v5740
        %v5742 = vmul.f32 %v5737, %v5741
        %vm5743 = vweird.f32 %v5676
        %vm5744 = vweird.f32 %v5737
        %vm5745 = vmor %vm5743, %vm5744
        %v5746 = vsel %vm5745, %v5737, %v5742
        %v5747 = vrsqrt.pop %v5677
        %v5748 = vmul.f32 %v5747, %v5677
        %v5749 = vmul.f32 %v5748, %v5747
        %v5750 = vmul.f32 0.5, %v5749
        %v5751 = vsub.f32 1.5, %v5750
        %v5752 = vmul.f32 %v5747, %v5751
        %vm5753 = vweird.f32 %v5677
        %vm5754 = vweird.f32 %v5747
        %vm5755 = vmor %vm5753, %vm5754
        %v5756 = vsel %vm5755, %v5747, %v5752
        %v5757 = vrsqrt.pop %v5678
        %v5758 = vmul.f32 %v5757, %v5678
        %v5759 = vmul.f32 %v5758, %v5757
        %v5760 = vmul.f32 0.5, %v5759
        %v5761 = vsub.f32 1.5, %v5760
        %v5762 = vmul.f32 %v5757, %v5761
        %vm5763 = vweird.f32 %v5678
        %vm5764 = vweird.f32 %v5757
        %vm5765 = vmor %vm5763, %vm5764
        %v5766 = vsel %vm5765, %v5757, %v5762
        %v5767 = vrsqrt.pop %v5679
        %v5768 = vmul.f32 %v5767, %v5679
        %v5769 = vmul.f32 %v5768, %v5767
        %v5770 = vmul.f32 0.5, %v5769
        %v5771 = vsub.f32 1.5, %v5770
        %v5772 = vmul.f32 %v5767, %v5771
        %vm5773 = vweird.f32 %v5679
        %vm5774 = vweird.f32 %v5767
        %vm5775 = vmor %vm5773, %vm5774
        %v5776 = vsel %vm5775, %v5767, %v5772
        %v5777 = vrsqrt.pop %v5680
        %v5778 = vmul.f32 %v5777, %v5680
        %v5779 = vmul.f32 %v5778, %v5777
        %v5780 = vmul.f32 0.5, %v5779
        %v5781 = vsub.f32 1.5, %v5780
        %v5782 = vmul.f32 %v5777, %v5781
        %vm5783 = vweird.f32 %v5680
        %vm5784 = vweird.f32 %v5777
        %vm5785 = vmor %vm5783, %vm5784
        %v5786 = vsel %vm5785, %v5777, %v5782
        %v5787 = vrsqrt.pop %v5681
        %v5788 = vmul.f32 %v5787, %v5681
        %v5789 = vmul.f32 %v5788, %v5787
        %v5790 = vmul.f32 0.5, %v5789
        %v5791 = vsub.f32 1.5, %v5790
        %v5792 = vmul.f32 %v5787, %v5791
        %vm5793 = vweird.f32 %v5681
        %vm5794 = vweird.f32 %v5787
        %vm5795 = vmor %vm5793, %vm5794
        %v5796 = vsel %vm5795, %v5787, %v5792
        %v5797 = vrsqrt.pop %v5682
        %v5798 = vmul.f32 %v5797, %v5682
        %v5799 = vmul.f32 %v5798, %v5797
        %v5800 = vmul.f32 0.5, %v5799
        %v5801 = vsub.f32 1.5, %v5800
        %v5802 = vmul.f32 %v5797, %v5801
        %vm5803 = vweird.f32 %v5682
        %vm5804 = vweird.f32 %v5797
        %vm5805 = vmor %vm5803, %vm5804
        %v5806 = vsel %vm5805, %v5797, %v5802
        %v5807 = vrsqrt.pop %v5683
        %v5808 = vmul.f32 %v5807, %v5683
        %v5809 = vmul.f32 %v5808, %v5807
        %v5810 = vmul.f32 0.5, %v5809
        %v5811 = vsub.f32 1.5, %v5810
        %v5812 = vmul.f32 %v5807, %v5811
        %vm5813 = vweird.f32 %v5683
        %vm5814 = vweird.f32 %v5807
        %vm5815 = vmor %vm5813, %vm5814
        %v5816 = vsel %vm5815, %v5807, %v5812
        %v5817 = vrsqrt.pop %v5684
        %v5818 = vmul.f32 %v5817, %v5684
        %v5819 = vmul.f32 %v5818, %v5817
        %v5820 = vmul.f32 0.5, %v5819
        %v5821 = vsub.f32 1.5, %v5820
        %v5822 = vmul.f32 %v5817, %v5821
        %vm5823 = vweird.f32 %v5684
        %vm5824 = vweird.f32 %v5817
        %vm5825 = vmor %vm5823, %vm5824
        %v5826 = vsel %vm5825, %v5817, %v5822
        %v5827 = vrsqrt.pop %v5685
        %v5828 = vmul.f32 %v5827, %v5685
        %v5829 = vmul.f32 %v5828, %v5827
        %v5830 = vmul.f32 0.5, %v5829
        %v5831 = vsub.f32 1.5, %v5830
        %v5832 = vmul.f32 %v5827, %v5831
        %vm5833 = vweird.f32 %v5685
        %vm5834 = vweird.f32 %v5827
        %vm5835 = vmor %vm5833, %vm5834
        %v5836 = vsel %vm5835, %v5827, %v5832
        %v5837 = vrsqrt.pop %v5686
        %v5838 = vmul.f32 %v5837, %v5686
        %v5839 = vmul.f32 %v5838, %v5837
        %v5840 = vmul.f32 0.5, %v5839
        %v5841 = vsub.f32 1.5, %v5840
        %v5842 = vmul.f32 %v5837, %v5841
        %vm5843 = vweird.f32 %v5686
        %vm5844 = vweird.f32 %v5837
        %vm5845 = vmor %vm5843, %vm5844
        %v5846 = vsel %vm5845, %v5837, %v5842
        %v5847 = vmul.f32 %v4884, %v5696
        %v5848 = vmul.f32 %v4885, %v5706
        %v5849 = vmul.f32 %v4886, %v5716
        %v5850 = vmul.f32 %v4887, %v5726
        %v5851 = vmul.f32 %v4888, %v5736
        %v5852 = vmul.f32 %v4889, %v5746
        %v5853 = vmul.f32 %v4890, %v5756
        %v5854 = vmul.f32 %v4891, %v5766
        %v5855 = vmul.f32 %v4892, %v5776
        %v5856 = vmul.f32 %v4893, %v5786
        %v5857 = vmul.f32 %v4894, %v5796
        %v5858 = vmul.f32 %v4895, %v5806
        %v5859 = vmul.f32 %v4896, %v5816
        %v5860 = vmul.f32 %v4897, %v5826
        %v5861 = vmul.f32 %v4898, %v5836
        %v5862 = vmul.f32 %v4899, %v5846
        %v5863 = vmul.f32 %v5847, %v5050
        %v5864 = vmul.f32 %v5848, %v5050
        %v5865 = vmul.f32 %v5849, %v5050
        %v5866 = vmul.f32 %v5850, %v5050
        %v5867 = vmul.f32 %v5851, %v5050
        %v5868 = vmul.f32 %v5852, %v5050
        %v5869 = vmul.f32 %v5853, %v5050
        %v5870 = vmul.f32 %v5854, %v5050
        %v5871 = vmul.f32 %v5855, %v5050
        %v5872 = vmul.f32 %v5856, %v5050
        %v5873 = vmul.f32 %v5857, %v5050
        %v5874 = vmul.f32 %v5858, %v5050
        %v5875 = vmul.f32 %v5859, %v5050
        %v5876 = vmul.f32 %v5860, %v5050
        %v5877 = vmul.f32 %v5861, %v5050
        %v5878 = vmul.f32 %v5862, %v5050
        %v5879 = vmul.f32 %v4884, %v4948
        %v5880 = vmul.f32 %v4885, %v4949
        %v5881 = vmul.f32 %v4886, %v4950
        %v5882 = vmul.f32 %v4887, %v4951
        %v5883 = vmul.f32 %v4888, %v4952
        %v5884 = vmul.f32 %v4889, %v4953
        %v5885 = vmul.f32 %v4890, %v4954
        %v5886 = vmul.f32 %v4891, %v4955
        %v5887 = vmul.f32 %v4892, %v4956
        %v5888 = vmul.f32 %v4893, %v4957
        %v5889 = vmul.f32 %v4894, %v4958
        %v5890 = vmul.f32 %v4895, %v4959
        %v5891 = vmul.f32 %v4896, %v4960
        %v5892 = vmul.f32 %v4897, %v4961
        %v5893 = vmul.f32 %v4898, %v4962
        %v5894 = vmul.f32 %v4899, %v4963
        %5895 = vadd.xlane.f32.xlu0 %v5879
        %v5896 = vpop.xlane.xlu0 %5895
        %5897 = vadd.xlane.f32.xlu0 %v5880
        %v5898 = vpop.xlane.xlu0 %5897
        %5899 = vadd.xlane.f32.xlu0 %v5881
        %v5900 = vpop.xlane.xlu0 %5899
        %5901 = vadd.xlane.f32.xlu0 %v5882
        %v5902 = vpop.xlane.xlu0 %5901
        %5903 = vadd.xlane.f32.xlu0 %v5883
        %v5904 = vpop.xlane.xlu0 %5903
        %5905 = vadd.xlane.f32.xlu0 %v5884
        %v5906 = vpop.xlane.xlu0 %5905
        %5907 = vadd.xlane.f32.xlu0 %v5885
        %v5908 = vpop.xlane.xlu0 %5907
        %5909 = vadd.xlane.f32.xlu0 %v5886
        %v5910 = vpop.xlane.xlu0 %5909
        %5911 = vadd.xlane.f32.xlu0 %v5887
        %v5912 = vpop.xlane.xlu0 %5911
        %5913 = vadd.xlane.f32.xlu0 %v5888
        %v5914 = vpop.xlane.xlu0 %5913
        %5915 = vadd.xlane.f32.xlu0 %v5889
        %v5916 = vpop.xlane.xlu0 %5915
        %5917 = vadd.xlane.f32.xlu0 %v5890
        %v5918 = vpop.xlane.xlu0 %5917
        %5919 = vadd.xlane.f32.xlu0 %v5891
        %v5920 = vpop.xlane.xlu0 %5919
        %5921 = vadd.xlane.f32.xlu0 %v5892
        %v5922 = vpop.xlane.xlu0 %5921
        %5923 = vadd.xlane.f32.xlu0 %v5893
        %v5924 = vpop.xlane.xlu0 %5923
        %5925 = vadd.xlane.f32.xlu0 %v5894
        %v5926 = vpop.xlane.xlu0 %5925
        %v5927 = vmul.f32 %v5896, %v1729
        %v5928 = vmul.f32 %v5898, %v1729
        %v5929 = vmul.f32 %v5900, %v1729
        %v5930 = vmul.f32 %v5902, %v1729
        %v5931 = vmul.f32 %v5904, %v1729
        %v5932 = vmul.f32 %v5906, %v1729
        %v5933 = vmul.f32 %v5908, %v1729
        %v5934 = vmul.f32 %v5910, %v1729
        %v5935 = vmul.f32 %v5912, %v1729
        %v5936 = vmul.f32 %v5914, %v1729
        %v5937 = vmul.f32 %v5916, %v1729
        %v5938 = vmul.f32 %v5918, %v1729
        %v5939 = vmul.f32 %v5920, %v1729
        %v5940 = vmul.f32 %v5922, %v1729
        %v5941 = vmul.f32 %v5924, %v1729
        %v5942 = vmul.f32 %v5926, %v1729
        %v5943 = vmul.f32 %v4948, %v5696
        %v5944 = vmul.f32 %v4949, %v5706
        %v5945 = vmul.f32 %v4950, %v5716
        %v5946 = vmul.f32 %v4951, %v5726
        %v5947 = vmul.f32 %v4952, %v5736
        %v5948 = vmul.f32 %v4953, %v5746
        %v5949 = vmul.f32 %v4954, %v5756
        %v5950 = vmul.f32 %v4955, %v5766
        %v5951 = vmul.f32 %v4956, %v5776
        %v5952 = vmul.f32 %v4957, %v5786
        %v5953 = vmul.f32 %v4958, %v5796
        %v5954 = vmul.f32 %v4959, %v5806
        %v5955 = vmul.f32 %v4960, %v5816
        %v5956 = vmul.f32 %v4961, %v5826
        %v5957 = vmul.f32 %v4962, %v5836
        %v5958 = vmul.f32 %v4963, %v5846
        %v5959 = vmul.f32 %v5696, %v5696
        %v5960 = vmul.f32 %v5706, %v5706
        %v5961 = vmul.f32 %v5716, %v5716
        %v5962 = vmul.f32 %v5726, %v5726
        %v5963 = vmul.f32 %v5736, %v5736
        %v5964 = vmul.f32 %v5746, %v5746
        %v5965 = vmul.f32 %v5756, %v5756
        %v5966 = vmul.f32 %v5766, %v5766
        %v5967 = vmul.f32 %v5776, %v5776
        %v5968 = vmul.f32 %v5786, %v5786
        %v5969 = vmul.f32 %v5796, %v5796
        %v5970 = vmul.f32 %v5806, %v5806
        %v5971 = vmul.f32 %v5816, %v5816
        %v5972 = vmul.f32 %v5826, %v5826
        %v5973 = vmul.f32 %v5836, %v5836
        %v5974 = vmul.f32 %v5846, %v5846
        %v5975 = vmul.f32 %v5959, %v5696
        %v5976 = vmul.f32 %v5960, %v5706
        %v5977 = vmul.f32 %v5961, %v5716
        %v5978 = vmul.f32 %v5962, %v5726
        %v5979 = vmul.f32 %v5963, %v5736
        %v5980 = vmul.f32 %v5964, %v5746
        %v5981 = vmul.f32 %v5965, %v5756
        %v5982 = vmul.f32 %v5966, %v5766
        %v5983 = vmul.f32 %v5967, %v5776
        %v5984 = vmul.f32 %v5968, %v5786
        %v5985 = vmul.f32 %v5969, %v5796
        %v5986 = vmul.f32 %v5970, %v5806
        %v5987 = vmul.f32 %v5971, %v5816
        %v5988 = vmul.f32 %v5972, %v5826
        %v5989 = vmul.f32 %v5973, %v5836
        %v5990 = vmul.f32 %v5974, %v5846
        %v5991 = vmul.f32 %v4884, %v5975
        %v5992 = vmul.f32 %v4885, %v5976
        %v5993 = vmul.f32 %v4886, %v5977
        %v5994 = vmul.f32 %v4887, %v5978
        %v5995 = vmul.f32 %v4888, %v5979
        %v5996 = vmul.f32 %v4889, %v5980
        %v5997 = vmul.f32 %v4890, %v5981
        %v5998 = vmul.f32 %v4891, %v5982
        %v5999 = vmul.f32 %v4892, %v5983
        %v6000 = vmul.f32 %v4893, %v5984
        %v6001 = vmul.f32 %v4894, %v5985
        %v6002 = vmul.f32 %v4895, %v5986
        %v6003 = vmul.f32 %v4896, %v5987
        %v6004 = vmul.f32 %v4897, %v5988
        %v6005 = vmul.f32 %v4898, %v5989
        %v6006 = vmul.f32 %v4899, %v5990
        %v6007 = vmul.f32 %v5991, %v5927
        %v6008 = vmul.f32 %v5992, %v5928
        %v6009 = vmul.f32 %v5993, %v5929
        %v6010 = vmul.f32 %v5994, %v5930
        %v6011 = vmul.f32 %v5995, %v5931
        %v6012 = vmul.f32 %v5996, %v5932
        %v6013 = vmul.f32 %v5997, %v5933
        %v6014 = vmul.f32 %v5998, %v5934
        %v6015 = vmul.f32 %v5999, %v5935
        %v6016 = vmul.f32 %v6000, %v5936
        %v6017 = vmul.f32 %v6001, %v5937
        %v6018 = vmul.f32 %v6002, %v5938
        %v6019 = vmul.f32 %v6003, %v5939
        %v6020 = vmul.f32 %v6004, %v5940
        %v6021 = vmul.f32 %v6005, %v5941
        %v6022 = vmul.f32 %v6006, %v5942
        %v6023 = vsub.f32 %v5943, %v6007
        %v6024 = vsub.f32 %v5944, %v6008
        %v6025 = vsub.f32 %v5945, %v6009
        %v6026 = vsub.f32 %v5946, %v6010
        %v6027 = vsub.f32 %v5947, %v6011
        %v6028 = vsub.f32 %v5948, %v6012
        %v6029 = vsub.f32 %v5949, %v6013
        %v6030 = vsub.f32 %v5950, %v6014
        %v6031 = vsub.f32 %v5951, %v6015
        %v6032 = vsub.f32 %v5952, %v6016
        %v6033 = vsub.f32 %v5953, %v6017
        %v6034 = vsub.f32 %v5954, %v6018
        %v6035 = vsub.f32 %v5955, %v6019
        %v6036 = vsub.f32 %v5956, %v6020
        %v6037 = vsub.f32 %v5957, %v6021
        %v6038 = vsub.f32 %v5958, %v6022
        %v6039 = vmul.f32 %v6023, %v5050
        %v6040 = vmul.f32 %v6024, %v5050
        %v6041 = vmul.f32 %v6025, %v5050
        %v6042 = vmul.f32 %v6026, %v5050
        %v6043 = vmul.f32 %v6027, %v5050
        %v6044 = vmul.f32 %v6028, %v5050
        %v6045 = vmul.f32 %v6029, %v5050
        %v6046 = vmul.f32 %v6030, %v5050
        %v6047 = vmul.f32 %v6031, %v5050
        %v6048 = vmul.f32 %v6032, %v5050
        %v6049 = vmul.f32 %v6033, %v5050
        %v6050 = vmul.f32 %v6034, %v5050
        %v6051 = vmul.f32 %v6035, %v5050
        %v6052 = vmul.f32 %v6036, %v5050
        %v6053 = vmul.f32 %v6037, %v5050
        %v6054 = vmul.f32 %v6038, %v5050
        %v6055 = vadd.f32 %v5350, 1.0
        %v6056 = vadd.f32 %v5352, 1.0
        %v6057 = vadd.f32 %v5355, 1.0
        %v6058 = vadd.f32 %v5357, 1.0
        %v6059 = vadd.f32 %v5360, 1.0
        %v6060 = vadd.f32 %v5362, 1.0
        %v6061 = vadd.f32 %v5365, 1.0
        %v6062 = vadd.f32 %v5367, 1.0
        %v6063 = vadd.f32 %v5370, 1.0
        %v6064 = vadd.f32 %v5372, 1.0
        %v6065 = vadd.f32 %v5375, 1.0
        %v6066 = vadd.f32 %v5377, 1.0
        %v6067 = vadd.f32 %v5380, 1.0
        %v6068 = vadd.f32 %v5382, 1.0
        %v6069 = vadd.f32 %v5385, 1.0
        %v6070 = vadd.f32 %v5387, 1.0
        %v6071 = vmul.f32 %v5863, %v6055
        %v6072 = vmul.f32 %v5864, %v6056
        %v6073 = vmul.f32 %v5865, %v6057
        %v6074 = vmul.f32 %v5866, %v6058
        %v6075 = vmul.f32 %v5867, %v6059
        %v6076 = vmul.f32 %v5868, %v6060
        %v6077 = vmul.f32 %v5869, %v6061
        %v6078 = vmul.f32 %v5870, %v6062
        %v6079 = vmul.f32 %v5871, %v6063
        %v6080 = vmul.f32 %v5872, %v6064
        %v6081 = vmul.f32 %v5873, %v6065
        %v6082 = vmul.f32 %v5874, %v6066
        %v6083 = vmul.f32 %v5875, %v6067
        %v6084 = vmul.f32 %v5876, %v6068
        %v6085 = vmul.f32 %v5877, %v6069
        %v6086 = vmul.f32 %v5878, %v6070
        %v6087 = vadd.f32 %v6071, %v5439
        %v6088 = vadd.f32 %v6072, %v5441
        %v6089 = vadd.f32 %v6073, %v5444
        %v6090 = vadd.f32 %v6074, %v5446
        %v6091 = vadd.f32 %v6075, %v5449
        %v6092 = vadd.f32 %v6076, %v5451
        %v6093 = vadd.f32 %v6077, %v5454
        %v6094 = vadd.f32 %v6078, %v5456
        %v6095 = vadd.f32 %v6079, %v5459
        %v6096 = vadd.f32 %v6080, %v5461
        %v6097 = vadd.f32 %v6081, %v5464
        %v6098 = vadd.f32 %v6082, %v5466
        %v6099 = vadd.f32 %v6083, %v5469
        %v6100 = vadd.f32 %v6084, %v5471
        %v6101 = vadd.f32 %v6085, %v5474
        %v6102 = vadd.f32 %v6086, %v5476
        %v6103 = vmul.f32 %v6039, %v6055
        %v6104 = vmul.f32 %v6040, %v6056
        %v6105 = vmul.f32 %v6041, %v6057
        %v6106 = vmul.f32 %v6042, %v6058
        %v6107 = vmul.f32 %v6043, %v6059
        %v6108 = vmul.f32 %v6044, %v6060
        %v6109 = vmul.f32 %v6045, %v6061
        %v6110 = vmul.f32 %v6046, %v6062
        %v6111 = vmul.f32 %v6047, %v6063
        %v6112 = vmul.f32 %v6048, %v6064
        %v6113 = vmul.f32 %v6049, %v6065
        %v6114 = vmul.f32 %v6050, %v6066
        %v6115 = vmul.f32 %v6051, %v6067
        %v6116 = vmul.f32 %v6052, %v6068
        %v6117 = vmul.f32 %v6053, %v6069
        %v6118 = vmul.f32 %v6054, %v6070
        %v6119 = vmul.f32 %v5863, %v5390
        %v6120 = vmul.f32 %v5864, %v5392
        %v6121 = vmul.f32 %v5865, %v5395
        %v6122 = vmul.f32 %v5866, %v5397
        %v6123 = vmul.f32 %v5867, %v5400
        %v6124 = vmul.f32 %v5868, %v5402
        %v6125 = vmul.f32 %v5869, %v5405
        %v6126 = vmul.f32 %v5870, %v5407
        %v6127 = vmul.f32 %v5871, %v5410
        %v6128 = vmul.f32 %v5872, %v5412
        %v6129 = vmul.f32 %v5873, %v5415
        %v6130 = vmul.f32 %v5874, %v5417
        %v6131 = vmul.f32 %v5875, %v5420
        %v6132 = vmul.f32 %v5876, %v5422
        %v6133 = vmul.f32 %v5877, %v5425
        %v6134 = vmul.f32 %v5878, %v5427
        %v6135 = vadd.f32 %v6103, %v6119
        %v6136 = vadd.f32 %v6104, %v6120
        %v6137 = vadd.f32 %v6105, %v6121
        %v6138 = vadd.f32 %v6106, %v6122
        %v6139 = vadd.f32 %v6107, %v6123
        %v6140 = vadd.f32 %v6108, %v6124
        %v6141 = vadd.f32 %v6109, %v6125
        %v6142 = vadd.f32 %v6110, %v6126
        %v6143 = vadd.f32 %v6111, %v6127
        %v6144 = vadd.f32 %v6112, %v6128
        %v6145 = vadd.f32 %v6113, %v6129
        %v6146 = vadd.f32 %v6114, %v6130
        %v6147 = vadd.f32 %v6115, %v6131
        %v6148 = vadd.f32 %v6116, %v6132
        %v6149 = vadd.f32 %v6117, %v6133
        %v6150 = vadd.f32 %v6118, %v6134
        %v6151 = vadd.f32 %v6135, %v5479
        %v6152 = vadd.f32 %v6136, %v5481
        %v6153 = vadd.f32 %v6137, %v5484
        %v6154 = vadd.f32 %v6138, %v5486
        %v6155 = vadd.f32 %v6139, %v5489
        %v6156 = vadd.f32 %v6140, %v5491
        %v6157 = vadd.f32 %v6141, %v5494
        %v6158 = vadd.f32 %v6142, %v5496
        %v6159 = vadd.f32 %v6143, %v5499
        %v6160 = vadd.f32 %v6144, %v5501
        %v6161 = vadd.f32 %v6145, %v5504
        %v6162 = vadd.f32 %v6146, %v5506
        %v6163 = vadd.f32 %v6147, %v5509
        %v6164 = vadd.f32 %v6148, %v5511
        %v6165 = vadd.f32 %v6149, %v5514
        %v6166 = vadd.f32 %v6150, %v5516
        %v6167 = vpack.c.bf16 %v6087, %v6087
        %v6168 = vpack.c.bf16 %v6088, %v6088
        %v6169 = vpack.c.bf16 %v6089, %v6089
        %v6170 = vpack.c.bf16 %v6090, %v6090
        %v6171 = vpack.c.bf16 %v6091, %v6091
        %v6172 = vpack.c.bf16 %v6092, %v6092
        %v6173 = vpack.c.bf16 %v6093, %v6093
        %v6174 = vpack.c.bf16 %v6094, %v6094
        %v6175 = vpack.c.bf16 %v6095, %v6095
        %v6176 = vpack.c.bf16 %v6096, %v6096
        %v6177 = vpack.c.bf16 %v6097, %v6097
        %v6178 = vpack.c.bf16 %v6098, %v6098
        %v6179 = vpack.c.bf16 %v6099, %v6099
        %v6180 = vpack.c.bf16 %v6100, %v6100
        %v6181 = vpack.c.bf16 %v6101, %v6101
        %v6182 = vpack.c.bf16 %v6102, %v6102
        %v6183 = vpack.c.bf16 %v6151, %v6151
        %v6184 = vpack.c.bf16 %v6152, %v6152
        %v6185 = vpack.c.bf16 %v6153, %v6153
        %v6186 = vpack.c.bf16 %v6154, %v6154
        %v6187 = vpack.c.bf16 %v6155, %v6155
        %v6188 = vpack.c.bf16 %v6156, %v6156
        %v6189 = vpack.c.bf16 %v6157, %v6157
        %v6190 = vpack.c.bf16 %v6158, %v6158
        %v6191 = vpack.c.bf16 %v6159, %v6159
        %v6192 = vpack.c.bf16 %v6160, %v6160
        %v6193 = vpack.c.bf16 %v6161, %v6161
        %v6194 = vpack.c.bf16 %v6162, %v6162
        %v6195 = vpack.c.bf16 %v6163, %v6163
        %v6196 = vpack.c.bf16 %v6164, %v6164
        %v6197 = vpack.c.bf16 %v6165, %v6165
        %v6198 = vpack.c.bf16 %v6166, %v6166
        %v6215 = vunpack.c.l.b16 %v6167
        %v6216 = vunpack.c.l.b16 %v6168
        %v6217 = vunpack.c.l.b16 %v6169
        %v6218 = vunpack.c.l.b16 %v6170
        %v6219 = vunpack.c.l.b16 %v6171
        %v6220 = vunpack.c.l.b16 %v6172
        %v6221 = vunpack.c.l.b16 %v6173
        %v6222 = vunpack.c.l.b16 %v6174
        %v6223 = vunpack.c.l.b16 %v6175
        %v6224 = vunpack.c.l.b16 %v6176
        %v6225 = vunpack.c.l.b16 %v6177
        %v6226 = vunpack.c.l.b16 %v6178
        %v6227 = vunpack.c.l.b16 %v6179
        %v6228 = vunpack.c.l.b16 %v6180
        %v6229 = vunpack.c.l.b16 %v6181
        %v6230 = vunpack.c.l.b16 %v6182
        %v6231 = vpack.c.b16 %v6216, %v6215
        %v6232 = vpack.c.b16 %v6218, %v6217
        %v6233 = vpack.c.b16 %v6220, %v6219
        %v6234 = vpack.c.b16 %v6222, %v6221
        %v6235 = vpack.c.b16 %v6224, %v6223
        %v6236 = vpack.c.b16 %v6226, %v6225
        %v6237 = vpack.c.b16 %v6228, %v6227
        %v6238 = vpack.c.b16 %v6230, %v6229
        %v6263 = vunpack.c.l.b16 %v6183
        %v6264 = vunpack.c.l.b16 %v6184
        %v6265 = vunpack.c.l.b16 %v6185
        %v6266 = vunpack.c.l.b16 %v6186
        %v6267 = vunpack.c.l.b16 %v6187
        %v6268 = vunpack.c.l.b16 %v6188
        %v6269 = vunpack.c.l.b16 %v6189
        %v6270 = vunpack.c.l.b16 %v6190
        %v6271 = vunpack.c.l.b16 %v6191
        %v6272 = vunpack.c.l.b16 %v6192
        %v6273 = vunpack.c.l.b16 %v6193
        %v6274 = vunpack.c.l.b16 %v6194
        %v6275 = vunpack.c.l.b16 %v6195
        %v6276 = vunpack.c.l.b16 %v6196
        %v6277 = vunpack.c.l.b16 %v6197
        %v6278 = vunpack.c.l.b16 %v6198
        %v6279 = vpack.c.b16 %v6264, %v6263
        %v6280 = vpack.c.b16 %v6266, %v6265
        %v6281 = vpack.c.b16 %v6268, %v6267
        %v6282 = vpack.c.b16 %v6270, %v6269
        %v6283 = vpack.c.b16 %v6272, %v6271
        %v6284 = vpack.c.b16 %v6274, %v6273
        %v6285 = vpack.c.b16 %v6276, %v6275
        %v6286 = vpack.c.b16 %v6278, %v6277
        %v6311 = vunpack.c.l.b16 %v5000
        %v6312 = vunpack.c.h.b16 %v5000
        %v6313 = vunpack.c.l.b16 %v5001
        %v6314 = vunpack.c.h.b16 %v5001
        %v6315 = vunpack.c.l.b16 %v5002
        %v6316 = vunpack.c.h.b16 %v5002
        %v6317 = vunpack.c.l.b16 %v5003
        %v6318 = vunpack.c.h.b16 %v5003
        %v6319 = vunpack.c.l.b16 %v5004
        %v6320 = vunpack.c.h.b16 %v5004
        %v6321 = vunpack.c.l.b16 %v5005
        %v6322 = vunpack.c.h.b16 %v5005
        %v6323 = vunpack.c.l.b16 %v5006
        %v6324 = vunpack.c.h.b16 %v5006
        %v6325 = vunpack.c.l.b16 %v5007
        %v6326 = vunpack.c.h.b16 %v5007
        %v6327 = vunpack.c.l.b16 %v5008
        %v6328 = vunpack.c.h.b16 %v5008
        %v6329 = vunpack.c.l.b16 %v5009
        %v6330 = vunpack.c.h.b16 %v5009
        %v6331 = vunpack.c.l.b16 %v5010
        %v6332 = vunpack.c.h.b16 %v5010
        %v6333 = vunpack.c.l.b16 %v5011
        %v6334 = vunpack.c.h.b16 %v5011
        %v6335 = vunpack.c.l.b16 %v5012
        %v6336 = vunpack.c.h.b16 %v5012
        %v6337 = vunpack.c.l.b16 %v5013
        %v6338 = vunpack.c.h.b16 %v5013
        %v6339 = vunpack.c.l.b16 %v5014
        %v6340 = vunpack.c.h.b16 %v5014
        %v6341 = vunpack.c.l.b16 %v5015
        %v6342 = vunpack.c.h.b16 %v5015
        %v6343 = vpack.c.b16 %v6313, %v6311
        %v6344 = vpack.c.b16 %v6314, %v6312
        %v6345 = vpack.c.b16 %v6317, %v6315
        %v6346 = vpack.c.b16 %v6318, %v6316
        %v6347 = vpack.c.b16 %v6321, %v6319
        %v6348 = vpack.c.b16 %v6322, %v6320
        %v6349 = vpack.c.b16 %v6325, %v6323
        %v6350 = vpack.c.b16 %v6326, %v6324
        %v6351 = vpack.c.b16 %v6329, %v6327
        %v6352 = vpack.c.b16 %v6330, %v6328
        %v6353 = vpack.c.b16 %v6333, %v6331
        %v6354 = vpack.c.b16 %v6334, %v6332
        %v6355 = vpack.c.b16 %v6337, %v6335
        %v6356 = vpack.c.b16 %v6338, %v6336
        %v6357 = vpack.c.b16 %v6341, %v6339
        %v6358 = vpack.c.b16 %v6342, %v6340
        %6375 = vmatpush.bf16.msra.mxu0 %v6357
        %6376 = vmatpush.bf16.msra.mxu0 %v6355
        %6377 = vmatpush.bf16.msra.mxu0 %v6353
        %6378 = vmatpush.bf16.msra.mxu0 %v6351
        %6379 = vmatpush.bf16.msra.mxu0 %v6349
        %6380 = vmatpush.bf16.msra.mxu0 %v6347
        %6381 = vmatpush.bf16.msra.mxu0 %v6345
        %6382 = vmatpush.bf16.msra.mxu0 %v6343
        %6383 = vmatmul.bf16.gmra.mxu0 %v6231
        %v6384 = vpop.f32.mrf.mxu0
        %v6385 = vadd.f32 0.0, %v6384
        %v6386 = vpop.f32.mrf.mxu0
        %v6387 = vadd.f32 0.0, %v6386
        %6388 = vmatmul.bf16.gmra.mxu0 %v6232
        %v6389 = vpop.f32.mrf.mxu0
        %v6390 = vadd.f32 0.0, %v6389
        %v6391 = vpop.f32.mrf.mxu0
        %v6392 = vadd.f32 0.0, %v6391
        %6393 = vmatmul.bf16.gmra.mxu0 %v6233
        %v6394 = vpop.f32.mrf.mxu0
        %v6395 = vadd.f32 0.0, %v6394
        %v6396 = vpop.f32.mrf.mxu0
        %v6397 = vadd.f32 0.0, %v6396
        %6398 = vmatmul.bf16.gmra.mxu0 %v6234
        %v6399 = vpop.f32.mrf.mxu0
        %v6400 = vadd.f32 0.0, %v6399
        %v6401 = vpop.f32.mrf.mxu0
        %v6402 = vadd.f32 0.0, %v6401
        %6403 = vmatmul.bf16.gmra.mxu0 %v6235
        %v6404 = vpop.f32.mrf.mxu0
        %v6405 = vadd.f32 0.0, %v6404
        %v6406 = vpop.f32.mrf.mxu0
        %v6407 = vadd.f32 0.0, %v6406
        %6408 = vmatmul.bf16.gmra.mxu0 %v6236
        %v6409 = vpop.f32.mrf.mxu0
        %v6410 = vadd.f32 0.0, %v6409
        %v6411 = vpop.f32.mrf.mxu0
        %v6412 = vadd.f32 0.0, %v6411
        %6413 = vmatmul.bf16.gmra.mxu0 %v6237
        %v6414 = vpop.f32.mrf.mxu0
        %v6415 = vadd.f32 0.0, %v6414
        %v6416 = vpop.f32.mrf.mxu0
        %v6417 = vadd.f32 0.0, %v6416
        %6418 = vmatmul.bf16.gmra.mxu0 %v6238
        %v6419 = vpop.f32.mrf.mxu0
        %v6420 = vadd.f32 0.0, %v6419
        %v6421 = vpop.f32.mrf.mxu0
        %v6422 = vadd.f32 0.0, %v6421
        %6423 = vmatmul.bf16.gmra.mxu0 %v6279
        %v6424 = vpop.f32.mrf.mxu0
        %v6425 = vadd.f32 0.0, %v6424
        %v6426 = vpop.f32.mrf.mxu0
        %v6427 = vadd.f32 0.0, %v6426
        %6428 = vmatmul.bf16.gmra.mxu0 %v6280
        %v6429 = vpop.f32.mrf.mxu0
        %v6430 = vadd.f32 0.0, %v6429
        %v6431 = vpop.f32.mrf.mxu0
        %v6432 = vadd.f32 0.0, %v6431
        %6433 = vmatmul.bf16.gmra.mxu0 %v6281
        %v6434 = vpop.f32.mrf.mxu0
        %v6435 = vadd.f32 0.0, %v6434
        %v6436 = vpop.f32.mrf.mxu0
        %v6437 = vadd.f32 0.0, %v6436
        %6438 = vmatmul.bf16.gmra.mxu0 %v6282
        %v6439 = vpop.f32.mrf.mxu0
        %v6440 = vadd.f32 0.0, %v6439
        %v6441 = vpop.f32.mrf.mxu0
        %v6442 = vadd.f32 0.0, %v6441
        %6443 = vmatmul.bf16.gmra.mxu0 %v6283
        %v6444 = vpop.f32.mrf.mxu0
        %v6445 = vadd.f32 0.0, %v6444
        %v6446 = vpop.f32.mrf.mxu0
        %v6447 = vadd.f32 0.0, %v6446
        %6448 = vmatmul.bf16.gmra.mxu0 %v6284
        %v6449 = vpop.f32.mrf.mxu0
        %v6450 = vadd.f32 0.0, %v6449
        %v6451 = vpop.f32.mrf.mxu0
        %v6452 = vadd.f32 0.0, %v6451
        %6453 = vmatmul.bf16.gmra.mxu0 %v6285
        %v6454 = vpop.f32.mrf.mxu0
        %v6455 = vadd.f32 0.0, %v6454
        %v6456 = vpop.f32.mrf.mxu0
        %v6457 = vadd.f32 0.0, %v6456
        %6458 = vmatmul.bf16.gmra.mxu0 %v6286
        %v6459 = vpop.f32.mrf.mxu0
        %v6460 = vadd.f32 0.0, %v6459
        %v6461 = vpop.f32.mrf.mxu0
        %v6462 = vadd.f32 0.0, %v6461
        %6463 = vdwg.mxu0
        %6464 = vmatpush.bf16.msra.mxu0 %v6358
        %6465 = vmatpush.bf16.msra.mxu0 %v6356
        %6466 = vmatpush.bf16.msra.mxu0 %v6354
        %6467 = vmatpush.bf16.msra.mxu0 %v6352
        %6468 = vmatpush.bf16.msra.mxu0 %v6350
        %6469 = vmatpush.bf16.msra.mxu0 %v6348
        %6470 = vmatpush.bf16.msra.mxu0 %v6346
        %6471 = vmatpush.bf16.msra.mxu0 %v6344
        %6472 = vmatmul.bf16.gmra.mxu0 %v6231
        %v6473 = vpop.f32.mrf.mxu0
        %v6474 = vadd.f32 0.0, %v6473
        %v6475 = vpop.f32.mrf.mxu0
        %v6476 = vadd.f32 0.0, %v6475
        %6477 = vmatmul.bf16.gmra.mxu0 %v6232
        %v6478 = vpop.f32.mrf.mxu0
        %v6479 = vadd.f32 0.0, %v6478
        %v6480 = vpop.f32.mrf.mxu0
        %v6481 = vadd.f32 0.0, %v6480
        %6482 = vmatmul.bf16.gmra.mxu0 %v6233
        %v6483 = vpop.f32.mrf.mxu0
        %v6484 = vadd.f32 0.0, %v6483
        %v6485 = vpop.f32.mrf.mxu0
        %v6486 = vadd.f32 0.0, %v6485
        %6487 = vmatmul.bf16.gmra.mxu0 %v6234
        %v6488 = vpop.f32.mrf.mxu0
        %v6489 = vadd.f32 0.0, %v6488
        %v6490 = vpop.f32.mrf.mxu0
        %v6491 = vadd.f32 0.0, %v6490
        %6492 = vmatmul.bf16.gmra.mxu0 %v6235
        %v6493 = vpop.f32.mrf.mxu0
        %v6494 = vadd.f32 0.0, %v6493
        %v6495 = vpop.f32.mrf.mxu0
        %v6496 = vadd.f32 0.0, %v6495
        %6497 = vmatmul.bf16.gmra.mxu0 %v6236
        %v6498 = vpop.f32.mrf.mxu0
        %v6499 = vadd.f32 0.0, %v6498
        %v6500 = vpop.f32.mrf.mxu0
        %v6501 = vadd.f32 0.0, %v6500
        %6502 = vmatmul.bf16.gmra.mxu0 %v6237
        %v6503 = vpop.f32.mrf.mxu0
        %v6504 = vadd.f32 0.0, %v6503
        %v6505 = vpop.f32.mrf.mxu0
        %v6506 = vadd.f32 0.0, %v6505
        %6507 = vmatmul.bf16.gmra.mxu0 %v6238
        %v6508 = vpop.f32.mrf.mxu0
        %v6509 = vadd.f32 0.0, %v6508
        %v6510 = vpop.f32.mrf.mxu0
        %v6511 = vadd.f32 0.0, %v6510
        %6512 = vmatmul.bf16.gmra.mxu0 %v6279
        %v6513 = vpop.f32.mrf.mxu0
        %v6514 = vadd.f32 0.0, %v6513
        %v6515 = vpop.f32.mrf.mxu0
        %v6516 = vadd.f32 0.0, %v6515
        %6517 = vmatmul.bf16.gmra.mxu0 %v6280
        %v6518 = vpop.f32.mrf.mxu0
        %v6519 = vadd.f32 0.0, %v6518
        %v6520 = vpop.f32.mrf.mxu0
        %v6521 = vadd.f32 0.0, %v6520
        %6522 = vmatmul.bf16.gmra.mxu0 %v6281
        %v6523 = vpop.f32.mrf.mxu0
        %v6524 = vadd.f32 0.0, %v6523
        %v6525 = vpop.f32.mrf.mxu0
        %v6526 = vadd.f32 0.0, %v6525
        %6527 = vmatmul.bf16.gmra.mxu0 %v6282
        %v6528 = vpop.f32.mrf.mxu0
        %v6529 = vadd.f32 0.0, %v6528
        %v6530 = vpop.f32.mrf.mxu0
        %v6531 = vadd.f32 0.0, %v6530
        %6532 = vmatmul.bf16.gmra.mxu0 %v6283
        %v6533 = vpop.f32.mrf.mxu0
        %v6534 = vadd.f32 0.0, %v6533
        %v6535 = vpop.f32.mrf.mxu0
        %v6536 = vadd.f32 0.0, %v6535
        %6537 = vmatmul.bf16.gmra.mxu0 %v6284
        %v6538 = vpop.f32.mrf.mxu0
        %v6539 = vadd.f32 0.0, %v6538
        %v6540 = vpop.f32.mrf.mxu0
        %v6541 = vadd.f32 0.0, %v6540
        %6542 = vmatmul.bf16.gmra.mxu0 %v6285
        %v6543 = vpop.f32.mrf.mxu0
        %v6544 = vadd.f32 0.0, %v6543
        %v6545 = vpop.f32.mrf.mxu0
        %v6546 = vadd.f32 0.0, %v6545
        %6547 = vmatmul.bf16.gmra.mxu0 %v6286
        %v6548 = vpop.f32.mrf.mxu0
        %v6549 = vadd.f32 0.0, %v6548
        %v6550 = vpop.f32.mrf.mxu0
        %v6551 = vadd.f32 0.0, %v6550
        %6552 = vdwg.mxu0
        %v6553 = vxor.u32 %v6385, 2147483648
        %v6554 = vxor.u32 %v6474, 2147483648
        %v6555 = vxor.u32 %v6387, 2147483648
        %v6556 = vxor.u32 %v6476, 2147483648
        %v6557 = vxor.u32 %v6390, 2147483648
        %v6558 = vxor.u32 %v6479, 2147483648
        %v6559 = vxor.u32 %v6392, 2147483648
        %v6560 = vxor.u32 %v6481, 2147483648
        %v6561 = vxor.u32 %v6395, 2147483648
        %v6562 = vxor.u32 %v6484, 2147483648
        %v6563 = vxor.u32 %v6397, 2147483648
        %v6564 = vxor.u32 %v6486, 2147483648
        %v6565 = vxor.u32 %v6400, 2147483648
        %v6566 = vxor.u32 %v6489, 2147483648
        %v6567 = vxor.u32 %v6402, 2147483648
        %v6568 = vxor.u32 %v6491, 2147483648
        %v6569 = vxor.u32 %v6405, 2147483648
        %v6570 = vxor.u32 %v6494, 2147483648
        %v6571 = vxor.u32 %v6407, 2147483648
        %v6572 = vxor.u32 %v6496, 2147483648
        %v6573 = vxor.u32 %v6410, 2147483648
        %v6574 = vxor.u32 %v6499, 2147483648
        %v6575 = vxor.u32 %v6412, 2147483648
        %v6576 = vxor.u32 %v6501, 2147483648
        %v6577 = vxor.u32 %v6415, 2147483648
        %v6578 = vxor.u32 %v6504, 2147483648
        %v6579 = vxor.u32 %v6417, 2147483648
        %v6580 = vxor.u32 %v6506, 2147483648
        %v6581 = vxor.u32 %v6420, 2147483648
        %v6582 = vxor.u32 %v6509, 2147483648
        %v6583 = vxor.u32 %v6422, 2147483648
        %v6584 = vxor.u32 %v6511, 2147483648
        %v6585 = vmul.f32 %v6553, 1.442695
        %v6586 = vpow.pop %v6585
        %v6587 = vmul.f32 %v6554, 1.442695
        %v6588 = vpow.pop %v6587
        %v6589 = vmul.f32 %v6555, 1.442695
        %v6590 = vpow.pop %v6589
        %v6591 = vmul.f32 %v6556, 1.442695
        %v6592 = vpow.pop %v6591
        %v6593 = vmul.f32 %v6557, 1.442695
        %v6594 = vpow.pop %v6593
        %v6595 = vmul.f32 %v6558, 1.442695
        %v6596 = vpow.pop %v6595
        %v6597 = vmul.f32 %v6559, 1.442695
        %v6598 = vpow.pop %v6597
        %v6599 = vmul.f32 %v6560, 1.442695
        %v6600 = vpow.pop %v6599
        %v6601 = vmul.f32 %v6561, 1.442695
        %v6602 = vpow.pop %v6601
        %v6603 = vmul.f32 %v6562, 1.442695
        %v6604 = vpow.pop %v6603
        %v6605 = vmul.f32 %v6563, 1.442695
        %v6606 = vpow.pop %v6605
        %v6607 = vmul.f32 %v6564, 1.442695
        %v6608 = vpow.pop %v6607
        %v6609 = vmul.f32 %v6565, 1.442695
        %v6610 = vpow.pop %v6609
        %v6611 = vmul.f32 %v6566, 1.442695
        %v6612 = vpow.pop %v6611
        %v6613 = vmul.f32 %v6567, 1.442695
        %v6614 = vpow.pop %v6613
        %v6615 = vmul.f32 %v6568, 1.442695
        %v6616 = vpow.pop %v6615
        %v6617 = vmul.f32 %v6569, 1.442695
        %v6618 = vpow.pop %v6617
        %v6619 = vmul.f32 %v6570, 1.442695
        %v6620 = vpow.pop %v6619
        %v6621 = vmul.f32 %v6571, 1.442695
        %v6622 = vpow.pop %v6621
        %v6623 = vmul.f32 %v6572, 1.442695
        %v6624 = vpow.pop %v6623
        %v6625 = vmul.f32 %v6573, 1.442695
        %v6626 = vpow.pop %v6625
        %v6627 = vmul.f32 %v6574, 1.442695
        %v6628 = vpow.pop %v6627
        %v6629 = vmul.f32 %v6575, 1.442695
        %v6630 = vpow.pop %v6629
        %v6631 = vmul.f32 %v6576, 1.442695
        %v6632 = vpow.pop %v6631
        %v6633 = vmul.f32 %v6577, 1.442695
        %v6634 = vpow.pop %v6633
        %v6635 = vmul.f32 %v6578, 1.442695
        %v6636 = vpow.pop %v6635
        %v6637 = vmul.f32 %v6579, 1.442695
        %v6638 = vpow.pop %v6637
        %v6639 = vmul.f32 %v6580, 1.442695
        %v6640 = vpow.pop %v6639
        %v6641 = vmul.f32 %v6581, 1.442695
        %v6642 = vpow.pop %v6641
        %v6643 = vmul.f32 %v6582, 1.442695
        %v6644 = vpow.pop %v6643
        %v6645 = vmul.f32 %v6583, 1.442695
        %v6646 = vpow.pop %v6645
        %v6647 = vmul.f32 %v6584, 1.442695
        %v6648 = vpow.pop %v6647
        %v6649 = vadd.f32 %v6586, 1.0
        %v6650 = vadd.f32 %v6588, 1.0
        %v6651 = vadd.f32 %v6590, 1.0
        %v6652 = vadd.f32 %v6592, 1.0
        %v6653 = vadd.f32 %v6594, 1.0
        %v6654 = vadd.f32 %v6596, 1.0
        %v6655 = vadd.f32 %v6598, 1.0
        %v6656 = vadd.f32 %v6600, 1.0
        %v6657 = vadd.f32 %v6602, 1.0
        %v6658 = vadd.f32 %v6604, 1.0
        %v6659 = vadd.f32 %v6606, 1.0
        %v6660 = vadd.f32 %v6608, 1.0
        %v6661 = vadd.f32 %v6610, 1.0
        %v6662 = vadd.f32 %v6612, 1.0
        %v6663 = vadd.f32 %v6614, 1.0
        %v6664 = vadd.f32 %v6616, 1.0
        %v6665 = vadd.f32 %v6618, 1.0
        %v6666 = vadd.f32 %v6620, 1.0
        %v6667 = vadd.f32 %v6622, 1.0
        %v6668 = vadd.f32 %v6624, 1.0
        %v6669 = vadd.f32 %v6626, 1.0
        %v6670 = vadd.f32 %v6628, 1.0
        %v6671 = vadd.f32 %v6630, 1.0
        %v6672 = vadd.f32 %v6632, 1.0
        %v6673 = vadd.f32 %v6634, 1.0
        %v6674 = vadd.f32 %v6636, 1.0
        %v6675 = vadd.f32 %v6638, 1.0
        %v6676 = vadd.f32 %v6640, 1.0
        %v6677 = vadd.f32 %v6642, 1.0
        %v6678 = vadd.f32 %v6644, 1.0
        %v6679 = vadd.f32 %v6646, 1.0
        %v6680 = vadd.f32 %v6648, 1.0
        %v6681 = vrcp.pop %v6649
        %v6682 = vmul.f32 %v6649, %v6681
        %v6683 = vsub.f32 1.0, %v6682
        %v6684 = vmul.f32 %v6681, %v6683
        %v6685 = vadd.f32 %v6681, %v6684
        %vm6686 = vweird.f32 %v6649
        %vm6687 = vweird.f32 %v6681
        %vm6688 = vmor %vm6686, %vm6687
        %v6689 = vsel %vm6688, %v6681, %v6685
        %v6690 = vand.u32 2147483647, %v6649
        %vm6691 = vcmp.eq.f32.partialorder %v6690, 8.507059e+37
        %v6692 = vand.u32 %v6649, 2147483648
        %v6693 = vor.u32 1.1754944e-38, %v6692
        %v6694 = vsel %vm6691, %v6693, %v6689
        %v6695 = vmul.f32 1.0, %v6694
        %v6696 = vrcp.pop %v6650
        %v6697 = vmul.f32 %v6650, %v6696
        %v6698 = vsub.f32 1.0, %v6697
        %v6699 = vmul.f32 %v6696, %v6698
        %v6700 = vadd.f32 %v6696, %v6699
        %vm6701 = vweird.f32 %v6650
        %vm6702 = vweird.f32 %v6696
        %vm6703 = vmor %vm6701, %vm6702
        %v6704 = vsel %vm6703, %v6696, %v6700
        %v6705 = vand.u32 2147483647, %v6650
        %vm6706 = vcmp.eq.f32.partialorder %v6705, 8.507059e+37
        %v6707 = vand.u32 %v6650, 2147483648
        %v6708 = vor.u32 1.1754944e-38, %v6707
        %v6709 = vsel %vm6706, %v6708, %v6704
        %v6710 = vmul.f32 1.0, %v6709
        %v6711 = vrcp.pop %v6651
        %v6712 = vmul.f32 %v6651, %v6711
        %v6713 = vsub.f32 1.0, %v6712
        %v6714 = vmul.f32 %v6711, %v6713
        %v6715 = vadd.f32 %v6711, %v6714
        %vm6716 = vweird.f32 %v6651
        %vm6717 = vweird.f32 %v6711
        %vm6718 = vmor %vm6716, %vm6717
        %v6719 = vsel %vm6718, %v6711, %v6715
        %v6720 = vand.u32 2147483647, %v6651
        %vm6721 = vcmp.eq.f32.partialorder %v6720, 8.507059e+37
        %v6722 = vand.u32 %v6651, 2147483648
        %v6723 = vor.u32 1.1754944e-38, %v6722
        %v6724 = vsel %vm6721, %v6723, %v6719
        %v6725 = vmul.f32 1.0, %v6724
        %v6726 = vrcp.pop %v6652
        %v6727 = vmul.f32 %v6652, %v6726
        %v6728 = vsub.f32 1.0, %v6727
        %v6729 = vmul.f32 %v6726, %v6728
        %v6730 = vadd.f32 %v6726, %v6729
        %vm6731 = vweird.f32 %v6652
        %vm6732 = vweird.f32 %v6726
        %vm6733 = vmor %vm6731, %vm6732
        %v6734 = vsel %vm6733, %v6726, %v6730
        %v6735 = vand.u32 2147483647, %v6652
        %vm6736 = vcmp.eq.f32.partialorder %v6735, 8.507059e+37
        %v6737 = vand.u32 %v6652, 2147483648
        %v6738 = vor.u32 1.1754944e-38, %v6737
        %v6739 = vsel %vm6736, %v6738, %v6734
        %v6740 = vmul.f32 1.0, %v6739
        %v6741 = vrcp.pop %v6653
        %v6742 = vmul.f32 %v6653, %v6741
        %v6743 = vsub.f32 1.0, %v6742
        %v6744 = vmul.f32 %v6741, %v6743
        %v6745 = vadd.f32 %v6741, %v6744
        %vm6746 = vweird.f32 %v6653
        %vm6747 = vweird.f32 %v6741
        %vm6748 = vmor %vm6746, %vm6747
        %v6749 = vsel %vm6748, %v6741, %v6745
        %v6750 = vand.u32 2147483647, %v6653
        %vm6751 = vcmp.eq.f32.partialorder %v6750, 8.507059e+37
        %v6752 = vand.u32 %v6653, 2147483648
        %v6753 = vor.u32 1.1754944e-38, %v6752
        %v6754 = vsel %vm6751, %v6753, %v6749
        %v6755 = vmul.f32 1.0, %v6754
        %v6756 = vrcp.pop %v6654
        %v6757 = vmul.f32 %v6654, %v6756
        %v6758 = vsub.f32 1.0, %v6757
        %v6759 = vmul.f32 %v6756, %v6758
        %v6760 = vadd.f32 %v6756, %v6759
        %vm6761 = vweird.f32 %v6654
        %vm6762 = vweird.f32 %v6756
        %vm6763 = vmor %vm6761, %vm6762
        %v6764 = vsel %vm6763, %v6756, %v6760
        %v6765 = vand.u32 2147483647, %v6654
        %vm6766 = vcmp.eq.f32.partialorder %v6765, 8.507059e+37
        %v6767 = vand.u32 %v6654, 2147483648
        %v6768 = vor.u32 1.1754944e-38, %v6767
        %v6769 = vsel %vm6766, %v6768, %v6764
        %v6770 = vmul.f32 1.0, %v6769
        %v6771 = vrcp.pop %v6655
        %v6772 = vmul.f32 %v6655, %v6771
        %v6773 = vsub.f32 1.0, %v6772
        %v6774 = vmul.f32 %v6771, %v6773
        %v6775 = vadd.f32 %v6771, %v6774
        %vm6776 = vweird.f32 %v6655
        %vm6777 = vweird.f32 %v6771
        %vm6778 = vmor %vm6776, %vm6777
        %v6779 = vsel %vm6778, %v6771, %v6775
        %v6780 = vand.u32 2147483647, %v6655
        %vm6781 = vcmp.eq.f32.partialorder %v6780, 8.507059e+37
        %v6782 = vand.u32 %v6655, 2147483648
        %v6783 = vor.u32 1.1754944e-38, %v6782
        %v6784 = vsel %vm6781, %v6783, %v6779
        %v6785 = vmul.f32 1.0, %v6784
        %v6786 = vrcp.pop %v6656
        %v6787 = vmul.f32 %v6656, %v6786
        %v6788 = vsub.f32 1.0, %v6787
        %v6789 = vmul.f32 %v6786, %v6788
        %v6790 = vadd.f32 %v6786, %v6789
        %vm6791 = vweird.f32 %v6656
        %vm6792 = vweird.f32 %v6786
        %vm6793 = vmor %vm6791, %vm6792
        %v6794 = vsel %vm6793, %v6786, %v6790
        %v6795 = vand.u32 2147483647, %v6656
        %vm6796 = vcmp.eq.f32.partialorder %v6795, 8.507059e+37
        %v6797 = vand.u32 %v6656, 2147483648
        %v6798 = vor.u32 1.1754944e-38, %v6797
        %v6799 = vsel %vm6796, %v6798, %v6794
        %v6800 = vmul.f32 1.0, %v6799
        %v6801 = vrcp.pop %v6657
        %v6802 = vmul.f32 %v6657, %v6801
        %v6803 = vsub.f32 1.0, %v6802
        %v6804 = vmul.f32 %v6801, %v6803
        %v6805 = vadd.f32 %v6801, %v6804
        %vm6806 = vweird.f32 %v6657
        %vm6807 = vweird.f32 %v6801
        %vm6808 = vmor %vm6806, %vm6807
        %v6809 = vsel %vm6808, %v6801, %v6805
        %v6810 = vand.u32 2147483647, %v6657
        %vm6811 = vcmp.eq.f32.partialorder %v6810, 8.507059e+37
        %v6812 = vand.u32 %v6657, 2147483648
        %v6813 = vor.u32 1.1754944e-38, %v6812
        %v6814 = vsel %vm6811, %v6813, %v6809
        %v6815 = vmul.f32 1.0, %v6814
        %v6816 = vrcp.pop %v6658
        %v6817 = vmul.f32 %v6658, %v6816
        %v6818 = vsub.f32 1.0, %v6817
        %v6819 = vmul.f32 %v6816, %v6818
        %v6820 = vadd.f32 %v6816, %v6819
        %vm6821 = vweird.f32 %v6658
        %vm6822 = vweird.f32 %v6816
        %vm6823 = vmor %vm6821, %vm6822
        %v6824 = vsel %vm6823, %v6816, %v6820
        %v6825 = vand.u32 2147483647, %v6658
        %vm6826 = vcmp.eq.f32.partialorder %v6825, 8.507059e+37
        %v6827 = vand.u32 %v6658, 2147483648
        %v6828 = vor.u32 1.1754944e-38, %v6827
        %v6829 = vsel %vm6826, %v6828, %v6824
        %v6830 = vmul.f32 1.0, %v6829
        %v6831 = vrcp.pop %v6659
        %v6832 = vmul.f32 %v6659, %v6831
        %v6833 = vsub.f32 1.0, %v6832
        %v6834 = vmul.f32 %v6831, %v6833
        %v6835 = vadd.f32 %v6831, %v6834
        %vm6836 = vweird.f32 %v6659
        %vm6837 = vweird.f32 %v6831
        %vm6838 = vmor %vm6836, %vm6837
        %v6839 = vsel %vm6838, %v6831, %v6835
        %v6840 = vand.u32 2147483647, %v6659
        %vm6841 = vcmp.eq.f32.partialorder %v6840, 8.507059e+37
        %v6842 = vand.u32 %v6659, 2147483648
        %v6843 = vor.u32 1.1754944e-38, %v6842
        %v6844 = vsel %vm6841, %v6843, %v6839
        %v6845 = vmul.f32 1.0, %v6844
        %v6846 = vrcp.pop %v6660
        %v6847 = vmul.f32 %v6660, %v6846
        %v6848 = vsub.f32 1.0, %v6847
        %v6849 = vmul.f32 %v6846, %v6848
        %v6850 = vadd.f32 %v6846, %v6849
        %vm6851 = vweird.f32 %v6660
        %vm6852 = vweird.f32 %v6846
        %vm6853 = vmor %vm6851, %vm6852
        %v6854 = vsel %vm6853, %v6846, %v6850
        %v6855 = vand.u32 2147483647, %v6660
        %vm6856 = vcmp.eq.f32.partialorder %v6855, 8.507059e+37
        %v6857 = vand.u32 %v6660, 2147483648
        %v6858 = vor.u32 1.1754944e-38, %v6857
        %v6859 = vsel %vm6856, %v6858, %v6854
        %v6860 = vmul.f32 1.0, %v6859
        %v6861 = vrcp.pop %v6661
        %v6862 = vmul.f32 %v6661, %v6861
        %v6863 = vsub.f32 1.0, %v6862
        %v6864 = vmul.f32 %v6861, %v6863
        %v6865 = vadd.f32 %v6861, %v6864
        %vm6866 = vweird.f32 %v6661
        %vm6867 = vweird.f32 %v6861
        %vm6868 = vmor %vm6866, %vm6867
        %v6869 = vsel %vm6868, %v6861, %v6865
        %v6870 = vand.u32 2147483647, %v6661
        %vm6871 = vcmp.eq.f32.partialorder %v6870, 8.507059e+37
        %v6872 = vand.u32 %v6661, 2147483648
        %v6873 = vor.u32 1.1754944e-38, %v6872
        %v6874 = vsel %vm6871, %v6873, %v6869
        %v6875 = vmul.f32 1.0, %v6874
        %v6876 = vrcp.pop %v6662
        %v6877 = vmul.f32 %v6662, %v6876
        %v6878 = vsub.f32 1.0, %v6877
        %v6879 = vmul.f32 %v6876, %v6878
        %v6880 = vadd.f32 %v6876, %v6879
        %vm6881 = vweird.f32 %v6662
        %vm6882 = vweird.f32 %v6876
        %vm6883 = vmor %vm6881, %vm6882
        %v6884 = vsel %vm6883, %v6876, %v6880
        %v6885 = vand.u32 2147483647, %v6662
        %vm6886 = vcmp.eq.f32.partialorder %v6885, 8.507059e+37
        %v6887 = vand.u32 %v6662, 2147483648
        %v6888 = vor.u32 1.1754944e-38, %v6887
        %v6889 = vsel %vm6886, %v6888, %v6884
        %v6890 = vmul.f32 1.0, %v6889
        %v6891 = vrcp.pop %v6663
        %v6892 = vmul.f32 %v6663, %v6891
        %v6893 = vsub.f32 1.0, %v6892
        %v6894 = vmul.f32 %v6891, %v6893
        %v6895 = vadd.f32 %v6891, %v6894
        %vm6896 = vweird.f32 %v6663
        %vm6897 = vweird.f32 %v6891
        %vm6898 = vmor %vm6896, %vm6897
        %v6899 = vsel %vm6898, %v6891, %v6895
        %v6900 = vand.u32 2147483647, %v6663
        %vm6901 = vcmp.eq.f32.partialorder %v6900, 8.507059e+37
        %v6902 = vand.u32 %v6663, 2147483648
        %v6903 = vor.u32 1.1754944e-38, %v6902
        %v6904 = vsel %vm6901, %v6903, %v6899
        %v6905 = vmul.f32 1.0, %v6904
        %v6906 = vrcp.pop %v6664
        %v6907 = vmul.f32 %v6664, %v6906
        %v6908 = vsub.f32 1.0, %v6907
        %v6909 = vmul.f32 %v6906, %v6908
        %v6910 = vadd.f32 %v6906, %v6909
        %vm6911 = vweird.f32 %v6664
        %vm6912 = vweird.f32 %v6906
        %vm6913 = vmor %vm6911, %vm6912
        %v6914 = vsel %vm6913, %v6906, %v6910
        %v6915 = vand.u32 2147483647, %v6664
        %vm6916 = vcmp.eq.f32.partialorder %v6915, 8.507059e+37
        %v6917 = vand.u32 %v6664, 2147483648
        %v6918 = vor.u32 1.1754944e-38, %v6917
        %v6919 = vsel %vm6916, %v6918, %v6914
        %v6920 = vmul.f32 1.0, %v6919
        %v6921 = vrcp.pop %v6665
        %v6922 = vmul.f32 %v6665, %v6921
        %v6923 = vsub.f32 1.0, %v6922
        %v6924 = vmul.f32 %v6921, %v6923
        %v6925 = vadd.f32 %v6921, %v6924
        %vm6926 = vweird.f32 %v6665
        %vm6927 = vweird.f32 %v6921
        %vm6928 = vmor %vm6926, %vm6927
        %v6929 = vsel %vm6928, %v6921, %v6925
        %v6930 = vand.u32 2147483647, %v6665
        %vm6931 = vcmp.eq.f32.partialorder %v6930, 8.507059e+37
        %v6932 = vand.u32 %v6665, 2147483648
        %v6933 = vor.u32 1.1754944e-38, %v6932
        %v6934 = vsel %vm6931, %v6933, %v6929
        %v6935 = vmul.f32 1.0, %v6934
        %v6936 = vrcp.pop %v6666
        %v6937 = vmul.f32 %v6666, %v6936
        %v6938 = vsub.f32 1.0, %v6937
        %v6939 = vmul.f32 %v6936, %v6938
        %v6940 = vadd.f32 %v6936, %v6939
        %vm6941 = vweird.f32 %v6666
        %vm6942 = vweird.f32 %v6936
        %vm6943 = vmor %vm6941, %vm6942
        %v6944 = vsel %vm6943, %v6936, %v6940
        %v6945 = vand.u32 2147483647, %v6666
        %vm6946 = vcmp.eq.f32.partialorder %v6945, 8.507059e+37
        %v6947 = vand.u32 %v6666, 2147483648
        %v6948 = vor.u32 1.1754944e-38, %v6947
        %v6949 = vsel %vm6946, %v6948, %v6944
        %v6950 = vmul.f32 1.0, %v6949
        %v6951 = vrcp.pop %v6667
        %v6952 = vmul.f32 %v6667, %v6951
        %v6953 = vsub.f32 1.0, %v6952
        %v6954 = vmul.f32 %v6951, %v6953
        %v6955 = vadd.f32 %v6951, %v6954
        %vm6956 = vweird.f32 %v6667
        %vm6957 = vweird.f32 %v6951
        %vm6958 = vmor %vm6956, %vm6957
        %v6959 = vsel %vm6958, %v6951, %v6955
        %v6960 = vand.u32 2147483647, %v6667
        %vm6961 = vcmp.eq.f32.partialorder %v6960, 8.507059e+37
        %v6962 = vand.u32 %v6667, 2147483648
        %v6963 = vor.u32 1.1754944e-38, %v6962
        %v6964 = vsel %vm6961, %v6963, %v6959
        %v6965 = vmul.f32 1.0, %v6964
        %v6966 = vrcp.pop %v6668
        %v6967 = vmul.f32 %v6668, %v6966
        %v6968 = vsub.f32 1.0, %v6967
        %v6969 = vmul.f32 %v6966, %v6968
        %v6970 = vadd.f32 %v6966, %v6969
        %vm6971 = vweird.f32 %v6668
        %vm6972 = vweird.f32 %v6966
        %vm6973 = vmor %vm6971, %vm6972
        %v6974 = vsel %vm6973, %v6966, %v6970
        %v6975 = vand.u32 2147483647, %v6668
        %vm6976 = vcmp.eq.f32.partialorder %v6975, 8.507059e+37
        %v6977 = vand.u32 %v6668, 2147483648
        %v6978 = vor.u32 1.1754944e-38, %v6977
        %v6979 = vsel %vm6976, %v6978, %v6974
        %v6980 = vmul.f32 1.0, %v6979
        %v6981 = vrcp.pop %v6669
        %v6982 = vmul.f32 %v6669, %v6981
        %v6983 = vsub.f32 1.0, %v6982
        %v6984 = vmul.f32 %v6981, %v6983
        %v6985 = vadd.f32 %v6981, %v6984
        %vm6986 = vweird.f32 %v6669
        %vm6987 = vweird.f32 %v6981
        %vm6988 = vmor %vm6986, %vm6987
        %v6989 = vsel %vm6988, %v6981, %v6985
        %v6990 = vand.u32 2147483647, %v6669
        %vm6991 = vcmp.eq.f32.partialorder %v6990, 8.507059e+37
        %v6992 = vand.u32 %v6669, 2147483648
        %v6993 = vor.u32 1.1754944e-38, %v6992
        %v6994 = vsel %vm6991, %v6993, %v6989
        %v6995 = vmul.f32 1.0, %v6994
        %v6996 = vrcp.pop %v6670
        %v6997 = vmul.f32 %v6670, %v6996
        %v6998 = vsub.f32 1.0, %v6997
        %v6999 = vmul.f32 %v6996, %v6998
        %v7000 = vadd.f32 %v6996, %v6999
        %vm7001 = vweird.f32 %v6670
        %vm7002 = vweird.f32 %v6996
        %vm7003 = vmor %vm7001, %vm7002
        %v7004 = vsel %vm7003, %v6996, %v7000
        %v7005 = vand.u32 2147483647, %v6670
        %vm7006 = vcmp.eq.f32.partialorder %v7005, 8.507059e+37
        %v7007 = vand.u32 %v6670, 2147483648
        %v7008 = vor.u32 1.1754944e-38, %v7007
        %v7009 = vsel %vm7006, %v7008, %v7004
        %v7010 = vmul.f32 1.0, %v7009
        %v7011 = vrcp.pop %v6671
        %v7012 = vmul.f32 %v6671, %v7011
        %v7013 = vsub.f32 1.0, %v7012
        %v7014 = vmul.f32 %v7011, %v7013
        %v7015 = vadd.f32 %v7011, %v7014
        %vm7016 = vweird.f32 %v6671
        %vm7017 = vweird.f32 %v7011
        %vm7018 = vmor %vm7016, %vm7017
        %v7019 = vsel %vm7018, %v7011, %v7015
        %v7020 = vand.u32 2147483647, %v6671
        %vm7021 = vcmp.eq.f32.partialorder %v7020, 8.507059e+37
        %v7022 = vand.u32 %v6671, 2147483648
        %v7023 = vor.u32 1.1754944e-38, %v7022
        %v7024 = vsel %vm7021, %v7023, %v7019
        %v7025 = vmul.f32 1.0, %v7024
        %v7026 = vrcp.pop %v6672
        %v7027 = vmul.f32 %v6672, %v7026
        %v7028 = vsub.f32 1.0, %v7027
        %v7029 = vmul.f32 %v7026, %v7028
        %v7030 = vadd.f32 %v7026, %v7029
        %vm7031 = vweird.f32 %v6672
        %vm7032 = vweird.f32 %v7026
        %vm7033 = vmor %vm7031, %vm7032
        %v7034 = vsel %vm7033, %v7026, %v7030
        %v7035 = vand.u32 2147483647, %v6672
        %vm7036 = vcmp.eq.f32.partialorder %v7035, 8.507059e+37
        %v7037 = vand.u32 %v6672, 2147483648
        %v7038 = vor.u32 1.1754944e-38, %v7037
        %v7039 = vsel %vm7036, %v7038, %v7034
        %v7040 = vmul.f32 1.0, %v7039
        %v7041 = vrcp.pop %v6673
        %v7042 = vmul.f32 %v6673, %v7041
        %v7043 = vsub.f32 1.0, %v7042
        %v7044 = vmul.f32 %v7041, %v7043
        %v7045 = vadd.f32 %v7041, %v7044
        %vm7046 = vweird.f32 %v6673
        %vm7047 = vweird.f32 %v7041
        %vm7048 = vmor %vm7046, %vm7047
        %v7049 = vsel %vm7048, %v7041, %v7045
        %v7050 = vand.u32 2147483647, %v6673
        %vm7051 = vcmp.eq.f32.partialorder %v7050, 8.507059e+37
        %v7052 = vand.u32 %v6673, 2147483648
        %v7053 = vor.u32 1.1754944e-38, %v7052
        %v7054 = vsel %vm7051, %v7053, %v7049
        %v7055 = vmul.f32 1.0, %v7054
        %v7056 = vrcp.pop %v6674
        %v7057 = vmul.f32 %v6674, %v7056
        %v7058 = vsub.f32 1.0, %v7057
        %v7059 = vmul.f32 %v7056, %v7058
        %v7060 = vadd.f32 %v7056, %v7059
        %vm7061 = vweird.f32 %v6674
        %vm7062 = vweird.f32 %v7056
        %vm7063 = vmor %vm7061, %vm7062
        %v7064 = vsel %vm7063, %v7056, %v7060
        %v7065 = vand.u32 2147483647, %v6674
        %vm7066 = vcmp.eq.f32.partialorder %v7065, 8.507059e+37
        %v7067 = vand.u32 %v6674, 2147483648
        %v7068 = vor.u32 1.1754944e-38, %v7067
        %v7069 = vsel %vm7066, %v7068, %v7064
        %v7070 = vmul.f32 1.0, %v7069
        %v7071 = vrcp.pop %v6675
        %v7072 = vmul.f32 %v6675, %v7071
        %v7073 = vsub.f32 1.0, %v7072
        %v7074 = vmul.f32 %v7071, %v7073
        %v7075 = vadd.f32 %v7071, %v7074
        %vm7076 = vweird.f32 %v6675
        %vm7077 = vweird.f32 %v7071
        %vm7078 = vmor %vm7076, %vm7077
        %v7079 = vsel %vm7078, %v7071, %v7075
        %v7080 = vand.u32 2147483647, %v6675
        %vm7081 = vcmp.eq.f32.partialorder %v7080, 8.507059e+37
        %v7082 = vand.u32 %v6675, 2147483648
        %v7083 = vor.u32 1.1754944e-38, %v7082
        %v7084 = vsel %vm7081, %v7083, %v7079
        %v7085 = vmul.f32 1.0, %v7084
        %v7086 = vrcp.pop %v6676
        %v7087 = vmul.f32 %v6676, %v7086
        %v7088 = vsub.f32 1.0, %v7087
        %v7089 = vmul.f32 %v7086, %v7088
        %v7090 = vadd.f32 %v7086, %v7089
        %vm7091 = vweird.f32 %v6676
        %vm7092 = vweird.f32 %v7086
        %vm7093 = vmor %vm7091, %vm7092
        %v7094 = vsel %vm7093, %v7086, %v7090
        %v7095 = vand.u32 2147483647, %v6676
        %vm7096 = vcmp.eq.f32.partialorder %v7095, 8.507059e+37
        %v7097 = vand.u32 %v6676, 2147483648
        %v7098 = vor.u32 1.1754944e-38, %v7097
        %v7099 = vsel %vm7096, %v7098, %v7094
        %v7100 = vmul.f32 1.0, %v7099
        %v7101 = vrcp.pop %v6677
        %v7102 = vmul.f32 %v6677, %v7101
        %v7103 = vsub.f32 1.0, %v7102
        %v7104 = vmul.f32 %v7101, %v7103
        %v7105 = vadd.f32 %v7101, %v7104
        %vm7106 = vweird.f32 %v6677
        %vm7107 = vweird.f32 %v7101
        %vm7108 = vmor %vm7106, %vm7107
        %v7109 = vsel %vm7108, %v7101, %v7105
        %v7110 = vand.u32 2147483647, %v6677
        %vm7111 = vcmp.eq.f32.partialorder %v7110, 8.507059e+37
        %v7112 = vand.u32 %v6677, 2147483648
        %v7113 = vor.u32 1.1754944e-38, %v7112
        %v7114 = vsel %vm7111, %v7113, %v7109
        %v7115 = vmul.f32 1.0, %v7114
        %v7116 = vrcp.pop %v6678
        %v7117 = vmul.f32 %v6678, %v7116
        %v7118 = vsub.f32 1.0, %v7117
        %v7119 = vmul.f32 %v7116, %v7118
        %v7120 = vadd.f32 %v7116, %v7119
        %vm7121 = vweird.f32 %v6678
        %vm7122 = vweird.f32 %v7116
        %vm7123 = vmor %vm7121, %vm7122
        %v7124 = vsel %vm7123, %v7116, %v7120
        %v7125 = vand.u32 2147483647, %v6678
        %vm7126 = vcmp.eq.f32.partialorder %v7125, 8.507059e+37
        %v7127 = vand.u32 %v6678, 2147483648
        %v7128 = vor.u32 1.1754944e-38, %v7127
        %v7129 = vsel %vm7126, %v7128, %v7124
        %v7130 = vmul.f32 1.0, %v7129
        %v7131 = vrcp.pop %v6679
        %v7132 = vmul.f32 %v6679, %v7131
        %v7133 = vsub.f32 1.0, %v7132
        %v7134 = vmul.f32 %v7131, %v7133
        %v7135 = vadd.f32 %v7131, %v7134
        %vm7136 = vweird.f32 %v6679
        %vm7137 = vweird.f32 %v7131
        %vm7138 = vmor %vm7136, %vm7137
        %v7139 = vsel %vm7138, %v7131, %v7135
        %v7140 = vand.u32 2147483647, %v6679
        %vm7141 = vcmp.eq.f32.partialorder %v7140, 8.507059e+37
        %v7142 = vand.u32 %v6679, 2147483648
        %v7143 = vor.u32 1.1754944e-38, %v7142
        %v7144 = vsel %vm7141, %v7143, %v7139
        %v7145 = vmul.f32 1.0, %v7144
        %v7146 = vrcp.pop %v6680
        %v7147 = vmul.f32 %v6680, %v7146
        %v7148 = vsub.f32 1.0, %v7147
        %v7149 = vmul.f32 %v7146, %v7148
        %v7150 = vadd.f32 %v7146, %v7149
        %vm7151 = vweird.f32 %v6680
        %vm7152 = vweird.f32 %v7146
        %vm7153 = vmor %vm7151, %vm7152
        %v7154 = vsel %vm7153, %v7146, %v7150
        %v7155 = vand.u32 2147483647, %v6680
        %vm7156 = vcmp.eq.f32.partialorder %v7155, 8.507059e+37
        %v7157 = vand.u32 %v6680, 2147483648
        %v7158 = vor.u32 1.1754944e-38, %v7157
        %v7159 = vsel %vm7156, %v7158, %v7154
        %v7160 = vmul.f32 1.0, %v7159
        %v7161 = vmul.f32 %v6385, %v6695
        %v7162 = vmul.f32 %v6474, %v6710
        %v7163 = vmul.f32 %v6387, %v6725
        %v7164 = vmul.f32 %v6476, %v6740
        %v7165 = vmul.f32 %v6390, %v6755
        %v7166 = vmul.f32 %v6479, %v6770
        %v7167 = vmul.f32 %v6392, %v6785
        %v7168 = vmul.f32 %v6481, %v6800
        %v7169 = vmul.f32 %v6395, %v6815
        %v7170 = vmul.f32 %v6484, %v6830
        %v7171 = vmul.f32 %v6397, %v6845
        %v7172 = vmul.f32 %v6486, %v6860
        %v7173 = vmul.f32 %v6400, %v6875
        %v7174 = vmul.f32 %v6489, %v6890
        %v7175 = vmul.f32 %v6402, %v6905
        %v7176 = vmul.f32 %v6491, %v6920
        %v7177 = vmul.f32 %v6405, %v6935
        %v7178 = vmul.f32 %v6494, %v6950
        %v7179 = vmul.f32 %v6407, %v6965
        %v7180 = vmul.f32 %v6496, %v6980
        %v7181 = vmul.f32 %v6410, %v6995
        %v7182 = vmul.f32 %v6499, %v7010
        %v7183 = vmul.f32 %v6412, %v7025
        %v7184 = vmul.f32 %v6501, %v7040
        %v7185 = vmul.f32 %v6415, %v7055
        %v7186 = vmul.f32 %v6504, %v7070
        %v7187 = vmul.f32 %v6417, %v7085
        %v7188 = vmul.f32 %v6506, %v7100
        %v7189 = vmul.f32 %v6420, %v7115
        %v7190 = vmul.f32 %v6509, %v7130
        %v7191 = vmul.f32 %v6422, %v7145
        %v7192 = vmul.f32 %v6511, %v7160
        %v7193 = vsub.f32 1.0, %v6695
        %v7194 = vsub.f32 1.0, %v6710
        %v7195 = vsub.f32 1.0, %v6725
        %v7196 = vsub.f32 1.0, %v6740
        %v7197 = vsub.f32 1.0, %v6755
        %v7198 = vsub.f32 1.0, %v6770
        %v7199 = vsub.f32 1.0, %v6785
        %v7200 = vsub.f32 1.0, %v6800
        %v7201 = vsub.f32 1.0, %v6815
        %v7202 = vsub.f32 1.0, %v6830
        %v7203 = vsub.f32 1.0, %v6845
        %v7204 = vsub.f32 1.0, %v6860
        %v7205 = vsub.f32 1.0, %v6875
        %v7206 = vsub.f32 1.0, %v6890
        %v7207 = vsub.f32 1.0, %v6905
        %v7208 = vsub.f32 1.0, %v6920
        %v7209 = vsub.f32 1.0, %v6935
        %v7210 = vsub.f32 1.0, %v6950
        %v7211 = vsub.f32 1.0, %v6965
        %v7212 = vsub.f32 1.0, %v6980
        %v7213 = vsub.f32 1.0, %v6995
        %v7214 = vsub.f32 1.0, %v7010
        %v7215 = vsub.f32 1.0, %v7025
        %v7216 = vsub.f32 1.0, %v7040
        %v7217 = vsub.f32 1.0, %v7055
        %v7218 = vsub.f32 1.0, %v7070
        %v7219 = vsub.f32 1.0, %v7085
        %v7220 = vsub.f32 1.0, %v7100
        %v7221 = vsub.f32 1.0, %v7115
        %v7222 = vsub.f32 1.0, %v7130
        %v7223 = vsub.f32 1.0, %v7145
        %v7224 = vsub.f32 1.0, %v7160
        %v7225 = vmul.f32 %v6385, %v7193
        %v7226 = vmul.f32 %v6474, %v7194
        %v7227 = vmul.f32 %v6387, %v7195
        %v7228 = vmul.f32 %v6476, %v7196
        %v7229 = vmul.f32 %v6390, %v7197
        %v7230 = vmul.f32 %v6479, %v7198
        %v7231 = vmul.f32 %v6392, %v7199
        %v7232 = vmul.f32 %v6481, %v7200
        %v7233 = vmul.f32 %v6395, %v7201
        %v7234 = vmul.f32 %v6484, %v7202
        %v7235 = vmul.f32 %v6397, %v7203
        %v7236 = vmul.f32 %v6486, %v7204
        %v7237 = vmul.f32 %v6400, %v7205
        %v7238 = vmul.f32 %v6489, %v7206
        %v7239 = vmul.f32 %v6402, %v7207
        %v7240 = vmul.f32 %v6491, %v7208
        %v7241 = vmul.f32 %v6405, %v7209
        %v7242 = vmul.f32 %v6494, %v7210
        %v7243 = vmul.f32 %v6407, %v7211
        %v7244 = vmul.f32 %v6496, %v7212
        %v7245 = vmul.f32 %v6410, %v7213
        %v7246 = vmul.f32 %v6499, %v7214
        %v7247 = vmul.f32 %v6412, %v7215
        %v7248 = vmul.f32 %v6501, %v7216
        %v7249 = vmul.f32 %v6415, %v7217
        %v7250 = vmul.f32 %v6504, %v7218
        %v7251 = vmul.f32 %v6417, %v7219
        %v7252 = vmul.f32 %v6506, %v7220
        %v7253 = vmul.f32 %v6420, %v7221
        %v7254 = vmul.f32 %v6509, %v7222
        %v7255 = vmul.f32 %v6422, %v7223
        %v7256 = vmul.f32 %v6511, %v7224
        %v7257 = vadd.f32 %v7225, 1.0
        %v7258 = vadd.f32 %v7226, 1.0
        %v7259 = vadd.f32 %v7227, 1.0
        %v7260 = vadd.f32 %v7228, 1.0
        %v7261 = vadd.f32 %v7229, 1.0
        %v7262 = vadd.f32 %v7230, 1.0
        %v7263 = vadd.f32 %v7231, 1.0
        %v7264 = vadd.f32 %v7232, 1.0
        %v7265 = vadd.f32 %v7233, 1.0
        %v7266 = vadd.f32 %v7234, 1.0
        %v7267 = vadd.f32 %v7235, 1.0
        %v7268 = vadd.f32 %v7236, 1.0
        %v7269 = vadd.f32 %v7237, 1.0
        %v7270 = vadd.f32 %v7238, 1.0
        %v7271 = vadd.f32 %v7239, 1.0
        %v7272 = vadd.f32 %v7240, 1.0
        %v7273 = vadd.f32 %v7241, 1.0
        %v7274 = vadd.f32 %v7242, 1.0
        %v7275 = vadd.f32 %v7243, 1.0
        %v7276 = vadd.f32 %v7244, 1.0
        %v7277 = vadd.f32 %v7245, 1.0
        %v7278 = vadd.f32 %v7246, 1.0
        %v7279 = vadd.f32 %v7247, 1.0
        %v7280 = vadd.f32 %v7248, 1.0
        %v7281 = vadd.f32 %v7249, 1.0
        %v7282 = vadd.f32 %v7250, 1.0
        %v7283 = vadd.f32 %v7251, 1.0
        %v7284 = vadd.f32 %v7252, 1.0
        %v7285 = vadd.f32 %v7253, 1.0
        %v7286 = vadd.f32 %v7254, 1.0
        %v7287 = vadd.f32 %v7255, 1.0
        %v7288 = vadd.f32 %v7256, 1.0
        %v7289 = vmul.f32 %v6695, %v7257
        %v7290 = vmul.f32 %v6710, %v7258
        %v7291 = vmul.f32 %v6725, %v7259
        %v7292 = vmul.f32 %v6740, %v7260
        %v7293 = vmul.f32 %v6755, %v7261
        %v7294 = vmul.f32 %v6770, %v7262
        %v7295 = vmul.f32 %v6785, %v7263
        %v7296 = vmul.f32 %v6800, %v7264
        %v7297 = vmul.f32 %v6815, %v7265
        %v7298 = vmul.f32 %v6830, %v7266
        %v7299 = vmul.f32 %v6845, %v7267
        %v7300 = vmul.f32 %v6860, %v7268
        %v7301 = vmul.f32 %v6875, %v7269
        %v7302 = vmul.f32 %v6890, %v7270
        %v7303 = vmul.f32 %v6905, %v7271
        %v7304 = vmul.f32 %v6920, %v7272
        %v7305 = vmul.f32 %v6935, %v7273
        %v7306 = vmul.f32 %v6950, %v7274
        %v7307 = vmul.f32 %v6965, %v7275
        %v7308 = vmul.f32 %v6980, %v7276
        %v7309 = vmul.f32 %v6995, %v7277
        %v7310 = vmul.f32 %v7010, %v7278
        %v7311 = vmul.f32 %v7025, %v7279
        %v7312 = vmul.f32 %v7040, %v7280
        %v7313 = vmul.f32 %v7055, %v7281
        %v7314 = vmul.f32 %v7070, %v7282
        %v7315 = vmul.f32 %v7085, %v7283
        %v7316 = vmul.f32 %v7100, %v7284
        %v7317 = vmul.f32 %v7115, %v7285
        %v7318 = vmul.f32 %v7130, %v7286
        %v7319 = vmul.f32 %v7145, %v7287
        %v7320 = vmul.f32 %v7160, %v7288
        %v7321 = vmul.f32 %v7289, %v6425
        %v7322 = vmul.f32 %v7290, %v6514
        %v7323 = vmul.f32 %v7291, %v6427
        %v7324 = vmul.f32 %v7292, %v6516
        %v7325 = vmul.f32 %v7293, %v6430
        %v7326 = vmul.f32 %v7294, %v6519
        %v7327 = vmul.f32 %v7295, %v6432
        %v7328 = vmul.f32 %v7296, %v6521
        %v7329 = vmul.f32 %v7297, %v6435
        %v7330 = vmul.f32 %v7298, %v6524
        %v7331 = vmul.f32 %v7299, %v6437
        %v7332 = vmul.f32 %v7300, %v6526
        %v7333 = vmul.f32 %v7301, %v6440
        %v7334 = vmul.f32 %v7302, %v6529
        %v7335 = vmul.f32 %v7303, %v6442
        %v7336 = vmul.f32 %v7304, %v6531
        %v7337 = vmul.f32 %v7305, %v6445
        %v7338 = vmul.f32 %v7306, %v6534
        %v7339 = vmul.f32 %v7307, %v6447
        %v7340 = vmul.f32 %v7308, %v6536
        %v7341 = vmul.f32 %v7309, %v6450
        %v7342 = vmul.f32 %v7310, %v6539
        %v7343 = vmul.f32 %v7311, %v6452
        %v7344 = vmul.f32 %v7312, %v6541
        %v7345 = vmul.f32 %v7313, %v6455
        %v7346 = vmul.f32 %v7314, %v6544
        %v7347 = vmul.f32 %v7315, %v6457
        %v7348 = vmul.f32 %v7316, %v6546
        %v7349 = vmul.f32 %v7317, %v6460
        %v7350 = vmul.f32 %v7318, %v6549
        %v7351 = vmul.f32 %v7319, %v6462
        %v7352 = vmul.f32 %v7320, %v6551
        %v7353 = vpack.c.bf16 %v7162, %v7161
        %v7354 = vpack.c.bf16 %v7164, %v7163
        %v7355 = vpack.c.bf16 %v7166, %v7165
        %v7356 = vpack.c.bf16 %v7168, %v7167
        %v7357 = vpack.c.bf16 %v7170, %v7169
        %v7358 = vpack.c.bf16 %v7172, %v7171
        %v7359 = vpack.c.bf16 %v7174, %v7173
        %v7360 = vpack.c.bf16 %v7176, %v7175
        %v7361 = vpack.c.bf16 %v7178, %v7177
        %v7362 = vpack.c.bf16 %v7180, %v7179
        %v7363 = vpack.c.bf16 %v7182, %v7181
        %v7364 = vpack.c.bf16 %v7184, %v7183
        %v7365 = vpack.c.bf16 %v7186, %v7185
        %v7366 = vpack.c.bf16 %v7188, %v7187
        %v7367 = vpack.c.bf16 %v7190, %v7189
        %v7368 = vpack.c.bf16 %v7192, %v7191
        %v7369 = vpack.c.bf16 %v7322, %v7321
        %v7370 = vpack.c.bf16 %v7324, %v7323
        %v7371 = vpack.c.bf16 %v7326, %v7325
        %v7372 = vpack.c.bf16 %v7328, %v7327
        %v7373 = vpack.c.bf16 %v7330, %v7329
        %v7374 = vpack.c.bf16 %v7332, %v7331
        %v7375 = vpack.c.bf16 %v7334, %v7333
        %v7376 = vpack.c.bf16 %v7336, %v7335
        %v7377 = vpack.c.bf16 %v7338, %v7337
        %v7378 = vpack.c.bf16 %v7340, %v7339
        %v7379 = vpack.c.bf16 %v7342, %v7341
        %v7380 = vpack.c.bf16 %v7344, %v7343
        %v7381 = vpack.c.bf16 %v7346, %v7345
        %v7382 = vpack.c.bf16 %v7348, %v7347
        %v7383 = vpack.c.bf16 %v7350, %v7349
        %v7384 = vpack.c.bf16 %v7352, %v7351
        %v7401 = vunpack.c.l.b16 %v7353
        %v7402 = vunpack.c.h.b16 %v7353
        %v7403 = vunpack.c.l.b16 %v7354
        %v7404 = vunpack.c.h.b16 %v7354
        %v7405 = vunpack.c.l.b16 %v7355
        %v7406 = vunpack.c.h.b16 %v7355
        %v7407 = vunpack.c.l.b16 %v7356
        %v7408 = vunpack.c.h.b16 %v7356
        %v7409 = vunpack.c.l.b16 %v7357
        %v7410 = vunpack.c.h.b16 %v7357
        %v7411 = vunpack.c.l.b16 %v7358
        %v7412 = vunpack.c.h.b16 %v7358
        %v7413 = vunpack.c.l.b16 %v7359
        %v7414 = vunpack.c.h.b16 %v7359
        %v7415 = vunpack.c.l.b16 %v7360
        %v7416 = vunpack.c.h.b16 %v7360
        %v7417 = vunpack.c.l.b16 %v7361
        %v7418 = vunpack.c.h.b16 %v7361
        %v7419 = vunpack.c.l.b16 %v7362
        %v7420 = vunpack.c.h.b16 %v7362
        %v7421 = vunpack.c.l.b16 %v7363
        %v7422 = vunpack.c.h.b16 %v7363
        %v7423 = vunpack.c.l.b16 %v7364
        %v7424 = vunpack.c.h.b16 %v7364
        %v7425 = vunpack.c.l.b16 %v7365
        %v7426 = vunpack.c.h.b16 %v7365
        %v7427 = vunpack.c.l.b16 %v7366
        %v7428 = vunpack.c.h.b16 %v7366
        %v7429 = vunpack.c.l.b16 %v7367
        %v7430 = vunpack.c.h.b16 %v7367
        %v7431 = vunpack.c.l.b16 %v7368
        %v7432 = vunpack.c.h.b16 %v7368
        %v7433 = vpack.c.b16 %v7403, %v7401
        %v7434 = vpack.c.b16 %v7404, %v7402
        %v7435 = vpack.c.b16 %v7407, %v7405
        %v7436 = vpack.c.b16 %v7408, %v7406
        %v7437 = vpack.c.b16 %v7411, %v7409
        %v7438 = vpack.c.b16 %v7412, %v7410
        %v7439 = vpack.c.b16 %v7415, %v7413
        %v7440 = vpack.c.b16 %v7416, %v7414
        %v7441 = vpack.c.b16 %v7419, %v7417
        %v7442 = vpack.c.b16 %v7420, %v7418
        %v7443 = vpack.c.b16 %v7423, %v7421
        %v7444 = vpack.c.b16 %v7424, %v7422
        %v7445 = vpack.c.b16 %v7427, %v7425
        %v7446 = vpack.c.b16 %v7428, %v7426
        %v7447 = vpack.c.b16 %v7431, %v7429
        %v7448 = vpack.c.b16 %v7432, %v7430
        %v7481 = vunpack.c.l.b16 %v7369
        %v7482 = vunpack.c.h.b16 %v7369
        %v7483 = vunpack.c.l.b16 %v7370
        %v7484 = vunpack.c.h.b16 %v7370
        %v7485 = vunpack.c.l.b16 %v7371
        %v7486 = vunpack.c.h.b16 %v7371
        %v7487 = vunpack.c.l.b16 %v7372
        %v7488 = vunpack.c.h.b16 %v7372
        %v7489 = vunpack.c.l.b16 %v7373
        %v7490 = vunpack.c.h.b16 %v7373
        %v7491 = vunpack.c.l.b16 %v7374
        %v7492 = vunpack.c.h.b16 %v7374
        %v7493 = vunpack.c.l.b16 %v7375
        %v7494 = vunpack.c.h.b16 %v7375
        %v7495 = vunpack.c.l.b16 %v7376
        %v7496 = vunpack.c.h.b16 %v7376
        %v7497 = vunpack.c.l.b16 %v7377
        %v7498 = vunpack.c.h.b16 %v7377
        %v7499 = vunpack.c.l.b16 %v7378
        %v7500 = vunpack.c.h.b16 %v7378
        %v7501 = vunpack.c.l.b16 %v7379
        %v7502 = vunpack.c.h.b16 %v7379
        %v7503 = vunpack.c.l.b16 %v7380
        %v7504 = vunpack.c.h.b16 %v7380
        %v7505 = vunpack.c.l.b16 %v7381
        %v7506 = vunpack.c.h.b16 %v7381
        %v7507 = vunpack.c.l.b16 %v7382
        %v7508 = vunpack.c.h.b16 %v7382
        %v7509 = vunpack.c.l.b16 %v7383
        %v7510 = vunpack.c.h.b16 %v7383
        %v7511 = vunpack.c.l.b16 %v7384
        %v7512 = vunpack.c.h.b16 %v7384
        %v7513 = vpack.c.b16 %v7483, %v7481
        %v7514 = vpack.c.b16 %v7484, %v7482
        %v7515 = vpack.c.b16 %v7487, %v7485
        %v7516 = vpack.c.b16 %v7488, %v7486
        %v7517 = vpack.c.b16 %v7491, %v7489
        %v7518 = vpack.c.b16 %v7492, %v7490
        %v7519 = vpack.c.b16 %v7495, %v7493
        %v7520 = vpack.c.b16 %v7496, %v7494
        %v7521 = vpack.c.b16 %v7499, %v7497
        %v7522 = vpack.c.b16 %v7500, %v7498
        %v7523 = vpack.c.b16 %v7503, %v7501
        %v7524 = vpack.c.b16 %v7504, %v7502
        %v7525 = vpack.c.b16 %v7507, %v7505
        %v7526 = vpack.c.b16 %v7508, %v7506
        %v7527 = vpack.c.b16 %v7511, %v7509
        %v7528 = vpack.c.b16 %v7512, %v7510
        %v7577 = vunpack.c.l.b16 %v5017
        %v7578 = vunpack.c.l.b16 %v5018
        %v7579 = vunpack.c.l.b16 %v5019
        %v7580 = vunpack.c.l.b16 %v5020
        %v7581 = vunpack.c.l.b16 %v5021
        %v7582 = vunpack.c.l.b16 %v5022
        %v7583 = vunpack.c.l.b16 %v5023
        %v7584 = vunpack.c.l.b16 %v5024
        %v7585 = vunpack.c.l.b16 %v5025
        %v7586 = vunpack.c.l.b16 %v5026
        %v7587 = vunpack.c.l.b16 %v5027
        %v7588 = vunpack.c.l.b16 %v5028
        %v7589 = vunpack.c.l.b16 %v5029
        %v7590 = vunpack.c.l.b16 %v5030
        %v7591 = vunpack.c.l.b16 %v5031
        %v7592 = vunpack.c.l.b16 %v5032
        %v7593 = vunpack.c.l.b16 %v5033
        %v7594 = vunpack.c.l.b16 %v5034
        %v7595 = vunpack.c.l.b16 %v5035
        %v7596 = vunpack.c.l.b16 %v5036
        %v7597 = vunpack.c.l.b16 %v5037
        %v7598 = vunpack.c.l.b16 %v5038
        %v7599 = vunpack.c.l.b16 %v5039
        %v7600 = vunpack.c.l.b16 %v5040
        %v7601 = vunpack.c.l.b16 %v5041
        %v7602 = vunpack.c.l.b16 %v5042
        %v7603 = vunpack.c.l.b16 %v5043
        %v7604 = vunpack.c.l.b16 %v5044
        %v7605 = vunpack.c.l.b16 %v5045
        %v7606 = vunpack.c.l.b16 %v5046
        %v7607 = vunpack.c.l.b16 %v5047
        %v7608 = vunpack.c.l.b16 %v5048
        %v7609 = vpack.c.b16 %v7578, %v7577
        %v7610 = vpack.c.b16 %v7580, %v7579
        %v7611 = vpack.c.b16 %v7582, %v7581
        %v7612 = vpack.c.b16 %v7584, %v7583
        %v7613 = vpack.c.b16 %v7586, %v7585
        %v7614 = vpack.c.b16 %v7588, %v7587
        %v7615 = vpack.c.b16 %v7590, %v7589
        %v7616 = vpack.c.b16 %v7592, %v7591
        %v7617 = vpack.c.b16 %v7594, %v7593
        %v7618 = vpack.c.b16 %v7596, %v7595
        %v7619 = vpack.c.b16 %v7598, %v7597
        %v7620 = vpack.c.b16 %v7600, %v7599
        %v7621 = vpack.c.b16 %v7602, %v7601
        %v7622 = vpack.c.b16 %v7604, %v7603
        %v7623 = vpack.c.b16 %v7606, %v7605
        %v7624 = vpack.c.b16 %v7608, %v7607
        %7641 = vmatpush.bf16.msra.mxu0 %v7616
        %7642 = vmatpush.bf16.msra.mxu0 %v7615
        %7643 = vmatpush.bf16.msra.mxu0 %v7614
        %7644 = vmatpush.bf16.msra.mxu0 %v7613
        %7645 = vmatpush.bf16.msra.mxu0 %v7612
        %7646 = vmatpush.bf16.msra.mxu0 %v7611
        %7647 = vmatpush.bf16.msra.mxu0 %v7610
        %7648 = vmatpush.bf16.msra.mxu0 %v7609
        %7649 = vmatmul.bf16.gmra.mxu0 %v7433
        %v7650 = vpop.f32.mrf.mxu0
        %v7651 = vadd.f32 0.0, %v7650
        %v7652 = vpop.f32.mrf.mxu0
        %v7653 = vadd.f32 0.0, %v7652
        %7654 = vmatmul.bf16.gmra.mxu0 %v7435
        %v7655 = vpop.f32.mrf.mxu0
        %v7656 = vadd.f32 0.0, %v7655
        %v7657 = vpop.f32.mrf.mxu0
        %v7658 = vadd.f32 0.0, %v7657
        %7659 = vmatmul.bf16.gmra.mxu0 %v7437
        %v7660 = vpop.f32.mrf.mxu0
        %v7661 = vadd.f32 0.0, %v7660
        %v7662 = vpop.f32.mrf.mxu0
        %v7663 = vadd.f32 0.0, %v7662
        %7664 = vmatmul.bf16.gmra.mxu0 %v7439
        %v7665 = vpop.f32.mrf.mxu0
        %v7666 = vadd.f32 0.0, %v7665
        %v7667 = vpop.f32.mrf.mxu0
        %v7668 = vadd.f32 0.0, %v7667
        %7669 = vmatmul.bf16.gmra.mxu0 %v7441
        %v7670 = vpop.f32.mrf.mxu0
        %v7671 = vadd.f32 0.0, %v7670
        %v7672 = vpop.f32.mrf.mxu0
        %v7673 = vadd.f32 0.0, %v7672
        %7674 = vmatmul.bf16.gmra.mxu0 %v7443
        %v7675 = vpop.f32.mrf.mxu0
        %v7676 = vadd.f32 0.0, %v7675
        %v7677 = vpop.f32.mrf.mxu0
        %v7678 = vadd.f32 0.0, %v7677
        %7679 = vmatmul.bf16.gmra.mxu0 %v7445
        %v7680 = vpop.f32.mrf.mxu0
        %v7681 = vadd.f32 0.0, %v7680
        %v7682 = vpop.f32.mrf.mxu0
        %v7683 = vadd.f32 0.0, %v7682
        %7684 = vmatmul.bf16.gmra.mxu0 %v7447
        %v7685 = vpop.f32.mrf.mxu0
        %v7686 = vadd.f32 0.0, %v7685
        %v7687 = vpop.f32.mrf.mxu0
        %v7688 = vadd.f32 0.0, %v7687
        %7689 = vmatmul.bf16.gmra.mxu0 %v7513
        %v7690 = vpop.f32.mrf.mxu0
        %v7691 = vadd.f32 0.0, %v7690
        %v7692 = vpop.f32.mrf.mxu0
        %v7693 = vadd.f32 0.0, %v7692
        %7694 = vmatmul.bf16.gmra.mxu0 %v7515
        %v7695 = vpop.f32.mrf.mxu0
        %v7696 = vadd.f32 0.0, %v7695
        %v7697 = vpop.f32.mrf.mxu0
        %v7698 = vadd.f32 0.0, %v7697
        %7699 = vmatmul.bf16.gmra.mxu0 %v7517
        %v7700 = vpop.f32.mrf.mxu0
        %v7701 = vadd.f32 0.0, %v7700
        %v7702 = vpop.f32.mrf.mxu0
        %v7703 = vadd.f32 0.0, %v7702
        %7704 = vmatmul.bf16.gmra.mxu0 %v7519
        %v7705 = vpop.f32.mrf.mxu0
        %v7706 = vadd.f32 0.0, %v7705
        %v7707 = vpop.f32.mrf.mxu0
        %v7708 = vadd.f32 0.0, %v7707
        %7709 = vmatmul.bf16.gmra.mxu0 %v7521
        %v7710 = vpop.f32.mrf.mxu0
        %v7711 = vadd.f32 0.0, %v7710
        %v7712 = vpop.f32.mrf.mxu0
        %v7713 = vadd.f32 0.0, %v7712
        %7714 = vmatmul.bf16.gmra.mxu0 %v7523
        %v7715 = vpop.f32.mrf.mxu0
        %v7716 = vadd.f32 0.0, %v7715
        %v7717 = vpop.f32.mrf.mxu0
        %v7718 = vadd.f32 0.0, %v7717
        %7719 = vmatmul.bf16.gmra.mxu0 %v7525
        %v7720 = vpop.f32.mrf.mxu0
        %v7721 = vadd.f32 0.0, %v7720
        %v7722 = vpop.f32.mrf.mxu0
        %v7723 = vadd.f32 0.0, %v7722
        %7724 = vmatmul.bf16.gmra.mxu0 %v7527
        %v7725 = vpop.f32.mrf.mxu0
        %v7726 = vadd.f32 0.0, %v7725
        %v7727 = vpop.f32.mrf.mxu0
        %v7728 = vadd.f32 0.0, %v7727
        %7729 = vdwg.mxu0
        %7730 = vmatpush.bf16.msra.mxu0 %v7624
        %7731 = vmatpush.bf16.msra.mxu0 %v7623
        %7732 = vmatpush.bf16.msra.mxu0 %v7622
        %7733 = vmatpush.bf16.msra.mxu0 %v7621
        %7734 = vmatpush.bf16.msra.mxu0 %v7620
        %7735 = vmatpush.bf16.msra.mxu0 %v7619
        %7736 = vmatpush.bf16.msra.mxu0 %v7618
        %7737 = vmatpush.bf16.msra.mxu0 %v7617
        %7738 = vmatmul.bf16.gmra.mxu0 %v7434
        %v7739 = vpop.f32.mrf.mxu0
        %v7740 = vadd.f32 %v7651, %v7739
        %v7741 = vpop.f32.mrf.mxu0
        %v7742 = vadd.f32 %v7653, %v7741
        %7743 = vmatmul.bf16.gmra.mxu0 %v7436
        %v7744 = vpop.f32.mrf.mxu0
        %v7745 = vadd.f32 %v7656, %v7744
        %v7746 = vpop.f32.mrf.mxu0
        %v7747 = vadd.f32 %v7658, %v7746
        %7748 = vmatmul.bf16.gmra.mxu0 %v7438
        %v7749 = vpop.f32.mrf.mxu0
        %v7750 = vadd.f32 %v7661, %v7749
        %v7751 = vpop.f32.mrf.mxu0
        %v7752 = vadd.f32 %v7663, %v7751
        %7753 = vmatmul.bf16.gmra.mxu0 %v7440
        %v7754 = vpop.f32.mrf.mxu0
        %v7755 = vadd.f32 %v7666, %v7754
        %v7756 = vpop.f32.mrf.mxu0
        %v7757 = vadd.f32 %v7668, %v7756
        %7758 = vmatmul.bf16.gmra.mxu0 %v7442
        %v7759 = vpop.f32.mrf.mxu0
        %v7760 = vadd.f32 %v7671, %v7759
        %v7761 = vpop.f32.mrf.mxu0
        %v7762 = vadd.f32 %v7673, %v7761
        %7763 = vmatmul.bf16.gmra.mxu0 %v7444
        %v7764 = vpop.f32.mrf.mxu0
        %v7765 = vadd.f32 %v7676, %v7764
        %v7766 = vpop.f32.mrf.mxu0
        %v7767 = vadd.f32 %v7678, %v7766
        %7768 = vmatmul.bf16.gmra.mxu0 %v7446
        %v7769 = vpop.f32.mrf.mxu0
        %v7770 = vadd.f32 %v7681, %v7769
        %v7771 = vpop.f32.mrf.mxu0
        %v7772 = vadd.f32 %v7683, %v7771
        %7773 = vmatmul.bf16.gmra.mxu0 %v7448
        %v7774 = vpop.f32.mrf.mxu0
        %v7775 = vadd.f32 %v7686, %v7774
        %v7776 = vpop.f32.mrf.mxu0
        %v7777 = vadd.f32 %v7688, %v7776
        %7778 = vmatmul.bf16.gmra.mxu0 %v7514
        %v7779 = vpop.f32.mrf.mxu0
        %v7780 = vadd.f32 %v7691, %v7779
        %v7781 = vpop.f32.mrf.mxu0
        %v7782 = vadd.f32 %v7693, %v7781
        %7783 = vmatmul.bf16.gmra.mxu0 %v7516
        %v7784 = vpop.f32.mrf.mxu0
        %v7785 = vadd.f32 %v7696, %v7784
        %v7786 = vpop.f32.mrf.mxu0
        %v7787 = vadd.f32 %v7698, %v7786
        %7788 = vmatmul.bf16.gmra.mxu0 %v7518
        %v7789 = vpop.f32.mrf.mxu0
        %v7790 = vadd.f32 %v7701, %v7789
        %v7791 = vpop.f32.mrf.mxu0
        %v7792 = vadd.f32 %v7703, %v7791
        %7793 = vmatmul.bf16.gmra.mxu0 %v7520
        %v7794 = vpop.f32.mrf.mxu0
        %v7795 = vadd.f32 %v7706, %v7794
        %v7796 = vpop.f32.mrf.mxu0
        %v7797 = vadd.f32 %v7708, %v7796
        %7798 = vmatmul.bf16.gmra.mxu0 %v7522
        %v7799 = vpop.f32.mrf.mxu0
        %v7800 = vadd.f32 %v7711, %v7799
        %v7801 = vpop.f32.mrf.mxu0
        %v7802 = vadd.f32 %v7713, %v7801
        %7803 = vmatmul.bf16.gmra.mxu0 %v7524
        %v7804 = vpop.f32.mrf.mxu0
        %v7805 = vadd.f32 %v7716, %v7804
        %v7806 = vpop.f32.mrf.mxu0
        %v7807 = vadd.f32 %v7718, %v7806
        %7808 = vmatmul.bf16.gmra.mxu0 %v7526
        %v7809 = vpop.f32.mrf.mxu0
        %v7810 = vadd.f32 %v7721, %v7809
        %v7811 = vpop.f32.mrf.mxu0
        %v7812 = vadd.f32 %v7723, %v7811
        %7813 = vmatmul.bf16.gmra.mxu0 %v7528
        %v7814 = vpop.f32.mrf.mxu0
        %v7815 = vadd.f32 %v7726, %v7814
        %v7816 = vpop.f32.mrf.mxu0
        %v7817 = vadd.f32 %v7728, %v7816
        %7818 = vdwg.mxu0
        %v7819 = vmul.f32 %v7740, %v5528
        %v7820 = vmul.f32 %v7742, %v5530
        %v7821 = vmul.f32 %v7745, %v5533
        %v7822 = vmul.f32 %v7747, %v5535
        %v7823 = vmul.f32 %v7750, %v5538
        %v7824 = vmul.f32 %v7752, %v5540
        %v7825 = vmul.f32 %v7755, %v5543
        %v7826 = vmul.f32 %v7757, %v5545
        %v7827 = vmul.f32 %v7760, %v5548
        %v7828 = vmul.f32 %v7762, %v5550
        %v7829 = vmul.f32 %v7765, %v5553
        %v7830 = vmul.f32 %v7767, %v5555
        %v7831 = vmul.f32 %v7770, %v5558
        %v7832 = vmul.f32 %v7772, %v5560
        %v7833 = vmul.f32 %v7775, %v5563
        %v7834 = vmul.f32 %v7777, %v5565
        %v7835 = vadd.f32 %v4884, %v7819
        %v7836 = vadd.f32 %v4885, %v7820
        %v7837 = vadd.f32 %v4886, %v7821
        %v7838 = vadd.f32 %v4887, %v7822
        %v7839 = vadd.f32 %v4888, %v7823
        %v7840 = vadd.f32 %v4889, %v7824
        %v7841 = vadd.f32 %v4890, %v7825
        %v7842 = vadd.f32 %v4891, %v7826
        %v7843 = vadd.f32 %v4892, %v7827
        %v7844 = vadd.f32 %v4893, %v7828
        %v7845 = vadd.f32 %v4894, %v7829
        %v7846 = vadd.f32 %v4895, %v7830
        %v7847 = vadd.f32 %v4896, %v7831
        %v7848 = vadd.f32 %v4897, %v7832
        %v7849 = vadd.f32 %v4898, %v7833
        %v7850 = vadd.f32 %v4899, %v7834
        %v7851 = vmul.f32 %v7780, %v5528
        %v7852 = vmul.f32 %v7782, %v5530
        %v7853 = vmul.f32 %v7785, %v5533
        %v7854 = vmul.f32 %v7787, %v5535
        %v7855 = vmul.f32 %v7790, %v5538
        %v7856 = vmul.f32 %v7792, %v5540
        %v7857 = vmul.f32 %v7795, %v5543
        %v7858 = vmul.f32 %v7797, %v5545
        %v7859 = vmul.f32 %v7800, %v5548
        %v7860 = vmul.f32 %v7802, %v5550
        %v7861 = vmul.f32 %v7805, %v5553
        %v7862 = vmul.f32 %v7807, %v5555
        %v7863 = vmul.f32 %v7810, %v5558
        %v7864 = vmul.f32 %v7812, %v5560
        %v7865 = vmul.f32 %v7815, %v5563
        %v7866 = vmul.f32 %v7817, %v5565
        %v7867 = vadd.f32 %v4948, %v7851
        %v7868 = vadd.f32 %v4949, %v7852
        %v7869 = vadd.f32 %v4950, %v7853
        %v7870 = vadd.f32 %v4951, %v7854
        %v7871 = vadd.f32 %v4952, %v7855
        %v7872 = vadd.f32 %v4953, %v7856
        %v7873 = vadd.f32 %v4954, %v7857
        %v7874 = vadd.f32 %v4955, %v7858
        %v7875 = vadd.f32 %v4956, %v7859
        %v7876 = vadd.f32 %v4957, %v7860
        %v7877 = vadd.f32 %v4958, %v7861
        %v7878 = vadd.f32 %v4959, %v7862
        %v7879 = vadd.f32 %v4960, %v7863
        %v7880 = vadd.f32 %v4961, %v7864
        %v7881 = vadd.f32 %v4962, %v7865
        %v7882 = vadd.f32 %v4963, %v7866
        %v7883 = vmul.f32 %v7740, %v5568
        %v7884 = vmul.f32 %v7742, %v5570
        %v7885 = vmul.f32 %v7745, %v5573
        %v7886 = vmul.f32 %v7747, %v5575
        %v7887 = vmul.f32 %v7750, %v5578
        %v7888 = vmul.f32 %v7752, %v5580
        %v7889 = vmul.f32 %v7755, %v5583
        %v7890 = vmul.f32 %v7757, %v5585
        %v7891 = vmul.f32 %v7760, %v5588
        %v7892 = vmul.f32 %v7762, %v5590
        %v7893 = vmul.f32 %v7765, %v5593
        %v7894 = vmul.f32 %v7767, %v5595
        %v7895 = vmul.f32 %v7770, %v5598
        %v7896 = vmul.f32 %v7772, %v5600
        %v7897 = vmul.f32 %v7775, %v5603
        %v7898 = vmul.f32 %v7777, %v5605
        %v7899 = vadd.f32 %v7867, %v7883
        %v7900 = vadd.f32 %v7868, %v7884
        %v7901 = vadd.f32 %v7869, %v7885
        %v7902 = vadd.f32 %v7870, %v7886
        %v7903 = vadd.f32 %v7871, %v7887
        %v7904 = vadd.f32 %v7872, %v7888
        %v7905 = vadd.f32 %v7873, %v7889
        %v7906 = vadd.f32 %v7874, %v7890
        %v7907 = vadd.f32 %v7875, %v7891
        %v7908 = vadd.f32 %v7876, %v7892
        %v7909 = vadd.f32 %v7877, %v7893
        %v7910 = vadd.f32 %v7878, %v7894
        %v7911 = vadd.f32 %v7879, %v7895
        %v7912 = vadd.f32 %v7880, %v7896
        %v7913 = vadd.f32 %v7881, %v7897
        %v7914 = vadd.f32 %v7882, %v7898
        %v7915 = vpack.c.bf16 %v7835, %v7835
        %v7916 = vpack.c.bf16 %v7836, %v7836
        %v7917 = vpack.c.bf16 %v7837, %v7837
        %v7918 = vpack.c.bf16 %v7838, %v7838
        %v7919 = vpack.c.bf16 %v7839, %v7839
        %v7920 = vpack.c.bf16 %v7840, %v7840
        %v7921 = vpack.c.bf16 %v7841, %v7841
        %v7922 = vpack.c.bf16 %v7842, %v7842
        %v7923 = vpack.c.bf16 %v7843, %v7843
        %v7924 = vpack.c.bf16 %v7844, %v7844
        %v7925 = vpack.c.bf16 %v7845, %v7845
        %v7926 = vpack.c.bf16 %v7846, %v7846
        %v7927 = vpack.c.bf16 %v7847, %v7847
        %v7928 = vpack.c.bf16 %v7848, %v7848
        %v7929 = vpack.c.bf16 %v7849, %v7849
        %v7930 = vpack.c.bf16 %v7850, %v7850
        %v7931 = vpack.c.bf16 %v7899, %v7899
        %v7932 = vpack.c.bf16 %v7900, %v7900
        %v7933 = vpack.c.bf16 %v7901, %v7901
        %v7934 = vpack.c.bf16 %v7902, %v7902
        %v7935 = vpack.c.bf16 %v7903, %v7903
        %v7936 = vpack.c.bf16 %v7904, %v7904
        %v7937 = vpack.c.bf16 %v7905, %v7905
        %v7938 = vpack.c.bf16 %v7906, %v7906
        %v7939 = vpack.c.bf16 %v7907, %v7907
        %v7940 = vpack.c.bf16 %v7908, %v7908
        %v7941 = vpack.c.bf16 %v7909, %v7909
        %v7942 = vpack.c.bf16 %v7910, %v7910
        %v7943 = vpack.c.bf16 %v7911, %v7911
        %v7944 = vpack.c.bf16 %v7912, %v7912
        %v7945 = vpack.c.bf16 %v7913, %v7913
        %v7946 = vpack.c.bf16 %v7914, %v7914
        %v7963 = vunpack.c.l.b16 %v7915
        %v7964 = vunpack.c.l.b16 %v7916
        %v7965 = vunpack.c.l.b16 %v7917
        %v7966 = vunpack.c.l.b16 %v7918
        %v7967 = vunpack.c.l.b16 %v7919
        %v7968 = vunpack.c.l.b16 %v7920
        %v7969 = vunpack.c.l.b16 %v7921
        %v7970 = vunpack.c.l.b16 %v7922
        %v7971 = vunpack.c.l.b16 %v7923
        %v7972 = vunpack.c.l.b16 %v7924
        %v7973 = vunpack.c.l.b16 %v7925
        %v7974 = vunpack.c.l.b16 %v7926
        %v7975 = vunpack.c.l.b16 %v7927
        %v7976 = vunpack.c.l.b16 %v7928
        %v7977 = vunpack.c.l.b16 %v7929
        %v7978 = vunpack.c.l.b16 %v7930
        %v7979 = vpack.c.b16 %v7964, %v7963
        %v7980 = vpack.c.b16 %v7966, %v7965
        %v7981 = vpack.c.b16 %v7968, %v7967
        %v7982 = vpack.c.b16 %v7970, %v7969
        %v7983 = vpack.c.b16 %v7972, %v7971
        %v7984 = vpack.c.b16 %v7974, %v7973
        %v7985 = vpack.c.b16 %v7976, %v7975
        %v7986 = vpack.c.b16 %v7978, %v7977
        %v8011 = vunpack.c.l.b16 %v7931
        %v8012 = vunpack.c.l.b16 %v7932
        %v8013 = vunpack.c.l.b16 %v7933
        %v8014 = vunpack.c.l.b16 %v7934
        %v8015 = vunpack.c.l.b16 %v7935
        %v8016 = vunpack.c.l.b16 %v7936
        %v8017 = vunpack.c.l.b16 %v7937
        %v8018 = vunpack.c.l.b16 %v7938
        %v8019 = vunpack.c.l.b16 %v7939
        %v8020 = vunpack.c.l.b16 %v7940
        %v8021 = vunpack.c.l.b16 %v7941
        %v8022 = vunpack.c.l.b16 %v7942
        %v8023 = vunpack.c.l.b16 %v7943
        %v8024 = vunpack.c.l.b16 %v7944
        %v8025 = vunpack.c.l.b16 %v7945
        %v8026 = vunpack.c.l.b16 %v7946
        %v8027 = vpack.c.b16 %v8012, %v8011
        %v8028 = vpack.c.b16 %v8014, %v8013
        %v8029 = vpack.c.b16 %v8016, %v8015
        %v8030 = vpack.c.b16 %v8018, %v8017
        %v8031 = vpack.c.b16 %v8020, %v8019
        %v8032 = vpack.c.b16 %v8022, %v8021
        %v8033 = vpack.c.b16 %v8024, %v8023
        %v8034 = vpack.c.b16 %v8026, %v8025
        %v8043 = vld [vmem:[%s8] sm:$0xf]
        %v8044 = vld [vmem:[%s8 + $0x4] sm:$0xf]
        %v8045 = vld [vmem:[%s8 + $0x8] sm:$0xf]
        %v8046 = vld [vmem:[%s8 + $0xc] sm:$0xf]
        %v8047 = vld [vmem:[%s8 + $0x10] sm:$0xf]
        %v8048 = vld [vmem:[%s8 + $0x14] sm:$0xf]
        %v8049 = vld [vmem:[%s8 + $0x18] sm:$0xf]
        %v8050 = vld [vmem:[%s8 + $0x1c] sm:$0xf]
        %v8051 = vld [vmem:[%s8 + $0x20] sm:$0xf]
        %v8052 = vld [vmem:[%s8 + $0x24] sm:$0xf]
        %v8053 = vld [vmem:[%s8 + $0x28] sm:$0xf]
        %v8054 = vld [vmem:[%s8 + $0x2c] sm:$0xf]
        %v8055 = vld [vmem:[%s8 + $0x30] sm:$0xf]
        %v8056 = vld [vmem:[%s8 + $0x34] sm:$0xf]
        %v8057 = vld [vmem:[%s8 + $0x38] sm:$0xf]
        %v8058 = vld [vmem:[%s8 + $0x3c] sm:$0xf]
        %v8059 = vld [vmem:[%s8 + $0x40] sm:$0xf]
        %v8060 = vld [vmem:[%s8 + $0x44] sm:$0xf]
        %v8061 = vld [vmem:[%s8 + $0x48] sm:$0xf]
        %v8062 = vld [vmem:[%s8 + $0x4c] sm:$0xf]
        %v8063 = vld [vmem:[%s8 + $0x50] sm:$0xf]
        %v8064 = vld [vmem:[%s8 + $0x54] sm:$0xf]
        %v8065 = vld [vmem:[%s8 + $0x58] sm:$0xf]
        %v8066 = vld [vmem:[%s8 + $0x5c] sm:$0xf]
        %v8067 = vld [vmem:[%s8 + $0x60] sm:$0xf]
        %v8068 = vld [vmem:[%s8 + $0x64] sm:$0xf]
        %v8069 = vld [vmem:[%s8 + $0x68] sm:$0xf]
        %v8070 = vld [vmem:[%s8 + $0x6c] sm:$0xf]
        %v8071 = vld [vmem:[%s8 + $0x70] sm:$0xf]
        %v8072 = vld [vmem:[%s8 + $0x74] sm:$0xf]
        %v8073 = vld [vmem:[%s8 + $0x78] sm:$0xf]
        %v8074 = vld [vmem:[%s8 + $0x7c] sm:$0xf]
        %v8107 = vunpack.c.l.b16 %v8043
        %v8108 = vunpack.c.l.b16 %v8044
        %v8109 = vunpack.c.l.b16 %v8045
        %v8110 = vunpack.c.l.b16 %v8046
        %v8111 = vunpack.c.l.b16 %v8047
        %v8112 = vunpack.c.l.b16 %v8048
        %v8113 = vunpack.c.l.b16 %v8049
        %v8114 = vunpack.c.l.b16 %v8050
        %v8115 = vunpack.c.l.b16 %v8051
        %v8116 = vunpack.c.l.b16 %v8052
        %v8117 = vunpack.c.l.b16 %v8053
        %v8118 = vunpack.c.l.b16 %v8054
        %v8119 = vunpack.c.l.b16 %v8055
        %v8120 = vunpack.c.l.b16 %v8056
        %v8121 = vunpack.c.l.b16 %v8057
        %v8122 = vunpack.c.l.b16 %v8058
        %v8123 = vunpack.c.l.b16 %v8059
        %v8124 = vunpack.c.l.b16 %v8060
        %v8125 = vunpack.c.l.b16 %v8061
        %v8126 = vunpack.c.l.b16 %v8062
        %v8127 = vunpack.c.l.b16 %v8063
        %v8128 = vunpack.c.l.b16 %v8064
        %v8129 = vunpack.c.l.b16 %v8065
        %v8130 = vunpack.c.l.b16 %v8066
        %v8131 = vunpack.c.l.b16 %v8067
        %v8132 = vunpack.c.l.b16 %v8068
        %v8133 = vunpack.c.l.b16 %v8069
        %v8134 = vunpack.c.l.b16 %v8070
        %v8135 = vunpack.c.l.b16 %v8071
        %v8136 = vunpack.c.l.b16 %v8072
        %v8137 = vunpack.c.l.b16 %v8073
        %v8138 = vunpack.c.l.b16 %v8074
        %v8139 = vpack.c.b16 %v8108, %v8107
        %v8140 = vpack.c.b16 %v8110, %v8109
        %v8141 = vpack.c.b16 %v8112, %v8111
        %v8142 = vpack.c.b16 %v8114, %v8113
        %v8143 = vpack.c.b16 %v8116, %v8115
        %v8144 = vpack.c.b16 %v8118, %v8117
        %v8145 = vpack.c.b16 %v8120, %v8119
        %v8146 = vpack.c.b16 %v8122, %v8121
        %v8147 = vpack.c.b16 %v8124, %v8123
        %v8148 = vpack.c.b16 %v8126, %v8125
        %v8149 = vpack.c.b16 %v8128, %v8127
        %v8150 = vpack.c.b16 %v8130, %v8129
        %v8151 = vpack.c.b16 %v8132, %v8131
        %v8152 = vpack.c.b16 %v8134, %v8133
        %v8153 = vpack.c.b16 %v8136, %v8135
        %v8154 = vpack.c.b16 %v8138, %v8137
        %8171 = vmatpush.bf16.msra.mxu0 %v8146
        %8172 = vmatpush.bf16.msra.mxu0 %v8145
        %8173 = vmatpush.bf16.msra.mxu0 %v8144
        %8174 = vmatpush.bf16.msra.mxu0 %v8143
        %8175 = vmatpush.bf16.msra.mxu0 %v8142
        %8176 = vmatpush.bf16.msra.mxu0 %v8141
        %8177 = vmatpush.bf16.msra.mxu0 %v8140
        %8178 = vmatpush.bf16.msra.mxu0 %v8139
        %8179 = vmatmul.bf16.gmra.mxu0 %v7979
        %v8180 = vpop.f32.mrf.mxu0
        %v8181 = vadd.f32 0.0, %v8180
        %v8182 = vpop.f32.mrf.mxu0
        %v8183 = vadd.f32 0.0, %v8182
        %8184 = vmatmul.bf16.gmra.mxu0 %v7980
        %v8185 = vpop.f32.mrf.mxu0
        %v8186 = vadd.f32 0.0, %v8185
        %v8187 = vpop.f32.mrf.mxu0
        %v8188 = vadd.f32 0.0, %v8187
        %8189 = vmatmul.bf16.gmra.mxu0 %v7981
        %v8190 = vpop.f32.mrf.mxu0
        %v8191 = vadd.f32 0.0, %v8190
        %v8192 = vpop.f32.mrf.mxu0
        %v8193 = vadd.f32 0.0, %v8192
        %8194 = vmatmul.bf16.gmra.mxu0 %v7982
        %v8195 = vpop.f32.mrf.mxu0
        %v8196 = vadd.f32 0.0, %v8195
        %v8197 = vpop.f32.mrf.mxu0
        %v8198 = vadd.f32 0.0, %v8197
        %8199 = vmatmul.bf16.gmra.mxu0 %v7983
        %v8200 = vpop.f32.mrf.mxu0
        %v8201 = vadd.f32 0.0, %v8200
        %v8202 = vpop.f32.mrf.mxu0
        %v8203 = vadd.f32 0.0, %v8202
        %8204 = vmatmul.bf16.gmra.mxu0 %v7984
        %v8205 = vpop.f32.mrf.mxu0
        %v8206 = vadd.f32 0.0, %v8205
        %v8207 = vpop.f32.mrf.mxu0
        %v8208 = vadd.f32 0.0, %v8207
        %8209 = vmatmul.bf16.gmra.mxu0 %v7985
        %v8210 = vpop.f32.mrf.mxu0
        %v8211 = vadd.f32 0.0, %v8210
        %v8212 = vpop.f32.mrf.mxu0
        %v8213 = vadd.f32 0.0, %v8212
        %8214 = vmatmul.bf16.gmra.mxu0 %v7986
        %v8215 = vpop.f32.mrf.mxu0
        %v8216 = vadd.f32 0.0, %v8215
        %v8217 = vpop.f32.mrf.mxu0
        %v8218 = vadd.f32 0.0, %v8217
        %8219 = vdwg.mxu0
        %8220 = vmatpush.bf16.msra.mxu0 %v8154
        %8221 = vmatpush.bf16.msra.mxu0 %v8153
        %8222 = vmatpush.bf16.msra.mxu0 %v8152
        %8223 = vmatpush.bf16.msra.mxu0 %v8151
        %8224 = vmatpush.bf16.msra.mxu0 %v8150
        %8225 = vmatpush.bf16.msra.mxu0 %v8149
        %8226 = vmatpush.bf16.msra.mxu0 %v8148
        %8227 = vmatpush.bf16.msra.mxu0 %v8147
        %8228 = vmatmul.bf16.gmra.mxu0 %v8027
        %v8229 = vpop.f32.mrf.mxu0
        %v8230 = vadd.f32 %v8181, %v8229
        %v8231 = vpop.f32.mrf.mxu0
        %v8232 = vadd.f32 %v8183, %v8231
        %8233 = vmatmul.bf16.gmra.mxu0 %v8028
        %v8234 = vpop.f32.mrf.mxu0
        %v8235 = vadd.f32 %v8186, %v8234
        %v8236 = vpop.f32.mrf.mxu0
        %v8237 = vadd.f32 %v8188, %v8236
        %8238 = vmatmul.bf16.gmra.mxu0 %v8029
        %v8239 = vpop.f32.mrf.mxu0
        %v8240 = vadd.f32 %v8191, %v8239
        %v8241 = vpop.f32.mrf.mxu0
        %v8242 = vadd.f32 %v8193, %v8241
        %8243 = vmatmul.bf16.gmra.mxu0 %v8030
        %v8244 = vpop.f32.mrf.mxu0
        %v8245 = vadd.f32 %v8196, %v8244
        %v8246 = vpop.f32.mrf.mxu0
        %v8247 = vadd.f32 %v8198, %v8246
        %8248 = vmatmul.bf16.gmra.mxu0 %v8031
        %v8249 = vpop.f32.mrf.mxu0
        %v8250 = vadd.f32 %v8201, %v8249
        %v8251 = vpop.f32.mrf.mxu0
        %v8252 = vadd.f32 %v8203, %v8251
        %8253 = vmatmul.bf16.gmra.mxu0 %v8032
        %v8254 = vpop.f32.mrf.mxu0
        %v8255 = vadd.f32 %v8206, %v8254
        %v8256 = vpop.f32.mrf.mxu0
        %v8257 = vadd.f32 %v8208, %v8256
        %8258 = vmatmul.bf16.gmra.mxu0 %v8033
        %v8259 = vpop.f32.mrf.mxu0
        %v8260 = vadd.f32 %v8211, %v8259
        %v8261 = vpop.f32.mrf.mxu0
        %v8262 = vadd.f32 %v8213, %v8261
        %8263 = vmatmul.bf16.gmra.mxu0 %v8034
        %v8264 = vpop.f32.mrf.mxu0
        %v8265 = vadd.f32 %v8216, %v8264
        %v8266 = vpop.f32.mrf.mxu0
        %v8267 = vadd.f32 %v8218, %v8266
        %8268 = vdwg.mxu0
        %8269 = vst [vmem:[%s412] sm:$0xff] %v8230
        %8270 = vst [vmem:[%s412 + $0x8] sm:$0xff] %v8232
        %8271 = vst [vmem:[%s412 + $0x10] sm:$0xff] %v8235
        %8272 = vst [vmem:[%s412 + $0x18] sm:$0xff] %v8237
        %8273 = vst [vmem:[%s412 + $0x20] sm:$0xff] %v8240
        %8274 = vst [vmem:[%s412 + $0x28] sm:$0xff] %v8242
        %8275 = vst [vmem:[%s412 + $0x30] sm:$0xff] %v8245
        %8276 = vst [vmem:[%s412 + $0x38] sm:$0xff] %v8247
        %8277 = vst [vmem:[%s412 + $0x40] sm:$0xff] %v8250
        %8278 = vst [vmem:[%s412 + $0x48] sm:$0xff] %v8252
        %8279 = vst [vmem:[%s412 + $0x50] sm:$0xff] %v8255
        %8280 = vst [vmem:[%s412 + $0x58] sm:$0xff] %v8257
        %8281 = vst [vmem:[%s412 + $0x60] sm:$0xff] %v8260
        %8282 = vst [vmem:[%s412 + $0x68] sm:$0xff] %v8262
        %8283 = vst [vmem:[%s412 + $0x70] sm:$0xff] %v8265
        %8284 = vst [vmem:[%s412 + $0x78] sm:$0xff] %v8267
        %s8285 = sand.u32 %s237, 1
        %s8286 = scalar_lea.sflag [#allocation4], %s8285
        %s8287 = sand.u32 %s237, 1
        %s8288 = smul.addr %s8287, 128
        %s8289 = scalar_lea.vmem [#allocation8], %s8288
        // Predicated region
        $region69: #{tpu_custom_call.1} parent=55 // pred_check
          %p8290 = pneg %p247
        $region70: #{tpu_custom_call.1} parent=55 // pred_check_branch
          %8292 = sbr.rel (%p8290) target = $region72
        $region71: #{tpu_custom_call.1} parent=55 // pred_region
          %s8293 = smul.u32 16, %s25
          %8295 = vsyncadd %s8286, 0
          %s8296 = smul.addr %s8293, 8
          %s8297 = scalar_lea.hbm %s9, %s8296
          %s8298 = sshll.u32 %s8289, 4
          %s8299 = int_to_ptr.vmem [resolvable:$true] %s8298
          %s8300 = sshll.u32 %s8297, 4
          %s8301 = int_to_ptr.hbm [resolvable:$true] %s8300
          %8306 = dma.vmem_to_hbm [thread:$0]  %s8299, 2048, %s8301, %s8286, 128, 128, 8
        $region72: #{tpu_custom_call.1} parent=55 // pred_fallthru
          _
      $region56: #{tpu_custom_call.1} parent=5 // pred_fallthru
        _
      %p8307 = scmp.le.s32.totalorder 2, %s20
      // Predicated region
      $region73: #{tpu_custom_call.1} parent=5 // pred_check
        %p8308 = pneg %p8307
      $region74: #{tpu_custom_call.1} parent=5 // pred_check_branch
        %8310 = sbr.rel (%p8308) target = $region76
      $region75: #{tpu_custom_call.1} parent=5 // pred_region
        %s8311 = ssub.s32 %s20, 2
        // Predicated region
        $region77: #{tpu_custom_call.1} parent=75 // pred_check
          %p8312 = pneg %p253
        $region78: #{tpu_custom_call.1} parent=75 // pred_check_branch
          %8314 = sbr.rel (%p8312) target = $region80
        $region79: #{tpu_custom_call.1} parent=75 // pred_region
          %s8315 = sand.u32 %s238, 1
          %s8316 = scalar_lea.sflag [#allocation4], %s8315
          %s8317 = sand.u32 %s238, 1
          %s8318 = smul.addr %s8317, 128
          %s8319 = scalar_lea.vmem [#allocation8], %s8318
          %8321 = dma.done %s8316, 2048
        $region80: #{tpu_custom_call.1} parent=75 // pred_fallthru
          _
      $region76: #{tpu_custom_call.1} parent=5 // pred_fallthru
        _
    $region6: #{tpu_custom_call.1} parent=1 // loop_footer
      %s24 = sadd.s32 1, %s20
    $region7: #{tpu_custom_call.1} parent=1 // loop_footer_branch
      %19 = sbr.rel target = $region3
    $region8: #{tpu_custom_call.1} parent=1 // loop_exit
      _
    %8322 = vsyncpa [#allocation3], 1
    %s8323 = scalar_lea.sflag [#allocation3], 1
    %8324 = vsyncpa %s8323, 1
    %8325 = vsyncpa [#allocation6], 1
    %8326 = vsyncpa [#allocation4], 1
    %s8327 = scalar_lea.sflag [#allocation4], 1
    %8328 = vsyncpa %s8327, 1

</llo_original>
